<compile_context>
chip_gen: v7x
topology: tpu7x:2x2x1
jax: 0.10.0
libtpu: 0.0.40
codegen_flags: <defaults>
</compile_context>

<pallas_src>
import functools

import numpy as np
import jax
import jax.numpy as jnp
from jax.experimental import pallas as pl
from jax.experimental.pallas import tpu as pltpu


def _round_up(x, m):
    return (x + m - 1) // m * m


def _tensorcores_per_device():
    """Best-effort count of TensorCores a single Pallas call can span."""
    try:
        kind = jax.devices()[0].device_kind.lower()
    except Exception:
        return 1
    # Megacore / dual-TC chips (v4, v5p, v7x).  v5e / v6e have one TC per chip.
    if any(tag in kind for tag in ("v4", "v5p", "v7", "7x")):
        return 2
    return 1


def _default_tile_n(n_aligned, num_tc):
    """Pick tile_n (multiple of 16) from the 16-aligned instance count."""
    # Target ~256-row tiles at large N; at least num_tc tiles (and a multiple of
    # num_tc) so 2-TC chips can shard the "parallel" grid axis.  On single-TC
    # chips small N stays a single tile (per-step overhead ~0.35 us dominates).
    num_tiles = max(num_tc, n_aligned // 256, 1)
    if num_tc > 1 and num_tiles % num_tc:
        num_tiles += num_tc - (num_tiles % num_tc)
    tile = _round_up(-(-n_aligned // num_tiles), 16)
    return max(16, min(tile, n_aligned))


def _filter_merger_kernel(ct_ref, eps_ref, wct_ref, wep_ref, wwe_ref, out_ref, *, k):
    """One TILE_N instance slab of the fused FilterMerger forward.

    ct_ref : (TN, P)      f32   center params (also streamed into the output add)
    eps_ref: (TN*K, P)    bf16  extreme-point params, pre-flattened in the wrapper
    wct/wep/wwe_ref: (P, P) bf16 weights, pre-transposed to (in, out) layout
    out_ref: (TN, P)      f32
    """
    tnk, p = eps_ref.shape
    tn = tnk // k
    mm_dtype = wct_ref.dtype

    ct = ct_ref[...]                                    # (TN, P)    f32
    eps_mm = eps_ref[...]                               # (TN*K, P)  bf16 (MXU-ready)

    # ct_proj(ct_param): (TN, P) -- MXU, bf16 operands, f32 accumulation.
    ct_proj = jnp.dot(ct.astype(mm_dtype), wct_ref[...],
                      preferred_element_type=jnp.float32)

    # ep_proj(eps_param): flat (TN*K, P) matmul, then view back to (TN, K, P)
    # (pure view: TN*K % 16 == 0, P % 128 == 0).
    ep_proj = jnp.dot(eps_mm, wep_ref[...],
                      preferred_element_type=jnp.float32).reshape(tn, k, p)

    # dists = (ep_proj - ct_proj.unsqueeze(1)) ** 2   -- f32 on the VPU.
    diff = ep_proj - ct_proj[:, None, :]
    dists = diff * diff

    # weight_eps = weight_eps_linear(dists): (TN, K, P).
    w = jnp.dot(dists.reshape(tnk, p).astype(mm_dtype), wwe_ref[...],
                preferred_element_type=jnp.float32).reshape(tn, k, p)

    # softmax over K fused with the weighted sum; one (TN, P) EUP reciprocal
    # replaces a (TN, K, P) divide.
    w_max = jnp.max(w, axis=1, keepdims=True)           # (TN, 1, P)
    w_exp = jnp.exp(w - w_max)                          # (TN, K, P) f32
    inv_den = pl.reciprocal(jnp.sum(w_exp, axis=1), approx=True)   # (TN, P)

    eps_f32 = eps_mm.astype(jnp.float32).reshape(tn, k, p)
    ep_merged = jnp.sum(eps_f32 * w_exp, axis=1) * inv_den          # (TN, P)

    # final_param = (ep_param + ct_param) / 2
    out_ref[...] = ((ep_merged + ct) * 0.5).astype(out_ref.dtype)


@functools.partial(jax.jit, static_argnames=("tile_n", "matmul_dtype"))
def filter_merger_forward(ct_param, eps_param, w_ct, w_ep, w_we, *,
                          tile_n=None, matmul_dtype=jnp.bfloat16):
    """FilterMerger.forward.

    ct_param : (N, P); eps_param : (N, K, P);
    w_ct / w_ep / w_we : (P, P) nn.Linear weights in (out, in) layout (bias-free).
    """
    N, P = ct_param.shape
    _, K, _ = eps_param.shape

    # ---- pad to TPU-friendly shapes (exact: zero padding contributes nothing,
    # padded rows/lanes are sliced off afterwards).
    P_pad = _round_up(P, 128)
    n16 = _round_up(N, 16)        # 16-row alignment keeps the bf16 eps block tileable
    num_tc = _tensorcores_per_device()
    if tile_n is None:
        tile_n = _default_tile_n(n16, num_tc)
    tile_n = max(16, _round_up(int(tile_n), 16))
    N_pad = _round_up(n16, tile_n)
    num_tiles = N_pad // tile_n

    pad_p = P_pad - P
    pad_n = N_pad - N

    ct_p = jnp.pad(ct_param, ((0, pad_n), (0, pad_p))) if (pad_n or pad_p) else ct_param
    eps_p = (jnp.pad(eps_param, ((0, pad_n), (0, 0), (0, pad_p)))
             if (pad_n or pad_p) else eps_param)
    # Stream eps as bf16, pre-flattened to (N*K, P): halves the dominant HBM
    # stream and removes the per-step f32->bf16 pack for the big matmul operand.
    eps_flat = eps_p.reshape(N_pad * K, P_pad).astype(matmul_dtype)

    def prep_weight(w):
        if pad_p:
            w = jnp.pad(w, ((0, pad_p), (0, pad_p)))
        # nn.Linear stores (out, in); transpose ONCE here so the in-kernel matmul
        # is canonical (M,K)x(K,N) with a stationary RHS (no per-step relayout).
        return w.T.astype(matmul_dtype)

    w_ct_t = prep_weight(w_ct)
    w_ep_t = prep_weight(w_ep)
    w_we_t = prep_weight(w_we)

    w_itemsize = np.dtype(matmul_dtype).itemsize

    cost = pl.CostEstimate(
        flops=2 * N_pad * P_pad * P_pad * (1 + 2 * K) + 10 * N_pad * K * P_pad,
        transcendentals=N_pad * K * P_pad + N_pad * P_pad,
        bytes_accessed=(N_pad * P_pad * 4                       # ct in  (f32)
                        + N_pad * K * P_pad * w_itemsize        # eps in (bf16)
                        + N_pad * P_pad * 4                     # out    (f32)
                        + 3 * P_pad * P_pad * w_itemsize),      # weights
    )

    # Right-size the scoped VMEM limit from the actual per-step footprint:
    # double-buffered IO blocks + resident weights + f32 intermediate slabs.
    io_blk = (tile_n * K * P_pad * w_itemsize      # eps block (bf16)
              + tile_n * P_pad * 4                 # ct block  (f32)
              + tile_n * P_pad * 4)                # out block (f32)
    interm = 8 * tile_n * K * P_pad * 4            # ep_proj/diff/dists/w/w_exp/eps_f32/...
    weights_bytes = 3 * P_pad * P_pad * w_itemsize
    need = 2 * io_blk + weights_bytes + interm
    vmem_limit = int(min(max(need + (8 << 20), 32 << 20), 48 << 20))

    kernel = functools.partial(_filter_merger_kernel, k=K)

    out_pad = pl.pallas_call(
        kernel,
        out_shape=jax.ShapeDtypeStruct((N_pad, P_pad), jnp.float32),
        grid=(num_tiles,),
        in_specs=[
            pl.BlockSpec((tile_n, P_pad), lambda i: (i, 0)),
            pl.BlockSpec((tile_n * K, P_pad), lambda i: (i, 0)),
            # Same block every grid step -> weights stay VMEM-resident.
            pl.BlockSpec((P_pad, P_pad), lambda i: (0, 0)),
            pl.BlockSpec((P_pad, P_pad), lambda i: (0, 0)),
            pl.BlockSpec((P_pad, P_pad), lambda i: (0, 0)),
        ],
        out_specs=pl.BlockSpec((tile_n, P_pad), lambda i: (i, 0)),
        compiler_params=pltpu.CompilerParams(
            dimension_semantics=("parallel",),      # 2-TC chips shard the N-tiles
            vmem_limit_bytes=vmem_limit,
        ),
        cost_estimate=cost,
    )(ct_p, eps_flat, w_ct_t, w_ep_t, w_we_t)

    return out_pad[:N, :P]


def filter_merger_reference(ct_param, eps_param, w_ct, w_ep, w_we, *,
                            matmul_dtype=jnp.float32, bf16_eps_stream=False):
    """Plain-JAX reference mirroring the PyTorch forward exactly (optionally with
    the same bf16 eps stream / bf16-operand f32-accumulate matmuls as the kernel)."""
    eps_in = (eps_param.astype(matmul_dtype).astype(jnp.float32)
              if bf16_eps_stream else eps_param)
    c = lambda x: x.astype(matmul_dtype)
    ct_proj = jnp.dot(c(ct_param), c(w_ct).T, preferred_element_type=jnp.float32)
    ep_proj = jnp.einsum("nkp,qp->nkq", c(eps_in), c(w_ep),
                         preferred_element_type=jnp.float32)
    dists = (ep_proj - ct_proj[:, None, :]) ** 2
    weight_eps = jnp.einsum("nkp,qp->nkq", c(dists), c(w_we),
                            preferred_element_type=jnp.float32)
    weight_eps = jax.nn.softmax(weight_eps, axis=1)
    ep_param = (eps_in * weight_eps).sum(axis=1)
    return (ep_param + ct_param) / 2.0


if __name__ == "__main__":
    # Small shapes consistent with the module: param_length=169 (module default),
    # K=8 extreme-point candidates, N=100 instances.  The default tile heuristic
    # gives a single 112-row tile on v5e/v6e and two 64-row tiles on 2-TC chips.
    N, K, P = 100, 8, 169

    key = jax.random.PRNGKey(0)
    k_ct, k_eps, k_wct, k_wep, k_wwe = jax.random.split(key, 5)

    ct_param = jax.random.normal(k_ct, (N, P), dtype=jnp.float32)
    eps_param = jax.random.normal(k_eps, (N, K, P), dtype=jnp.float32)

    scale = 1.0 / jnp.sqrt(jnp.float32(P))
    w_ct = jax.random.normal(k_wct, (P, P), dtype=jnp.float32) * scale   # ct_proj
    w_ep = jax.random.normal(k_wep, (P, P), dtype=jnp.float32) * scale   # ep_proj
    w_we = jax.random.normal(k_wwe, (P, P), dtype=jnp.float32) * scale   # weight_eps_linear

    # TODO(synk): self.linear (param_length*5 -> param_length) is defined in
    # __init__ but never used in forward(); intentionally not implemented.

    out = filter_merger_forward(ct_param, eps_param, w_ct, w_ep, w_we)
    out = jax.block_until_ready(out)
    assert out.shape == (N, P)

    # Tight check: reference using the same bf16 eps stream and bf16-operand /
    # f32-accumulate matmuls as the kernel (residual diff: approx reciprocal,
    # MXU vs XLA rounding).
    ref_tight = filter_merger_reference(ct_param, eps_param, w_ct, w_ep, w_we,
                                        matmul_dtype=jnp.bfloat16,
                                        bf16_eps_stream=True)
    err_tight = float(jnp.max(jnp.abs(out - ref_tight)))
    assert err_tight < 2e-2, f"tight check failed: max abs err {err_tight}"

    # Loose sanity check vs the pure-f32 reference (bf16 operands/stream perturb
    # the softmax logits slightly -> compare mean error relative to signal scale).
    ref_f32 = filter_merger_reference(ct_param, eps_param, w_ct, w_ep, w_we)
    rel = float(jnp.mean(jnp.abs(out - ref_f32))
                / (jnp.mean(jnp.abs(ref_f32)) + 1e-8))
    assert rel < 8e-2, f"loose check failed: relative mean err {rel}"

    print("KERNEL_OK")
</pallas_src>

<mosaic_0001>
module attributes {stable_mosaic.version = 11 : i64} {
  func.func @_filter_merger_kernel(%arg0: i32, %arg1: memref<112x256xf32, #tpu.memory_space<vmem>>, %arg2: memref<896x256xbf16, #tpu.memory_space<vmem>>, %arg3: memref<256x256xbf16, #tpu.memory_space<vmem>>, %arg4: memref<256x256xbf16, #tpu.memory_space<vmem>>, %arg5: memref<256x256xbf16, #tpu.memory_space<vmem>>, %arg6: memref<112x256xf32, #tpu.memory_space<vmem>>) attributes {dimension_semantics = [#tpu.dimension_semantics<parallel>], iteration_bounds = array<i64: 1>, scalar_prefetch = 0 : i64, scratch_operands = 0 : i64, tpu.core_type = #tpu.core_type<tc>, window_params = [{transform_indices = @transform_0, window_bounds = array<i64: 112, 256>}, {transform_indices = @transform_1, window_bounds = array<i64: 896, 256>}, {pipeline_mode = #tpu.pipeline_mode<synchronous>, transform_indices = @transform_2, window_bounds = array<i64: 256, 256>}, {pipeline_mode = #tpu.pipeline_mode<synchronous>, transform_indices = @transform_3, window_bounds = array<i64: 256, 256>}, {pipeline_mode = #tpu.pipeline_mode<synchronous>, transform_indices = @transform_4, window_bounds = array<i64: 256, 256>}, {transform_indices = @transform_5, window_bounds = array<i64: 112, 256>}]} {
    %c0 = arith.constant 0 : index
    %c0_0 = arith.constant 0 : index
    %0 = vector.load %arg1[%c0, %c0_0] : memref<112x256xf32, #tpu.memory_space<vmem>>, vector<112x256xf32>
    %c0_1 = arith.constant 0 : index
    %c0_2 = arith.constant 0 : index
    %1 = vector.load %arg2[%c0_1, %c0_2] : memref<896x256xbf16, #tpu.memory_space<vmem>>, vector<896x256xbf16>
    %2 = arith.truncf %0 : vector<112x256xf32> to vector<112x256xbf16>
    %c0_3 = arith.constant 0 : index
    %c0_4 = arith.constant 0 : index
    %3 = vector.load %arg3[%c0_3, %c0_4] : memref<256x256xbf16, #tpu.memory_space<vmem>>, vector<256x256xbf16>
    %cst = arith.constant dense<0.000000e+00> : vector<112x256xf32>
    %4 = tpu.matmul %2, %3, %cst {dimension_numbers = #tpu.dot_dimension_numbers<[1], [0], [0], [1], [0, 0, 1, 1], [], []>} : vector<112x256xbf16>, vector<256x256xbf16>, vector<112x256xf32> -> vector<112x256xf32>
    %c0_5 = arith.constant 0 : index
    %c0_6 = arith.constant 0 : index
    %5 = vector.load %arg4[%c0_5, %c0_6] : memref<256x256xbf16, #tpu.memory_space<vmem>>, vector<256x256xbf16>
    %cst_7 = arith.constant dense<0.000000e+00> : vector<896x256xf32>
    %6 = tpu.matmul %1, %5, %cst_7 {dimension_numbers = #tpu.dot_dimension_numbers<[1], [0], [0], [1], [0, 0, 1, 1], [], []>} : vector<896x256xbf16>, vector<256x256xbf16>, vector<896x256xf32> -> vector<896x256xf32>
    %7 = vector.shape_cast %6 : vector<896x256xf32> to vector<112x8x256xf32>
    %8 = vector.shape_cast %4 : vector<112x256xf32> to vector<112x1x256xf32>
    %9 = vector.broadcast %8 : vector<112x1x256xf32> to vector<112x8x256xf32>
    %10 = arith.subf %7, %9 : vector<112x8x256xf32>
    %11 = arith.mulf %10, %10 : vector<112x8x256xf32>
    %12 = vector.shape_cast %11 : vector<112x8x256xf32> to vector<896x256xf32>
    %13 = arith.truncf %12 : vector<896x256xf32> to vector<896x256xbf16>
    %c0_8 = arith.constant 0 : index
    %c0_9 = arith.constant 0 : index
    %14 = vector.load %arg5[%c0_8, %c0_9] : memref<256x256xbf16, #tpu.memory_space<vmem>>, vector<256x256xbf16>
    %cst_10 = arith.constant dense<0.000000e+00> : vector<896x256xf32>
    %15 = tpu.matmul %13, %14, %cst_10 {dimension_numbers = #tpu.dot_dimension_numbers<[1], [0], [0], [1], [0, 0, 1, 1], [], []>} : vector<896x256xbf16>, vector<256x256xbf16>, vector<896x256xf32> -> vector<896x256xf32>
    %16 = vector.shape_cast %15 : vector<896x256xf32> to vector<112x8x256xf32>
    %cst_11 = arith.constant dense<0xFF800000> : vector<112x256xf32>
    %17 = vector.multi_reduction <maximumf>, %16, %cst_11 [1] : vector<112x8x256xf32> to vector<112x256xf32>
    %18 = vector.shape_cast %17 : vector<112x256xf32> to vector<112x1x256xf32>
    %19 = vector.broadcast %18 : vector<112x1x256xf32> to vector<112x8x256xf32>
    %20 = arith.subf %16, %19 : vector<112x8x256xf32>
    %21 = math.exp %20 : vector<112x8x256xf32>
    %cst_12 = arith.constant dense<0.000000e+00> : vector<112x256xf32>
    %22 = vector.multi_reduction <add>, %21, %cst_12 [1] : vector<112x8x256xf32> to vector<112x256xf32>
    %23 = tpu.reciprocal %22 {approx = true} : vector<112x256xf32> -> vector<112x256xf32>
    %24 = arith.extf %1 : vector<896x256xbf16> to vector<896x256xf32>
    %25 = vector.shape_cast %24 : vector<896x256xf32> to vector<112x8x256xf32>
    %26 = arith.mulf %25, %21 : vector<112x8x256xf32>
    %cst_13 = arith.constant dense<0.000000e+00> : vector<112x256xf32>
    %27 = vector.multi_reduction <add>, %26, %cst_13 [1] : vector<112x8x256xf32> to vector<112x256xf32>
    %28 = arith.mulf %27, %23 : vector<112x256xf32>
    %29 = arith.addf %28, %0 : vector<112x256xf32>
    %cst_14 = arith.constant 5.000000e-01 : f32
    %30 = vector.broadcast %cst_14 : f32 to vector<112x256xf32>
    %31 = arith.mulf %29, %30 : vector<112x256xf32>
    %c0_15 = arith.constant 0 : index
    %c0_16 = arith.constant 0 : index
    %32 = vector.load %arg6[%c0_15, %c0_16] : memref<112x256xf32, #tpu.memory_space<vmem>>, vector<112x256xf32>
    tpu.vector_store %arg6[%c0_15, %c0_16], %31 {strides = array<i32>} : memref<112x256xf32, #tpu.memory_space<vmem>>, vector<112x256xf32>,
    return
  }
  func.func @transform_0(%arg0: i32) -> (i32, i32) {
    %c0_i32 = arith.constant 0 : i32
    %c0_i32_0 = arith.constant 0 : i32
    return %arg0, %c0_i32 : i32, i32
  }
  func.func @transform_1(%arg0: i32) -> (i32, i32) {
    %c0_i32 = arith.constant 0 : i32
    %c0_i32_0 = arith.constant 0 : i32
    return %arg0, %c0_i32 : i32, i32
  }
  func.func @transform_2(%arg0: i32) -> (i32, i32) {
    %c0_i32 = arith.constant 0 : i32
    %c0_i32_0 = arith.constant 0 : i32
    %c0_i32_1 = arith.constant 0 : i32
    return %c0_i32, %c0_i32_0 : i32, i32
  }
  func.func @transform_3(%arg0: i32) -> (i32, i32) {
    %c0_i32 = arith.constant 0 : i32
    %c0_i32_0 = arith.constant 0 : i32
    %c0_i32_1 = arith.constant 0 : i32
    return %c0_i32, %c0_i32_0 : i32, i32
  }
  func.func @transform_4(%arg0: i32) -> (i32, i32) {
    %c0_i32 = arith.constant 0 : i32
    %c0_i32_0 = arith.constant 0 : i32
    %c0_i32_1 = arith.constant 0 : i32
    return %c0_i32, %c0_i32_0 : i32, i32
  }
  func.func @transform_5(%arg0: i32) -> (i32, i32) {
    %c0_i32 = arith.constant 0 : i32
    %c0_i32_0 = arith.constant 0 : i32
    return %arg0, %c0_i32 : i32, i32
  }
}

</mosaic_0001>

<llo_original>
// kernel: filter_merger_forward.1
$region0: #{filter_merger_forward.1}
  #allocation0 [shape = 'u32[]', space=smem, size = 0x4, offset = 0x4, fixed_abs, tag = 'smem constant byte address 0x4 - core index']
  #allocation1 [shape = 'u32[144,128]{1,0:T(1,128)}', space=vmem, size = 0x12000, scoped, tag = 'internal scratch']
  %s0 = inlined_call_operand.vmem [shape: f32[112,256], index: 0, kind: input, shape index: {}]
  %s1 = inlined_call_operand.vmem [shape: bf16[896,256], index: 1, kind: input, shape index: {}]
  %s2 = inlined_call_operand.vmem [shape: bf16[256,256], index: 2, kind: input, shape index: {}]
  %s3 = inlined_call_operand.vmem [shape: bf16[256,256], index: 3, kind: input, shape index: {}]
  %s4 = inlined_call_operand.vmem [shape: bf16[256,256], index: 4, kind: input, shape index: {}]
  %s5 = inlined_call_operand.vmem [shape: f32[112,256], index: 5, kind: output, shape index: {}]
  %s6 = sld [smem:[#allocation0]]
  $region30: #{filter_merger_forward.1} parent=0
    _
  %s8 = ssub.s32 1, %s6
  %s9 = scalar_select 0, %s8, %s6
  // Predicated region
  $region2: #{filter_merger_forward.1} parent=0 // pred_check
    _
  $region3: #{filter_merger_forward.1} parent=0 // pred_check_branch
    %11 = sbr.rel (0) target = $region5
  $region4: #{filter_merger_forward.1} parent=0 // pred_region
    _
  $region5: #{filter_merger_forward.1} parent=0 // pred_fallthru
    _
  // Predicated region
  $region6: #{filter_merger_forward.1} parent=0 // pred_check
    _
  $region7: #{filter_merger_forward.1} parent=0 // pred_check_branch
    %13 = sbr.rel (0) target = $region9
  $region8: #{filter_merger_forward.1} parent=0 // pred_region
    _
  $region9: #{filter_merger_forward.1} parent=0 // pred_fallthru
    _
  // Predicated region
  $region10: #{filter_merger_forward.1} parent=0 // pred_check
    _
  $region11: #{filter_merger_forward.1} parent=0 // pred_check_branch
    %15 = sbr.rel (0) target = $region13
  $region12: #{filter_merger_forward.1} parent=0 // pred_region
    _
  $region13: #{filter_merger_forward.1} parent=0 // pred_fallthru
    _
  // Predicated region
  $region14: #{filter_merger_forward.1} parent=0 // pred_check
    _
  $region15: #{filter_merger_forward.1} parent=0 // pred_check_branch
    %17 = sbr.rel (0) target = $region17
  $region16: #{filter_merger_forward.1} parent=0 // pred_region
    _
  $region17: #{filter_merger_forward.1} parent=0 // pred_fallthru
    _
  // Predicated region
  $region18: #{filter_merger_forward.1} parent=0 // pred_check
    _
  $region19: #{filter_merger_forward.1} parent=0 // pred_check_branch
    %19 = sbr.rel (0) target = $region21
  $region20: #{filter_merger_forward.1} parent=0 // pred_region
    _
  $region21: #{filter_merger_forward.1} parent=0 // pred_fallthru
    _
  %v20 = vld [vmem:[%s0] sm:$0xff]
  %v21 = vld [vmem:[%s0 + $0x8] sm:$0xff]
  %v22 = vld [vmem:[%s0 + $0x10] sm:$0xff]
  %v23 = vld [vmem:[%s0 + $0x18] sm:$0xff]
  %v24 = vld [vmem:[%s0 + $0x20] sm:$0xff]
  %v25 = vld [vmem:[%s0 + $0x28] sm:$0xff]
  %v26 = vld [vmem:[%s0 + $0x30] sm:$0xff]
  %v27 = vld [vmem:[%s0 + $0x38] sm:$0xff]
  %v28 = vld [vmem:[%s0 + $0x40] sm:$0xff]
  %v29 = vld [vmem:[%s0 + $0x48] sm:$0xff]
  %v30 = vld [vmem:[%s0 + $0x50] sm:$0xff]
  %v31 = vld [vmem:[%s0 + $0x58] sm:$0xff]
  %v32 = vld [vmem:[%s0 + $0x60] sm:$0xff]
  %v33 = vld [vmem:[%s0 + $0x68] sm:$0xff]
  %v34 = vld [vmem:[%s0 + $0x70] sm:$0xff]
  %v35 = vld [vmem:[%s0 + $0x78] sm:$0xff]
  %v36 = vld [vmem:[%s0 + $0x80] sm:$0xff]
  %v37 = vld [vmem:[%s0 + $0x88] sm:$0xff]
  %v38 = vld [vmem:[%s0 + $0x90] sm:$0xff]
  %v39 = vld [vmem:[%s0 + $0x98] sm:$0xff]
  %v40 = vld [vmem:[%s0 + $0xa0] sm:$0xff]
  %v41 = vld [vmem:[%s0 + $0xa8] sm:$0xff]
  %v42 = vld [vmem:[%s0 + $0xb0] sm:$0xff]
  %v43 = vld [vmem:[%s0 + $0xb8] sm:$0xff]
  %v44 = vld [vmem:[%s0 + $0xc0] sm:$0xff]
  %v45 = vld [vmem:[%s0 + $0xc8] sm:$0xff]
  %v46 = vld [vmem:[%s0 + $0xd0] sm:$0xff]
  %v47 = vld [vmem:[%s0 + $0xd8] sm:$0xff]
  %v48 = vld [vmem:[%s1] sm:$0xff]
  %v49 = vld [vmem:[%s1 + $0x8] sm:$0xff]
  %v50 = vld [vmem:[%s1 + $0x10] sm:$0xff]
  %v51 = vld [vmem:[%s1 + $0x18] sm:$0xff]
  %v52 = vld [vmem:[%s1 + $0x20] sm:$0xff]
  %v53 = vld [vmem:[%s1 + $0x28] sm:$0xff]
  %v54 = vld [vmem:[%s1 + $0x30] sm:$0xff]
  %v55 = vld [vmem:[%s1 + $0x38] sm:$0xff]
  %v56 = vld [vmem:[%s1 + $0x40] sm:$0xff]
  %v57 = vld [vmem:[%s1 + $0x48] sm:$0xff]
  %v58 = vld [vmem:[%s1 + $0x50] sm:$0xff]
  %v59 = vld [vmem:[%s1 + $0x58] sm:$0xff]
  %v60 = vld [vmem:[%s1 + $0x60] sm:$0xff]
  %v61 = vld [vmem:[%s1 + $0x68] sm:$0xff]
  %v62 = vld [vmem:[%s1 + $0x70] sm:$0xff]
  %v63 = vld [vmem:[%s1 + $0x78] sm:$0xff]
  %v64 = vld [vmem:[%s1 + $0x80] sm:$0xff]
  %v65 = vld [vmem:[%s1 + $0x88] sm:$0xff]
  %v66 = vld [vmem:[%s1 + $0x90] sm:$0xff]
  %v67 = vld [vmem:[%s1 + $0x98] sm:$0xff]
  %v68 = vld [vmem:[%s1 + $0xa0] sm:$0xff]
  %v69 = vld [vmem:[%s1 + $0xa8] sm:$0xff]
  %v70 = vld [vmem:[%s1 + $0xb0] sm:$0xff]
  %v71 = vld [vmem:[%s1 + $0xb8] sm:$0xff]
  %v72 = vld [vmem:[%s1 + $0xc0] sm:$0xff]
  %v73 = vld [vmem:[%s1 + $0xc8] sm:$0xff]
  %v74 = vld [vmem:[%s1 + $0xd0] sm:$0xff]
  %v75 = vld [vmem:[%s1 + $0xd8] sm:$0xff]
  %v76 = vld [vmem:[%s1 + $0xe0] sm:$0xff]
  %v77 = vld [vmem:[%s1 + $0xe8] sm:$0xff]
  %v78 = vld [vmem:[%s1 + $0xf0] sm:$0xff]
  %v79 = vld [vmem:[%s1 + $0xf8] sm:$0xff]
  %v80 = vld [vmem:[%s1 + $0x100] sm:$0xff]
  %v81 = vld [vmem:[%s1 + $0x108] sm:$0xff]
  %v82 = vld [vmem:[%s1 + $0x110] sm:$0xff]
  %v83 = vld [vmem:[%s1 + $0x118] sm:$0xff]
  %v84 = vld [vmem:[%s1 + $0x120] sm:$0xff]
  %v85 = vld [vmem:[%s1 + $0x128] sm:$0xff]
  %v86 = vld [vmem:[%s1 + $0x130] sm:$0xff]
  %v87 = vld [vmem:[%s1 + $0x138] sm:$0xff]
  %v88 = vld [vmem:[%s1 + $0x140] sm:$0xff]
  %v89 = vld [vmem:[%s1 + $0x148] sm:$0xff]
  %v90 = vld [vmem:[%s1 + $0x150] sm:$0xff]
  %v91 = vld [vmem:[%s1 + $0x158] sm:$0xff]
  %v92 = vld [vmem:[%s1 + $0x160] sm:$0xff]
  %v93 = vld [vmem:[%s1 + $0x168] sm:$0xff]
  %v94 = vld [vmem:[%s1 + $0x170] sm:$0xff]
  %v95 = vld [vmem:[%s1 + $0x178] sm:$0xff]
  %v96 = vld [vmem:[%s1 + $0x180] sm:$0xff]
  %v97 = vld [vmem:[%s1 + $0x188] sm:$0xff]
  %v98 = vld [vmem:[%s1 + $0x190] sm:$0xff]
  %v99 = vld [vmem:[%s1 + $0x198] sm:$0xff]
  %v100 = vld [vmem:[%s1 + $0x1a0] sm:$0xff]
  %v101 = vld [vmem:[%s1 + $0x1a8] sm:$0xff]
  %v102 = vld [vmem:[%s1 + $0x1b0] sm:$0xff]
  %v103 = vld [vmem:[%s1 + $0x1b8] sm:$0xff]
  %v104 = vld [vmem:[%s1 + $0x1c0] sm:$0xff]
  %v105 = vld [vmem:[%s1 + $0x1c8] sm:$0xff]
  %v106 = vld [vmem:[%s1 + $0x1d0] sm:$0xff]
  %v107 = vld [vmem:[%s1 + $0x1d8] sm:$0xff]
  %v108 = vld [vmem:[%s1 + $0x1e0] sm:$0xff]
  %v109 = vld [vmem:[%s1 + $0x1e8] sm:$0xff]
  %v110 = vld [vmem:[%s1 + $0x1f0] sm:$0xff]
  %v111 = vld [vmem:[%s1 + $0x1f8] sm:$0xff]
  %v112 = vld [vmem:[%s1 + $0x200] sm:$0xff]
  %v113 = vld [vmem:[%s1 + $0x208] sm:$0xff]
  %v114 = vld [vmem:[%s1 + $0x210] sm:$0xff]
  %v115 = vld [vmem:[%s1 + $0x218] sm:$0xff]
  %v116 = vld [vmem:[%s1 + $0x220] sm:$0xff]
  %v117 = vld [vmem:[%s1 + $0x228] sm:$0xff]
  %v118 = vld [vmem:[%s1 + $0x230] sm:$0xff]
  %v119 = vld [vmem:[%s1 + $0x238] sm:$0xff]
  %v120 = vld [vmem:[%s1 + $0x240] sm:$0xff]
  %v121 = vld [vmem:[%s1 + $0x248] sm:$0xff]
  %v122 = vld [vmem:[%s1 + $0x250] sm:$0xff]
  %v123 = vld [vmem:[%s1 + $0x258] sm:$0xff]
  %v124 = vld [vmem:[%s1 + $0x260] sm:$0xff]
  %v125 = vld [vmem:[%s1 + $0x268] sm:$0xff]
  %v126 = vld [vmem:[%s1 + $0x270] sm:$0xff]
  %v127 = vld [vmem:[%s1 + $0x278] sm:$0xff]
  %v128 = vld [vmem:[%s1 + $0x280] sm:$0xff]
  %v129 = vld [vmem:[%s1 + $0x288] sm:$0xff]
  %v130 = vld [vmem:[%s1 + $0x290] sm:$0xff]
  %v131 = vld [vmem:[%s1 + $0x298] sm:$0xff]
  %v132 = vld [vmem:[%s1 + $0x2a0] sm:$0xff]
  %v133 = vld [vmem:[%s1 + $0x2a8] sm:$0xff]
  %v134 = vld [vmem:[%s1 + $0x2b0] sm:$0xff]
  %v135 = vld [vmem:[%s1 + $0x2b8] sm:$0xff]
  %v136 = vld [vmem:[%s1 + $0x2c0] sm:$0xff]
  %v137 = vld [vmem:[%s1 + $0x2c8] sm:$0xff]
  %v138 = vld [vmem:[%s1 + $0x2d0] sm:$0xff]
  %v139 = vld [vmem:[%s1 + $0x2d8] sm:$0xff]
  %v140 = vld [vmem:[%s1 + $0x2e0] sm:$0xff]
  %v141 = vld [vmem:[%s1 + $0x2e8] sm:$0xff]
  %v142 = vld [vmem:[%s1 + $0x2f0] sm:$0xff]
  %v143 = vld [vmem:[%s1 + $0x2f8] sm:$0xff]
  %v144 = vld [vmem:[%s1 + $0x300] sm:$0xff]
  %v145 = vld [vmem:[%s1 + $0x308] sm:$0xff]
  %v146 = vld [vmem:[%s1 + $0x310] sm:$0xff]
  %v147 = vld [vmem:[%s1 + $0x318] sm:$0xff]
  %v148 = vld [vmem:[%s1 + $0x320] sm:$0xff]
  %v149 = vld [vmem:[%s1 + $0x328] sm:$0xff]
  %v150 = vld [vmem:[%s1 + $0x330] sm:$0xff]
  %v151 = vld [vmem:[%s1 + $0x338] sm:$0xff]
  %v152 = vld [vmem:[%s1 + $0x340] sm:$0xff]
  %v153 = vld [vmem:[%s1 + $0x348] sm:$0xff]
  %v154 = vld [vmem:[%s1 + $0x350] sm:$0xff]
  %v155 = vld [vmem:[%s1 + $0x358] sm:$0xff]
  %v156 = vld [vmem:[%s1 + $0x360] sm:$0xff]
  %v157 = vld [vmem:[%s1 + $0x368] sm:$0xff]
  %v158 = vld [vmem:[%s1 + $0x370] sm:$0xff]
  %v159 = vld [vmem:[%s1 + $0x378] sm:$0xff]
  %v160 = vpack.c.bf16 %v22, %v20
  %v161 = vpack.c.bf16 %v23, %v21
  %v162 = vpack.c.bf16 %v26, %v24
  %v163 = vpack.c.bf16 %v27, %v25
  %v164 = vpack.c.bf16 %v30, %v28
  %v165 = vpack.c.bf16 %v31, %v29
  %v166 = vpack.c.bf16 %v34, %v32
  %v167 = vpack.c.bf16 %v35, %v33
  %v168 = vpack.c.bf16 %v38, %v36
  %v169 = vpack.c.bf16 %v39, %v37
  %v170 = vpack.c.bf16 %v42, %v40
  %v171 = vpack.c.bf16 %v43, %v41
  %v172 = vpack.c.bf16 %v46, %v44
  %v173 = vpack.c.bf16 %v47, %v45
  %v174 = vld [vmem:[%s2] sm:$0xff]
  %v175 = vld [vmem:[%s2 + $0x8] sm:$0xff]
  %v176 = vld [vmem:[%s2 + $0x10] sm:$0xff]
  %v177 = vld [vmem:[%s2 + $0x18] sm:$0xff]
  %v178 = vld [vmem:[%s2 + $0x20] sm:$0xff]
  %v179 = vld [vmem:[%s2 + $0x28] sm:$0xff]
  %v180 = vld [vmem:[%s2 + $0x30] sm:$0xff]
  %v181 = vld [vmem:[%s2 + $0x38] sm:$0xff]
  %v182 = vld [vmem:[%s2 + $0x40] sm:$0xff]
  %v183 = vld [vmem:[%s2 + $0x48] sm:$0xff]
  %v184 = vld [vmem:[%s2 + $0x50] sm:$0xff]
  %v185 = vld [vmem:[%s2 + $0x58] sm:$0xff]
  %v186 = vld [vmem:[%s2 + $0x60] sm:$0xff]
  %v187 = vld [vmem:[%s2 + $0x68] sm:$0xff]
  %v188 = vld [vmem:[%s2 + $0x70] sm:$0xff]
  %v189 = vld [vmem:[%s2 + $0x78] sm:$0xff]
  %v190 = vld [vmem:[%s2 + $0x80] sm:$0xff]
  %v191 = vld [vmem:[%s2 + $0x88] sm:$0xff]
  %v192 = vld [vmem:[%s2 + $0x90] sm:$0xff]
  %v193 = vld [vmem:[%s2 + $0x98] sm:$0xff]
  %v194 = vld [vmem:[%s2 + $0xa0] sm:$0xff]
  %v195 = vld [vmem:[%s2 + $0xa8] sm:$0xff]
  %v196 = vld [vmem:[%s2 + $0xb0] sm:$0xff]
  %v197 = vld [vmem:[%s2 + $0xb8] sm:$0xff]
  %v198 = vld [vmem:[%s2 + $0xc0] sm:$0xff]
  %v199 = vld [vmem:[%s2 + $0xc8] sm:$0xff]
  %v200 = vld [vmem:[%s2 + $0xd0] sm:$0xff]
  %v201 = vld [vmem:[%s2 + $0xd8] sm:$0xff]
  %v202 = vld [vmem:[%s2 + $0xe0] sm:$0xff]
  %v203 = vld [vmem:[%s2 + $0xe8] sm:$0xff]
  %v204 = vld [vmem:[%s2 + $0xf0] sm:$0xff]
  %v205 = vld [vmem:[%s2 + $0xf8] sm:$0xff]
  %v238 = vunpack.c.l.b16 %v174
  %v239 = vunpack.c.h.b16 %v174
  %v240 = vunpack.c.l.b16 %v175
  %v241 = vunpack.c.h.b16 %v175
  %v242 = vunpack.c.l.b16 %v176
  %v243 = vunpack.c.h.b16 %v176
  %v244 = vunpack.c.l.b16 %v177
  %v245 = vunpack.c.h.b16 %v177
  %v246 = vunpack.c.l.b16 %v178
  %v247 = vunpack.c.h.b16 %v178
  %v248 = vunpack.c.l.b16 %v179
  %v249 = vunpack.c.h.b16 %v179
  %v250 = vunpack.c.l.b16 %v180
  %v251 = vunpack.c.h.b16 %v180
  %v252 = vunpack.c.l.b16 %v181
  %v253 = vunpack.c.h.b16 %v181
  %v254 = vunpack.c.l.b16 %v182
  %v255 = vunpack.c.h.b16 %v182
  %v256 = vunpack.c.l.b16 %v183
  %v257 = vunpack.c.h.b16 %v183
  %v258 = vunpack.c.l.b16 %v184
  %v259 = vunpack.c.h.b16 %v184
  %v260 = vunpack.c.l.b16 %v185
  %v261 = vunpack.c.h.b16 %v185
  %v262 = vunpack.c.l.b16 %v186
  %v263 = vunpack.c.h.b16 %v186
  %v264 = vunpack.c.l.b16 %v187
  %v265 = vunpack.c.h.b16 %v187
  %v266 = vunpack.c.l.b16 %v188
  %v267 = vunpack.c.h.b16 %v188
  %v268 = vunpack.c.l.b16 %v189
  %v269 = vunpack.c.h.b16 %v189
  %v270 = vunpack.c.l.b16 %v190
  %v271 = vunpack.c.h.b16 %v190
  %v272 = vunpack.c.l.b16 %v191
  %v273 = vunpack.c.h.b16 %v191
  %v274 = vunpack.c.l.b16 %v192
  %v275 = vunpack.c.h.b16 %v192
  %v276 = vunpack.c.l.b16 %v193
  %v277 = vunpack.c.h.b16 %v193
  %v278 = vunpack.c.l.b16 %v194
  %v279 = vunpack.c.h.b16 %v194
  %v280 = vunpack.c.l.b16 %v195
  %v281 = vunpack.c.h.b16 %v195
  %v282 = vunpack.c.l.b16 %v196
  %v283 = vunpack.c.h.b16 %v196
  %v284 = vunpack.c.l.b16 %v197
  %v285 = vunpack.c.h.b16 %v197
  %v286 = vunpack.c.l.b16 %v198
  %v287 = vunpack.c.h.b16 %v198
  %v288 = vunpack.c.l.b16 %v199
  %v289 = vunpack.c.h.b16 %v199
  %v290 = vunpack.c.l.b16 %v200
  %v291 = vunpack.c.h.b16 %v200
  %v292 = vunpack.c.l.b16 %v201
  %v293 = vunpack.c.h.b16 %v201
  %v294 = vunpack.c.l.b16 %v202
  %v295 = vunpack.c.h.b16 %v202
  %v296 = vunpack.c.l.b16 %v203
  %v297 = vunpack.c.h.b16 %v203
  %v298 = vunpack.c.l.b16 %v204
  %v299 = vunpack.c.h.b16 %v204
  %v300 = vunpack.c.l.b16 %v205
  %v301 = vunpack.c.h.b16 %v205
  %v302 = vpack.c.b16 %v240, %v238
  %v303 = vpack.c.b16 %v241, %v239
  %v304 = vpack.c.b16 %v244, %v242
  %v305 = vpack.c.b16 %v245, %v243
  %v306 = vpack.c.b16 %v248, %v246
  %v307 = vpack.c.b16 %v249, %v247
  %v308 = vpack.c.b16 %v252, %v250
  %v309 = vpack.c.b16 %v253, %v251
  %v310 = vpack.c.b16 %v256, %v254
  %v311 = vpack.c.b16 %v257, %v255
  %v312 = vpack.c.b16 %v260, %v258
  %v313 = vpack.c.b16 %v261, %v259
  %v314 = vpack.c.b16 %v264, %v262
  %v315 = vpack.c.b16 %v265, %v263
  %v316 = vpack.c.b16 %v268, %v266
  %v317 = vpack.c.b16 %v269, %v267
  %v318 = vpack.c.b16 %v272, %v270
  %v319 = vpack.c.b16 %v273, %v271
  %v320 = vpack.c.b16 %v276, %v274
  %v321 = vpack.c.b16 %v277, %v275
  %v322 = vpack.c.b16 %v280, %v278
  %v323 = vpack.c.b16 %v281, %v279
  %v324 = vpack.c.b16 %v284, %v282
  %v325 = vpack.c.b16 %v285, %v283
  %v326 = vpack.c.b16 %v288, %v286
  %v327 = vpack.c.b16 %v289, %v287
  %v328 = vpack.c.b16 %v292, %v290
  %v329 = vpack.c.b16 %v293, %v291
  %v330 = vpack.c.b16 %v296, %v294
  %v331 = vpack.c.b16 %v297, %v295
  %v332 = vpack.c.b16 %v300, %v298
  %v333 = vpack.c.b16 %v301, %v299
  %366 = vmatprep.subr.bf16.mxu0 %v303
  %367 = vmatpush1.bf16.msra.mxu0 %v302
  %368 = vmatprep.subr.bf16.mxu0 %v305
  %369 = vmatpush1.bf16.msra.mxu0 %v304
  %370 = vmatprep.subr.bf16.mxu0 %v307
  %371 = vmatpush1.bf16.msra.mxu0 %v306
  %372 = vmatprep.subr.bf16.mxu0 %v309
  %373 = vmatpush1.bf16.msra.mxu0 %v308
  %374 = vmatprep.subr.bf16.mxu0 %v311
  %375 = vmatpush1.bf16.msra.mxu0 %v310
  %376 = vmatprep.subr.bf16.mxu0 %v313
  %377 = vmatpush1.bf16.msra.mxu0 %v312
  %378 = vmatprep.subr.bf16.mxu0 %v315
  %379 = vmatpush1.bf16.msra.mxu0 %v314
  %380 = vmatprep.subr.bf16.mxu0 %v317
  %381 = vmatpush1.bf16.msra.mxu0 %v316
  %382 = vmatprep.subr.bf16.mxu0 %v319
  %383 = vmatpush1.bf16.msra.mxu0 %v318
  %384 = vmatprep.subr.bf16.mxu0 %v321
  %385 = vmatpush1.bf16.msra.mxu0 %v320
  %386 = vmatprep.subr.bf16.mxu0 %v323
  %387 = vmatpush1.bf16.msra.mxu0 %v322
  %388 = vmatprep.subr.bf16.mxu0 %v325
  %389 = vmatpush1.bf16.msra.mxu0 %v324
  %390 = vmatprep.subr.bf16.mxu0 %v327
  %391 = vmatpush1.bf16.msra.mxu0 %v326
  %392 = vmatprep.subr.bf16.mxu0 %v329
  %393 = vmatpush1.bf16.msra.mxu0 %v328
  %394 = vmatprep.subr.bf16.mxu0 %v331
  %395 = vmatpush1.bf16.msra.mxu0 %v330
  %396 = vmatprep.subr.bf16.mxu0 %v333
  %397 = vmatpush1.bf16.msra.mxu0 %v332
  %398 = vmatprep.mubr.bf16.mxu0 %v161
  %399 = vmatmul.mubr.bf16.gmra.mrb[0].mxu0 %v160
  %v400 = vpop.f32.mrb[0].mxu0
  %v401 = vadd.f32 0.0, %v400
  %v402 = vpop.f32.mrb[0].mxu0
  %v403 = vadd.f32 0.0, %v402
  %v404 = vpop.f32.mrb[0].mxu0
  %v405 = vadd.f32 0.0, %v404
  %v406 = vpop.f32.mrb[0].mxu0
  %v407 = vadd.f32 0.0, %v406
  %408 = vmatprep.mubr.bf16.mxu0 %v163
  %409 = vmatmul.mubr.bf16.gmra.mrb[0].mxu0 %v162
  %v410 = vpop.f32.mrb[0].mxu0
  %v411 = vadd.f32 0.0, %v410
  %v412 = vpop.f32.mrb[0].mxu0
  %v413 = vadd.f32 0.0, %v412
  %v414 = vpop.f32.mrb[0].mxu0
  %v415 = vadd.f32 0.0, %v414
  %v416 = vpop.f32.mrb[0].mxu0
  %v417 = vadd.f32 0.0, %v416
  %418 = vmatprep.mubr.bf16.mxu0 %v165
  %419 = vmatmul.mubr.bf16.gmra.mrb[0].mxu0 %v164
  %v420 = vpop.f32.mrb[0].mxu0
  %v421 = vadd.f32 0.0, %v420
  %v422 = vpop.f32.mrb[0].mxu0
  %v423 = vadd.f32 0.0, %v422
  %v424 = vpop.f32.mrb[0].mxu0
  %v425 = vadd.f32 0.0, %v424
  %v426 = vpop.f32.mrb[0].mxu0
  %v427 = vadd.f32 0.0, %v426
  %428 = vmatprep.mubr.bf16.mxu0 %v167
  %429 = vmatmul.mubr.bf16.gmra.mrb[0].mxu0 %v166
  %v430 = vpop.f32.mrb[0].mxu0
  %v431 = vadd.f32 0.0, %v430
  %v432 = vpop.f32.mrb[0].mxu0
  %v433 = vadd.f32 0.0, %v432
  %v434 = vpop.f32.mrb[0].mxu0
  %v435 = vadd.f32 0.0, %v434
  %v436 = vpop.f32.mrb[0].mxu0
  %v437 = vadd.f32 0.0, %v436
  %438 = vmatprep.mubr.bf16.mxu0 %v169
  %439 = vmatmul.mubr.bf16.gmra.mrb[0].mxu0 %v168
  %v440 = vpop.f32.mrb[0].mxu0
  %v441 = vadd.f32 0.0, %v440
  %v442 = vpop.f32.mrb[0].mxu0
  %v443 = vadd.f32 0.0, %v442
  %v444 = vpop.f32.mrb[0].mxu0
  %v445 = vadd.f32 0.0, %v444
  %v446 = vpop.f32.mrb[0].mxu0
  %v447 = vadd.f32 0.0, %v446
  %448 = vmatprep.mubr.bf16.mxu0 %v171
  %449 = vmatmul.mubr.bf16.gmra.mrb[0].mxu0 %v170
  %v450 = vpop.f32.mrb[0].mxu0
  %v451 = vadd.f32 0.0, %v450
  %v452 = vpop.f32.mrb[0].mxu0
  %v453 = vadd.f32 0.0, %v452
  %v454 = vpop.f32.mrb[0].mxu0
  %v455 = vadd.f32 0.0, %v454
  %v456 = vpop.f32.mrb[0].mxu0
  %v457 = vadd.f32 0.0, %v456
  %458 = vmatprep.mubr.bf16.mxu0 %v173
  %459 = vmatmul.mubr.bf16.gmra.mrb[0].mxu0 %v172
  %v460 = vpop.f32.mrb[0].mxu0
  %v461 = vadd.f32 0.0, %v460
  %v462 = vpop.f32.mrb[0].mxu0
  %v463 = vadd.f32 0.0, %v462
  %v464 = vpop.f32.mrb[0].mxu0
  %v465 = vadd.f32 0.0, %v464
  %v466 = vpop.f32.mrb[0].mxu0
  %v467 = vadd.f32 0.0, %v466
  %468 = vdwg.mxu0
  %v469 = vld [vmem:[%s3] sm:$0xff]
  %v470 = vld [vmem:[%s3 + $0x8] sm:$0xff]
  %v471 = vld [vmem:[%s3 + $0x10] sm:$0xff]
  %v472 = vld [vmem:[%s3 + $0x18] sm:$0xff]
  %v473 = vld [vmem:[%s3 + $0x20] sm:$0xff]
  %v474 = vld [vmem:[%s3 + $0x28] sm:$0xff]
  %v475 = vld [vmem:[%s3 + $0x30] sm:$0xff]
  %v476 = vld [vmem:[%s3 + $0x38] sm:$0xff]
  %v477 = vld [vmem:[%s3 + $0x40] sm:$0xff]
  %v478 = vld [vmem:[%s3 + $0x48] sm:$0xff]
  %v479 = vld [vmem:[%s3 + $0x50] sm:$0xff]
  %v480 = vld [vmem:[%s3 + $0x58] sm:$0xff]
  %v481 = vld [vmem:[%s3 + $0x60] sm:$0xff]
  %v482 = vld [vmem:[%s3 + $0x68] sm:$0xff]
  %v483 = vld [vmem:[%s3 + $0x70] sm:$0xff]
  %v484 = vld [vmem:[%s3 + $0x78] sm:$0xff]
  %v485 = vld [vmem:[%s3 + $0x80] sm:$0xff]
  %v486 = vld [vmem:[%s3 + $0x88] sm:$0xff]
  %v487 = vld [vmem:[%s3 + $0x90] sm:$0xff]
  %v488 = vld [vmem:[%s3 + $0x98] sm:$0xff]
  %v489 = vld [vmem:[%s3 + $0xa0] sm:$0xff]
  %v490 = vld [vmem:[%s3 + $0xa8] sm:$0xff]
  %v491 = vld [vmem:[%s3 + $0xb0] sm:$0xff]
  %v492 = vld [vmem:[%s3 + $0xb8] sm:$0xff]
  %v493 = vld [vmem:[%s3 + $0xc0] sm:$0xff]
  %v494 = vld [vmem:[%s3 + $0xc8] sm:$0xff]
  %v495 = vld [vmem:[%s3 + $0xd0] sm:$0xff]
  %v496 = vld [vmem:[%s3 + $0xd8] sm:$0xff]
  %v497 = vld [vmem:[%s3 + $0xe0] sm:$0xff]
  %v498 = vld [vmem:[%s3 + $0xe8] sm:$0xff]
  %v499 = vld [vmem:[%s3 + $0xf0] sm:$0xff]
  %v500 = vld [vmem:[%s3 + $0xf8] sm:$0xff]
  %v613 = vunpack.c.l.b16 %v48
  %v614 = vunpack.c.h.b16 %v48
  %v615 = vunpack.c.l.b16 %v49
  %v616 = vunpack.c.h.b16 %v49
  %v617 = vunpack.c.l.b16 %v50
  %v618 = vunpack.c.h.b16 %v50
  %v619 = vunpack.c.l.b16 %v51
  %v620 = vunpack.c.h.b16 %v51
  %v621 = vunpack.c.l.b16 %v52
  %v622 = vunpack.c.h.b16 %v52
  %v623 = vunpack.c.l.b16 %v53
  %v624 = vunpack.c.h.b16 %v53
  %v625 = vunpack.c.l.b16 %v54
  %v626 = vunpack.c.h.b16 %v54
  %v627 = vunpack.c.l.b16 %v55
  %v628 = vunpack.c.h.b16 %v55
  %v629 = vunpack.c.l.b16 %v56
  %v630 = vunpack.c.h.b16 %v56
  %v631 = vunpack.c.l.b16 %v57
  %v632 = vunpack.c.h.b16 %v57
  %v633 = vunpack.c.l.b16 %v58
  %v634 = vunpack.c.h.b16 %v58
  %v635 = vunpack.c.l.b16 %v59
  %v636 = vunpack.c.h.b16 %v59
  %v637 = vunpack.c.l.b16 %v60
  %v638 = vunpack.c.h.b16 %v60
  %v639 = vunpack.c.l.b16 %v61
  %v640 = vunpack.c.h.b16 %v61
  %v641 = vunpack.c.l.b16 %v62
  %v642 = vunpack.c.h.b16 %v62
  %v643 = vunpack.c.l.b16 %v63
  %v644 = vunpack.c.h.b16 %v63
  %v645 = vunpack.c.l.b16 %v64
  %v646 = vunpack.c.h.b16 %v64
  %v647 = vunpack.c.l.b16 %v65
  %v648 = vunpack.c.h.b16 %v65
  %v649 = vunpack.c.l.b16 %v66
  %v650 = vunpack.c.h.b16 %v66
  %v651 = vunpack.c.l.b16 %v67
  %v652 = vunpack.c.h.b16 %v67
  %v653 = vunpack.c.l.b16 %v68
  %v654 = vunpack.c.h.b16 %v68
  %v655 = vunpack.c.l.b16 %v69
  %v656 = vunpack.c.h.b16 %v69
  %v657 = vunpack.c.l.b16 %v70
  %v658 = vunpack.c.h.b16 %v70
  %v659 = vunpack.c.l.b16 %v71
  %v660 = vunpack.c.h.b16 %v71
  %v661 = vunpack.c.l.b16 %v72
  %v662 = vunpack.c.h.b16 %v72
  %v663 = vunpack.c.l.b16 %v73
  %v664 = vunpack.c.h.b16 %v73
  %v665 = vunpack.c.l.b16 %v74
  %v666 = vunpack.c.h.b16 %v74
  %v667 = vunpack.c.l.b16 %v75
  %v668 = vunpack.c.h.b16 %v75
  %v669 = vunpack.c.l.b16 %v76
  %v670 = vunpack.c.h.b16 %v76
  %v671 = vunpack.c.l.b16 %v77
  %v672 = vunpack.c.h.b16 %v77
  %v673 = vunpack.c.l.b16 %v78
  %v674 = vunpack.c.h.b16 %v78
  %v675 = vunpack.c.l.b16 %v79
  %v676 = vunpack.c.h.b16 %v79
  %v677 = vunpack.c.l.b16 %v80
  %v678 = vunpack.c.h.b16 %v80
  %v679 = vunpack.c.l.b16 %v81
  %v680 = vunpack.c.h.b16 %v81
  %v681 = vunpack.c.l.b16 %v82
  %v682 = vunpack.c.h.b16 %v82
  %v683 = vunpack.c.l.b16 %v83
  %v684 = vunpack.c.h.b16 %v83
  %v685 = vunpack.c.l.b16 %v84
  %v686 = vunpack.c.h.b16 %v84
  %v687 = vunpack.c.l.b16 %v85
  %v688 = vunpack.c.h.b16 %v85
  %v689 = vunpack.c.l.b16 %v86
  %v690 = vunpack.c.h.b16 %v86
  %v691 = vunpack.c.l.b16 %v87
  %v692 = vunpack.c.h.b16 %v87
  %v693 = vunpack.c.l.b16 %v88
  %v694 = vunpack.c.h.b16 %v88
  %v695 = vunpack.c.l.b16 %v89
  %v696 = vunpack.c.h.b16 %v89
  %v697 = vunpack.c.l.b16 %v90
  %v698 = vunpack.c.h.b16 %v90
  %v699 = vunpack.c.l.b16 %v91
  %v700 = vunpack.c.h.b16 %v91
  %v701 = vunpack.c.l.b16 %v92
  %v702 = vunpack.c.h.b16 %v92
  %v703 = vunpack.c.l.b16 %v93
  %v704 = vunpack.c.h.b16 %v93
  %v705 = vunpack.c.l.b16 %v94
  %v706 = vunpack.c.h.b16 %v94
  %v707 = vunpack.c.l.b16 %v95
  %v708 = vunpack.c.h.b16 %v95
  %v709 = vunpack.c.l.b16 %v96
  %v710 = vunpack.c.h.b16 %v96
  %v711 = vunpack.c.l.b16 %v97
  %v712 = vunpack.c.h.b16 %v97
  %v713 = vunpack.c.l.b16 %v98
  %v714 = vunpack.c.h.b16 %v98
  %v715 = vunpack.c.l.b16 %v99
  %v716 = vunpack.c.h.b16 %v99
  %v717 = vunpack.c.l.b16 %v100
  %v718 = vunpack.c.h.b16 %v100
  %v719 = vunpack.c.l.b16 %v101
  %v720 = vunpack.c.h.b16 %v101
  %v721 = vunpack.c.l.b16 %v102
  %v722 = vunpack.c.h.b16 %v102
  %v723 = vunpack.c.l.b16 %v103
  %v724 = vunpack.c.h.b16 %v103
  %v725 = vunpack.c.l.b16 %v104
  %v726 = vunpack.c.h.b16 %v104
  %v727 = vunpack.c.l.b16 %v105
  %v728 = vunpack.c.h.b16 %v105
  %v729 = vunpack.c.l.b16 %v106
  %v730 = vunpack.c.h.b16 %v106
  %v731 = vunpack.c.l.b16 %v107
  %v732 = vunpack.c.h.b16 %v107
  %v733 = vunpack.c.l.b16 %v108
  %v734 = vunpack.c.h.b16 %v108
  %v735 = vunpack.c.l.b16 %v109
  %v736 = vunpack.c.h.b16 %v109
  %v737 = vunpack.c.l.b16 %v110
  %v738 = vunpack.c.h.b16 %v110
  %v739 = vunpack.c.l.b16 %v111
  %v740 = vunpack.c.h.b16 %v111
  %v741 = vunpack.c.l.b16 %v112
  %v742 = vunpack.c.h.b16 %v112
  %v743 = vunpack.c.l.b16 %v113
  %v744 = vunpack.c.h.b16 %v113
  %v745 = vunpack.c.l.b16 %v114
  %v746 = vunpack.c.h.b16 %v114
  %v747 = vunpack.c.l.b16 %v115
  %v748 = vunpack.c.h.b16 %v115
  %v749 = vunpack.c.l.b16 %v116
  %v750 = vunpack.c.h.b16 %v116
  %v751 = vunpack.c.l.b16 %v117
  %v752 = vunpack.c.h.b16 %v117
  %v753 = vunpack.c.l.b16 %v118
  %v754 = vunpack.c.h.b16 %v118
  %v755 = vunpack.c.l.b16 %v119
  %v756 = vunpack.c.h.b16 %v119
  %v757 = vunpack.c.l.b16 %v120
  %v758 = vunpack.c.h.b16 %v120
  %v759 = vunpack.c.l.b16 %v121
  %v760 = vunpack.c.h.b16 %v121
  %v761 = vunpack.c.l.b16 %v122
  %v762 = vunpack.c.h.b16 %v122
  %v763 = vunpack.c.l.b16 %v123
  %v764 = vunpack.c.h.b16 %v123
  %v765 = vunpack.c.l.b16 %v124
  %v766 = vunpack.c.h.b16 %v124
  %v767 = vunpack.c.l.b16 %v125
  %v768 = vunpack.c.h.b16 %v125
  %v769 = vunpack.c.l.b16 %v126
  %v770 = vunpack.c.h.b16 %v126
  %v771 = vunpack.c.l.b16 %v127
  %v772 = vunpack.c.h.b16 %v127
  %v773 = vunpack.c.l.b16 %v128
  %v774 = vunpack.c.h.b16 %v128
  %v775 = vunpack.c.l.b16 %v129
  %v776 = vunpack.c.h.b16 %v129
  %v777 = vunpack.c.l.b16 %v130
  %v778 = vunpack.c.h.b16 %v130
  %v779 = vunpack.c.l.b16 %v131
  %v780 = vunpack.c.h.b16 %v131
  %v781 = vunpack.c.l.b16 %v132
  %v782 = vunpack.c.h.b16 %v132
  %v783 = vunpack.c.l.b16 %v133
  %v784 = vunpack.c.h.b16 %v133
  %v785 = vunpack.c.l.b16 %v134
  %v786 = vunpack.c.h.b16 %v134
  %v787 = vunpack.c.l.b16 %v135
  %v788 = vunpack.c.h.b16 %v135
  %v789 = vunpack.c.l.b16 %v136
  %v790 = vunpack.c.h.b16 %v136
  %v791 = vunpack.c.l.b16 %v137
  %v792 = vunpack.c.h.b16 %v137
  %v793 = vunpack.c.l.b16 %v138
  %v794 = vunpack.c.h.b16 %v138
  %v795 = vunpack.c.l.b16 %v139
  %v796 = vunpack.c.h.b16 %v139
  %v797 = vunpack.c.l.b16 %v140
  %v798 = vunpack.c.h.b16 %v140
  %v799 = vunpack.c.l.b16 %v141
  %v800 = vunpack.c.h.b16 %v141
  %v801 = vunpack.c.l.b16 %v142
  %v802 = vunpack.c.h.b16 %v142
  %v803 = vunpack.c.l.b16 %v143
  %v804 = vunpack.c.h.b16 %v143
  %v805 = vunpack.c.l.b16 %v144
  %v806 = vunpack.c.h.b16 %v144
  %v807 = vunpack.c.l.b16 %v145
  %v808 = vunpack.c.h.b16 %v145
  %v809 = vunpack.c.l.b16 %v146
  %v810 = vunpack.c.h.b16 %v146
  %v811 = vunpack.c.l.b16 %v147
  %v812 = vunpack.c.h.b16 %v147
  %v813 = vunpack.c.l.b16 %v148
  %v814 = vunpack.c.h.b16 %v148
  %v815 = vunpack.c.l.b16 %v149
  %v816 = vunpack.c.h.b16 %v149
  %v817 = vunpack.c.l.b16 %v150
  %v818 = vunpack.c.h.b16 %v150
  %v819 = vunpack.c.l.b16 %v151
  %v820 = vunpack.c.h.b16 %v151
  %v821 = vunpack.c.l.b16 %v152
  %v822 = vunpack.c.h.b16 %v152
  %v823 = vunpack.c.l.b16 %v153
  %v824 = vunpack.c.h.b16 %v153
  %v825 = vunpack.c.l.b16 %v154
  %v826 = vunpack.c.h.b16 %v154
  %v827 = vunpack.c.l.b16 %v155
  %v828 = vunpack.c.h.b16 %v155
  %v829 = vunpack.c.l.b16 %v156
  %v830 = vunpack.c.h.b16 %v156
  %v831 = vunpack.c.l.b16 %v157
  %v832 = vunpack.c.h.b16 %v157
  %v833 = vunpack.c.l.b16 %v158
  %v834 = vunpack.c.h.b16 %v158
  %v835 = vunpack.c.l.b16 %v159
  %v836 = vunpack.c.h.b16 %v159
  %v837 = vpack.c.b16 %v615, %v613
  %v838 = vpack.c.b16 %v616, %v614
  %v839 = vpack.c.b16 %v619, %v617
  %v840 = vpack.c.b16 %v620, %v618
  %v841 = vpack.c.b16 %v623, %v621
  %v842 = vpack.c.b16 %v624, %v622
  %v843 = vpack.c.b16 %v627, %v625
  %v844 = vpack.c.b16 %v628, %v626
  %v845 = vpack.c.b16 %v631, %v629
  %v846 = vpack.c.b16 %v632, %v630
  %v847 = vpack.c.b16 %v635, %v633
  %v848 = vpack.c.b16 %v636, %v634
  %v849 = vpack.c.b16 %v639, %v637
  %v850 = vpack.c.b16 %v640, %v638
  %v851 = vpack.c.b16 %v643, %v641
  %v852 = vpack.c.b16 %v644, %v642
  %v853 = vpack.c.b16 %v647, %v645
  %v854 = vpack.c.b16 %v648, %v646
  %v855 = vpack.c.b16 %v651, %v649
  %v856 = vpack.c.b16 %v652, %v650
  %v857 = vpack.c.b16 %v655, %v653
  %v858 = vpack.c.b16 %v656, %v654
  %v859 = vpack.c.b16 %v659, %v657
  %v860 = vpack.c.b16 %v660, %v658
  %v861 = vpack.c.b16 %v663, %v661
  %v862 = vpack.c.b16 %v664, %v662
  %v863 = vpack.c.b16 %v667, %v665
  %v864 = vpack.c.b16 %v668, %v666
  %v865 = vpack.c.b16 %v671, %v669
  %v866 = vpack.c.b16 %v672, %v670
  %v867 = vpack.c.b16 %v675, %v673
  %v868 = vpack.c.b16 %v676, %v674
  %v869 = vpack.c.b16 %v679, %v677
  %v870 = vpack.c.b16 %v680, %v678
  %v871 = vpack.c.b16 %v683, %v681
  %v872 = vpack.c.b16 %v684, %v682
  %v873 = vpack.c.b16 %v687, %v685
  %v874 = vpack.c.b16 %v688, %v686
  %v875 = vpack.c.b16 %v691, %v689
  %v876 = vpack.c.b16 %v692, %v690
  %v877 = vpack.c.b16 %v695, %v693
  %v878 = vpack.c.b16 %v696, %v694
  %v879 = vpack.c.b16 %v699, %v697
  %v880 = vpack.c.b16 %v700, %v698
  %v881 = vpack.c.b16 %v703, %v701
  %v882 = vpack.c.b16 %v704, %v702
  %v883 = vpack.c.b16 %v707, %v705
  %v884 = vpack.c.b16 %v708, %v706
  %v885 = vpack.c.b16 %v711, %v709
  %v886 = vpack.c.b16 %v712, %v710
  %v887 = vpack.c.b16 %v715, %v713
  %v888 = vpack.c.b16 %v716, %v714
  %v889 = vpack.c.b16 %v719, %v717
  %v890 = vpack.c.b16 %v720, %v718
  %v891 = vpack.c.b16 %v723, %v721
  %v892 = vpack.c.b16 %v724, %v722
  %v893 = vpack.c.b16 %v727, %v725
  %v894 = vpack.c.b16 %v728, %v726
  %v895 = vpack.c.b16 %v731, %v729
  %v896 = vpack.c.b16 %v732, %v730
  %v897 = vpack.c.b16 %v735, %v733
  %v898 = vpack.c.b16 %v736, %v734
  %v899 = vpack.c.b16 %v739, %v737
  %v900 = vpack.c.b16 %v740, %v738
  %v901 = vpack.c.b16 %v743, %v741
  %v902 = vpack.c.b16 %v744, %v742
  %v903 = vpack.c.b16 %v747, %v745
  %v904 = vpack.c.b16 %v748, %v746
  %v905 = vpack.c.b16 %v751, %v749
  %v906 = vpack.c.b16 %v752, %v750
  %v907 = vpack.c.b16 %v755, %v753
  %v908 = vpack.c.b16 %v756, %v754
  %v909 = vpack.c.b16 %v759, %v757
  %v910 = vpack.c.b16 %v760, %v758
  %v911 = vpack.c.b16 %v763, %v761
  %v912 = vpack.c.b16 %v764, %v762
  %v913 = vpack.c.b16 %v767, %v765
  %v914 = vpack.c.b16 %v768, %v766
  %v915 = vpack.c.b16 %v771, %v769
  %v916 = vpack.c.b16 %v772, %v770
  %v917 = vpack.c.b16 %v775, %v773
  %v918 = vpack.c.b16 %v776, %v774
  %v919 = vpack.c.b16 %v779, %v777
  %v920 = vpack.c.b16 %v780, %v778
  %v921 = vpack.c.b16 %v783, %v781
  %v922 = vpack.c.b16 %v784, %v782
  %v923 = vpack.c.b16 %v787, %v785
  %v924 = vpack.c.b16 %v788, %v786
  %v925 = vpack.c.b16 %v791, %v789
  %v926 = vpack.c.b16 %v792, %v790
  %v927 = vpack.c.b16 %v795, %v793
  %v928 = vpack.c.b16 %v796, %v794
  %v929 = vpack.c.b16 %v799, %v797
  %v930 = vpack.c.b16 %v800, %v798
  %v931 = vpack.c.b16 %v803, %v801
  %v932 = vpack.c.b16 %v804, %v802
  %v933 = vpack.c.b16 %v807, %v805
  %v934 = vpack.c.b16 %v808, %v806
  %v935 = vpack.c.b16 %v811, %v809
  %v936 = vpack.c.b16 %v812, %v810
  %v937 = vpack.c.b16 %v815, %v813
  %v938 = vpack.c.b16 %v816, %v814
  %v939 = vpack.c.b16 %v819, %v817
  %v940 = vpack.c.b16 %v820, %v818
  %v941 = vpack.c.b16 %v823, %v821
  %v942 = vpack.c.b16 %v824, %v822
  %v943 = vpack.c.b16 %v827, %v825
  %v944 = vpack.c.b16 %v828, %v826
  %v945 = vpack.c.b16 %v831, %v829
  %v946 = vpack.c.b16 %v832, %v830
  %v947 = vpack.c.b16 %v835, %v833
  %v948 = vpack.c.b16 %v836, %v834
  %v1093 = vunpack.c.l.b16 %v469
  %v1094 = vunpack.c.h.b16 %v469
  %v1095 = vunpack.c.l.b16 %v470
  %v1096 = vunpack.c.h.b16 %v470
  %v1097 = vunpack.c.l.b16 %v471
  %v1098 = vunpack.c.h.b16 %v471
  %v1099 = vunpack.c.l.b16 %v472
  %v1100 = vunpack.c.h.b16 %v472
  %v1101 = vunpack.c.l.b16 %v473
  %v1102 = vunpack.c.h.b16 %v473
  %v1103 = vunpack.c.l.b16 %v474
  %v1104 = vunpack.c.h.b16 %v474
  %v1105 = vunpack.c.l.b16 %v475
  %v1106 = vunpack.c.h.b16 %v475
  %v1107 = vunpack.c.l.b16 %v476
  %v1108 = vunpack.c.h.b16 %v476
  %v1109 = vunpack.c.l.b16 %v477
  %v1110 = vunpack.c.h.b16 %v477
  %v1111 = vunpack.c.l.b16 %v478
  %v1112 = vunpack.c.h.b16 %v478
  %v1113 = vunpack.c.l.b16 %v479
  %v1114 = vunpack.c.h.b16 %v479
  %v1115 = vunpack.c.l.b16 %v480
  %v1116 = vunpack.c.h.b16 %v480
  %v1117 = vunpack.c.l.b16 %v481
  %v1118 = vunpack.c.h.b16 %v481
  %v1119 = vunpack.c.l.b16 %v482
  %v1120 = vunpack.c.h.b16 %v482
  %v1121 = vunpack.c.l.b16 %v483
  %v1122 = vunpack.c.h.b16 %v483
  %v1123 = vunpack.c.l.b16 %v484
  %v1124 = vunpack.c.h.b16 %v484
  %v1125 = vunpack.c.l.b16 %v485
  %v1126 = vunpack.c.h.b16 %v485
  %v1127 = vunpack.c.l.b16 %v486
  %v1128 = vunpack.c.h.b16 %v486
  %v1129 = vunpack.c.l.b16 %v487
  %v1130 = vunpack.c.h.b16 %v487
  %v1131 = vunpack.c.l.b16 %v488
  %v1132 = vunpack.c.h.b16 %v488
  %v1133 = vunpack.c.l.b16 %v489
  %v1134 = vunpack.c.h.b16 %v489
  %v1135 = vunpack.c.l.b16 %v490
  %v1136 = vunpack.c.h.b16 %v490
  %v1137 = vunpack.c.l.b16 %v491
  %v1138 = vunpack.c.h.b16 %v491
  %v1139 = vunpack.c.l.b16 %v492
  %v1140 = vunpack.c.h.b16 %v492
  %v1141 = vunpack.c.l.b16 %v493
  %v1142 = vunpack.c.h.b16 %v493
  %v1143 = vunpack.c.l.b16 %v494
  %v1144 = vunpack.c.h.b16 %v494
  %v1145 = vunpack.c.l.b16 %v495
  %v1146 = vunpack.c.h.b16 %v495
  %v1147 = vunpack.c.l.b16 %v496
  %v1148 = vunpack.c.h.b16 %v496
  %v1149 = vunpack.c.l.b16 %v497
  %v1150 = vunpack.c.h.b16 %v497
  %v1151 = vunpack.c.l.b16 %v498
  %v1152 = vunpack.c.h.b16 %v498
  %v1153 = vunpack.c.l.b16 %v499
  %v1154 = vunpack.c.h.b16 %v499
  %v1155 = vunpack.c.l.b16 %v500
  %v1156 = vunpack.c.h.b16 %v500
  %v1157 = vpack.c.b16 %v1095, %v1093
  %v1158 = vpack.c.b16 %v1096, %v1094
  %v1159 = vpack.c.b16 %v1099, %v1097
  %v1160 = vpack.c.b16 %v1100, %v1098
  %v1161 = vpack.c.b16 %v1103, %v1101
  %v1162 = vpack.c.b16 %v1104, %v1102
  %v1163 = vpack.c.b16 %v1107, %v1105
  %v1164 = vpack.c.b16 %v1108, %v1106
  %v1165 = vpack.c.b16 %v1111, %v1109
  %v1166 = vpack.c.b16 %v1112, %v1110
  %v1167 = vpack.c.b16 %v1115, %v1113
  %v1168 = vpack.c.b16 %v1116, %v1114
  %v1169 = vpack.c.b16 %v1119, %v1117
  %v1170 = vpack.c.b16 %v1120, %v1118
  %v1171 = vpack.c.b16 %v1123, %v1121
  %v1172 = vpack.c.b16 %v1124, %v1122
  %v1173 = vpack.c.b16 %v1127, %v1125
  %v1174 = vpack.c.b16 %v1128, %v1126
  %v1175 = vpack.c.b16 %v1131, %v1129
  %v1176 = vpack.c.b16 %v1132, %v1130
  %v1177 = vpack.c.b16 %v1135, %v1133
  %v1178 = vpack.c.b16 %v1136, %v1134
  %v1179 = vpack.c.b16 %v1139, %v1137
  %v1180 = vpack.c.b16 %v1140, %v1138
  %v1181 = vpack.c.b16 %v1143, %v1141
  %v1182 = vpack.c.b16 %v1144, %v1142
  %v1183 = vpack.c.b16 %v1147, %v1145
  %v1184 = vpack.c.b16 %v1148, %v1146
  %v1185 = vpack.c.b16 %v1151, %v1149
  %v1186 = vpack.c.b16 %v1152, %v1150
  %v1187 = vpack.c.b16 %v1155, %v1153
  %v1188 = vpack.c.b16 %v1156, %v1154
  %1221 = vmatprep.subr.bf16.mxu0 %v1158
  %1222 = vmatpush1.bf16.msra.mxu0 %v1157
  %1223 = vmatprep.subr.bf16.mxu0 %v1160
  %1224 = vmatpush1.bf16.msra.mxu0 %v1159
  %1225 = vmatprep.subr.bf16.mxu0 %v1162
  %1226 = vmatpush1.bf16.msra.mxu0 %v1161
  %1227 = vmatprep.subr.bf16.mxu0 %v1164
  %1228 = vmatpush1.bf16.msra.mxu0 %v1163
  %1229 = vmatprep.subr.bf16.mxu0 %v1166
  %1230 = vmatpush1.bf16.msra.mxu0 %v1165
  %1231 = vmatprep.subr.bf16.mxu0 %v1168
  %1232 = vmatpush1.bf16.msra.mxu0 %v1167
  %1233 = vmatprep.subr.bf16.mxu0 %v1170
  %1234 = vmatpush1.bf16.msra.mxu0 %v1169
  %1235 = vmatprep.subr.bf16.mxu0 %v1172
  %1236 = vmatpush1.bf16.msra.mxu0 %v1171
  %1237 = vmatprep.subr.bf16.mxu0 %v1174
  %1238 = vmatpush1.bf16.msra.mxu0 %v1173
  %1239 = vmatprep.subr.bf16.mxu0 %v1176
  %1240 = vmatpush1.bf16.msra.mxu0 %v1175
  %1241 = vmatprep.subr.bf16.mxu0 %v1178
  %1242 = vmatpush1.bf16.msra.mxu0 %v1177
  %1243 = vmatprep.subr.bf16.mxu0 %v1180
  %1244 = vmatpush1.bf16.msra.mxu0 %v1179
  %1245 = vmatprep.subr.bf16.mxu0 %v1182
  %1246 = vmatpush1.bf16.msra.mxu0 %v1181
  %1247 = vmatprep.subr.bf16.mxu0 %v1184
  %1248 = vmatpush1.bf16.msra.mxu0 %v1183
  %1249 = vmatprep.subr.bf16.mxu0 %v1186
  %1250 = vmatpush1.bf16.msra.mxu0 %v1185
  %1251 = vmatprep.subr.bf16.mxu0 %v1188
  %1252 = vmatpush1.bf16.msra.mxu0 %v1187
  %1253 = vmatprep.mubr.bf16.mxu0 %v838
  %1254 = vmatmul.mubr.bf16.gmra.mrb[0].mxu0 %v837
  %v1255 = vpop.f32.mrb[0].mxu0
  %v1256 = vadd.f32 0.0, %v1255
  %v1257 = vpop.f32.mrb[0].mxu0
  %v1258 = vadd.f32 0.0, %v1257
  %v1259 = vpop.f32.mrb[0].mxu0
  %v1260 = vadd.f32 0.0, %v1259
  %v1261 = vpop.f32.mrb[0].mxu0
  %v1262 = vadd.f32 0.0, %v1261
  %1263 = vmatprep.mubr.bf16.mxu0 %v840
  %1264 = vmatmul.mubr.bf16.gmra.mrb[0].mxu0 %v839
  %v1265 = vpop.f32.mrb[0].mxu0
  %v1266 = vadd.f32 0.0, %v1265
  %v1267 = vpop.f32.mrb[0].mxu0
  %v1268 = vadd.f32 0.0, %v1267
  %v1269 = vpop.f32.mrb[0].mxu0
  %v1270 = vadd.f32 0.0, %v1269
  %v1271 = vpop.f32.mrb[0].mxu0
  %v1272 = vadd.f32 0.0, %v1271
  %1273 = vmatprep.mubr.bf16.mxu0 %v842
  %1274 = vmatmul.mubr.bf16.gmra.mrb[0].mxu0 %v841
  %v1275 = vpop.f32.mrb[0].mxu0
  %v1276 = vadd.f32 0.0, %v1275
  %v1277 = vpop.f32.mrb[0].mxu0
  %v1278 = vadd.f32 0.0, %v1277
  %v1279 = vpop.f32.mrb[0].mxu0
  %v1280 = vadd.f32 0.0, %v1279
  %v1281 = vpop.f32.mrb[0].mxu0
  %v1282 = vadd.f32 0.0, %v1281
  %1283 = vmatprep.mubr.bf16.mxu0 %v844
  %1284 = vmatmul.mubr.bf16.gmra.mrb[0].mxu0 %v843
  %v1285 = vpop.f32.mrb[0].mxu0
  %v1286 = vadd.f32 0.0, %v1285
  %v1287 = vpop.f32.mrb[0].mxu0
  %v1288 = vadd.f32 0.0, %v1287
  %v1289 = vpop.f32.mrb[0].mxu0
  %v1290 = vadd.f32 0.0, %v1289
  %v1291 = vpop.f32.mrb[0].mxu0
  %v1292 = vadd.f32 0.0, %v1291
  %1293 = vmatprep.mubr.bf16.mxu0 %v846
  %1294 = vmatmul.mubr.bf16.gmra.mrb[0].mxu0 %v845
  %v1295 = vpop.f32.mrb[0].mxu0
  %v1296 = vadd.f32 0.0, %v1295
  %v1297 = vpop.f32.mrb[0].mxu0
  %v1298 = vadd.f32 0.0, %v1297
  %v1299 = vpop.f32.mrb[0].mxu0
  %v1300 = vadd.f32 0.0, %v1299
  %v1301 = vpop.f32.mrb[0].mxu0
  %v1302 = vadd.f32 0.0, %v1301
  %1303 = vmatprep.mubr.bf16.mxu0 %v848
  %1304 = vmatmul.mubr.bf16.gmra.mrb[0].mxu0 %v847
  %v1305 = vpop.f32.mrb[0].mxu0
  %v1306 = vadd.f32 0.0, %v1305
  %v1307 = vpop.f32.mrb[0].mxu0
  %v1308 = vadd.f32 0.0, %v1307
  %v1309 = vpop.f32.mrb[0].mxu0
  %v1310 = vadd.f32 0.0, %v1309
  %v1311 = vpop.f32.mrb[0].mxu0
  %v1312 = vadd.f32 0.0, %v1311
  %1313 = vmatprep.mubr.bf16.mxu0 %v850
  %1314 = vmatmul.mubr.bf16.gmra.mrb[0].mxu0 %v849
  %v1315 = vpop.f32.mrb[0].mxu0
  %v1316 = vadd.f32 0.0, %v1315
  %v1317 = vpop.f32.mrb[0].mxu0
  %v1318 = vadd.f32 0.0, %v1317
  %v1319 = vpop.f32.mrb[0].mxu0
  %v1320 = vadd.f32 0.0, %v1319
  %v1321 = vpop.f32.mrb[0].mxu0
  %v1322 = vadd.f32 0.0, %v1321
  %1323 = vmatprep.mubr.bf16.mxu0 %v852
  %1324 = vmatmul.mubr.bf16.gmra.mrb[0].mxu0 %v851
  %v1325 = vpop.f32.mrb[0].mxu0
  %v1326 = vadd.f32 0.0, %v1325
  %v1327 = vpop.f32.mrb[0].mxu0
  %v1328 = vadd.f32 0.0, %v1327
  %v1329 = vpop.f32.mrb[0].mxu0
  %v1330 = vadd.f32 0.0, %v1329
  %v1331 = vpop.f32.mrb[0].mxu0
  %v1332 = vadd.f32 0.0, %v1331
  %1333 = vmatprep.mubr.bf16.mxu0 %v854
  %1334 = vmatmul.mubr.bf16.gmra.mrb[0].mxu0 %v853
  %v1335 = vpop.f32.mrb[0].mxu0
  %v1336 = vadd.f32 0.0, %v1335
  %v1337 = vpop.f32.mrb[0].mxu0
  %v1338 = vadd.f32 0.0, %v1337
  %v1339 = vpop.f32.mrb[0].mxu0
  %v1340 = vadd.f32 0.0, %v1339
  %v1341 = vpop.f32.mrb[0].mxu0
  %v1342 = vadd.f32 0.0, %v1341
  %1343 = vmatprep.mubr.bf16.mxu0 %v856
  %1344 = vmatmul.mubr.bf16.gmra.mrb[0].mxu0 %v855
  %v1345 = vpop.f32.mrb[0].mxu0
  %v1346 = vadd.f32 0.0, %v1345
  %v1347 = vpop.f32.mrb[0].mxu0
  %v1348 = vadd.f32 0.0, %v1347
  %v1349 = vpop.f32.mrb[0].mxu0
  %v1350 = vadd.f32 0.0, %v1349
  %v1351 = vpop.f32.mrb[0].mxu0
  %v1352 = vadd.f32 0.0, %v1351
  %1353 = vmatprep.mubr.bf16.mxu0 %v858
  %1354 = vmatmul.mubr.bf16.gmra.mrb[0].mxu0 %v857
  %v1355 = vpop.f32.mrb[0].mxu0
  %v1356 = vadd.f32 0.0, %v1355
  %v1357 = vpop.f32.mrb[0].mxu0
  %v1358 = vadd.f32 0.0, %v1357
  %v1359 = vpop.f32.mrb[0].mxu0
  %v1360 = vadd.f32 0.0, %v1359
  %v1361 = vpop.f32.mrb[0].mxu0
  %v1362 = vadd.f32 0.0, %v1361
  %1363 = vmatprep.mubr.bf16.mxu0 %v860
  %1364 = vmatmul.mubr.bf16.gmra.mrb[0].mxu0 %v859
  %v1365 = vpop.f32.mrb[0].mxu0
  %v1366 = vadd.f32 0.0, %v1365
  %v1367 = vpop.f32.mrb[0].mxu0
  %v1368 = vadd.f32 0.0, %v1367
  %v1369 = vpop.f32.mrb[0].mxu0
  %v1370 = vadd.f32 0.0, %v1369
  %v1371 = vpop.f32.mrb[0].mxu0
  %v1372 = vadd.f32 0.0, %v1371
  %1373 = vmatprep.mubr.bf16.mxu0 %v862
  %1374 = vmatmul.mubr.bf16.gmra.mrb[0].mxu0 %v861
  %v1375 = vpop.f32.mrb[0].mxu0
  %v1376 = vadd.f32 0.0, %v1375
  %v1377 = vpop.f32.mrb[0].mxu0
  %v1378 = vadd.f32 0.0, %v1377
  %v1379 = vpop.f32.mrb[0].mxu0
  %v1380 = vadd.f32 0.0, %v1379
  %v1381 = vpop.f32.mrb[0].mxu0
  %v1382 = vadd.f32 0.0, %v1381
  %1383 = vmatprep.mubr.bf16.mxu0 %v864
  %1384 = vmatmul.mubr.bf16.gmra.mrb[0].mxu0 %v863
  %v1385 = vpop.f32.mrb[0].mxu0
  %v1386 = vadd.f32 0.0, %v1385
  %v1387 = vpop.f32.mrb[0].mxu0
  %v1388 = vadd.f32 0.0, %v1387
  %v1389 = vpop.f32.mrb[0].mxu0
  %v1390 = vadd.f32 0.0, %v1389
  %v1391 = vpop.f32.mrb[0].mxu0
  %v1392 = vadd.f32 0.0, %v1391
  %1393 = vmatprep.mubr.bf16.mxu0 %v866
  %1394 = vmatmul.mubr.bf16.gmra.mrb[0].mxu0 %v865
  %v1395 = vpop.f32.mrb[0].mxu0
  %v1396 = vadd.f32 0.0, %v1395
  %v1397 = vpop.f32.mrb[0].mxu0
  %v1398 = vadd.f32 0.0, %v1397
  %v1399 = vpop.f32.mrb[0].mxu0
  %v1400 = vadd.f32 0.0, %v1399
  %v1401 = vpop.f32.mrb[0].mxu0
  %v1402 = vadd.f32 0.0, %v1401
  %1403 = vmatprep.mubr.bf16.mxu0 %v868
  %1404 = vmatmul.mubr.bf16.gmra.mrb[0].mxu0 %v867
  %v1405 = vpop.f32.mrb[0].mxu0
  %v1406 = vadd.f32 0.0, %v1405
  %v1407 = vpop.f32.mrb[0].mxu0
  %v1408 = vadd.f32 0.0, %v1407
  %v1409 = vpop.f32.mrb[0].mxu0
  %v1410 = vadd.f32 0.0, %v1409
  %v1411 = vpop.f32.mrb[0].mxu0
  %v1412 = vadd.f32 0.0, %v1411
  %1413 = vmatprep.mubr.bf16.mxu0 %v870
  %1414 = vmatmul.mubr.bf16.gmra.mrb[0].mxu0 %v869
  %v1415 = vpop.f32.mrb[0].mxu0
  %v1416 = vadd.f32 0.0, %v1415
  %v1417 = vpop.f32.mrb[0].mxu0
  %v1418 = vadd.f32 0.0, %v1417
  %v1419 = vpop.f32.mrb[0].mxu0
  %v1420 = vadd.f32 0.0, %v1419
  %v1421 = vpop.f32.mrb[0].mxu0
  %v1422 = vadd.f32 0.0, %v1421
  %1423 = vmatprep.mubr.bf16.mxu0 %v872
  %1424 = vmatmul.mubr.bf16.gmra.mrb[0].mxu0 %v871
  %v1425 = vpop.f32.mrb[0].mxu0
  %v1426 = vadd.f32 0.0, %v1425
  %v1427 = vpop.f32.mrb[0].mxu0
  %v1428 = vadd.f32 0.0, %v1427
  %v1429 = vpop.f32.mrb[0].mxu0
  %v1430 = vadd.f32 0.0, %v1429
  %v1431 = vpop.f32.mrb[0].mxu0
  %v1432 = vadd.f32 0.0, %v1431
  %1433 = vmatprep.mubr.bf16.mxu0 %v874
  %1434 = vmatmul.mubr.bf16.gmra.mrb[0].mxu0 %v873
  %v1435 = vpop.f32.mrb[0].mxu0
  %v1436 = vadd.f32 0.0, %v1435
  %v1437 = vpop.f32.mrb[0].mxu0
  %v1438 = vadd.f32 0.0, %v1437
  %v1439 = vpop.f32.mrb[0].mxu0
  %v1440 = vadd.f32 0.0, %v1439
  %v1441 = vpop.f32.mrb[0].mxu0
  %v1442 = vadd.f32 0.0, %v1441
  %1443 = vmatprep.mubr.bf16.mxu0 %v876
  %1444 = vmatmul.mubr.bf16.gmra.mrb[0].mxu0 %v875
  %v1445 = vpop.f32.mrb[0].mxu0
  %v1446 = vadd.f32 0.0, %v1445
  %v1447 = vpop.f32.mrb[0].mxu0
  %v1448 = vadd.f32 0.0, %v1447
  %v1449 = vpop.f32.mrb[0].mxu0
  %v1450 = vadd.f32 0.0, %v1449
  %v1451 = vpop.f32.mrb[0].mxu0
  %v1452 = vadd.f32 0.0, %v1451
  %1453 = vmatprep.mubr.bf16.mxu0 %v878
  %1454 = vmatmul.mubr.bf16.gmra.mrb[0].mxu0 %v877
  %v1455 = vpop.f32.mrb[0].mxu0
  %v1456 = vadd.f32 0.0, %v1455
  %v1457 = vpop.f32.mrb[0].mxu0
  %v1458 = vadd.f32 0.0, %v1457
  %v1459 = vpop.f32.mrb[0].mxu0
  %v1460 = vadd.f32 0.0, %v1459
  %v1461 = vpop.f32.mrb[0].mxu0
  %v1462 = vadd.f32 0.0, %v1461
  %1463 = vmatprep.mubr.bf16.mxu0 %v880
  %1464 = vmatmul.mubr.bf16.gmra.mrb[0].mxu0 %v879
  %v1465 = vpop.f32.mrb[0].mxu0
  %v1466 = vadd.f32 0.0, %v1465
  %v1467 = vpop.f32.mrb[0].mxu0
  %v1468 = vadd.f32 0.0, %v1467
  %v1469 = vpop.f32.mrb[0].mxu0
  %v1470 = vadd.f32 0.0, %v1469
  %v1471 = vpop.f32.mrb[0].mxu0
  %v1472 = vadd.f32 0.0, %v1471
  %1473 = vmatprep.mubr.bf16.mxu0 %v882
  %1474 = vmatmul.mubr.bf16.gmra.mrb[0].mxu0 %v881
  %v1475 = vpop.f32.mrb[0].mxu0
  %v1476 = vadd.f32 0.0, %v1475
  %v1477 = vpop.f32.mrb[0].mxu0
  %v1478 = vadd.f32 0.0, %v1477
  %v1479 = vpop.f32.mrb[0].mxu0
  %v1480 = vadd.f32 0.0, %v1479
  %v1481 = vpop.f32.mrb[0].mxu0
  %v1482 = vadd.f32 0.0, %v1481
  %1483 = vmatprep.mubr.bf16.mxu0 %v884
  %1484 = vmatmul.mubr.bf16.gmra.mrb[0].mxu0 %v883
  %v1485 = vpop.f32.mrb[0].mxu0
  %v1486 = vadd.f32 0.0, %v1485
  %v1487 = vpop.f32.mrb[0].mxu0
  %v1488 = vadd.f32 0.0, %v1487
  %v1489 = vpop.f32.mrb[0].mxu0
  %v1490 = vadd.f32 0.0, %v1489
  %v1491 = vpop.f32.mrb[0].mxu0
  %v1492 = vadd.f32 0.0, %v1491
  %1493 = vmatprep.mubr.bf16.mxu0 %v886
  %1494 = vmatmul.mubr.bf16.gmra.mrb[0].mxu0 %v885
  %v1495 = vpop.f32.mrb[0].mxu0
  %v1496 = vadd.f32 0.0, %v1495
  %v1497 = vpop.f32.mrb[0].mxu0
  %v1498 = vadd.f32 0.0, %v1497
  %v1499 = vpop.f32.mrb[0].mxu0
  %v1500 = vadd.f32 0.0, %v1499
  %v1501 = vpop.f32.mrb[0].mxu0
  %v1502 = vadd.f32 0.0, %v1501
  %1503 = vmatprep.mubr.bf16.mxu0 %v888
  %1504 = vmatmul.mubr.bf16.gmra.mrb[0].mxu0 %v887
  %v1505 = vpop.f32.mrb[0].mxu0
  %v1506 = vadd.f32 0.0, %v1505
  %v1507 = vpop.f32.mrb[0].mxu0
  %v1508 = vadd.f32 0.0, %v1507
  %v1509 = vpop.f32.mrb[0].mxu0
  %v1510 = vadd.f32 0.0, %v1509
  %v1511 = vpop.f32.mrb[0].mxu0
  %v1512 = vadd.f32 0.0, %v1511
  %1513 = vmatprep.mubr.bf16.mxu0 %v890
  %1514 = vmatmul.mubr.bf16.gmra.mrb[0].mxu0 %v889
  %v1515 = vpop.f32.mrb[0].mxu0
  %v1516 = vadd.f32 0.0, %v1515
  %v1517 = vpop.f32.mrb[0].mxu0
  %v1518 = vadd.f32 0.0, %v1517
  %v1519 = vpop.f32.mrb[0].mxu0
  %v1520 = vadd.f32 0.0, %v1519
  %v1521 = vpop.f32.mrb[0].mxu0
  %v1522 = vadd.f32 0.0, %v1521
  %1523 = vmatprep.mubr.bf16.mxu0 %v892
  %1524 = vmatmul.mubr.bf16.gmra.mrb[0].mxu0 %v891
  %v1525 = vpop.f32.mrb[0].mxu0
  %v1526 = vadd.f32 0.0, %v1525
  %v1527 = vpop.f32.mrb[0].mxu0
  %v1528 = vadd.f32 0.0, %v1527
  %v1529 = vpop.f32.mrb[0].mxu0
  %v1530 = vadd.f32 0.0, %v1529
  %v1531 = vpop.f32.mrb[0].mxu0
  %v1532 = vadd.f32 0.0, %v1531
  %1533 = vmatprep.mubr.bf16.mxu0 %v894
  %1534 = vmatmul.mubr.bf16.gmra.mrb[0].mxu0 %v893
  %v1535 = vpop.f32.mrb[0].mxu0
  %v1536 = vadd.f32 0.0, %v1535
  %v1537 = vpop.f32.mrb[0].mxu0
  %v1538 = vadd.f32 0.0, %v1537
  %v1539 = vpop.f32.mrb[0].mxu0
  %v1540 = vadd.f32 0.0, %v1539
  %v1541 = vpop.f32.mrb[0].mxu0
  %v1542 = vadd.f32 0.0, %v1541
  %1543 = vmatprep.mubr.bf16.mxu0 %v896
  %1544 = vmatmul.mubr.bf16.gmra.mrb[0].mxu0 %v895
  %v1545 = vpop.f32.mrb[0].mxu0
  %v1546 = vadd.f32 0.0, %v1545
  %v1547 = vpop.f32.mrb[0].mxu0
  %v1548 = vadd.f32 0.0, %v1547
  %v1549 = vpop.f32.mrb[0].mxu0
  %v1550 = vadd.f32 0.0, %v1549
  %v1551 = vpop.f32.mrb[0].mxu0
  %v1552 = vadd.f32 0.0, %v1551
  %1553 = vmatprep.mubr.bf16.mxu0 %v898
  %1554 = vmatmul.mubr.bf16.gmra.mrb[0].mxu0 %v897
  %v1555 = vpop.f32.mrb[0].mxu0
  %v1556 = vadd.f32 0.0, %v1555
  %v1557 = vpop.f32.mrb[0].mxu0
  %v1558 = vadd.f32 0.0, %v1557
  %v1559 = vpop.f32.mrb[0].mxu0
  %v1560 = vadd.f32 0.0, %v1559
  %v1561 = vpop.f32.mrb[0].mxu0
  %v1562 = vadd.f32 0.0, %v1561
  %1563 = vmatprep.mubr.bf16.mxu0 %v900
  %1564 = vmatmul.mubr.bf16.gmra.mrb[0].mxu0 %v899
  %v1565 = vpop.f32.mrb[0].mxu0
  %v1566 = vadd.f32 0.0, %v1565
  %v1567 = vpop.f32.mrb[0].mxu0
  %v1568 = vadd.f32 0.0, %v1567
  %v1569 = vpop.f32.mrb[0].mxu0
  %v1570 = vadd.f32 0.0, %v1569
  %v1571 = vpop.f32.mrb[0].mxu0
  %v1572 = vadd.f32 0.0, %v1571
  %1573 = vmatprep.mubr.bf16.mxu0 %v902
  %1574 = vmatmul.mubr.bf16.gmra.mrb[0].mxu0 %v901
  %v1575 = vpop.f32.mrb[0].mxu0
  %v1576 = vadd.f32 0.0, %v1575
  %v1577 = vpop.f32.mrb[0].mxu0
  %v1578 = vadd.f32 0.0, %v1577
  %v1579 = vpop.f32.mrb[0].mxu0
  %v1580 = vadd.f32 0.0, %v1579
  %v1581 = vpop.f32.mrb[0].mxu0
  %v1582 = vadd.f32 0.0, %v1581
  %1583 = vmatprep.mubr.bf16.mxu0 %v904
  %1584 = vmatmul.mubr.bf16.gmra.mrb[0].mxu0 %v903
  %v1585 = vpop.f32.mrb[0].mxu0
  %v1586 = vadd.f32 0.0, %v1585
  %v1587 = vpop.f32.mrb[0].mxu0
  %v1588 = vadd.f32 0.0, %v1587
  %v1589 = vpop.f32.mrb[0].mxu0
  %v1590 = vadd.f32 0.0, %v1589
  %v1591 = vpop.f32.mrb[0].mxu0
  %v1592 = vadd.f32 0.0, %v1591
  %1593 = vmatprep.mubr.bf16.mxu0 %v906
  %1594 = vmatmul.mubr.bf16.gmra.mrb[0].mxu0 %v905
  %v1595 = vpop.f32.mrb[0].mxu0
  %v1596 = vadd.f32 0.0, %v1595
  %v1597 = vpop.f32.mrb[0].mxu0
  %v1598 = vadd.f32 0.0, %v1597
  %v1599 = vpop.f32.mrb[0].mxu0
  %v1600 = vadd.f32 0.0, %v1599
  %v1601 = vpop.f32.mrb[0].mxu0
  %v1602 = vadd.f32 0.0, %v1601
  %1603 = vmatprep.mubr.bf16.mxu0 %v908
  %1604 = vmatmul.mubr.bf16.gmra.mrb[0].mxu0 %v907
  %v1605 = vpop.f32.mrb[0].mxu0
  %v1606 = vadd.f32 0.0, %v1605
  %v1607 = vpop.f32.mrb[0].mxu0
  %v1608 = vadd.f32 0.0, %v1607
  %v1609 = vpop.f32.mrb[0].mxu0
  %v1610 = vadd.f32 0.0, %v1609
  %v1611 = vpop.f32.mrb[0].mxu0
  %v1612 = vadd.f32 0.0, %v1611
  %1613 = vmatprep.mubr.bf16.mxu0 %v910
  %1614 = vmatmul.mubr.bf16.gmra.mrb[0].mxu0 %v909
  %v1615 = vpop.f32.mrb[0].mxu0
  %v1616 = vadd.f32 0.0, %v1615
  %v1617 = vpop.f32.mrb[0].mxu0
  %v1618 = vadd.f32 0.0, %v1617
  %v1619 = vpop.f32.mrb[0].mxu0
  %v1620 = vadd.f32 0.0, %v1619
  %v1621 = vpop.f32.mrb[0].mxu0
  %v1622 = vadd.f32 0.0, %v1621
  %1623 = vmatprep.mubr.bf16.mxu0 %v912
  %1624 = vmatmul.mubr.bf16.gmra.mrb[0].mxu0 %v911
  %v1625 = vpop.f32.mrb[0].mxu0
  %v1626 = vadd.f32 0.0, %v1625
  %v1627 = vpop.f32.mrb[0].mxu0
  %v1628 = vadd.f32 0.0, %v1627
  %v1629 = vpop.f32.mrb[0].mxu0
  %v1630 = vadd.f32 0.0, %v1629
  %v1631 = vpop.f32.mrb[0].mxu0
  %v1632 = vadd.f32 0.0, %v1631
  %1633 = vmatprep.mubr.bf16.mxu0 %v914
  %1634 = vmatmul.mubr.bf16.gmra.mrb[0].mxu0 %v913
  %v1635 = vpop.f32.mrb[0].mxu0
  %v1636 = vadd.f32 0.0, %v1635
  %v1637 = vpop.f32.mrb[0].mxu0
  %v1638 = vadd.f32 0.0, %v1637
  %v1639 = vpop.f32.mrb[0].mxu0
  %v1640 = vadd.f32 0.0, %v1639
  %v1641 = vpop.f32.mrb[0].mxu0
  %v1642 = vadd.f32 0.0, %v1641
  %1643 = vmatprep.mubr.bf16.mxu0 %v916
  %1644 = vmatmul.mubr.bf16.gmra.mrb[0].mxu0 %v915
  %v1645 = vpop.f32.mrb[0].mxu0
  %v1646 = vadd.f32 0.0, %v1645
  %v1647 = vpop.f32.mrb[0].mxu0
  %v1648 = vadd.f32 0.0, %v1647
  %v1649 = vpop.f32.mrb[0].mxu0
  %v1650 = vadd.f32 0.0, %v1649
  %v1651 = vpop.f32.mrb[0].mxu0
  %v1652 = vadd.f32 0.0, %v1651
  %1653 = vmatprep.mubr.bf16.mxu0 %v918
  %1654 = vmatmul.mubr.bf16.gmra.mrb[0].mxu0 %v917
  %v1655 = vpop.f32.mrb[0].mxu0
  %v1656 = vadd.f32 0.0, %v1655
  %v1657 = vpop.f32.mrb[0].mxu0
  %v1658 = vadd.f32 0.0, %v1657
  %v1659 = vpop.f32.mrb[0].mxu0
  %v1660 = vadd.f32 0.0, %v1659
  %v1661 = vpop.f32.mrb[0].mxu0
  %v1662 = vadd.f32 0.0, %v1661
  %1663 = vmatprep.mubr.bf16.mxu0 %v920
  %1664 = vmatmul.mubr.bf16.gmra.mrb[0].mxu0 %v919
  %v1665 = vpop.f32.mrb[0].mxu0
  %v1666 = vadd.f32 0.0, %v1665
  %v1667 = vpop.f32.mrb[0].mxu0
  %v1668 = vadd.f32 0.0, %v1667
  %v1669 = vpop.f32.mrb[0].mxu0
  %v1670 = vadd.f32 0.0, %v1669
  %v1671 = vpop.f32.mrb[0].mxu0
  %v1672 = vadd.f32 0.0, %v1671
  %1673 = vmatprep.mubr.bf16.mxu0 %v922
  %1674 = vmatmul.mubr.bf16.gmra.mrb[0].mxu0 %v921
  %v1675 = vpop.f32.mrb[0].mxu0
  %v1676 = vadd.f32 0.0, %v1675
  %v1677 = vpop.f32.mrb[0].mxu0
  %v1678 = vadd.f32 0.0, %v1677
  %v1679 = vpop.f32.mrb[0].mxu0
  %v1680 = vadd.f32 0.0, %v1679
  %v1681 = vpop.f32.mrb[0].mxu0
  %v1682 = vadd.f32 0.0, %v1681
  %1683 = vmatprep.mubr.bf16.mxu0 %v924
  %1684 = vmatmul.mubr.bf16.gmra.mrb[0].mxu0 %v923
  %v1685 = vpop.f32.mrb[0].mxu0
  %v1686 = vadd.f32 0.0, %v1685
  %v1687 = vpop.f32.mrb[0].mxu0
  %v1688 = vadd.f32 0.0, %v1687
  %v1689 = vpop.f32.mrb[0].mxu0
  %v1690 = vadd.f32 0.0, %v1689
  %v1691 = vpop.f32.mrb[0].mxu0
  %v1692 = vadd.f32 0.0, %v1691
  %1693 = vmatprep.mubr.bf16.mxu0 %v926
  %1694 = vmatmul.mubr.bf16.gmra.mrb[0].mxu0 %v925
  %v1695 = vpop.f32.mrb[0].mxu0
  %v1696 = vadd.f32 0.0, %v1695
  %v1697 = vpop.f32.mrb[0].mxu0
  %v1698 = vadd.f32 0.0, %v1697
  %v1699 = vpop.f32.mrb[0].mxu0
  %v1700 = vadd.f32 0.0, %v1699
  %v1701 = vpop.f32.mrb[0].mxu0
  %v1702 = vadd.f32 0.0, %v1701
  %1703 = vmatprep.mubr.bf16.mxu0 %v928
  %1704 = vmatmul.mubr.bf16.gmra.mrb[0].mxu0 %v927
  %v1705 = vpop.f32.mrb[0].mxu0
  %v1706 = vadd.f32 0.0, %v1705
  %v1707 = vpop.f32.mrb[0].mxu0
  %v1708 = vadd.f32 0.0, %v1707
  %v1709 = vpop.f32.mrb[0].mxu0
  %v1710 = vadd.f32 0.0, %v1709
  %v1711 = vpop.f32.mrb[0].mxu0
  %v1712 = vadd.f32 0.0, %v1711
  %1713 = vmatprep.mubr.bf16.mxu0 %v930
  %1714 = vmatmul.mubr.bf16.gmra.mrb[0].mxu0 %v929
  %v1715 = vpop.f32.mrb[0].mxu0
  %v1716 = vadd.f32 0.0, %v1715
  %v1717 = vpop.f32.mrb[0].mxu0
  %v1718 = vadd.f32 0.0, %v1717
  %v1719 = vpop.f32.mrb[0].mxu0
  %v1720 = vadd.f32 0.0, %v1719
  %v1721 = vpop.f32.mrb[0].mxu0
  %v1722 = vadd.f32 0.0, %v1721
  %1723 = vmatprep.mubr.bf16.mxu0 %v932
  %1724 = vmatmul.mubr.bf16.gmra.mrb[0].mxu0 %v931
  %v1725 = vpop.f32.mrb[0].mxu0
  %v1726 = vadd.f32 0.0, %v1725
  %v1727 = vpop.f32.mrb[0].mxu0
  %v1728 = vadd.f32 0.0, %v1727
  %v1729 = vpop.f32.mrb[0].mxu0
  %v1730 = vadd.f32 0.0, %v1729
  %v1731 = vpop.f32.mrb[0].mxu0
  %v1732 = vadd.f32 0.0, %v1731
  %1733 = vmatprep.mubr.bf16.mxu0 %v934
  %1734 = vmatmul.mubr.bf16.gmra.mrb[0].mxu0 %v933
  %v1735 = vpop.f32.mrb[0].mxu0
  %v1736 = vadd.f32 0.0, %v1735
  %v1737 = vpop.f32.mrb[0].mxu0
  %v1738 = vadd.f32 0.0, %v1737
  %v1739 = vpop.f32.mrb[0].mxu0
  %v1740 = vadd.f32 0.0, %v1739
  %v1741 = vpop.f32.mrb[0].mxu0
  %v1742 = vadd.f32 0.0, %v1741
  %1743 = vmatprep.mubr.bf16.mxu0 %v936
  %1744 = vmatmul.mubr.bf16.gmra.mrb[0].mxu0 %v935
  %v1745 = vpop.f32.mrb[0].mxu0
  %v1746 = vadd.f32 0.0, %v1745
  %v1747 = vpop.f32.mrb[0].mxu0
  %v1748 = vadd.f32 0.0, %v1747
  %v1749 = vpop.f32.mrb[0].mxu0
  %v1750 = vadd.f32 0.0, %v1749
  %v1751 = vpop.f32.mrb[0].mxu0
  %v1752 = vadd.f32 0.0, %v1751
  %1753 = vmatprep.mubr.bf16.mxu0 %v938
  %1754 = vmatmul.mubr.bf16.gmra.mrb[0].mxu0 %v937
  %v1755 = vpop.f32.mrb[0].mxu0
  %v1756 = vadd.f32 0.0, %v1755
  %v1757 = vpop.f32.mrb[0].mxu0
  %v1758 = vadd.f32 0.0, %v1757
  %v1759 = vpop.f32.mrb[0].mxu0
  %v1760 = vadd.f32 0.0, %v1759
  %v1761 = vpop.f32.mrb[0].mxu0
  %v1762 = vadd.f32 0.0, %v1761
  %1763 = vmatprep.mubr.bf16.mxu0 %v940
  %1764 = vmatmul.mubr.bf16.gmra.mrb[0].mxu0 %v939
  %v1765 = vpop.f32.mrb[0].mxu0
  %v1766 = vadd.f32 0.0, %v1765
  %v1767 = vpop.f32.mrb[0].mxu0
  %v1768 = vadd.f32 0.0, %v1767
  %v1769 = vpop.f32.mrb[0].mxu0
  %v1770 = vadd.f32 0.0, %v1769
  %v1771 = vpop.f32.mrb[0].mxu0
  %v1772 = vadd.f32 0.0, %v1771
  %1773 = vmatprep.mubr.bf16.mxu0 %v942
  %1774 = vmatmul.mubr.bf16.gmra.mrb[0].mxu0 %v941
  %v1775 = vpop.f32.mrb[0].mxu0
  %v1776 = vadd.f32 0.0, %v1775
  %v1777 = vpop.f32.mrb[0].mxu0
  %v1778 = vadd.f32 0.0, %v1777
  %v1779 = vpop.f32.mrb[0].mxu0
  %v1780 = vadd.f32 0.0, %v1779
  %v1781 = vpop.f32.mrb[0].mxu0
  %v1782 = vadd.f32 0.0, %v1781
  %1783 = vmatprep.mubr.bf16.mxu0 %v944
  %1784 = vmatmul.mubr.bf16.gmra.mrb[0].mxu0 %v943
  %v1785 = vpop.f32.mrb[0].mxu0
  %v1786 = vadd.f32 0.0, %v1785
  %v1787 = vpop.f32.mrb[0].mxu0
  %v1788 = vadd.f32 0.0, %v1787
  %v1789 = vpop.f32.mrb[0].mxu0
  %v1790 = vadd.f32 0.0, %v1789
  %v1791 = vpop.f32.mrb[0].mxu0
  %v1792 = vadd.f32 0.0, %v1791
  %1793 = vmatprep.mubr.bf16.mxu0 %v946
  %1794 = vmatmul.mubr.bf16.gmra.mrb[0].mxu0 %v945
  %v1795 = vpop.f32.mrb[0].mxu0
  %v1796 = vadd.f32 0.0, %v1795
  %v1797 = vpop.f32.mrb[0].mxu0
  %v1798 = vadd.f32 0.0, %v1797
  %v1799 = vpop.f32.mrb[0].mxu0
  %v1800 = vadd.f32 0.0, %v1799
  %v1801 = vpop.f32.mrb[0].mxu0
  %v1802 = vadd.f32 0.0, %v1801
  %1803 = vmatprep.mubr.bf16.mxu0 %v948
  %1804 = vmatmul.mubr.bf16.gmra.mrb[0].mxu0 %v947
  %v1805 = vpop.f32.mrb[0].mxu0
  %v1806 = vadd.f32 0.0, %v1805
  %v1807 = vpop.f32.mrb[0].mxu0
  %v1808 = vadd.f32 0.0, %v1807
  %v1809 = vpop.f32.mrb[0].mxu0
  %v1810 = vadd.f32 0.0, %v1809
  %v1811 = vpop.f32.mrb[0].mxu0
  %v1812 = vadd.f32 0.0, %v1811
  %1813 = vdwg.mxu0
  %v1842 = vcombine.low %v401, %v403
  %v1843 = vcombine.high %v401, %v403
  %v1845 = vunpack.c.l.s4 1966171168
  %v1846 = vunpack.c.0.s8 %v1845
  %v1847 = vlaneseq
  %v1848 = vshrl.u32 %v1847, 7
  %v1849 = vsub.s32 %v1846, %v1848
  %v1850 = vrot.slane %v1842, %v1849
  %v1852 = vunpack.c.l.s4 1966171168
  %v1853 = vunpack.c.0.s8 %v1852
  %v1854 = vlaneseq
  %v1855 = vshrl.u32 %v1854, 7
  %v1856 = vsub.s32 %v1853, %v1855
  %v1857 = vrot.slane %v1843, %v1856
  %v1858 = vcombine.high %v1850, %v1850
  %v1859 = vcombine.high %v1857, %v1857
  %v1861 = vunpack.c.l.s4 1966171168
  %v1862 = vunpack.c.0.s8 %v1861
  %v1863 = vlaneseq
  %v1864 = vshrl.u32 %v1863, 7
  %v1865 = vsub.s32 %v1862, %v1864
  %v1866 = vrot.slane %v1850, %v1865
  %v1868 = vunpack.c.l.s4 1966171168
  %v1869 = vunpack.c.0.s8 %v1868
  %v1870 = vlaneseq
  %v1871 = vshrl.u32 %v1870, 7
  %v1872 = vsub.s32 %v1869, %v1871
  %v1873 = vrot.slane %v1857, %v1872
  %v1875 = vunpack.c.l.s4 1966171168
  %v1876 = vunpack.c.0.s8 %v1875
  %v1877 = vlaneseq
  %v1878 = vshrl.u32 %v1877, 7
  %v1879 = vsub.s32 %v1876, %v1878
  %v1880 = vrot.slane %v1858, %v1879
  %v1882 = vunpack.c.l.s4 1966171168
  %v1883 = vunpack.c.0.s8 %v1882
  %v1884 = vlaneseq
  %v1885 = vshrl.u32 %v1884, 7
  %v1886 = vsub.s32 %v1883, %v1885
  %v1887 = vrot.slane %v1859, %v1886
  %v1888 = vcombine.high %v1866, %v1866
  %v1889 = vcombine.high %v1873, %v1873
  %v1890 = vcombine.high %v1880, %v1880
  %v1891 = vcombine.high %v1887, %v1887
  %v1892 = vcombine.low %v405, %v407
  %v1893 = vcombine.high %v405, %v407
  %v1895 = vunpack.c.l.s4 1966171168
  %v1896 = vunpack.c.0.s8 %v1895
  %v1897 = vlaneseq
  %v1898 = vshrl.u32 %v1897, 7
  %v1899 = vsub.s32 %v1896, %v1898
  %v1900 = vrot.slane %v1892, %v1899
  %v1902 = vunpack.c.l.s4 1966171168
  %v1903 = vunpack.c.0.s8 %v1902
  %v1904 = vlaneseq
  %v1905 = vshrl.u32 %v1904, 7
  %v1906 = vsub.s32 %v1903, %v1905
  %v1907 = vrot.slane %v1893, %v1906
  %v1908 = vcombine.high %v1900, %v1900
  %v1909 = vcombine.high %v1907, %v1907
  %v1911 = vunpack.c.l.s4 1966171168
  %v1912 = vunpack.c.0.s8 %v1911
  %v1913 = vlaneseq
  %v1914 = vshrl.u32 %v1913, 7
  %v1915 = vsub.s32 %v1912, %v1914
  %v1916 = vrot.slane %v1900, %v1915
  %v1918 = vunpack.c.l.s4 1966171168
  %v1919 = vunpack.c.0.s8 %v1918
  %v1920 = vlaneseq
  %v1921 = vshrl.u32 %v1920, 7
  %v1922 = vsub.s32 %v1919, %v1921
  %v1923 = vrot.slane %v1907, %v1922
  %v1925 = vunpack.c.l.s4 1966171168
  %v1926 = vunpack.c.0.s8 %v1925
  %v1927 = vlaneseq
  %v1928 = vshrl.u32 %v1927, 7
  %v1929 = vsub.s32 %v1926, %v1928
  %v1930 = vrot.slane %v1908, %v1929
  %v1932 = vunpack.c.l.s4 1966171168
  %v1933 = vunpack.c.0.s8 %v1932
  %v1934 = vlaneseq
  %v1935 = vshrl.u32 %v1934, 7
  %v1936 = vsub.s32 %v1933, %v1935
  %v1937 = vrot.slane %v1909, %v1936
  %v1938 = vcombine.high %v1916, %v1916
  %v1939 = vcombine.high %v1923, %v1923
  %v1940 = vcombine.high %v1930, %v1930
  %v1941 = vcombine.high %v1937, %v1937
  %v1942 = vcombine.low %v411, %v413
  %v1943 = vcombine.high %v411, %v413
  %v1945 = vunpack.c.l.s4 1966171168
  %v1946 = vunpack.c.0.s8 %v1945
  %v1947 = vlaneseq
  %v1948 = vshrl.u32 %v1947, 7
  %v1949 = vsub.s32 %v1946, %v1948
  %v1950 = vrot.slane %v1942, %v1949
  %v1952 = vunpack.c.l.s4 1966171168
  %v1953 = vunpack.c.0.s8 %v1952
  %v1954 = vlaneseq
  %v1955 = vshrl.u32 %v1954, 7
  %v1956 = vsub.s32 %v1953, %v1955
  %v1957 = vrot.slane %v1943, %v1956
  %v1958 = vcombine.high %v1950, %v1950
  %v1959 = vcombine.high %v1957, %v1957
  %v1961 = vunpack.c.l.s4 1966171168
  %v1962 = vunpack.c.0.s8 %v1961
  %v1963 = vlaneseq
  %v1964 = vshrl.u32 %v1963, 7
  %v1965 = vsub.s32 %v1962, %v1964
  %v1966 = vrot.slane %v1950, %v1965
  %v1968 = vunpack.c.l.s4 1966171168
  %v1969 = vunpack.c.0.s8 %v1968
  %v1970 = vlaneseq
  %v1971 = vshrl.u32 %v1970, 7
  %v1972 = vsub.s32 %v1969, %v1971
  %v1973 = vrot.slane %v1957, %v1972
  %v1975 = vunpack.c.l.s4 1966171168
  %v1976 = vunpack.c.0.s8 %v1975
  %v1977 = vlaneseq
  %v1978 = vshrl.u32 %v1977, 7
  %v1979 = vsub.s32 %v1976, %v1978
  %v1980 = vrot.slane %v1958, %v1979
  %v1982 = vunpack.c.l.s4 1966171168
  %v1983 = vunpack.c.0.s8 %v1982
  %v1984 = vlaneseq
  %v1985 = vshrl.u32 %v1984, 7
  %v1986 = vsub.s32 %v1983, %v1985
  %v1987 = vrot.slane %v1959, %v1986
  %v1988 = vcombine.high %v1966, %v1966
  %v1989 = vcombine.high %v1973, %v1973
  %v1990 = vcombine.high %v1980, %v1980
  %v1991 = vcombine.high %v1987, %v1987
  %v1992 = vcombine.low %v415, %v417
  %v1993 = vcombine.high %v415, %v417
  %v1995 = vunpack.c.l.s4 1966171168
  %v1996 = vunpack.c.0.s8 %v1995
  %v1997 = vlaneseq
  %v1998 = vshrl.u32 %v1997, 7
  %v1999 = vsub.s32 %v1996, %v1998
  %v2000 = vrot.slane %v1992, %v1999
  %v2002 = vunpack.c.l.s4 1966171168
  %v2003 = vunpack.c.0.s8 %v2002
  %v2004 = vlaneseq
  %v2005 = vshrl.u32 %v2004, 7
  %v2006 = vsub.s32 %v2003, %v2005
  %v2007 = vrot.slane %v1993, %v2006
  %v2008 = vcombine.high %v2000, %v2000
  %v2009 = vcombine.high %v2007, %v2007
  %v2011 = vunpack.c.l.s4 1966171168
  %v2012 = vunpack.c.0.s8 %v2011
  %v2013 = vlaneseq
  %v2014 = vshrl.u32 %v2013, 7
  %v2015 = vsub.s32 %v2012, %v2014
  %v2016 = vrot.slane %v2000, %v2015
  %v2018 = vunpack.c.l.s4 1966171168
  %v2019 = vunpack.c.0.s8 %v2018
  %v2020 = vlaneseq
  %v2021 = vshrl.u32 %v2020, 7
  %v2022 = vsub.s32 %v2019, %v2021
  %v2023 = vrot.slane %v2007, %v2022
  %v2025 = vunpack.c.l.s4 1966171168
  %v2026 = vunpack.c.0.s8 %v2025
  %v2027 = vlaneseq
  %v2028 = vshrl.u32 %v2027, 7
  %v2029 = vsub.s32 %v2026, %v2028
  %v2030 = vrot.slane %v2008, %v2029
  %v2032 = vunpack.c.l.s4 1966171168
  %v2033 = vunpack.c.0.s8 %v2032
  %v2034 = vlaneseq
  %v2035 = vshrl.u32 %v2034, 7
  %v2036 = vsub.s32 %v2033, %v2035
  %v2037 = vrot.slane %v2009, %v2036
  %v2038 = vcombine.high %v2016, %v2016
  %v2039 = vcombine.high %v2023, %v2023
  %v2040 = vcombine.high %v2030, %v2030
  %v2041 = vcombine.high %v2037, %v2037
  %v2042 = vcombine.low %v421, %v423
  %v2043 = vcombine.high %v421, %v423
  %v2045 = vunpack.c.l.s4 1966171168
  %v2046 = vunpack.c.0.s8 %v2045
  %v2047 = vlaneseq
  %v2048 = vshrl.u32 %v2047, 7
  %v2049 = vsub.s32 %v2046, %v2048
  %v2050 = vrot.slane %v2042, %v2049
  %v2052 = vunpack.c.l.s4 1966171168
  %v2053 = vunpack.c.0.s8 %v2052
  %v2054 = vlaneseq
  %v2055 = vshrl.u32 %v2054, 7
  %v2056 = vsub.s32 %v2053, %v2055
  %v2057 = vrot.slane %v2043, %v2056
  %v2058 = vcombine.high %v2050, %v2050
  %v2059 = vcombine.high %v2057, %v2057
  %v2061 = vunpack.c.l.s4 1966171168
  %v2062 = vunpack.c.0.s8 %v2061
  %v2063 = vlaneseq
  %v2064 = vshrl.u32 %v2063, 7
  %v2065 = vsub.s32 %v2062, %v2064
  %v2066 = vrot.slane %v2050, %v2065
  %v2068 = vunpack.c.l.s4 1966171168
  %v2069 = vunpack.c.0.s8 %v2068
  %v2070 = vlaneseq
  %v2071 = vshrl.u32 %v2070, 7
  %v2072 = vsub.s32 %v2069, %v2071
  %v2073 = vrot.slane %v2057, %v2072
  %v2075 = vunpack.c.l.s4 1966171168
  %v2076 = vunpack.c.0.s8 %v2075
  %v2077 = vlaneseq
  %v2078 = vshrl.u32 %v2077, 7
  %v2079 = vsub.s32 %v2076, %v2078
  %v2080 = vrot.slane %v2058, %v2079
  %v2082 = vunpack.c.l.s4 1966171168
  %v2083 = vunpack.c.0.s8 %v2082
  %v2084 = vlaneseq
  %v2085 = vshrl.u32 %v2084, 7
  %v2086 = vsub.s32 %v2083, %v2085
  %v2087 = vrot.slane %v2059, %v2086
  %v2088 = vcombine.high %v2066, %v2066
  %v2089 = vcombine.high %v2073, %v2073
  %v2090 = vcombine.high %v2080, %v2080
  %v2091 = vcombine.high %v2087, %v2087
  %v2092 = vcombine.low %v425, %v427
  %v2093 = vcombine.high %v425, %v427
  %v2095 = vunpack.c.l.s4 1966171168
  %v2096 = vunpack.c.0.s8 %v2095
  %v2097 = vlaneseq
  %v2098 = vshrl.u32 %v2097, 7
  %v2099 = vsub.s32 %v2096, %v2098
  %v2100 = vrot.slane %v2092, %v2099
  %v2102 = vunpack.c.l.s4 1966171168
  %v2103 = vunpack.c.0.s8 %v2102
  %v2104 = vlaneseq
  %v2105 = vshrl.u32 %v2104, 7
  %v2106 = vsub.s32 %v2103, %v2105
  %v2107 = vrot.slane %v2093, %v2106
  %v2108 = vcombine.high %v2100, %v2100
  %v2109 = vcombine.high %v2107, %v2107
  %v2111 = vunpack.c.l.s4 1966171168
  %v2112 = vunpack.c.0.s8 %v2111
  %v2113 = vlaneseq
  %v2114 = vshrl.u32 %v2113, 7
  %v2115 = vsub.s32 %v2112, %v2114
  %v2116 = vrot.slane %v2100, %v2115
  %v2118 = vunpack.c.l.s4 1966171168
  %v2119 = vunpack.c.0.s8 %v2118
  %v2120 = vlaneseq
  %v2121 = vshrl.u32 %v2120, 7
  %v2122 = vsub.s32 %v2119, %v2121
  %v2123 = vrot.slane %v2107, %v2122
  %v2125 = vunpack.c.l.s4 1966171168
  %v2126 = vunpack.c.0.s8 %v2125
  %v2127 = vlaneseq
  %v2128 = vshrl.u32 %v2127, 7
  %v2129 = vsub.s32 %v2126, %v2128
  %v2130 = vrot.slane %v2108, %v2129
  %v2132 = vunpack.c.l.s4 1966171168
  %v2133 = vunpack.c.0.s8 %v2132
  %v2134 = vlaneseq
  %v2135 = vshrl.u32 %v2134, 7
  %v2136 = vsub.s32 %v2133, %v2135
  %v2137 = vrot.slane %v2109, %v2136
  %v2138 = vcombine.high %v2116, %v2116
  %v2139 = vcombine.high %v2123, %v2123
  %v2140 = vcombine.high %v2130, %v2130
  %v2141 = vcombine.high %v2137, %v2137
  %v2142 = vcombine.low %v431, %v433
  %v2143 = vcombine.high %v431, %v433
  %v2145 = vunpack.c.l.s4 1966171168
  %v2146 = vunpack.c.0.s8 %v2145
  %v2147 = vlaneseq
  %v2148 = vshrl.u32 %v2147, 7
  %v2149 = vsub.s32 %v2146, %v2148
  %v2150 = vrot.slane %v2142, %v2149
  %v2152 = vunpack.c.l.s4 1966171168
  %v2153 = vunpack.c.0.s8 %v2152
  %v2154 = vlaneseq
  %v2155 = vshrl.u32 %v2154, 7
  %v2156 = vsub.s32 %v2153, %v2155
  %v2157 = vrot.slane %v2143, %v2156
  %v2158 = vcombine.high %v2150, %v2150
  %v2159 = vcombine.high %v2157, %v2157
  %v2161 = vunpack.c.l.s4 1966171168
  %v2162 = vunpack.c.0.s8 %v2161
  %v2163 = vlaneseq
  %v2164 = vshrl.u32 %v2163, 7
  %v2165 = vsub.s32 %v2162, %v2164
  %v2166 = vrot.slane %v2150, %v2165
  %v2168 = vunpack.c.l.s4 1966171168
  %v2169 = vunpack.c.0.s8 %v2168
  %v2170 = vlaneseq
  %v2171 = vshrl.u32 %v2170, 7
  %v2172 = vsub.s32 %v2169, %v2171
  %v2173 = vrot.slane %v2157, %v2172
  %v2175 = vunpack.c.l.s4 1966171168
  %v2176 = vunpack.c.0.s8 %v2175
  %v2177 = vlaneseq
  %v2178 = vshrl.u32 %v2177, 7
  %v2179 = vsub.s32 %v2176, %v2178
  %v2180 = vrot.slane %v2158, %v2179
  %v2182 = vunpack.c.l.s4 1966171168
  %v2183 = vunpack.c.0.s8 %v2182
  %v2184 = vlaneseq
  %v2185 = vshrl.u32 %v2184, 7
  %v2186 = vsub.s32 %v2183, %v2185
  %v2187 = vrot.slane %v2159, %v2186
  %v2188 = vcombine.high %v2166, %v2166
  %v2189 = vcombine.high %v2173, %v2173
  %v2190 = vcombine.high %v2180, %v2180
  %v2191 = vcombine.high %v2187, %v2187
  %v2192 = vcombine.low %v435, %v437
  %v2193 = vcombine.high %v435, %v437
  %v2195 = vunpack.c.l.s4 1966171168
  %v2196 = vunpack.c.0.s8 %v2195
  %v2197 = vlaneseq
  %v2198 = vshrl.u32 %v2197, 7
  %v2199 = vsub.s32 %v2196, %v2198
  %v2200 = vrot.slane %v2192, %v2199
  %v2202 = vunpack.c.l.s4 1966171168
  %v2203 = vunpack.c.0.s8 %v2202
  %v2204 = vlaneseq
  %v2205 = vshrl.u32 %v2204, 7
  %v2206 = vsub.s32 %v2203, %v2205
  %v2207 = vrot.slane %v2193, %v2206
  %v2208 = vcombine.high %v2200, %v2200
  %v2209 = vcombine.high %v2207, %v2207
  %v2211 = vunpack.c.l.s4 1966171168
  %v2212 = vunpack.c.0.s8 %v2211
  %v2213 = vlaneseq
  %v2214 = vshrl.u32 %v2213, 7
  %v2215 = vsub.s32 %v2212, %v2214
  %v2216 = vrot.slane %v2200, %v2215
  %v2218 = vunpack.c.l.s4 1966171168
  %v2219 = vunpack.c.0.s8 %v2218
  %v2220 = vlaneseq
  %v2221 = vshrl.u32 %v2220, 7
  %v2222 = vsub.s32 %v2219, %v2221
  %v2223 = vrot.slane %v2207, %v2222
  %v2225 = vunpack.c.l.s4 1966171168
  %v2226 = vunpack.c.0.s8 %v2225
  %v2227 = vlaneseq
  %v2228 = vshrl.u32 %v2227, 7
  %v2229 = vsub.s32 %v2226, %v2228
  %v2230 = vrot.slane %v2208, %v2229
  %v2232 = vunpack.c.l.s4 1966171168
  %v2233 = vunpack.c.0.s8 %v2232
  %v2234 = vlaneseq
  %v2235 = vshrl.u32 %v2234, 7
  %v2236 = vsub.s32 %v2233, %v2235
  %v2237 = vrot.slane %v2209, %v2236
  %v2238 = vcombine.high %v2216, %v2216
  %v2239 = vcombine.high %v2223, %v2223
  %v2240 = vcombine.high %v2230, %v2230
  %v2241 = vcombine.high %v2237, %v2237
  %v2242 = vcombine.low %v441, %v443
  %v2243 = vcombine.high %v441, %v443
  %v2245 = vunpack.c.l.s4 1966171168
  %v2246 = vunpack.c.0.s8 %v2245
  %v2247 = vlaneseq
  %v2248 = vshrl.u32 %v2247, 7
  %v2249 = vsub.s32 %v2246, %v2248
  %v2250 = vrot.slane %v2242, %v2249
  %v2252 = vunpack.c.l.s4 1966171168
  %v2253 = vunpack.c.0.s8 %v2252
  %v2254 = vlaneseq
  %v2255 = vshrl.u32 %v2254, 7
  %v2256 = vsub.s32 %v2253, %v2255
  %v2257 = vrot.slane %v2243, %v2256
  %v2258 = vcombine.high %v2250, %v2250
  %v2259 = vcombine.high %v2257, %v2257
  %v2261 = vunpack.c.l.s4 1966171168
  %v2262 = vunpack.c.0.s8 %v2261
  %v2263 = vlaneseq
  %v2264 = vshrl.u32 %v2263, 7
  %v2265 = vsub.s32 %v2262, %v2264
  %v2266 = vrot.slane %v2250, %v2265
  %v2268 = vunpack.c.l.s4 1966171168
  %v2269 = vunpack.c.0.s8 %v2268
  %v2270 = vlaneseq
  %v2271 = vshrl.u32 %v2270, 7
  %v2272 = vsub.s32 %v2269, %v2271
  %v2273 = vrot.slane %v2257, %v2272
  %v2275 = vunpack.c.l.s4 1966171168
  %v2276 = vunpack.c.0.s8 %v2275
  %v2277 = vlaneseq
  %v2278 = vshrl.u32 %v2277, 7
  %v2279 = vsub.s32 %v2276, %v2278
  %v2280 = vrot.slane %v2258, %v2279
  %v2282 = vunpack.c.l.s4 1966171168
  %v2283 = vunpack.c.0.s8 %v2282
  %v2284 = vlaneseq
  %v2285 = vshrl.u32 %v2284, 7
  %v2286 = vsub.s32 %v2283, %v2285
  %v2287 = vrot.slane %v2259, %v2286
  %v2288 = vcombine.high %v2266, %v2266
  %v2289 = vcombine.high %v2273, %v2273
  %v2290 = vcombine.high %v2280, %v2280
  %v2291 = vcombine.high %v2287, %v2287
  %v2292 = vcombine.low %v445, %v447
  %v2293 = vcombine.high %v445, %v447
  %v2295 = vunpack.c.l.s4 1966171168
  %v2296 = vunpack.c.0.s8 %v2295
  %v2297 = vlaneseq
  %v2298 = vshrl.u32 %v2297, 7
  %v2299 = vsub.s32 %v2296, %v2298
  %v2300 = vrot.slane %v2292, %v2299
  %v2302 = vunpack.c.l.s4 1966171168
  %v2303 = vunpack.c.0.s8 %v2302
  %v2304 = vlaneseq
  %v2305 = vshrl.u32 %v2304, 7
  %v2306 = vsub.s32 %v2303, %v2305
  %v2307 = vrot.slane %v2293, %v2306
  %v2308 = vcombine.high %v2300, %v2300
  %v2309 = vcombine.high %v2307, %v2307
  %v2311 = vunpack.c.l.s4 1966171168
  %v2312 = vunpack.c.0.s8 %v2311
  %v2313 = vlaneseq
  %v2314 = vshrl.u32 %v2313, 7
  %v2315 = vsub.s32 %v2312, %v2314
  %v2316 = vrot.slane %v2300, %v2315
  %v2318 = vunpack.c.l.s4 1966171168
  %v2319 = vunpack.c.0.s8 %v2318
  %v2320 = vlaneseq
  %v2321 = vshrl.u32 %v2320, 7
  %v2322 = vsub.s32 %v2319, %v2321
  %v2323 = vrot.slane %v2307, %v2322
  %v2325 = vunpack.c.l.s4 1966171168
  %v2326 = vunpack.c.0.s8 %v2325
  %v2327 = vlaneseq
  %v2328 = vshrl.u32 %v2327, 7
  %v2329 = vsub.s32 %v2326, %v2328
  %v2330 = vrot.slane %v2308, %v2329
  %v2332 = vunpack.c.l.s4 1966171168
  %v2333 = vunpack.c.0.s8 %v2332
  %v2334 = vlaneseq
  %v2335 = vshrl.u32 %v2334, 7
  %v2336 = vsub.s32 %v2333, %v2335
  %v2337 = vrot.slane %v2309, %v2336
  %v2338 = vcombine.high %v2316, %v2316
  %v2339 = vcombine.high %v2323, %v2323
  %v2340 = vcombine.high %v2330, %v2330
  %v2341 = vcombine.high %v2337, %v2337
  %v2342 = vcombine.low %v451, %v453
  %v2343 = vcombine.high %v451, %v453
  %v2345 = vunpack.c.l.s4 1966171168
  %v2346 = vunpack.c.0.s8 %v2345
  %v2347 = vlaneseq
  %v2348 = vshrl.u32 %v2347, 7
  %v2349 = vsub.s32 %v2346, %v2348
  %v2350 = vrot.slane %v2342, %v2349
  %v2352 = vunpack.c.l.s4 1966171168
  %v2353 = vunpack.c.0.s8 %v2352
  %v2354 = vlaneseq
  %v2355 = vshrl.u32 %v2354, 7
  %v2356 = vsub.s32 %v2353, %v2355
  %v2357 = vrot.slane %v2343, %v2356
  %v2358 = vcombine.high %v2350, %v2350
  %v2359 = vcombine.high %v2357, %v2357
  %v2361 = vunpack.c.l.s4 1966171168
  %v2362 = vunpack.c.0.s8 %v2361
  %v2363 = vlaneseq
  %v2364 = vshrl.u32 %v2363, 7
  %v2365 = vsub.s32 %v2362, %v2364
  %v2366 = vrot.slane %v2350, %v2365
  %v2368 = vunpack.c.l.s4 1966171168
  %v2369 = vunpack.c.0.s8 %v2368
  %v2370 = vlaneseq
  %v2371 = vshrl.u32 %v2370, 7
  %v2372 = vsub.s32 %v2369, %v2371
  %v2373 = vrot.slane %v2357, %v2372
  %v2375 = vunpack.c.l.s4 1966171168
  %v2376 = vunpack.c.0.s8 %v2375
  %v2377 = vlaneseq
  %v2378 = vshrl.u32 %v2377, 7
  %v2379 = vsub.s32 %v2376, %v2378
  %v2380 = vrot.slane %v2358, %v2379
  %v2382 = vunpack.c.l.s4 1966171168
  %v2383 = vunpack.c.0.s8 %v2382
  %v2384 = vlaneseq
  %v2385 = vshrl.u32 %v2384, 7
  %v2386 = vsub.s32 %v2383, %v2385
  %v2387 = vrot.slane %v2359, %v2386
  %v2388 = vcombine.high %v2366, %v2366
  %v2389 = vcombine.high %v2373, %v2373
  %v2390 = vcombine.high %v2380, %v2380
  %v2391 = vcombine.high %v2387, %v2387
  %v2392 = vcombine.low %v455, %v457
  %v2393 = vcombine.high %v455, %v457
  %v2395 = vunpack.c.l.s4 1966171168
  %v2396 = vunpack.c.0.s8 %v2395
  %v2397 = vlaneseq
  %v2398 = vshrl.u32 %v2397, 7
  %v2399 = vsub.s32 %v2396, %v2398
  %v2400 = vrot.slane %v2392, %v2399
  %v2402 = vunpack.c.l.s4 1966171168
  %v2403 = vunpack.c.0.s8 %v2402
  %v2404 = vlaneseq
  %v2405 = vshrl.u32 %v2404, 7
  %v2406 = vsub.s32 %v2403, %v2405
  %v2407 = vrot.slane %v2393, %v2406
  %v2408 = vcombine.high %v2400, %v2400
  %v2409 = vcombine.high %v2407, %v2407
  %v2411 = vunpack.c.l.s4 1966171168
  %v2412 = vunpack.c.0.s8 %v2411
  %v2413 = vlaneseq
  %v2414 = vshrl.u32 %v2413, 7
  %v2415 = vsub.s32 %v2412, %v2414
  %v2416 = vrot.slane %v2400, %v2415
  %v2418 = vunpack.c.l.s4 1966171168
  %v2419 = vunpack.c.0.s8 %v2418
  %v2420 = vlaneseq
  %v2421 = vshrl.u32 %v2420, 7
  %v2422 = vsub.s32 %v2419, %v2421
  %v2423 = vrot.slane %v2407, %v2422
  %v2425 = vunpack.c.l.s4 1966171168
  %v2426 = vunpack.c.0.s8 %v2425
  %v2427 = vlaneseq
  %v2428 = vshrl.u32 %v2427, 7
  %v2429 = vsub.s32 %v2426, %v2428
  %v2430 = vrot.slane %v2408, %v2429
  %v2432 = vunpack.c.l.s4 1966171168
  %v2433 = vunpack.c.0.s8 %v2432
  %v2434 = vlaneseq
  %v2435 = vshrl.u32 %v2434, 7
  %v2436 = vsub.s32 %v2433, %v2435
  %v2437 = vrot.slane %v2409, %v2436
  %v2438 = vcombine.high %v2416, %v2416
  %v2439 = vcombine.high %v2423, %v2423
  %v2440 = vcombine.high %v2430, %v2430
  %v2441 = vcombine.high %v2437, %v2437
  %v2442 = vcombine.low %v461, %v463
  %v2443 = vcombine.high %v461, %v463
  %v2445 = vunpack.c.l.s4 1966171168
  %v2446 = vunpack.c.0.s8 %v2445
  %v2447 = vlaneseq
  %v2448 = vshrl.u32 %v2447, 7
  %v2449 = vsub.s32 %v2446, %v2448
  %v2450 = vrot.slane %v2442, %v2449
  %v2452 = vunpack.c.l.s4 1966171168
  %v2453 = vunpack.c.0.s8 %v2452
  %v2454 = vlaneseq
  %v2455 = vshrl.u32 %v2454, 7
  %v2456 = vsub.s32 %v2453, %v2455
  %v2457 = vrot.slane %v2443, %v2456
  %v2458 = vcombine.high %v2450, %v2450
  %v2459 = vcombine.high %v2457, %v2457
  %v2461 = vunpack.c.l.s4 1966171168
  %v2462 = vunpack.c.0.s8 %v2461
  %v2463 = vlaneseq
  %v2464 = vshrl.u32 %v2463, 7
  %v2465 = vsub.s32 %v2462, %v2464
  %v2466 = vrot.slane %v2450, %v2465
  %v2468 = vunpack.c.l.s4 1966171168
  %v2469 = vunpack.c.0.s8 %v2468
  %v2470 = vlaneseq
  %v2471 = vshrl.u32 %v2470, 7
  %v2472 = vsub.s32 %v2469, %v2471
  %v2473 = vrot.slane %v2457, %v2472
  %v2475 = vunpack.c.l.s4 1966171168
  %v2476 = vunpack.c.0.s8 %v2475
  %v2477 = vlaneseq
  %v2478 = vshrl.u32 %v2477, 7
  %v2479 = vsub.s32 %v2476, %v2478
  %v2480 = vrot.slane %v2458, %v2479
  %v2482 = vunpack.c.l.s4 1966171168
  %v2483 = vunpack.c.0.s8 %v2482
  %v2484 = vlaneseq
  %v2485 = vshrl.u32 %v2484, 7
  %v2486 = vsub.s32 %v2483, %v2485
  %v2487 = vrot.slane %v2459, %v2486
  %v2488 = vcombine.high %v2466, %v2466
  %v2489 = vcombine.high %v2473, %v2473
  %v2490 = vcombine.high %v2480, %v2480
  %v2491 = vcombine.high %v2487, %v2487
  %v2492 = vcombine.low %v465, %v467
  %v2493 = vcombine.high %v465, %v467
  %v2495 = vunpack.c.l.s4 1966171168
  %v2496 = vunpack.c.0.s8 %v2495
  %v2497 = vlaneseq
  %v2498 = vshrl.u32 %v2497, 7
  %v2499 = vsub.s32 %v2496, %v2498
  %v2500 = vrot.slane %v2492, %v2499
  %v2502 = vunpack.c.l.s4 1966171168
  %v2503 = vunpack.c.0.s8 %v2502
  %v2504 = vlaneseq
  %v2505 = vshrl.u32 %v2504, 7
  %v2506 = vsub.s32 %v2503, %v2505
  %v2507 = vrot.slane %v2493, %v2506
  %v2508 = vcombine.high %v2500, %v2500
  %v2509 = vcombine.high %v2507, %v2507
  %v2511 = vunpack.c.l.s4 1966171168
  %v2512 = vunpack.c.0.s8 %v2511
  %v2513 = vlaneseq
  %v2514 = vshrl.u32 %v2513, 7
  %v2515 = vsub.s32 %v2512, %v2514
  %v2516 = vrot.slane %v2500, %v2515
  %v2518 = vunpack.c.l.s4 1966171168
  %v2519 = vunpack.c.0.s8 %v2518
  %v2520 = vlaneseq
  %v2521 = vshrl.u32 %v2520, 7
  %v2522 = vsub.s32 %v2519, %v2521
  %v2523 = vrot.slane %v2507, %v2522
  %v2525 = vunpack.c.l.s4 1966171168
  %v2526 = vunpack.c.0.s8 %v2525
  %v2527 = vlaneseq
  %v2528 = vshrl.u32 %v2527, 7
  %v2529 = vsub.s32 %v2526, %v2528
  %v2530 = vrot.slane %v2508, %v2529
  %v2532 = vunpack.c.l.s4 1966171168
  %v2533 = vunpack.c.0.s8 %v2532
  %v2534 = vlaneseq
  %v2535 = vshrl.u32 %v2534, 7
  %v2536 = vsub.s32 %v2533, %v2535
  %v2537 = vrot.slane %v2509, %v2536
  %v2538 = vcombine.high %v2516, %v2516
  %v2539 = vcombine.high %v2523, %v2523
  %v2540 = vcombine.high %v2530, %v2530
  %v2541 = vcombine.high %v2537, %v2537
  %v2542 = vlaneseq
  %v2543 = vshrl.u32 %v2542, 7
  %v2544 = vsub.s32 0, %v2543
  %v2545 = vrot.slane %v1866, %v2544
  %v2546 = vlaneseq
  %v2547 = vshrl.u32 %v2546, 7
  %v2548 = vsub.s32 1, %v2547
  %v2549 = vrot.slane %v1866, %v2548
  %v2550 = vlaneseq
  %v2551 = vshrl.u32 %v2550, 7
  %v2552 = vsub.s32 0, %v2551
  %v2553 = vrot.slane %v1880, %v2552
  %v2554 = vlaneseq
  %v2555 = vshrl.u32 %v2554, 7
  %v2556 = vsub.s32 1, %v2555
  %v2557 = vrot.slane %v1880, %v2556
  %v2558 = vlaneseq
  %v2559 = vshrl.u32 %v2558, 7
  %v2560 = vsub.s32 0, %v2559
  %v2561 = vrot.slane %v1888, %v2560
  %v2562 = vlaneseq
  %v2563 = vshrl.u32 %v2562, 7
  %v2564 = vsub.s32 1, %v2563
  %v2565 = vrot.slane %v1888, %v2564
  %v2566 = vlaneseq
  %v2567 = vshrl.u32 %v2566, 7
  %v2568 = vsub.s32 0, %v2567
  %v2569 = vrot.slane %v1890, %v2568
  %v2570 = vlaneseq
  %v2571 = vshrl.u32 %v2570, 7
  %v2572 = vsub.s32 1, %v2571
  %v2573 = vrot.slane %v1890, %v2572
  %v2574 = vlaneseq
  %v2575 = vshrl.u32 %v2574, 7
  %v2576 = vsub.s32 0, %v2575
  %v2577 = vrot.slane %v1873, %v2576
  %v2578 = vlaneseq
  %v2579 = vshrl.u32 %v2578, 7
  %v2580 = vsub.s32 1, %v2579
  %v2581 = vrot.slane %v1873, %v2580
  %v2582 = vlaneseq
  %v2583 = vshrl.u32 %v2582, 7
  %v2584 = vsub.s32 0, %v2583
  %v2585 = vrot.slane %v1887, %v2584
  %v2586 = vlaneseq
  %v2587 = vshrl.u32 %v2586, 7
  %v2588 = vsub.s32 1, %v2587
  %v2589 = vrot.slane %v1887, %v2588
  %v2590 = vlaneseq
  %v2591 = vshrl.u32 %v2590, 7
  %v2592 = vsub.s32 0, %v2591
  %v2593 = vrot.slane %v1889, %v2592
  %v2594 = vlaneseq
  %v2595 = vshrl.u32 %v2594, 7
  %v2596 = vsub.s32 1, %v2595
  %v2597 = vrot.slane %v1889, %v2596
  %v2598 = vlaneseq
  %v2599 = vshrl.u32 %v2598, 7
  %v2600 = vsub.s32 0, %v2599
  %v2601 = vrot.slane %v1891, %v2600
  %v2602 = vlaneseq
  %v2603 = vshrl.u32 %v2602, 7
  %v2604 = vsub.s32 1, %v2603
  %v2605 = vrot.slane %v1891, %v2604
  %v2606 = vlaneseq
  %v2607 = vshrl.u32 %v2606, 7
  %v2608 = vsub.s32 0, %v2607
  %v2609 = vrot.slane %v1916, %v2608
  %v2610 = vlaneseq
  %v2611 = vshrl.u32 %v2610, 7
  %v2612 = vsub.s32 1, %v2611
  %v2613 = vrot.slane %v1916, %v2612
  %v2614 = vlaneseq
  %v2615 = vshrl.u32 %v2614, 7
  %v2616 = vsub.s32 0, %v2615
  %v2617 = vrot.slane %v1930, %v2616
  %v2618 = vlaneseq
  %v2619 = vshrl.u32 %v2618, 7
  %v2620 = vsub.s32 1, %v2619
  %v2621 = vrot.slane %v1930, %v2620
  %v2622 = vlaneseq
  %v2623 = vshrl.u32 %v2622, 7
  %v2624 = vsub.s32 0, %v2623
  %v2625 = vrot.slane %v1938, %v2624
  %v2626 = vlaneseq
  %v2627 = vshrl.u32 %v2626, 7
  %v2628 = vsub.s32 1, %v2627
  %v2629 = vrot.slane %v1938, %v2628
  %v2630 = vlaneseq
  %v2631 = vshrl.u32 %v2630, 7
  %v2632 = vsub.s32 0, %v2631
  %v2633 = vrot.slane %v1940, %v2632
  %v2634 = vlaneseq
  %v2635 = vshrl.u32 %v2634, 7
  %v2636 = vsub.s32 1, %v2635
  %v2637 = vrot.slane %v1940, %v2636
  %v2638 = vlaneseq
  %v2639 = vshrl.u32 %v2638, 7
  %v2640 = vsub.s32 0, %v2639
  %v2641 = vrot.slane %v1923, %v2640
  %v2642 = vlaneseq
  %v2643 = vshrl.u32 %v2642, 7
  %v2644 = vsub.s32 1, %v2643
  %v2645 = vrot.slane %v1923, %v2644
  %v2646 = vlaneseq
  %v2647 = vshrl.u32 %v2646, 7
  %v2648 = vsub.s32 0, %v2647
  %v2649 = vrot.slane %v1937, %v2648
  %v2650 = vlaneseq
  %v2651 = vshrl.u32 %v2650, 7
  %v2652 = vsub.s32 1, %v2651
  %v2653 = vrot.slane %v1937, %v2652
  %v2654 = vlaneseq
  %v2655 = vshrl.u32 %v2654, 7
  %v2656 = vsub.s32 0, %v2655
  %v2657 = vrot.slane %v1939, %v2656
  %v2658 = vlaneseq
  %v2659 = vshrl.u32 %v2658, 7
  %v2660 = vsub.s32 1, %v2659
  %v2661 = vrot.slane %v1939, %v2660
  %v2662 = vlaneseq
  %v2663 = vshrl.u32 %v2662, 7
  %v2664 = vsub.s32 0, %v2663
  %v2665 = vrot.slane %v1941, %v2664
  %v2666 = vlaneseq
  %v2667 = vshrl.u32 %v2666, 7
  %v2668 = vsub.s32 1, %v2667
  %v2669 = vrot.slane %v1941, %v2668
  %v2670 = vlaneseq
  %v2671 = vshrl.u32 %v2670, 7
  %v2672 = vsub.s32 0, %v2671
  %v2673 = vrot.slane %v1966, %v2672
  %v2674 = vlaneseq
  %v2675 = vshrl.u32 %v2674, 7
  %v2676 = vsub.s32 1, %v2675
  %v2677 = vrot.slane %v1966, %v2676
  %v2678 = vlaneseq
  %v2679 = vshrl.u32 %v2678, 7
  %v2680 = vsub.s32 0, %v2679
  %v2681 = vrot.slane %v1980, %v2680
  %v2682 = vlaneseq
  %v2683 = vshrl.u32 %v2682, 7
  %v2684 = vsub.s32 1, %v2683
  %v2685 = vrot.slane %v1980, %v2684
  %v2686 = vlaneseq
  %v2687 = vshrl.u32 %v2686, 7
  %v2688 = vsub.s32 0, %v2687
  %v2689 = vrot.slane %v1988, %v2688
  %v2690 = vlaneseq
  %v2691 = vshrl.u32 %v2690, 7
  %v2692 = vsub.s32 1, %v2691
  %v2693 = vrot.slane %v1988, %v2692
  %v2694 = vlaneseq
  %v2695 = vshrl.u32 %v2694, 7
  %v2696 = vsub.s32 0, %v2695
  %v2697 = vrot.slane %v1990, %v2696
  %v2698 = vlaneseq
  %v2699 = vshrl.u32 %v2698, 7
  %v2700 = vsub.s32 1, %v2699
  %v2701 = vrot.slane %v1990, %v2700
  %v2702 = vlaneseq
  %v2703 = vshrl.u32 %v2702, 7
  %v2704 = vsub.s32 0, %v2703
  %v2705 = vrot.slane %v1973, %v2704
  %v2706 = vlaneseq
  %v2707 = vshrl.u32 %v2706, 7
  %v2708 = vsub.s32 1, %v2707
  %v2709 = vrot.slane %v1973, %v2708
  %v2710 = vlaneseq
  %v2711 = vshrl.u32 %v2710, 7
  %v2712 = vsub.s32 0, %v2711
  %v2713 = vrot.slane %v1987, %v2712
  %v2714 = vlaneseq
  %v2715 = vshrl.u32 %v2714, 7
  %v2716 = vsub.s32 1, %v2715
  %v2717 = vrot.slane %v1987, %v2716
  %v2718 = vlaneseq
  %v2719 = vshrl.u32 %v2718, 7
  %v2720 = vsub.s32 0, %v2719
  %v2721 = vrot.slane %v1989, %v2720
  %v2722 = vlaneseq
  %v2723 = vshrl.u32 %v2722, 7
  %v2724 = vsub.s32 1, %v2723
  %v2725 = vrot.slane %v1989, %v2724
  %v2726 = vlaneseq
  %v2727 = vshrl.u32 %v2726, 7
  %v2728 = vsub.s32 0, %v2727
  %v2729 = vrot.slane %v1991, %v2728
  %v2730 = vlaneseq
  %v2731 = vshrl.u32 %v2730, 7
  %v2732 = vsub.s32 1, %v2731
  %v2733 = vrot.slane %v1991, %v2732
  %v2734 = vlaneseq
  %v2735 = vshrl.u32 %v2734, 7
  %v2736 = vsub.s32 0, %v2735
  %v2737 = vrot.slane %v2016, %v2736
  %v2738 = vlaneseq
  %v2739 = vshrl.u32 %v2738, 7
  %v2740 = vsub.s32 1, %v2739
  %v2741 = vrot.slane %v2016, %v2740
  %v2742 = vlaneseq
  %v2743 = vshrl.u32 %v2742, 7
  %v2744 = vsub.s32 0, %v2743
  %v2745 = vrot.slane %v2030, %v2744
  %v2746 = vlaneseq
  %v2747 = vshrl.u32 %v2746, 7
  %v2748 = vsub.s32 1, %v2747
  %v2749 = vrot.slane %v2030, %v2748
  %v2750 = vlaneseq
  %v2751 = vshrl.u32 %v2750, 7
  %v2752 = vsub.s32 0, %v2751
  %v2753 = vrot.slane %v2038, %v2752
  %v2754 = vlaneseq
  %v2755 = vshrl.u32 %v2754, 7
  %v2756 = vsub.s32 1, %v2755
  %v2757 = vrot.slane %v2038, %v2756
  %v2758 = vlaneseq
  %v2759 = vshrl.u32 %v2758, 7
  %v2760 = vsub.s32 0, %v2759
  %v2761 = vrot.slane %v2040, %v2760
  %v2762 = vlaneseq
  %v2763 = vshrl.u32 %v2762, 7
  %v2764 = vsub.s32 1, %v2763
  %v2765 = vrot.slane %v2040, %v2764
  %v2766 = vlaneseq
  %v2767 = vshrl.u32 %v2766, 7
  %v2768 = vsub.s32 0, %v2767
  %v2769 = vrot.slane %v2023, %v2768
  %v2770 = vlaneseq
  %v2771 = vshrl.u32 %v2770, 7
  %v2772 = vsub.s32 1, %v2771
  %v2773 = vrot.slane %v2023, %v2772
  %v2774 = vlaneseq
  %v2775 = vshrl.u32 %v2774, 7
  %v2776 = vsub.s32 0, %v2775
  %v2777 = vrot.slane %v2037, %v2776
  %v2778 = vlaneseq
  %v2779 = vshrl.u32 %v2778, 7
  %v2780 = vsub.s32 1, %v2779
  %v2781 = vrot.slane %v2037, %v2780
  %v2782 = vlaneseq
  %v2783 = vshrl.u32 %v2782, 7
  %v2784 = vsub.s32 0, %v2783
  %v2785 = vrot.slane %v2039, %v2784
  %v2786 = vlaneseq
  %v2787 = vshrl.u32 %v2786, 7
  %v2788 = vsub.s32 1, %v2787
  %v2789 = vrot.slane %v2039, %v2788
  %v2790 = vlaneseq
  %v2791 = vshrl.u32 %v2790, 7
  %v2792 = vsub.s32 0, %v2791
  %v2793 = vrot.slane %v2041, %v2792
  %v2794 = vlaneseq
  %v2795 = vshrl.u32 %v2794, 7
  %v2796 = vsub.s32 1, %v2795
  %v2797 = vrot.slane %v2041, %v2796
  %v2798 = vlaneseq
  %v2799 = vshrl.u32 %v2798, 7
  %v2800 = vsub.s32 0, %v2799
  %v2801 = vrot.slane %v2066, %v2800
  %v2802 = vlaneseq
  %v2803 = vshrl.u32 %v2802, 7
  %v2804 = vsub.s32 1, %v2803
  %v2805 = vrot.slane %v2066, %v2804
  %v2806 = vlaneseq
  %v2807 = vshrl.u32 %v2806, 7
  %v2808 = vsub.s32 0, %v2807
  %v2809 = vrot.slane %v2080, %v2808
  %v2810 = vlaneseq
  %v2811 = vshrl.u32 %v2810, 7
  %v2812 = vsub.s32 1, %v2811
  %v2813 = vrot.slane %v2080, %v2812
  %v2814 = vlaneseq
  %v2815 = vshrl.u32 %v2814, 7
  %v2816 = vsub.s32 0, %v2815
  %v2817 = vrot.slane %v2088, %v2816
  %v2818 = vlaneseq
  %v2819 = vshrl.u32 %v2818, 7
  %v2820 = vsub.s32 1, %v2819
  %v2821 = vrot.slane %v2088, %v2820
  %v2822 = vlaneseq
  %v2823 = vshrl.u32 %v2822, 7
  %v2824 = vsub.s32 0, %v2823
  %v2825 = vrot.slane %v2090, %v2824
  %v2826 = vlaneseq
  %v2827 = vshrl.u32 %v2826, 7
  %v2828 = vsub.s32 1, %v2827
  %v2829 = vrot.slane %v2090, %v2828
  %v2830 = vlaneseq
  %v2831 = vshrl.u32 %v2830, 7
  %v2832 = vsub.s32 0, %v2831
  %v2833 = vrot.slane %v2073, %v2832
  %v2834 = vlaneseq
  %v2835 = vshrl.u32 %v2834, 7
  %v2836 = vsub.s32 1, %v2835
  %v2837 = vrot.slane %v2073, %v2836
  %v2838 = vlaneseq
  %v2839 = vshrl.u32 %v2838, 7
  %v2840 = vsub.s32 0, %v2839
  %v2841 = vrot.slane %v2087, %v2840
  %v2842 = vlaneseq
  %v2843 = vshrl.u32 %v2842, 7
  %v2844 = vsub.s32 1, %v2843
  %v2845 = vrot.slane %v2087, %v2844
  %v2846 = vlaneseq
  %v2847 = vshrl.u32 %v2846, 7
  %v2848 = vsub.s32 0, %v2847
  %v2849 = vrot.slane %v2089, %v2848
  %v2850 = vlaneseq
  %v2851 = vshrl.u32 %v2850, 7
  %v2852 = vsub.s32 1, %v2851
  %v2853 = vrot.slane %v2089, %v2852
  %v2854 = vlaneseq
  %v2855 = vshrl.u32 %v2854, 7
  %v2856 = vsub.s32 0, %v2855
  %v2857 = vrot.slane %v2091, %v2856
  %v2858 = vlaneseq
  %v2859 = vshrl.u32 %v2858, 7
  %v2860 = vsub.s32 1, %v2859
  %v2861 = vrot.slane %v2091, %v2860
  %v2862 = vlaneseq
  %v2863 = vshrl.u32 %v2862, 7
  %v2864 = vsub.s32 0, %v2863
  %v2865 = vrot.slane %v2116, %v2864
  %v2866 = vlaneseq
  %v2867 = vshrl.u32 %v2866, 7
  %v2868 = vsub.s32 1, %v2867
  %v2869 = vrot.slane %v2116, %v2868
  %v2870 = vlaneseq
  %v2871 = vshrl.u32 %v2870, 7
  %v2872 = vsub.s32 0, %v2871
  %v2873 = vrot.slane %v2130, %v2872
  %v2874 = vlaneseq
  %v2875 = vshrl.u32 %v2874, 7
  %v2876 = vsub.s32 1, %v2875
  %v2877 = vrot.slane %v2130, %v2876
  %v2878 = vlaneseq
  %v2879 = vshrl.u32 %v2878, 7
  %v2880 = vsub.s32 0, %v2879
  %v2881 = vrot.slane %v2138, %v2880
  %v2882 = vlaneseq
  %v2883 = vshrl.u32 %v2882, 7
  %v2884 = vsub.s32 1, %v2883
  %v2885 = vrot.slane %v2138, %v2884
  %v2886 = vlaneseq
  %v2887 = vshrl.u32 %v2886, 7
  %v2888 = vsub.s32 0, %v2887
  %v2889 = vrot.slane %v2140, %v2888
  %v2890 = vlaneseq
  %v2891 = vshrl.u32 %v2890, 7
  %v2892 = vsub.s32 1, %v2891
  %v2893 = vrot.slane %v2140, %v2892
  %v2894 = vlaneseq
  %v2895 = vshrl.u32 %v2894, 7
  %v2896 = vsub.s32 0, %v2895
  %v2897 = vrot.slane %v2123, %v2896
  %v2898 = vlaneseq
  %v2899 = vshrl.u32 %v2898, 7
  %v2900 = vsub.s32 1, %v2899
  %v2901 = vrot.slane %v2123, %v2900
  %v2902 = vlaneseq
  %v2903 = vshrl.u32 %v2902, 7
  %v2904 = vsub.s32 0, %v2903
  %v2905 = vrot.slane %v2137, %v2904
  %v2906 = vlaneseq
  %v2907 = vshrl.u32 %v2906, 7
  %v2908 = vsub.s32 1, %v2907
  %v2909 = vrot.slane %v2137, %v2908
  %v2910 = vlaneseq
  %v2911 = vshrl.u32 %v2910, 7
  %v2912 = vsub.s32 0, %v2911
  %v2913 = vrot.slane %v2139, %v2912
  %v2914 = vlaneseq
  %v2915 = vshrl.u32 %v2914, 7
  %v2916 = vsub.s32 1, %v2915
  %v2917 = vrot.slane %v2139, %v2916
  %v2918 = vlaneseq
  %v2919 = vshrl.u32 %v2918, 7
  %v2920 = vsub.s32 0, %v2919
  %v2921 = vrot.slane %v2141, %v2920
  %v2922 = vlaneseq
  %v2923 = vshrl.u32 %v2922, 7
  %v2924 = vsub.s32 1, %v2923
  %v2925 = vrot.slane %v2141, %v2924
  %v2926 = vlaneseq
  %v2927 = vshrl.u32 %v2926, 7
  %v2928 = vsub.s32 0, %v2927
  %v2929 = vrot.slane %v2166, %v2928
  %v2930 = vlaneseq
  %v2931 = vshrl.u32 %v2930, 7
  %v2932 = vsub.s32 1, %v2931
  %v2933 = vrot.slane %v2166, %v2932
  %v2934 = vlaneseq
  %v2935 = vshrl.u32 %v2934, 7
  %v2936 = vsub.s32 0, %v2935
  %v2937 = vrot.slane %v2180, %v2936
  %v2938 = vlaneseq
  %v2939 = vshrl.u32 %v2938, 7
  %v2940 = vsub.s32 1, %v2939
  %v2941 = vrot.slane %v2180, %v2940
  %v2942 = vlaneseq
  %v2943 = vshrl.u32 %v2942, 7
  %v2944 = vsub.s32 0, %v2943
  %v2945 = vrot.slane %v2188, %v2944
  %v2946 = vlaneseq
  %v2947 = vshrl.u32 %v2946, 7
  %v2948 = vsub.s32 1, %v2947
  %v2949 = vrot.slane %v2188, %v2948
  %v2950 = vlaneseq
  %v2951 = vshrl.u32 %v2950, 7
  %v2952 = vsub.s32 0, %v2951
  %v2953 = vrot.slane %v2190, %v2952
  %v2954 = vlaneseq
  %v2955 = vshrl.u32 %v2954, 7
  %v2956 = vsub.s32 1, %v2955
  %v2957 = vrot.slane %v2190, %v2956
  %v2958 = vlaneseq
  %v2959 = vshrl.u32 %v2958, 7
  %v2960 = vsub.s32 0, %v2959
  %v2961 = vrot.slane %v2173, %v2960
  %v2962 = vlaneseq
  %v2963 = vshrl.u32 %v2962, 7
  %v2964 = vsub.s32 1, %v2963
  %v2965 = vrot.slane %v2173, %v2964
  %v2966 = vlaneseq
  %v2967 = vshrl.u32 %v2966, 7
  %v2968 = vsub.s32 0, %v2967
  %v2969 = vrot.slane %v2187, %v2968
  %v2970 = vlaneseq
  %v2971 = vshrl.u32 %v2970, 7
  %v2972 = vsub.s32 1, %v2971
  %v2973 = vrot.slane %v2187, %v2972
  %v2974 = vlaneseq
  %v2975 = vshrl.u32 %v2974, 7
  %v2976 = vsub.s32 0, %v2975
  %v2977 = vrot.slane %v2189, %v2976
  %v2978 = vlaneseq
  %v2979 = vshrl.u32 %v2978, 7
  %v2980 = vsub.s32 1, %v2979
  %v2981 = vrot.slane %v2189, %v2980
  %v2982 = vlaneseq
  %v2983 = vshrl.u32 %v2982, 7
  %v2984 = vsub.s32 0, %v2983
  %v2985 = vrot.slane %v2191, %v2984
  %v2986 = vlaneseq
  %v2987 = vshrl.u32 %v2986, 7
  %v2988 = vsub.s32 1, %v2987
  %v2989 = vrot.slane %v2191, %v2988
  %v2990 = vlaneseq
  %v2991 = vshrl.u32 %v2990, 7
  %v2992 = vsub.s32 0, %v2991
  %v2993 = vrot.slane %v2216, %v2992
  %v2994 = vlaneseq
  %v2995 = vshrl.u32 %v2994, 7
  %v2996 = vsub.s32 1, %v2995
  %v2997 = vrot.slane %v2216, %v2996
  %v2998 = vlaneseq
  %v2999 = vshrl.u32 %v2998, 7
  %v3000 = vsub.s32 0, %v2999
  %v3001 = vrot.slane %v2230, %v3000
  %v3002 = vlaneseq
  %v3003 = vshrl.u32 %v3002, 7
  %v3004 = vsub.s32 1, %v3003
  %v3005 = vrot.slane %v2230, %v3004
  %v3006 = vlaneseq
  %v3007 = vshrl.u32 %v3006, 7
  %v3008 = vsub.s32 0, %v3007
  %v3009 = vrot.slane %v2238, %v3008
  %v3010 = vlaneseq
  %v3011 = vshrl.u32 %v3010, 7
  %v3012 = vsub.s32 1, %v3011
  %v3013 = vrot.slane %v2238, %v3012
  %v3014 = vlaneseq
  %v3015 = vshrl.u32 %v3014, 7
  %v3016 = vsub.s32 0, %v3015
  %v3017 = vrot.slane %v2240, %v3016
  %v3018 = vlaneseq
  %v3019 = vshrl.u32 %v3018, 7
  %v3020 = vsub.s32 1, %v3019
  %v3021 = vrot.slane %v2240, %v3020
  %v3022 = vlaneseq
  %v3023 = vshrl.u32 %v3022, 7
  %v3024 = vsub.s32 0, %v3023
  %v3025 = vrot.slane %v2223, %v3024
  %v3026 = vlaneseq
  %v3027 = vshrl.u32 %v3026, 7
  %v3028 = vsub.s32 1, %v3027
  %v3029 = vrot.slane %v2223, %v3028
  %v3030 = vlaneseq
  %v3031 = vshrl.u32 %v3030, 7
  %v3032 = vsub.s32 0, %v3031
  %v3033 = vrot.slane %v2237, %v3032
  %v3034 = vlaneseq
  %v3035 = vshrl.u32 %v3034, 7
  %v3036 = vsub.s32 1, %v3035
  %v3037 = vrot.slane %v2237, %v3036
  %v3038 = vlaneseq
  %v3039 = vshrl.u32 %v3038, 7
  %v3040 = vsub.s32 0, %v3039
  %v3041 = vrot.slane %v2239, %v3040
  %v3042 = vlaneseq
  %v3043 = vshrl.u32 %v3042, 7
  %v3044 = vsub.s32 1, %v3043
  %v3045 = vrot.slane %v2239, %v3044
  %v3046 = vlaneseq
  %v3047 = vshrl.u32 %v3046, 7
  %v3048 = vsub.s32 0, %v3047
  %v3049 = vrot.slane %v2241, %v3048
  %v3050 = vlaneseq
  %v3051 = vshrl.u32 %v3050, 7
  %v3052 = vsub.s32 1, %v3051
  %v3053 = vrot.slane %v2241, %v3052
  %v3054 = vlaneseq
  %v3055 = vshrl.u32 %v3054, 7
  %v3056 = vsub.s32 0, %v3055
  %v3057 = vrot.slane %v2266, %v3056
  %v3058 = vlaneseq
  %v3059 = vshrl.u32 %v3058, 7
  %v3060 = vsub.s32 1, %v3059
  %v3061 = vrot.slane %v2266, %v3060
  %v3062 = vlaneseq
  %v3063 = vshrl.u32 %v3062, 7
  %v3064 = vsub.s32 0, %v3063
  %v3065 = vrot.slane %v2280, %v3064
  %v3066 = vlaneseq
  %v3067 = vshrl.u32 %v3066, 7
  %v3068 = vsub.s32 1, %v3067
  %v3069 = vrot.slane %v2280, %v3068
  %v3070 = vlaneseq
  %v3071 = vshrl.u32 %v3070, 7
  %v3072 = vsub.s32 0, %v3071
  %v3073 = vrot.slane %v2288, %v3072
  %v3074 = vlaneseq
  %v3075 = vshrl.u32 %v3074, 7
  %v3076 = vsub.s32 1, %v3075
  %v3077 = vrot.slane %v2288, %v3076
  %v3078 = vlaneseq
  %v3079 = vshrl.u32 %v3078, 7
  %v3080 = vsub.s32 0, %v3079
  %v3081 = vrot.slane %v2290, %v3080
  %v3082 = vlaneseq
  %v3083 = vshrl.u32 %v3082, 7
  %v3084 = vsub.s32 1, %v3083
  %v3085 = vrot.slane %v2290, %v3084
  %v3086 = vlaneseq
  %v3087 = vshrl.u32 %v3086, 7
  %v3088 = vsub.s32 0, %v3087
  %v3089 = vrot.slane %v2273, %v3088
  %v3090 = vlaneseq
  %v3091 = vshrl.u32 %v3090, 7
  %v3092 = vsub.s32 1, %v3091
  %v3093 = vrot.slane %v2273, %v3092
  %v3094 = vlaneseq
  %v3095 = vshrl.u32 %v3094, 7
  %v3096 = vsub.s32 0, %v3095
  %v3097 = vrot.slane %v2287, %v3096
  %v3098 = vlaneseq
  %v3099 = vshrl.u32 %v3098, 7
  %v3100 = vsub.s32 1, %v3099
  %v3101 = vrot.slane %v2287, %v3100
  %v3102 = vlaneseq
  %v3103 = vshrl.u32 %v3102, 7
  %v3104 = vsub.s32 0, %v3103
  %v3105 = vrot.slane %v2289, %v3104
  %v3106 = vlaneseq
  %v3107 = vshrl.u32 %v3106, 7
  %v3108 = vsub.s32 1, %v3107
  %v3109 = vrot.slane %v2289, %v3108
  %v3110 = vlaneseq
  %v3111 = vshrl.u32 %v3110, 7
  %v3112 = vsub.s32 0, %v3111
  %v3113 = vrot.slane %v2291, %v3112
  %v3114 = vlaneseq
  %v3115 = vshrl.u32 %v3114, 7
  %v3116 = vsub.s32 1, %v3115
  %v3117 = vrot.slane %v2291, %v3116
  %v3118 = vlaneseq
  %v3119 = vshrl.u32 %v3118, 7
  %v3120 = vsub.s32 0, %v3119
  %v3121 = vrot.slane %v2316, %v3120
  %v3122 = vlaneseq
  %v3123 = vshrl.u32 %v3122, 7
  %v3124 = vsub.s32 1, %v3123
  %v3125 = vrot.slane %v2316, %v3124
  %v3126 = vlaneseq
  %v3127 = vshrl.u32 %v3126, 7
  %v3128 = vsub.s32 0, %v3127
  %v3129 = vrot.slane %v2330, %v3128
  %v3130 = vlaneseq
  %v3131 = vshrl.u32 %v3130, 7
  %v3132 = vsub.s32 1, %v3131
  %v3133 = vrot.slane %v2330, %v3132
  %v3134 = vlaneseq
  %v3135 = vshrl.u32 %v3134, 7
  %v3136 = vsub.s32 0, %v3135
  %v3137 = vrot.slane %v2338, %v3136
  %v3138 = vlaneseq
  %v3139 = vshrl.u32 %v3138, 7
  %v3140 = vsub.s32 1, %v3139
  %v3141 = vrot.slane %v2338, %v3140
  %v3142 = vlaneseq
  %v3143 = vshrl.u32 %v3142, 7
  %v3144 = vsub.s32 0, %v3143
  %v3145 = vrot.slane %v2340, %v3144
  %v3146 = vlaneseq
  %v3147 = vshrl.u32 %v3146, 7
  %v3148 = vsub.s32 1, %v3147
  %v3149 = vrot.slane %v2340, %v3148
  %v3150 = vlaneseq
  %v3151 = vshrl.u32 %v3150, 7
  %v3152 = vsub.s32 0, %v3151
  %v3153 = vrot.slane %v2323, %v3152
  %v3154 = vlaneseq
  %v3155 = vshrl.u32 %v3154, 7
  %v3156 = vsub.s32 1, %v3155
  %v3157 = vrot.slane %v2323, %v3156
  %v3158 = vlaneseq
  %v3159 = vshrl.u32 %v3158, 7
  %v3160 = vsub.s32 0, %v3159
  %v3161 = vrot.slane %v2337, %v3160
  %v3162 = vlaneseq
  %v3163 = vshrl.u32 %v3162, 7
  %v3164 = vsub.s32 1, %v3163
  %v3165 = vrot.slane %v2337, %v3164
  %v3166 = vlaneseq
  %v3167 = vshrl.u32 %v3166, 7
  %v3168 = vsub.s32 0, %v3167
  %v3169 = vrot.slane %v2339, %v3168
  %v3170 = vlaneseq
  %v3171 = vshrl.u32 %v3170, 7
  %v3172 = vsub.s32 1, %v3171
  %v3173 = vrot.slane %v2339, %v3172
  %v3174 = vlaneseq
  %v3175 = vshrl.u32 %v3174, 7
  %v3176 = vsub.s32 0, %v3175
  %v3177 = vrot.slane %v2341, %v3176
  %v3178 = vlaneseq
  %v3179 = vshrl.u32 %v3178, 7
  %v3180 = vsub.s32 1, %v3179
  %v3181 = vrot.slane %v2341, %v3180
  %v3182 = vlaneseq
  %v3183 = vshrl.u32 %v3182, 7
  %v3184 = vsub.s32 0, %v3183
  %v3185 = vrot.slane %v2366, %v3184
  %v3186 = vlaneseq
  %v3187 = vshrl.u32 %v3186, 7
  %v3188 = vsub.s32 1, %v3187
  %v3189 = vrot.slane %v2366, %v3188
  %v3190 = vlaneseq
  %v3191 = vshrl.u32 %v3190, 7
  %v3192 = vsub.s32 0, %v3191
  %v3193 = vrot.slane %v2380, %v3192
  %v3194 = vlaneseq
  %v3195 = vshrl.u32 %v3194, 7
  %v3196 = vsub.s32 1, %v3195
  %v3197 = vrot.slane %v2380, %v3196
  %v3198 = vlaneseq
  %v3199 = vshrl.u32 %v3198, 7
  %v3200 = vsub.s32 0, %v3199
  %v3201 = vrot.slane %v2388, %v3200
  %v3202 = vlaneseq
  %v3203 = vshrl.u32 %v3202, 7
  %v3204 = vsub.s32 1, %v3203
  %v3205 = vrot.slane %v2388, %v3204
  %v3206 = vlaneseq
  %v3207 = vshrl.u32 %v3206, 7
  %v3208 = vsub.s32 0, %v3207
  %v3209 = vrot.slane %v2390, %v3208
  %v3210 = vlaneseq
  %v3211 = vshrl.u32 %v3210, 7
  %v3212 = vsub.s32 1, %v3211
  %v3213 = vrot.slane %v2390, %v3212
  %v3214 = vlaneseq
  %v3215 = vshrl.u32 %v3214, 7
  %v3216 = vsub.s32 0, %v3215
  %v3217 = vrot.slane %v2373, %v3216
  %v3218 = vlaneseq
  %v3219 = vshrl.u32 %v3218, 7
  %v3220 = vsub.s32 1, %v3219
  %v3221 = vrot.slane %v2373, %v3220
  %v3222 = vlaneseq
  %v3223 = vshrl.u32 %v3222, 7
  %v3224 = vsub.s32 0, %v3223
  %v3225 = vrot.slane %v2387, %v3224
  %v3226 = vlaneseq
  %v3227 = vshrl.u32 %v3226, 7
  %v3228 = vsub.s32 1, %v3227
  %v3229 = vrot.slane %v2387, %v3228
  %v3230 = vlaneseq
  %v3231 = vshrl.u32 %v3230, 7
  %v3232 = vsub.s32 0, %v3231
  %v3233 = vrot.slane %v2389, %v3232
  %v3234 = vlaneseq
  %v3235 = vshrl.u32 %v3234, 7
  %v3236 = vsub.s32 1, %v3235
  %v3237 = vrot.slane %v2389, %v3236
  %v3238 = vlaneseq
  %v3239 = vshrl.u32 %v3238, 7
  %v3240 = vsub.s32 0, %v3239
  %v3241 = vrot.slane %v2391, %v3240
  %v3242 = vlaneseq
  %v3243 = vshrl.u32 %v3242, 7
  %v3244 = vsub.s32 1, %v3243
  %v3245 = vrot.slane %v2391, %v3244
  %v3246 = vlaneseq
  %v3247 = vshrl.u32 %v3246, 7
  %v3248 = vsub.s32 0, %v3247
  %v3249 = vrot.slane %v2416, %v3248
  %v3250 = vlaneseq
  %v3251 = vshrl.u32 %v3250, 7
  %v3252 = vsub.s32 1, %v3251
  %v3253 = vrot.slane %v2416, %v3252
  %v3254 = vlaneseq
  %v3255 = vshrl.u32 %v3254, 7
  %v3256 = vsub.s32 0, %v3255
  %v3257 = vrot.slane %v2430, %v3256
  %v3258 = vlaneseq
  %v3259 = vshrl.u32 %v3258, 7
  %v3260 = vsub.s32 1, %v3259
  %v3261 = vrot.slane %v2430, %v3260
  %v3262 = vlaneseq
  %v3263 = vshrl.u32 %v3262, 7
  %v3264 = vsub.s32 0, %v3263
  %v3265 = vrot.slane %v2438, %v3264
  %v3266 = vlaneseq
  %v3267 = vshrl.u32 %v3266, 7
  %v3268 = vsub.s32 1, %v3267
  %v3269 = vrot.slane %v2438, %v3268
  %v3270 = vlaneseq
  %v3271 = vshrl.u32 %v3270, 7
  %v3272 = vsub.s32 0, %v3271
  %v3273 = vrot.slane %v2440, %v3272
  %v3274 = vlaneseq
  %v3275 = vshrl.u32 %v3274, 7
  %v3276 = vsub.s32 1, %v3275
  %v3277 = vrot.slane %v2440, %v3276
  %v3278 = vlaneseq
  %v3279 = vshrl.u32 %v3278, 7
  %v3280 = vsub.s32 0, %v3279
  %v3281 = vrot.slane %v2423, %v3280
  %v3282 = vlaneseq
  %v3283 = vshrl.u32 %v3282, 7
  %v3284 = vsub.s32 1, %v3283
  %v3285 = vrot.slane %v2423, %v3284
  %v3286 = vlaneseq
  %v3287 = vshrl.u32 %v3286, 7
  %v3288 = vsub.s32 0, %v3287
  %v3289 = vrot.slane %v2437, %v3288
  %v3290 = vlaneseq
  %v3291 = vshrl.u32 %v3290, 7
  %v3292 = vsub.s32 1, %v3291
  %v3293 = vrot.slane %v2437, %v3292
  %v3294 = vlaneseq
  %v3295 = vshrl.u32 %v3294, 7
  %v3296 = vsub.s32 0, %v3295
  %v3297 = vrot.slane %v2439, %v3296
  %v3298 = vlaneseq
  %v3299 = vshrl.u32 %v3298, 7
  %v3300 = vsub.s32 1, %v3299
  %v3301 = vrot.slane %v2439, %v3300
  %v3302 = vlaneseq
  %v3303 = vshrl.u32 %v3302, 7
  %v3304 = vsub.s32 0, %v3303
  %v3305 = vrot.slane %v2441, %v3304
  %v3306 = vlaneseq
  %v3307 = vshrl.u32 %v3306, 7
  %v3308 = vsub.s32 1, %v3307
  %v3309 = vrot.slane %v2441, %v3308
  %v3310 = vlaneseq
  %v3311 = vshrl.u32 %v3310, 7
  %v3312 = vsub.s32 0, %v3311
  %v3313 = vrot.slane %v2466, %v3312
  %v3314 = vlaneseq
  %v3315 = vshrl.u32 %v3314, 7
  %v3316 = vsub.s32 1, %v3315
  %v3317 = vrot.slane %v2466, %v3316
  %v3318 = vlaneseq
  %v3319 = vshrl.u32 %v3318, 7
  %v3320 = vsub.s32 0, %v3319
  %v3321 = vrot.slane %v2480, %v3320
  %v3322 = vlaneseq
  %v3323 = vshrl.u32 %v3322, 7
  %v3324 = vsub.s32 1, %v3323
  %v3325 = vrot.slane %v2480, %v3324
  %v3326 = vlaneseq
  %v3327 = vshrl.u32 %v3326, 7
  %v3328 = vsub.s32 0, %v3327
  %v3329 = vrot.slane %v2488, %v3328
  %v3330 = vlaneseq
  %v3331 = vshrl.u32 %v3330, 7
  %v3332 = vsub.s32 1, %v3331
  %v3333 = vrot.slane %v2488, %v3332
  %v3334 = vlaneseq
  %v3335 = vshrl.u32 %v3334, 7
  %v3336 = vsub.s32 0, %v3335
  %v3337 = vrot.slane %v2490, %v3336
  %v3338 = vlaneseq
  %v3339 = vshrl.u32 %v3338, 7
  %v3340 = vsub.s32 1, %v3339
  %v3341 = vrot.slane %v2490, %v3340
  %v3342 = vlaneseq
  %v3343 = vshrl.u32 %v3342, 7
  %v3344 = vsub.s32 0, %v3343
  %v3345 = vrot.slane %v2473, %v3344
  %v3346 = vlaneseq
  %v3347 = vshrl.u32 %v3346, 7
  %v3348 = vsub.s32 1, %v3347
  %v3349 = vrot.slane %v2473, %v3348
  %v3350 = vlaneseq
  %v3351 = vshrl.u32 %v3350, 7
  %v3352 = vsub.s32 0, %v3351
  %v3353 = vrot.slane %v2487, %v3352
  %v3354 = vlaneseq
  %v3355 = vshrl.u32 %v3354, 7
  %v3356 = vsub.s32 1, %v3355
  %v3357 = vrot.slane %v2487, %v3356
  %v3358 = vlaneseq
  %v3359 = vshrl.u32 %v3358, 7
  %v3360 = vsub.s32 0, %v3359
  %v3361 = vrot.slane %v2489, %v3360
  %v3362 = vlaneseq
  %v3363 = vshrl.u32 %v3362, 7
  %v3364 = vsub.s32 1, %v3363
  %v3365 = vrot.slane %v2489, %v3364
  %v3366 = vlaneseq
  %v3367 = vshrl.u32 %v3366, 7
  %v3368 = vsub.s32 0, %v3367
  %v3369 = vrot.slane %v2491, %v3368
  %v3370 = vlaneseq
  %v3371 = vshrl.u32 %v3370, 7
  %v3372 = vsub.s32 1, %v3371
  %v3373 = vrot.slane %v2491, %v3372
  %v3374 = vlaneseq
  %v3375 = vshrl.u32 %v3374, 7
  %v3376 = vsub.s32 0, %v3375
  %v3377 = vrot.slane %v2516, %v3376
  %v3378 = vlaneseq
  %v3379 = vshrl.u32 %v3378, 7
  %v3380 = vsub.s32 1, %v3379
  %v3381 = vrot.slane %v2516, %v3380
  %v3382 = vlaneseq
  %v3383 = vshrl.u32 %v3382, 7
  %v3384 = vsub.s32 0, %v3383
  %v3385 = vrot.slane %v2530, %v3384
  %v3386 = vlaneseq
  %v3387 = vshrl.u32 %v3386, 7
  %v3388 = vsub.s32 1, %v3387
  %v3389 = vrot.slane %v2530, %v3388
  %v3390 = vlaneseq
  %v3391 = vshrl.u32 %v3390, 7
  %v3392 = vsub.s32 0, %v3391
  %v3393 = vrot.slane %v2538, %v3392
  %v3394 = vlaneseq
  %v3395 = vshrl.u32 %v3394, 7
  %v3396 = vsub.s32 1, %v3395
  %v3397 = vrot.slane %v2538, %v3396
  %v3398 = vlaneseq
  %v3399 = vshrl.u32 %v3398, 7
  %v3400 = vsub.s32 0, %v3399
  %v3401 = vrot.slane %v2540, %v3400
  %v3402 = vlaneseq
  %v3403 = vshrl.u32 %v3402, 7
  %v3404 = vsub.s32 1, %v3403
  %v3405 = vrot.slane %v2540, %v3404
  %v3406 = vlaneseq
  %v3407 = vshrl.u32 %v3406, 7
  %v3408 = vsub.s32 0, %v3407
  %v3409 = vrot.slane %v2523, %v3408
  %v3410 = vlaneseq
  %v3411 = vshrl.u32 %v3410, 7
  %v3412 = vsub.s32 1, %v3411
  %v3413 = vrot.slane %v2523, %v3412
  %v3414 = vlaneseq
  %v3415 = vshrl.u32 %v3414, 7
  %v3416 = vsub.s32 0, %v3415
  %v3417 = vrot.slane %v2537, %v3416
  %v3418 = vlaneseq
  %v3419 = vshrl.u32 %v3418, 7
  %v3420 = vsub.s32 1, %v3419
  %v3421 = vrot.slane %v2537, %v3420
  %v3422 = vlaneseq
  %v3423 = vshrl.u32 %v3422, 7
  %v3424 = vsub.s32 0, %v3423
  %v3425 = vrot.slane %v2539, %v3424
  %v3426 = vlaneseq
  %v3427 = vshrl.u32 %v3426, 7
  %v3428 = vsub.s32 1, %v3427
  %v3429 = vrot.slane %v2539, %v3428
  %v3430 = vlaneseq
  %v3431 = vshrl.u32 %v3430, 7
  %v3432 = vsub.s32 0, %v3431
  %v3433 = vrot.slane %v2541, %v3432
  %v3434 = vlaneseq
  %v3435 = vshrl.u32 %v3434, 7
  %v3436 = vsub.s32 1, %v3435
  %v3437 = vrot.slane %v2541, %v3436
  %v3662 = vsub.f32 %v1256, %v2545
  %v3663 = vsub.f32 %v1258, %v2549
  %v3664 = vsub.f32 %v1260, %v2553
  %v3665 = vsub.f32 %v1262, %v2557
  %v3666 = vsub.f32 %v1266, %v2561
  %v3667 = vsub.f32 %v1268, %v2565
  %v3668 = vsub.f32 %v1270, %v2569
  %v3669 = vsub.f32 %v1272, %v2573
  %v3670 = vsub.f32 %v1276, %v2577
  %v3671 = vsub.f32 %v1278, %v2581
  %v3672 = vsub.f32 %v1280, %v2585
  %v3673 = vsub.f32 %v1282, %v2589
  %v3674 = vsub.f32 %v1286, %v2593
  %v3675 = vsub.f32 %v1288, %v2597
  %v3676 = vsub.f32 %v1290, %v2601
  %v3677 = vsub.f32 %v1292, %v2605
  %v3678 = vsub.f32 %v1296, %v2609
  %v3679 = vsub.f32 %v1298, %v2613
  %v3680 = vsub.f32 %v1300, %v2617
  %v3681 = vsub.f32 %v1302, %v2621
  %v3682 = vsub.f32 %v1306, %v2625
  %v3683 = vsub.f32 %v1308, %v2629
  %v3684 = vsub.f32 %v1310, %v2633
  %v3685 = vsub.f32 %v1312, %v2637
  %v3686 = vsub.f32 %v1316, %v2641
  %v3687 = vsub.f32 %v1318, %v2645
  %v3688 = vsub.f32 %v1320, %v2649
  %v3689 = vsub.f32 %v1322, %v2653
  %v3690 = vsub.f32 %v1326, %v2657
  %v3691 = vsub.f32 %v1328, %v2661
  %v3692 = vsub.f32 %v1330, %v2665
  %v3693 = vsub.f32 %v1332, %v2669
  %v3694 = vsub.f32 %v1336, %v2673
  %v3695 = vsub.f32 %v1338, %v2677
  %v3696 = vsub.f32 %v1340, %v2681
  %v3697 = vsub.f32 %v1342, %v2685
  %v3698 = vsub.f32 %v1346, %v2689
  %v3699 = vsub.f32 %v1348, %v2693
  %v3700 = vsub.f32 %v1350, %v2697
  %v3701 = vsub.f32 %v1352, %v2701
  %v3702 = vsub.f32 %v1356, %v2705
  %v3703 = vsub.f32 %v1358, %v2709
  %v3704 = vsub.f32 %v1360, %v2713
  %v3705 = vsub.f32 %v1362, %v2717
  %v3706 = vsub.f32 %v1366, %v2721
  %v3707 = vsub.f32 %v1368, %v2725
  %v3708 = vsub.f32 %v1370, %v2729
  %v3709 = vsub.f32 %v1372, %v2733
  %v3710 = vsub.f32 %v1376, %v2737
  %v3711 = vsub.f32 %v1378, %v2741
  %v3712 = vsub.f32 %v1380, %v2745
  %v3713 = vsub.f32 %v1382, %v2749
  %v3714 = vsub.f32 %v1386, %v2753
  %v3715 = vsub.f32 %v1388, %v2757
  %v3716 = vsub.f32 %v1390, %v2761
  %v3717 = vsub.f32 %v1392, %v2765
  %v3718 = vsub.f32 %v1396, %v2769
  %v3719 = vsub.f32 %v1398, %v2773
  %v3720 = vsub.f32 %v1400, %v2777
  %v3721 = vsub.f32 %v1402, %v2781
  %v3722 = vsub.f32 %v1406, %v2785
  %v3723 = vsub.f32 %v1408, %v2789
  %v3724 = vsub.f32 %v1410, %v2793
  %v3725 = vsub.f32 %v1412, %v2797
  %v3726 = vsub.f32 %v1416, %v2801
  %v3727 = vsub.f32 %v1418, %v2805
  %v3728 = vsub.f32 %v1420, %v2809
  %v3729 = vsub.f32 %v1422, %v2813
  %v3730 = vsub.f32 %v1426, %v2817
  %v3731 = vsub.f32 %v1428, %v2821
  %v3732 = vsub.f32 %v1430, %v2825
  %v3733 = vsub.f32 %v1432, %v2829
  %v3734 = vsub.f32 %v1436, %v2833
  %v3735 = vsub.f32 %v1438, %v2837
  %v3736 = vsub.f32 %v1440, %v2841
  %v3737 = vsub.f32 %v1442, %v2845
  %v3738 = vsub.f32 %v1446, %v2849
  %v3739 = vsub.f32 %v1448, %v2853
  %v3740 = vsub.f32 %v1450, %v2857
  %v3741 = vsub.f32 %v1452, %v2861
  %v3742 = vsub.f32 %v1456, %v2865
  %v3743 = vsub.f32 %v1458, %v2869
  %v3744 = vsub.f32 %v1460, %v2873
  %v3745 = vsub.f32 %v1462, %v2877
  %v3746 = vsub.f32 %v1466, %v2881
  %v3747 = vsub.f32 %v1468, %v2885
  %v3748 = vsub.f32 %v1470, %v2889
  %v3749 = vsub.f32 %v1472, %v2893
  %v3750 = vsub.f32 %v1476, %v2897
  %v3751 = vsub.f32 %v1478, %v2901
  %v3752 = vsub.f32 %v1480, %v2905
  %v3753 = vsub.f32 %v1482, %v2909
  %v3754 = vsub.f32 %v1486, %v2913
  %v3755 = vsub.f32 %v1488, %v2917
  %v3756 = vsub.f32 %v1490, %v2921
  %v3757 = vsub.f32 %v1492, %v2925
  %v3758 = vsub.f32 %v1496, %v2929
  %v3759 = vsub.f32 %v1498, %v2933
  %v3760 = vsub.f32 %v1500, %v2937
  %v3761 = vsub.f32 %v1502, %v2941
  %v3762 = vsub.f32 %v1506, %v2945
  %v3763 = vsub.f32 %v1508, %v2949
  %v3764 = vsub.f32 %v1510, %v2953
  %v3765 = vsub.f32 %v1512, %v2957
  %v3766 = vsub.f32 %v1516, %v2961
  %v3767 = vsub.f32 %v1518, %v2965
  %v3768 = vsub.f32 %v1520, %v2969
  %v3769 = vsub.f32 %v1522, %v2973
  %v3770 = vsub.f32 %v1526, %v2977
  %v3771 = vsub.f32 %v1528, %v2981
  %v3772 = vsub.f32 %v1530, %v2985
  %v3773 = vsub.f32 %v1532, %v2989
  %v3774 = vsub.f32 %v1536, %v2993
  %v3775 = vsub.f32 %v1538, %v2997
  %v3776 = vsub.f32 %v1540, %v3001
  %v3777 = vsub.f32 %v1542, %v3005
  %v3778 = vsub.f32 %v1546, %v3009
  %v3779 = vsub.f32 %v1548, %v3013
  %v3780 = vsub.f32 %v1550, %v3017
  %v3781 = vsub.f32 %v1552, %v3021
  %v3782 = vsub.f32 %v1556, %v3025
  %v3783 = vsub.f32 %v1558, %v3029
  %v3784 = vsub.f32 %v1560, %v3033
  %v3785 = vsub.f32 %v1562, %v3037
  %v3786 = vsub.f32 %v1566, %v3041
  %v3787 = vsub.f32 %v1568, %v3045
  %v3788 = vsub.f32 %v1570, %v3049
  %v3789 = vsub.f32 %v1572, %v3053
  %v3790 = vsub.f32 %v1576, %v3057
  %v3791 = vsub.f32 %v1578, %v3061
  %v3792 = vsub.f32 %v1580, %v3065
  %v3793 = vsub.f32 %v1582, %v3069
  %v3794 = vsub.f32 %v1586, %v3073
  %v3795 = vsub.f32 %v1588, %v3077
  %v3796 = vsub.f32 %v1590, %v3081
  %v3797 = vsub.f32 %v1592, %v3085
  %v3798 = vsub.f32 %v1596, %v3089
  %v3799 = vsub.f32 %v1598, %v3093
  %v3800 = vsub.f32 %v1600, %v3097
  %v3801 = vsub.f32 %v1602, %v3101
  %v3802 = vsub.f32 %v1606, %v3105
  %v3803 = vsub.f32 %v1608, %v3109
  %v3804 = vsub.f32 %v1610, %v3113
  %v3805 = vsub.f32 %v1612, %v3117
  %v3806 = vsub.f32 %v1616, %v3121
  %v3807 = vsub.f32 %v1618, %v3125
  %v3808 = vsub.f32 %v1620, %v3129
  %v3809 = vsub.f32 %v1622, %v3133
  %v3810 = vsub.f32 %v1626, %v3137
  %v3811 = vsub.f32 %v1628, %v3141
  %v3812 = vsub.f32 %v1630, %v3145
  %v3813 = vsub.f32 %v1632, %v3149
  %v3814 = vsub.f32 %v1636, %v3153
  %v3815 = vsub.f32 %v1638, %v3157
  %v3816 = vsub.f32 %v1640, %v3161
  %v3817 = vsub.f32 %v1642, %v3165
  %v3818 = vsub.f32 %v1646, %v3169
  %v3819 = vsub.f32 %v1648, %v3173
  %v3820 = vsub.f32 %v1650, %v3177
  %v3821 = vsub.f32 %v1652, %v3181
  %v3822 = vsub.f32 %v1656, %v3185
  %v3823 = vsub.f32 %v1658, %v3189
  %v3824 = vsub.f32 %v1660, %v3193
  %v3825 = vsub.f32 %v1662, %v3197
  %v3826 = vsub.f32 %v1666, %v3201
  %v3827 = vsub.f32 %v1668, %v3205
  %v3828 = vsub.f32 %v1670, %v3209
  %v3829 = vsub.f32 %v1672, %v3213
  %v3830 = vsub.f32 %v1676, %v3217
  %v3831 = vsub.f32 %v1678, %v3221
  %v3832 = vsub.f32 %v1680, %v3225
  %v3833 = vsub.f32 %v1682, %v3229
  %v3834 = vsub.f32 %v1686, %v3233
  %v3835 = vsub.f32 %v1688, %v3237
  %v3836 = vsub.f32 %v1690, %v3241
  %v3837 = vsub.f32 %v1692, %v3245
  %v3838 = vsub.f32 %v1696, %v3249
  %v3839 = vsub.f32 %v1698, %v3253
  %v3840 = vsub.f32 %v1700, %v3257
  %v3841 = vsub.f32 %v1702, %v3261
  %v3842 = vsub.f32 %v1706, %v3265
  %v3843 = vsub.f32 %v1708, %v3269
  %v3844 = vsub.f32 %v1710, %v3273
  %v3845 = vsub.f32 %v1712, %v3277
  %v3846 = vsub.f32 %v1716, %v3281
  %v3847 = vsub.f32 %v1718, %v3285
  %v3848 = vsub.f32 %v1720, %v3289
  %v3849 = vsub.f32 %v1722, %v3293
  %v3850 = vsub.f32 %v1726, %v3297
  %v3851 = vsub.f32 %v1728, %v3301
  %v3852 = vsub.f32 %v1730, %v3305
  %v3853 = vsub.f32 %v1732, %v3309
  %v3854 = vsub.f32 %v1736, %v3313
  %v3855 = vsub.f32 %v1738, %v3317
  %v3856 = vsub.f32 %v1740, %v3321
  %v3857 = vsub.f32 %v1742, %v3325
  %v3858 = vsub.f32 %v1746, %v3329
  %v3859 = vsub.f32 %v1748, %v3333
  %v3860 = vsub.f32 %v1750, %v3337
  %v3861 = vsub.f32 %v1752, %v3341
  %v3862 = vsub.f32 %v1756, %v3345
  %v3863 = vsub.f32 %v1758, %v3349
  %v3864 = vsub.f32 %v1760, %v3353
  %v3865 = vsub.f32 %v1762, %v3357
  %v3866 = vsub.f32 %v1766, %v3361
  %v3867 = vsub.f32 %v1768, %v3365
  %v3868 = vsub.f32 %v1770, %v3369
  %v3869 = vsub.f32 %v1772, %v3373
  %v3870 = vsub.f32 %v1776, %v3377
  %v3871 = vsub.f32 %v1778, %v3381
  %v3872 = vsub.f32 %v1780, %v3385
  %v3873 = vsub.f32 %v1782, %v3389
  %v3874 = vsub.f32 %v1786, %v3393
  %v3875 = vsub.f32 %v1788, %v3397
  %v3876 = vsub.f32 %v1790, %v3401
  %v3877 = vsub.f32 %v1792, %v3405
  %v3878 = vsub.f32 %v1796, %v3409
  %v3879 = vsub.f32 %v1798, %v3413
  %v3880 = vsub.f32 %v1800, %v3417
  %v3881 = vsub.f32 %v1802, %v3421
  %v3882 = vsub.f32 %v1806, %v3425
  %v3883 = vsub.f32 %v1808, %v3429
  %v3884 = vsub.f32 %v1810, %v3433
  %v3885 = vsub.f32 %v1812, %v3437
  %v3886 = vmul.f32 %v3662, %v3662
  %v3887 = vmul.f32 %v3663, %v3663
  %v3888 = vmul.f32 %v3664, %v3664
  %v3889 = vmul.f32 %v3665, %v3665
  %v3890 = vmul.f32 %v3666, %v3666
  %v3891 = vmul.f32 %v3667, %v3667
  %v3892 = vmul.f32 %v3668, %v3668
  %v3893 = vmul.f32 %v3669, %v3669
  %v3894 = vmul.f32 %v3670, %v3670
  %v3895 = vmul.f32 %v3671, %v3671
  %v3896 = vmul.f32 %v3672, %v3672
  %v3897 = vmul.f32 %v3673, %v3673
  %v3898 = vmul.f32 %v3674, %v3674
  %v3899 = vmul.f32 %v3675, %v3675
  %v3900 = vmul.f32 %v3676, %v3676
  %v3901 = vmul.f32 %v3677, %v3677
  %v3902 = vmul.f32 %v3678, %v3678
  %v3903 = vmul.f32 %v3679, %v3679
  %v3904 = vmul.f32 %v3680, %v3680
  %v3905 = vmul.f32 %v3681, %v3681
  %v3906 = vmul.f32 %v3682, %v3682
  %v3907 = vmul.f32 %v3683, %v3683
  %v3908 = vmul.f32 %v3684, %v3684
  %v3909 = vmul.f32 %v3685, %v3685
  %v3910 = vmul.f32 %v3686, %v3686
  %v3911 = vmul.f32 %v3687, %v3687
  %v3912 = vmul.f32 %v3688, %v3688
  %v3913 = vmul.f32 %v3689, %v3689
  %v3914 = vmul.f32 %v3690, %v3690
  %v3915 = vmul.f32 %v3691, %v3691
  %v3916 = vmul.f32 %v3692, %v3692
  %v3917 = vmul.f32 %v3693, %v3693
  %v3918 = vmul.f32 %v3694, %v3694
  %v3919 = vmul.f32 %v3695, %v3695
  %v3920 = vmul.f32 %v3696, %v3696
  %v3921 = vmul.f32 %v3697, %v3697
  %v3922 = vmul.f32 %v3698, %v3698
  %v3923 = vmul.f32 %v3699, %v3699
  %v3924 = vmul.f32 %v3700, %v3700
  %v3925 = vmul.f32 %v3701, %v3701
  %v3926 = vmul.f32 %v3702, %v3702
  %v3927 = vmul.f32 %v3703, %v3703
  %v3928 = vmul.f32 %v3704, %v3704
  %v3929 = vmul.f32 %v3705, %v3705
  %v3930 = vmul.f32 %v3706, %v3706
  %v3931 = vmul.f32 %v3707, %v3707
  %v3932 = vmul.f32 %v3708, %v3708
  %v3933 = vmul.f32 %v3709, %v3709
  %v3934 = vmul.f32 %v3710, %v3710
  %v3935 = vmul.f32 %v3711, %v3711
  %v3936 = vmul.f32 %v3712, %v3712
  %v3937 = vmul.f32 %v3713, %v3713
  %v3938 = vmul.f32 %v3714, %v3714
  %v3939 = vmul.f32 %v3715, %v3715
  %v3940 = vmul.f32 %v3716, %v3716
  %v3941 = vmul.f32 %v3717, %v3717
  %v3942 = vmul.f32 %v3718, %v3718
  %v3943 = vmul.f32 %v3719, %v3719
  %v3944 = vmul.f32 %v3720, %v3720
  %v3945 = vmul.f32 %v3721, %v3721
  %v3946 = vmul.f32 %v3722, %v3722
  %v3947 = vmul.f32 %v3723, %v3723
  %v3948 = vmul.f32 %v3724, %v3724
  %v3949 = vmul.f32 %v3725, %v3725
  %v3950 = vmul.f32 %v3726, %v3726
  %v3951 = vmul.f32 %v3727, %v3727
  %v3952 = vmul.f32 %v3728, %v3728
  %v3953 = vmul.f32 %v3729, %v3729
  %v3954 = vmul.f32 %v3730, %v3730
  %v3955 = vmul.f32 %v3731, %v3731
  %v3956 = vmul.f32 %v3732, %v3732
  %v3957 = vmul.f32 %v3733, %v3733
  %v3958 = vmul.f32 %v3734, %v3734
  %v3959 = vmul.f32 %v3735, %v3735
  %v3960 = vmul.f32 %v3736, %v3736
  %v3961 = vmul.f32 %v3737, %v3737
  %v3962 = vmul.f32 %v3738, %v3738
  %v3963 = vmul.f32 %v3739, %v3739
  %v3964 = vmul.f32 %v3740, %v3740
  %v3965 = vmul.f32 %v3741, %v3741
  %v3966 = vmul.f32 %v3742, %v3742
  %v3967 = vmul.f32 %v3743, %v3743
  %v3968 = vmul.f32 %v3744, %v3744
  %v3969 = vmul.f32 %v3745, %v3745
  %v3970 = vmul.f32 %v3746, %v3746
  %v3971 = vmul.f32 %v3747, %v3747
  %v3972 = vmul.f32 %v3748, %v3748
  %v3973 = vmul.f32 %v3749, %v3749
  %v3974 = vmul.f32 %v3750, %v3750
  %v3975 = vmul.f32 %v3751, %v3751
  %v3976 = vmul.f32 %v3752, %v3752
  %v3977 = vmul.f32 %v3753, %v3753
  %v3978 = vmul.f32 %v3754, %v3754
  %v3979 = vmul.f32 %v3755, %v3755
  %v3980 = vmul.f32 %v3756, %v3756
  %v3981 = vmul.f32 %v3757, %v3757
  %v3982 = vmul.f32 %v3758, %v3758
  %v3983 = vmul.f32 %v3759, %v3759
  %v3984 = vmul.f32 %v3760, %v3760
  %v3985 = vmul.f32 %v3761, %v3761
  %v3986 = vmul.f32 %v3762, %v3762
  %v3987 = vmul.f32 %v3763, %v3763
  %v3988 = vmul.f32 %v3764, %v3764
  %v3989 = vmul.f32 %v3765, %v3765
  %v3990 = vmul.f32 %v3766, %v3766
  %v3991 = vmul.f32 %v3767, %v3767
  %v3992 = vmul.f32 %v3768, %v3768
  %v3993 = vmul.f32 %v3769, %v3769
  %v3994 = vmul.f32 %v3770, %v3770
  %v3995 = vmul.f32 %v3771, %v3771
  %v3996 = vmul.f32 %v3772, %v3772
  %v3997 = vmul.f32 %v3773, %v3773
  %v3998 = vmul.f32 %v3774, %v3774
  %v3999 = vmul.f32 %v3775, %v3775
  %v4000 = vmul.f32 %v3776, %v3776
  %v4001 = vmul.f32 %v3777, %v3777
  %v4002 = vmul.f32 %v3778, %v3778
  %v4003 = vmul.f32 %v3779, %v3779
  %v4004 = vmul.f32 %v3780, %v3780
  %v4005 = vmul.f32 %v3781, %v3781
  %v4006 = vmul.f32 %v3782, %v3782
  %v4007 = vmul.f32 %v3783, %v3783
  %v4008 = vmul.f32 %v3784, %v3784
  %v4009 = vmul.f32 %v3785, %v3785
  %v4010 = vmul.f32 %v3786, %v3786
  %v4011 = vmul.f32 %v3787, %v3787
  %v4012 = vmul.f32 %v3788, %v3788
  %v4013 = vmul.f32 %v3789, %v3789
  %v4014 = vmul.f32 %v3790, %v3790
  %v4015 = vmul.f32 %v3791, %v3791
  %v4016 = vmul.f32 %v3792, %v3792
  %v4017 = vmul.f32 %v3793, %v3793
  %v4018 = vmul.f32 %v3794, %v3794
  %v4019 = vmul.f32 %v3795, %v3795
  %v4020 = vmul.f32 %v3796, %v3796
  %v4021 = vmul.f32 %v3797, %v3797
  %v4022 = vmul.f32 %v3798, %v3798
  %v4023 = vmul.f32 %v3799, %v3799
  %v4024 = vmul.f32 %v3800, %v3800
  %v4025 = vmul.f32 %v3801, %v3801
  %v4026 = vmul.f32 %v3802, %v3802
  %v4027 = vmul.f32 %v3803, %v3803
  %v4028 = vmul.f32 %v3804, %v3804
  %v4029 = vmul.f32 %v3805, %v3805
  %v4030 = vmul.f32 %v3806, %v3806
  %v4031 = vmul.f32 %v3807, %v3807
  %v4032 = vmul.f32 %v3808, %v3808
  %v4033 = vmul.f32 %v3809, %v3809
  %v4034 = vmul.f32 %v3810, %v3810
  %v4035 = vmul.f32 %v3811, %v3811
  %v4036 = vmul.f32 %v3812, %v3812
  %v4037 = vmul.f32 %v3813, %v3813
  %v4038 = vmul.f32 %v3814, %v3814
  %v4039 = vmul.f32 %v3815, %v3815
  %v4040 = vmul.f32 %v3816, %v3816
  %v4041 = vmul.f32 %v3817, %v3817
  %v4042 = vmul.f32 %v3818, %v3818
  %v4043 = vmul.f32 %v3819, %v3819
  %v4044 = vmul.f32 %v3820, %v3820
  %v4045 = vmul.f32 %v3821, %v3821
  %v4046 = vmul.f32 %v3822, %v3822
  %v4047 = vmul.f32 %v3823, %v3823
  %v4048 = vmul.f32 %v3824, %v3824
  %v4049 = vmul.f32 %v3825, %v3825
  %v4050 = vmul.f32 %v3826, %v3826
  %v4051 = vmul.f32 %v3827, %v3827
  %v4052 = vmul.f32 %v3828, %v3828
  %v4053 = vmul.f32 %v3829, %v3829
  %v4054 = vmul.f32 %v3830, %v3830
  %v4055 = vmul.f32 %v3831, %v3831
  %v4056 = vmul.f32 %v3832, %v3832
  %v4057 = vmul.f32 %v3833, %v3833
  %v4058 = vmul.f32 %v3834, %v3834
  %v4059 = vmul.f32 %v3835, %v3835
  %v4060 = vmul.f32 %v3836, %v3836
  %v4061 = vmul.f32 %v3837, %v3837
  %v4062 = vmul.f32 %v3838, %v3838
  %v4063 = vmul.f32 %v3839, %v3839
  %v4064 = vmul.f32 %v3840, %v3840
  %v4065 = vmul.f32 %v3841, %v3841
  %v4066 = vmul.f32 %v3842, %v3842
  %v4067 = vmul.f32 %v3843, %v3843
  %v4068 = vmul.f32 %v3844, %v3844
  %v4069 = vmul.f32 %v3845, %v3845
  %v4070 = vmul.f32 %v3846, %v3846
  %v4071 = vmul.f32 %v3847, %v3847
  %v4072 = vmul.f32 %v3848, %v3848
  %v4073 = vmul.f32 %v3849, %v3849
  %v4074 = vmul.f32 %v3850, %v3850
  %v4075 = vmul.f32 %v3851, %v3851
  %v4076 = vmul.f32 %v3852, %v3852
  %v4077 = vmul.f32 %v3853, %v3853
  %v4078 = vmul.f32 %v3854, %v3854
  %v4079 = vmul.f32 %v3855, %v3855
  %v4080 = vmul.f32 %v3856, %v3856
  %v4081 = vmul.f32 %v3857, %v3857
  %v4082 = vmul.f32 %v3858, %v3858
  %v4083 = vmul.f32 %v3859, %v3859
  %v4084 = vmul.f32 %v3860, %v3860
  %v4085 = vmul.f32 %v3861, %v3861
  %v4086 = vmul.f32 %v3862, %v3862
  %v4087 = vmul.f32 %v3863, %v3863
  %v4088 = vmul.f32 %v3864, %v3864
  %v4089 = vmul.f32 %v3865, %v3865
  %v4090 = vmul.f32 %v3866, %v3866
  %v4091 = vmul.f32 %v3867, %v3867
  %v4092 = vmul.f32 %v3868, %v3868
  %v4093 = vmul.f32 %v3869, %v3869
  %v4094 = vmul.f32 %v3870, %v3870
  %v4095 = vmul.f32 %v3871, %v3871
  %v4096 = vmul.f32 %v3872, %v3872
  %v4097 = vmul.f32 %v3873, %v3873
  %v4098 = vmul.f32 %v3874, %v3874
  %v4099 = vmul.f32 %v3875, %v3875
  %v4100 = vmul.f32 %v3876, %v3876
  %v4101 = vmul.f32 %v3877, %v3877
  %v4102 = vmul.f32 %v3878, %v3878
  %v4103 = vmul.f32 %v3879, %v3879
  %v4104 = vmul.f32 %v3880, %v3880
  %v4105 = vmul.f32 %v3881, %v3881
  %v4106 = vmul.f32 %v3882, %v3882
  %v4107 = vmul.f32 %v3883, %v3883
  %v4108 = vmul.f32 %v3884, %v3884
  %v4109 = vmul.f32 %v3885, %v3885
  %v4110 = vpack.c.bf16 %v3888, %v3886
  %v4111 = vpack.c.bf16 %v3889, %v3887
  %v4112 = vpack.c.bf16 %v3892, %v3890
  %v4113 = vpack.c.bf16 %v3893, %v3891
  %v4114 = vpack.c.bf16 %v3896, %v3894
  %v4115 = vpack.c.bf16 %v3897, %v3895
  %v4116 = vpack.c.bf16 %v3900, %v3898
  %v4117 = vpack.c.bf16 %v3901, %v3899
  %v4118 = vpack.c.bf16 %v3904, %v3902
  %v4119 = vpack.c.bf16 %v3905, %v3903
  %v4120 = vpack.c.bf16 %v3908, %v3906
  %v4121 = vpack.c.bf16 %v3909, %v3907
  %v4122 = vpack.c.bf16 %v3912, %v3910
  %v4123 = vpack.c.bf16 %v3913, %v3911
  %v4124 = vpack.c.bf16 %v3916, %v3914
  %v4125 = vpack.c.bf16 %v3917, %v3915
  %v4126 = vpack.c.bf16 %v3920, %v3918
  %v4127 = vpack.c.bf16 %v3921, %v3919
  %v4128 = vpack.c.bf16 %v3924, %v3922
  %v4129 = vpack.c.bf16 %v3925, %v3923
  %v4130 = vpack.c.bf16 %v3928, %v3926
  %v4131 = vpack.c.bf16 %v3929, %v3927
  %v4132 = vpack.c.bf16 %v3932, %v3930
  %v4133 = vpack.c.bf16 %v3933, %v3931
  %v4134 = vpack.c.bf16 %v3936, %v3934
  %v4135 = vpack.c.bf16 %v3937, %v3935
  %v4136 = vpack.c.bf16 %v3940, %v3938
  %v4137 = vpack.c.bf16 %v3941, %v3939
  %v4138 = vpack.c.bf16 %v3944, %v3942
  %v4139 = vpack.c.bf16 %v3945, %v3943
  %v4140 = vpack.c.bf16 %v3948, %v3946
  %v4141 = vpack.c.bf16 %v3949, %v3947
  %v4142 = vpack.c.bf16 %v3952, %v3950
  %v4143 = vpack.c.bf16 %v3953, %v3951
  %v4144 = vpack.c.bf16 %v3956, %v3954
  %v4145 = vpack.c.bf16 %v3957, %v3955
  %v4146 = vpack.c.bf16 %v3960, %v3958
  %v4147 = vpack.c.bf16 %v3961, %v3959
  %v4148 = vpack.c.bf16 %v3964, %v3962
  %v4149 = vpack.c.bf16 %v3965, %v3963
  %v4150 = vpack.c.bf16 %v3968, %v3966
  %v4151 = vpack.c.bf16 %v3969, %v3967
  %v4152 = vpack.c.bf16 %v3972, %v3970
  %v4153 = vpack.c.bf16 %v3973, %v3971
  %v4154 = vpack.c.bf16 %v3976, %v3974
  %v4155 = vpack.c.bf16 %v3977, %v3975
  %v4156 = vpack.c.bf16 %v3980, %v3978
  %v4157 = vpack.c.bf16 %v3981, %v3979
  %v4158 = vpack.c.bf16 %v3984, %v3982
  %v4159 = vpack.c.bf16 %v3985, %v3983
  %v4160 = vpack.c.bf16 %v3988, %v3986
  %v4161 = vpack.c.bf16 %v3989, %v3987
  %v4162 = vpack.c.bf16 %v3992, %v3990
  %v4163 = vpack.c.bf16 %v3993, %v3991
  %v4164 = vpack.c.bf16 %v3996, %v3994
  %v4165 = vpack.c.bf16 %v3997, %v3995
  %v4166 = vpack.c.bf16 %v4000, %v3998
  %v4167 = vpack.c.bf16 %v4001, %v3999
  %v4168 = vpack.c.bf16 %v4004, %v4002
  %v4169 = vpack.c.bf16 %v4005, %v4003
  %v4170 = vpack.c.bf16 %v4008, %v4006
  %v4171 = vpack.c.bf16 %v4009, %v4007
  %v4172 = vpack.c.bf16 %v4012, %v4010
  %v4173 = vpack.c.bf16 %v4013, %v4011
  %v4174 = vpack.c.bf16 %v4016, %v4014
  %v4175 = vpack.c.bf16 %v4017, %v4015
  %v4176 = vpack.c.bf16 %v4020, %v4018
  %v4177 = vpack.c.bf16 %v4021, %v4019
  %v4178 = vpack.c.bf16 %v4024, %v4022
  %v4179 = vpack.c.bf16 %v4025, %v4023
  %v4180 = vpack.c.bf16 %v4028, %v4026
  %v4181 = vpack.c.bf16 %v4029, %v4027
  %v4182 = vpack.c.bf16 %v4032, %v4030
  %v4183 = vpack.c.bf16 %v4033, %v4031
  %v4184 = vpack.c.bf16 %v4036, %v4034
  %v4185 = vpack.c.bf16 %v4037, %v4035
  %v4186 = vpack.c.bf16 %v4040, %v4038
  %v4187 = vpack.c.bf16 %v4041, %v4039
  %v4188 = vpack.c.bf16 %v4044, %v4042
  %v4189 = vpack.c.bf16 %v4045, %v4043
  %v4190 = vpack.c.bf16 %v4048, %v4046
  %v4191 = vpack.c.bf16 %v4049, %v4047
  %v4192 = vpack.c.bf16 %v4052, %v4050
  %v4193 = vpack.c.bf16 %v4053, %v4051
  %v4194 = vpack.c.bf16 %v4056, %v4054
  %v4195 = vpack.c.bf16 %v4057, %v4055
  %v4196 = vpack.c.bf16 %v4060, %v4058
  %v4197 = vpack.c.bf16 %v4061, %v4059
  %v4198 = vpack.c.bf16 %v4064, %v4062
  %v4199 = vpack.c.bf16 %v4065, %v4063
  %v4200 = vpack.c.bf16 %v4068, %v4066
  %v4201 = vpack.c.bf16 %v4069, %v4067
  %v4202 = vpack.c.bf16 %v4072, %v4070
  %v4203 = vpack.c.bf16 %v4073, %v4071
  %v4204 = vpack.c.bf16 %v4076, %v4074
  %v4205 = vpack.c.bf16 %v4077, %v4075
  %v4206 = vpack.c.bf16 %v4080, %v4078
  %v4207 = vpack.c.bf16 %v4081, %v4079
  %v4208 = vpack.c.bf16 %v4084, %v4082
  %v4209 = vpack.c.bf16 %v4085, %v4083
  %v4210 = vpack.c.bf16 %v4088, %v4086
  %v4211 = vpack.c.bf16 %v4089, %v4087
  %v4212 = vpack.c.bf16 %v4092, %v4090
  %v4213 = vpack.c.bf16 %v4093, %v4091
  %v4214 = vpack.c.bf16 %v4096, %v4094
  %v4215 = vpack.c.bf16 %v4097, %v4095
  %v4216 = vpack.c.bf16 %v4100, %v4098
  %v4217 = vpack.c.bf16 %v4101, %v4099
  %v4218 = vpack.c.bf16 %v4104, %v4102
  %v4219 = vpack.c.bf16 %v4105, %v4103
  %v4220 = vpack.c.bf16 %v4108, %v4106
  %v4221 = vpack.c.bf16 %v4109, %v4107
  %v4222 = vld [vmem:[%s4] sm:$0xff]
  %v4223 = vld [vmem:[%s4 + $0x8] sm:$0xff]
  %v4224 = vld [vmem:[%s4 + $0x10] sm:$0xff]
  %v4225 = vld [vmem:[%s4 + $0x18] sm:$0xff]
  %v4226 = vld [vmem:[%s4 + $0x20] sm:$0xff]
  %v4227 = vld [vmem:[%s4 + $0x28] sm:$0xff]
  %v4228 = vld [vmem:[%s4 + $0x30] sm:$0xff]
  %v4229 = vld [vmem:[%s4 + $0x38] sm:$0xff]
  %v4230 = vld [vmem:[%s4 + $0x40] sm:$0xff]
  %v4231 = vld [vmem:[%s4 + $0x48] sm:$0xff]
  %v4232 = vld [vmem:[%s4 + $0x50] sm:$0xff]
  %v4233 = vld [vmem:[%s4 + $0x58] sm:$0xff]
  %v4234 = vld [vmem:[%s4 + $0x60] sm:$0xff]
  %v4235 = vld [vmem:[%s4 + $0x68] sm:$0xff]
  %v4236 = vld [vmem:[%s4 + $0x70] sm:$0xff]
  %v4237 = vld [vmem:[%s4 + $0x78] sm:$0xff]
  %v4238 = vld [vmem:[%s4 + $0x80] sm:$0xff]
  %v4239 = vld [vmem:[%s4 + $0x88] sm:$0xff]
  %v4240 = vld [vmem:[%s4 + $0x90] sm:$0xff]
  %v4241 = vld [vmem:[%s4 + $0x98] sm:$0xff]
  %v4242 = vld [vmem:[%s4 + $0xa0] sm:$0xff]
  %v4243 = vld [vmem:[%s4 + $0xa8] sm:$0xff]
  %v4244 = vld [vmem:[%s4 + $0xb0] sm:$0xff]
  %v4245 = vld [vmem:[%s4 + $0xb8] sm:$0xff]
  %v4246 = vld [vmem:[%s4 + $0xc0] sm:$0xff]
  %v4247 = vld [vmem:[%s4 + $0xc8] sm:$0xff]
  %v4248 = vld [vmem:[%s4 + $0xd0] sm:$0xff]
  %v4249 = vld [vmem:[%s4 + $0xd8] sm:$0xff]
  %v4250 = vld [vmem:[%s4 + $0xe0] sm:$0xff]
  %v4251 = vld [vmem:[%s4 + $0xe8] sm:$0xff]
  %v4252 = vld [vmem:[%s4 + $0xf0] sm:$0xff]
  %v4253 = vld [vmem:[%s4 + $0xf8] sm:$0xff]
  %v4286 = vunpack.c.l.b16 %v4222
  %v4287 = vunpack.c.h.b16 %v4222
  %v4288 = vunpack.c.l.b16 %v4223
  %v4289 = vunpack.c.h.b16 %v4223
  %v4290 = vunpack.c.l.b16 %v4224
  %v4291 = vunpack.c.h.b16 %v4224
  %v4292 = vunpack.c.l.b16 %v4225
  %v4293 = vunpack.c.h.b16 %v4225
  %v4294 = vunpack.c.l.b16 %v4226
  %v4295 = vunpack.c.h.b16 %v4226
  %v4296 = vunpack.c.l.b16 %v4227
  %v4297 = vunpack.c.h.b16 %v4227
  %v4298 = vunpack.c.l.b16 %v4228
  %v4299 = vunpack.c.h.b16 %v4228
  %v4300 = vunpack.c.l.b16 %v4229
  %v4301 = vunpack.c.h.b16 %v4229
  %v4302 = vunpack.c.l.b16 %v4230
  %v4303 = vunpack.c.h.b16 %v4230
  %v4304 = vunpack.c.l.b16 %v4231
  %v4305 = vunpack.c.h.b16 %v4231
  %v4306 = vunpack.c.l.b16 %v4232
  %v4307 = vunpack.c.h.b16 %v4232
  %v4308 = vunpack.c.l.b16 %v4233
  %v4309 = vunpack.c.h.b16 %v4233
  %v4310 = vunpack.c.l.b16 %v4234
  %v4311 = vunpack.c.h.b16 %v4234
  %v4312 = vunpack.c.l.b16 %v4235
  %v4313 = vunpack.c.h.b16 %v4235
  %v4314 = vunpack.c.l.b16 %v4236
  %v4315 = vunpack.c.h.b16 %v4236
  %v4316 = vunpack.c.l.b16 %v4237
  %v4317 = vunpack.c.h.b16 %v4237
  %v4318 = vunpack.c.l.b16 %v4238
  %v4319 = vunpack.c.h.b16 %v4238
  %v4320 = vunpack.c.l.b16 %v4239
  %v4321 = vunpack.c.h.b16 %v4239
  %v4322 = vunpack.c.l.b16 %v4240
  %v4323 = vunpack.c.h.b16 %v4240
  %v4324 = vunpack.c.l.b16 %v4241
  %v4325 = vunpack.c.h.b16 %v4241
  %v4326 = vunpack.c.l.b16 %v4242
  %v4327 = vunpack.c.h.b16 %v4242
  %v4328 = vunpack.c.l.b16 %v4243
  %v4329 = vunpack.c.h.b16 %v4243
  %v4330 = vunpack.c.l.b16 %v4244
  %v4331 = vunpack.c.h.b16 %v4244
  %v4332 = vunpack.c.l.b16 %v4245
  %v4333 = vunpack.c.h.b16 %v4245
  %v4334 = vunpack.c.l.b16 %v4246
  %v4335 = vunpack.c.h.b16 %v4246
  %v4336 = vunpack.c.l.b16 %v4247
  %v4337 = vunpack.c.h.b16 %v4247
  %v4338 = vunpack.c.l.b16 %v4248
  %v4339 = vunpack.c.h.b16 %v4248
  %v4340 = vunpack.c.l.b16 %v4249
  %v4341 = vunpack.c.h.b16 %v4249
  %v4342 = vunpack.c.l.b16 %v4250
  %v4343 = vunpack.c.h.b16 %v4250
  %v4344 = vunpack.c.l.b16 %v4251
  %v4345 = vunpack.c.h.b16 %v4251
  %v4346 = vunpack.c.l.b16 %v4252
  %v4347 = vunpack.c.h.b16 %v4252
  %v4348 = vunpack.c.l.b16 %v4253
  %v4349 = vunpack.c.h.b16 %v4253
  %v4350 = vpack.c.b16 %v4288, %v4286
  %v4351 = vpack.c.b16 %v4289, %v4287
  %v4352 = vpack.c.b16 %v4292, %v4290
  %v4353 = vpack.c.b16 %v4293, %v4291
  %v4354 = vpack.c.b16 %v4296, %v4294
  %v4355 = vpack.c.b16 %v4297, %v4295
  %v4356 = vpack.c.b16 %v4300, %v4298
  %v4357 = vpack.c.b16 %v4301, %v4299
  %v4358 = vpack.c.b16 %v4304, %v4302
  %v4359 = vpack.c.b16 %v4305, %v4303
  %v4360 = vpack.c.b16 %v4308, %v4306
  %v4361 = vpack.c.b16 %v4309, %v4307
  %v4362 = vpack.c.b16 %v4312, %v4310
  %v4363 = vpack.c.b16 %v4313, %v4311
  %v4364 = vpack.c.b16 %v4316, %v4314
  %v4365 = vpack.c.b16 %v4317, %v4315
  %v4366 = vpack.c.b16 %v4320, %v4318
  %v4367 = vpack.c.b16 %v4321, %v4319
  %v4368 = vpack.c.b16 %v4324, %v4322
  %v4369 = vpack.c.b16 %v4325, %v4323
  %v4370 = vpack.c.b16 %v4328, %v4326
  %v4371 = vpack.c.b16 %v4329, %v4327
  %v4372 = vpack.c.b16 %v4332, %v4330
  %v4373 = vpack.c.b16 %v4333, %v4331
  %v4374 = vpack.c.b16 %v4336, %v4334
  %v4375 = vpack.c.b16 %v4337, %v4335
  %v4376 = vpack.c.b16 %v4340, %v4338
  %v4377 = vpack.c.b16 %v4341, %v4339
  %v4378 = vpack.c.b16 %v4344, %v4342
  %v4379 = vpack.c.b16 %v4345, %v4343
  %v4380 = vpack.c.b16 %v4348, %v4346
  %v4381 = vpack.c.b16 %v4349, %v4347
  %4414 = vmatprep.subr.bf16.mxu0 %v4351
  %4415 = vmatpush1.bf16.msra.mxu0 %v4350
  %4416 = vmatprep.subr.bf16.mxu0 %v4353
  %4417 = vmatpush1.bf16.msra.mxu0 %v4352
  %4418 = vmatprep.subr.bf16.mxu0 %v4355
  %4419 = vmatpush1.bf16.msra.mxu0 %v4354
  %4420 = vmatprep.subr.bf16.mxu0 %v4357
  %4421 = vmatpush1.bf16.msra.mxu0 %v4356
  %4422 = vmatprep.subr.bf16.mxu0 %v4359
  %4423 = vmatpush1.bf16.msra.mxu0 %v4358
  %4424 = vmatprep.subr.bf16.mxu0 %v4361
  %4425 = vmatpush1.bf16.msra.mxu0 %v4360
  %4426 = vmatprep.subr.bf16.mxu0 %v4363
  %4427 = vmatpush1.bf16.msra.mxu0 %v4362
  %4428 = vmatprep.subr.bf16.mxu0 %v4365
  %4429 = vmatpush1.bf16.msra.mxu0 %v4364
  %4430 = vmatprep.subr.bf16.mxu0 %v4367
  %4431 = vmatpush1.bf16.msra.mxu0 %v4366
  %4432 = vmatprep.subr.bf16.mxu0 %v4369
  %4433 = vmatpush1.bf16.msra.mxu0 %v4368
  %4434 = vmatprep.subr.bf16.mxu0 %v4371
  %4435 = vmatpush1.bf16.msra.mxu0 %v4370
  %4436 = vmatprep.subr.bf16.mxu0 %v4373
  %4437 = vmatpush1.bf16.msra.mxu0 %v4372
  %4438 = vmatprep.subr.bf16.mxu0 %v4375
  %4439 = vmatpush1.bf16.msra.mxu0 %v4374
  %4440 = vmatprep.subr.bf16.mxu0 %v4377
  %4441 = vmatpush1.bf16.msra.mxu0 %v4376
  %4442 = vmatprep.subr.bf16.mxu0 %v4379
  %4443 = vmatpush1.bf16.msra.mxu0 %v4378
  %4444 = vmatprep.subr.bf16.mxu0 %v4381
  %4445 = vmatpush1.bf16.msra.mxu0 %v4380
  %4446 = vmatprep.mubr.bf16.mxu0 %v4111
  %4447 = vmatmul.mubr.bf16.gmra.mrb[0].mxu0 %v4110
  %v4448 = vpop.f32.mrb[0].mxu0
  %v4449 = vadd.f32 0.0, %v4448
  %v4450 = vpop.f32.mrb[0].mxu0
  %v4451 = vadd.f32 0.0, %v4450
  %v4452 = vpop.f32.mrb[0].mxu0
  %v4453 = vadd.f32 0.0, %v4452
  %v4454 = vpop.f32.mrb[0].mxu0
  %v4455 = vadd.f32 0.0, %v4454
  %4456 = vmatprep.mubr.bf16.mxu0 %v4113
  %4457 = vmatmul.mubr.bf16.gmra.mrb[0].mxu0 %v4112
  %v4458 = vpop.f32.mrb[0].mxu0
  %v4459 = vadd.f32 0.0, %v4458
  %v4460 = vpop.f32.mrb[0].mxu0
  %v4461 = vadd.f32 0.0, %v4460
  %v4462 = vpop.f32.mrb[0].mxu0
  %v4463 = vadd.f32 0.0, %v4462
  %v4464 = vpop.f32.mrb[0].mxu0
  %v4465 = vadd.f32 0.0, %v4464
  %4466 = vmatprep.mubr.bf16.mxu0 %v4115
  %4467 = vmatmul.mubr.bf16.gmra.mrb[0].mxu0 %v4114
  %v4468 = vpop.f32.mrb[0].mxu0
  %v4469 = vadd.f32 0.0, %v4468
  %v4470 = vpop.f32.mrb[0].mxu0
  %v4471 = vadd.f32 0.0, %v4470
  %v4472 = vpop.f32.mrb[0].mxu0
  %v4473 = vadd.f32 0.0, %v4472
  %v4474 = vpop.f32.mrb[0].mxu0
  %v4475 = vadd.f32 0.0, %v4474
  %4476 = vmatprep.mubr.bf16.mxu0 %v4117
  %4477 = vmatmul.mubr.bf16.gmra.mrb[0].mxu0 %v4116
  %v4478 = vpop.f32.mrb[0].mxu0
  %v4479 = vadd.f32 0.0, %v4478
  %v4480 = vpop.f32.mrb[0].mxu0
  %v4481 = vadd.f32 0.0, %v4480
  %v4482 = vpop.f32.mrb[0].mxu0
  %v4483 = vadd.f32 0.0, %v4482
  %v4484 = vpop.f32.mrb[0].mxu0
  %v4485 = vadd.f32 0.0, %v4484
  %4486 = vmatprep.mubr.bf16.mxu0 %v4119
  %4487 = vmatmul.mubr.bf16.gmra.mrb[0].mxu0 %v4118
  %v4488 = vpop.f32.mrb[0].mxu0
  %v4489 = vadd.f32 0.0, %v4488
  %v4490 = vpop.f32.mrb[0].mxu0
  %v4491 = vadd.f32 0.0, %v4490
  %v4492 = vpop.f32.mrb[0].mxu0
  %v4493 = vadd.f32 0.0, %v4492
  %v4494 = vpop.f32.mrb[0].mxu0
  %v4495 = vadd.f32 0.0, %v4494
  %4496 = vmatprep.mubr.bf16.mxu0 %v4121
  %4497 = vmatmul.mubr.bf16.gmra.mrb[0].mxu0 %v4120
  %v4498 = vpop.f32.mrb[0].mxu0
  %v4499 = vadd.f32 0.0, %v4498
  %v4500 = vpop.f32.mrb[0].mxu0
  %v4501 = vadd.f32 0.0, %v4500
  %v4502 = vpop.f32.mrb[0].mxu0
  %v4503 = vadd.f32 0.0, %v4502
  %v4504 = vpop.f32.mrb[0].mxu0
  %v4505 = vadd.f32 0.0, %v4504
  %4506 = vmatprep.mubr.bf16.mxu0 %v4123
  %4507 = vmatmul.mubr.bf16.gmra.mrb[0].mxu0 %v4122
  %v4508 = vpop.f32.mrb[0].mxu0
  %v4509 = vadd.f32 0.0, %v4508
  %v4510 = vpop.f32.mrb[0].mxu0
  %v4511 = vadd.f32 0.0, %v4510
  %v4512 = vpop.f32.mrb[0].mxu0
  %v4513 = vadd.f32 0.0, %v4512
  %v4514 = vpop.f32.mrb[0].mxu0
  %v4515 = vadd.f32 0.0, %v4514
  %4516 = vmatprep.mubr.bf16.mxu0 %v4125
  %4517 = vmatmul.mubr.bf16.gmra.mrb[0].mxu0 %v4124
  %v4518 = vpop.f32.mrb[0].mxu0
  %v4519 = vadd.f32 0.0, %v4518
  %v4520 = vpop.f32.mrb[0].mxu0
  %v4521 = vadd.f32 0.0, %v4520
  %v4522 = vpop.f32.mrb[0].mxu0
  %v4523 = vadd.f32 0.0, %v4522
  %v4524 = vpop.f32.mrb[0].mxu0
  %v4525 = vadd.f32 0.0, %v4524
  %4526 = vmatprep.mubr.bf16.mxu0 %v4127
  %4527 = vmatmul.mubr.bf16.gmra.mrb[0].mxu0 %v4126
  %v4528 = vpop.f32.mrb[0].mxu0
  %v4529 = vadd.f32 0.0, %v4528
  %v4530 = vpop.f32.mrb[0].mxu0
  %v4531 = vadd.f32 0.0, %v4530
  %v4532 = vpop.f32.mrb[0].mxu0
  %v4533 = vadd.f32 0.0, %v4532
  %v4534 = vpop.f32.mrb[0].mxu0
  %v4535 = vadd.f32 0.0, %v4534
  %4536 = vmatprep.mubr.bf16.mxu0 %v4129
  %4537 = vmatmul.mubr.bf16.gmra.mrb[0].mxu0 %v4128
  %v4538 = vpop.f32.mrb[0].mxu0
  %v4539 = vadd.f32 0.0, %v4538
  %v4540 = vpop.f32.mrb[0].mxu0
  %v4541 = vadd.f32 0.0, %v4540
  %v4542 = vpop.f32.mrb[0].mxu0
  %v4543 = vadd.f32 0.0, %v4542
  %v4544 = vpop.f32.mrb[0].mxu0
  %v4545 = vadd.f32 0.0, %v4544
  %4546 = vmatprep.mubr.bf16.mxu0 %v4131
  %4547 = vmatmul.mubr.bf16.gmra.mrb[0].mxu0 %v4130
  %v4548 = vpop.f32.mrb[0].mxu0
  %v4549 = vadd.f32 0.0, %v4548
  %v4550 = vpop.f32.mrb[0].mxu0
  %v4551 = vadd.f32 0.0, %v4550
  %v4552 = vpop.f32.mrb[0].mxu0
  %v4553 = vadd.f32 0.0, %v4552
  %v4554 = vpop.f32.mrb[0].mxu0
  %v4555 = vadd.f32 0.0, %v4554
  %4556 = vmatprep.mubr.bf16.mxu0 %v4133
  %4557 = vmatmul.mubr.bf16.gmra.mrb[0].mxu0 %v4132
  %v4558 = vpop.f32.mrb[0].mxu0
  %v4559 = vadd.f32 0.0, %v4558
  %v4560 = vpop.f32.mrb[0].mxu0
  %v4561 = vadd.f32 0.0, %v4560
  %v4562 = vpop.f32.mrb[0].mxu0
  %v4563 = vadd.f32 0.0, %v4562
  %v4564 = vpop.f32.mrb[0].mxu0
  %v4565 = vadd.f32 0.0, %v4564
  %4566 = vmatprep.mubr.bf16.mxu0 %v4135
  %4567 = vmatmul.mubr.bf16.gmra.mrb[0].mxu0 %v4134
  %v4568 = vpop.f32.mrb[0].mxu0
  %v4569 = vadd.f32 0.0, %v4568
  %v4570 = vpop.f32.mrb[0].mxu0
  %v4571 = vadd.f32 0.0, %v4570
  %v4572 = vpop.f32.mrb[0].mxu0
  %v4573 = vadd.f32 0.0, %v4572
  %v4574 = vpop.f32.mrb[0].mxu0
  %v4575 = vadd.f32 0.0, %v4574
  %4576 = vmatprep.mubr.bf16.mxu0 %v4137
  %4577 = vmatmul.mubr.bf16.gmra.mrb[0].mxu0 %v4136
  %v4578 = vpop.f32.mrb[0].mxu0
  %v4579 = vadd.f32 0.0, %v4578
  %v4580 = vpop.f32.mrb[0].mxu0
  %v4581 = vadd.f32 0.0, %v4580
  %v4582 = vpop.f32.mrb[0].mxu0
  %v4583 = vadd.f32 0.0, %v4582
  %v4584 = vpop.f32.mrb[0].mxu0
  %v4585 = vadd.f32 0.0, %v4584
  %4586 = vmatprep.mubr.bf16.mxu0 %v4139
  %4587 = vmatmul.mubr.bf16.gmra.mrb[0].mxu0 %v4138
  %v4588 = vpop.f32.mrb[0].mxu0
  %v4589 = vadd.f32 0.0, %v4588
  %v4590 = vpop.f32.mrb[0].mxu0
  %v4591 = vadd.f32 0.0, %v4590
  %v4592 = vpop.f32.mrb[0].mxu0
  %v4593 = vadd.f32 0.0, %v4592
  %v4594 = vpop.f32.mrb[0].mxu0
  %v4595 = vadd.f32 0.0, %v4594
  %4596 = vmatprep.mubr.bf16.mxu0 %v4141
  %4597 = vmatmul.mubr.bf16.gmra.mrb[0].mxu0 %v4140
  %v4598 = vpop.f32.mrb[0].mxu0
  %v4599 = vadd.f32 0.0, %v4598
  %v4600 = vpop.f32.mrb[0].mxu0
  %v4601 = vadd.f32 0.0, %v4600
  %v4602 = vpop.f32.mrb[0].mxu0
  %v4603 = vadd.f32 0.0, %v4602
  %v4604 = vpop.f32.mrb[0].mxu0
  %v4605 = vadd.f32 0.0, %v4604
  %4606 = vmatprep.mubr.bf16.mxu0 %v4143
  %4607 = vmatmul.mubr.bf16.gmra.mrb[0].mxu0 %v4142
  %v4608 = vpop.f32.mrb[0].mxu0
  %v4609 = vadd.f32 0.0, %v4608
  %v4610 = vpop.f32.mrb[0].mxu0
  %v4611 = vadd.f32 0.0, %v4610
  %v4612 = vpop.f32.mrb[0].mxu0
  %v4613 = vadd.f32 0.0, %v4612
  %v4614 = vpop.f32.mrb[0].mxu0
  %v4615 = vadd.f32 0.0, %v4614
  %4616 = vmatprep.mubr.bf16.mxu0 %v4145
  %4617 = vmatmul.mubr.bf16.gmra.mrb[0].mxu0 %v4144
  %v4618 = vpop.f32.mrb[0].mxu0
  %v4619 = vadd.f32 0.0, %v4618
  %v4620 = vpop.f32.mrb[0].mxu0
  %v4621 = vadd.f32 0.0, %v4620
  %v4622 = vpop.f32.mrb[0].mxu0
  %v4623 = vadd.f32 0.0, %v4622
  %v4624 = vpop.f32.mrb[0].mxu0
  %v4625 = vadd.f32 0.0, %v4624
  %4626 = vmatprep.mubr.bf16.mxu0 %v4147
  %4627 = vmatmul.mubr.bf16.gmra.mrb[0].mxu0 %v4146
  %v4628 = vpop.f32.mrb[0].mxu0
  %v4629 = vadd.f32 0.0, %v4628
  %v4630 = vpop.f32.mrb[0].mxu0
  %v4631 = vadd.f32 0.0, %v4630
  %v4632 = vpop.f32.mrb[0].mxu0
  %v4633 = vadd.f32 0.0, %v4632
  %v4634 = vpop.f32.mrb[0].mxu0
  %v4635 = vadd.f32 0.0, %v4634
  %4636 = vmatprep.mubr.bf16.mxu0 %v4149
  %4637 = vmatmul.mubr.bf16.gmra.mrb[0].mxu0 %v4148
  %v4638 = vpop.f32.mrb[0].mxu0
  %v4639 = vadd.f32 0.0, %v4638
  %v4640 = vpop.f32.mrb[0].mxu0
  %v4641 = vadd.f32 0.0, %v4640
  %v4642 = vpop.f32.mrb[0].mxu0
  %v4643 = vadd.f32 0.0, %v4642
  %v4644 = vpop.f32.mrb[0].mxu0
  %v4645 = vadd.f32 0.0, %v4644
  %4646 = vmatprep.mubr.bf16.mxu0 %v4151
  %4647 = vmatmul.mubr.bf16.gmra.mrb[0].mxu0 %v4150
  %v4648 = vpop.f32.mrb[0].mxu0
  %v4649 = vadd.f32 0.0, %v4648
  %v4650 = vpop.f32.mrb[0].mxu0
  %v4651 = vadd.f32 0.0, %v4650
  %v4652 = vpop.f32.mrb[0].mxu0
  %v4653 = vadd.f32 0.0, %v4652
  %v4654 = vpop.f32.mrb[0].mxu0
  %v4655 = vadd.f32 0.0, %v4654
  %4656 = vmatprep.mubr.bf16.mxu0 %v4153
  %4657 = vmatmul.mubr.bf16.gmra.mrb[0].mxu0 %v4152
  %v4658 = vpop.f32.mrb[0].mxu0
  %v4659 = vadd.f32 0.0, %v4658
  %v4660 = vpop.f32.mrb[0].mxu0
  %v4661 = vadd.f32 0.0, %v4660
  %v4662 = vpop.f32.mrb[0].mxu0
  %v4663 = vadd.f32 0.0, %v4662
  %v4664 = vpop.f32.mrb[0].mxu0
  %v4665 = vadd.f32 0.0, %v4664
  %4666 = vmatprep.mubr.bf16.mxu0 %v4155
  %4667 = vmatmul.mubr.bf16.gmra.mrb[0].mxu0 %v4154
  %v4668 = vpop.f32.mrb[0].mxu0
  %v4669 = vadd.f32 0.0, %v4668
  %v4670 = vpop.f32.mrb[0].mxu0
  %v4671 = vadd.f32 0.0, %v4670
  %v4672 = vpop.f32.mrb[0].mxu0
  %v4673 = vadd.f32 0.0, %v4672
  %v4674 = vpop.f32.mrb[0].mxu0
  %v4675 = vadd.f32 0.0, %v4674
  %4676 = vmatprep.mubr.bf16.mxu0 %v4157
  %4677 = vmatmul.mubr.bf16.gmra.mrb[0].mxu0 %v4156
  %v4678 = vpop.f32.mrb[0].mxu0
  %v4679 = vadd.f32 0.0, %v4678
  %v4680 = vpop.f32.mrb[0].mxu0
  %v4681 = vadd.f32 0.0, %v4680
  %v4682 = vpop.f32.mrb[0].mxu0
  %v4683 = vadd.f32 0.0, %v4682
  %v4684 = vpop.f32.mrb[0].mxu0
  %v4685 = vadd.f32 0.0, %v4684
  %4686 = vmatprep.mubr.bf16.mxu0 %v4159
  %4687 = vmatmul.mubr.bf16.gmra.mrb[0].mxu0 %v4158
  %v4688 = vpop.f32.mrb[0].mxu0
  %v4689 = vadd.f32 0.0, %v4688
  %v4690 = vpop.f32.mrb[0].mxu0
  %v4691 = vadd.f32 0.0, %v4690
  %v4692 = vpop.f32.mrb[0].mxu0
  %v4693 = vadd.f32 0.0, %v4692
  %v4694 = vpop.f32.mrb[0].mxu0
  %v4695 = vadd.f32 0.0, %v4694
  %4696 = vmatprep.mubr.bf16.mxu0 %v4161
  %4697 = vmatmul.mubr.bf16.gmra.mrb[0].mxu0 %v4160
  %v4698 = vpop.f32.mrb[0].mxu0
  %v4699 = vadd.f32 0.0, %v4698
  %v4700 = vpop.f32.mrb[0].mxu0
  %v4701 = vadd.f32 0.0, %v4700
  %v4702 = vpop.f32.mrb[0].mxu0
  %v4703 = vadd.f32 0.0, %v4702
  %v4704 = vpop.f32.mrb[0].mxu0
  %v4705 = vadd.f32 0.0, %v4704
  %4706 = vmatprep.mubr.bf16.mxu0 %v4163
  %4707 = vmatmul.mubr.bf16.gmra.mrb[0].mxu0 %v4162
  %v4708 = vpop.f32.mrb[0].mxu0
  %v4709 = vadd.f32 0.0, %v4708
  %v4710 = vpop.f32.mrb[0].mxu0
  %v4711 = vadd.f32 0.0, %v4710
  %v4712 = vpop.f32.mrb[0].mxu0
  %v4713 = vadd.f32 0.0, %v4712
  %v4714 = vpop.f32.mrb[0].mxu0
  %v4715 = vadd.f32 0.0, %v4714
  %4716 = vmatprep.mubr.bf16.mxu0 %v4165
  %4717 = vmatmul.mubr.bf16.gmra.mrb[0].mxu0 %v4164
  %v4718 = vpop.f32.mrb[0].mxu0
  %v4719 = vadd.f32 0.0, %v4718
  %v4720 = vpop.f32.mrb[0].mxu0
  %v4721 = vadd.f32 0.0, %v4720
  %v4722 = vpop.f32.mrb[0].mxu0
  %v4723 = vadd.f32 0.0, %v4722
  %v4724 = vpop.f32.mrb[0].mxu0
  %v4725 = vadd.f32 0.0, %v4724
  %4726 = vmatprep.mubr.bf16.mxu0 %v4167
  %4727 = vmatmul.mubr.bf16.gmra.mrb[0].mxu0 %v4166
  %v4728 = vpop.f32.mrb[0].mxu0
  %v4729 = vadd.f32 0.0, %v4728
  %v4730 = vpop.f32.mrb[0].mxu0
  %v4731 = vadd.f32 0.0, %v4730
  %v4732 = vpop.f32.mrb[0].mxu0
  %v4733 = vadd.f32 0.0, %v4732
  %v4734 = vpop.f32.mrb[0].mxu0
  %v4735 = vadd.f32 0.0, %v4734
  %4736 = vmatprep.mubr.bf16.mxu0 %v4169
  %4737 = vmatmul.mubr.bf16.gmra.mrb[0].mxu0 %v4168
  %v4738 = vpop.f32.mrb[0].mxu0
  %v4739 = vadd.f32 0.0, %v4738
  %v4740 = vpop.f32.mrb[0].mxu0
  %v4741 = vadd.f32 0.0, %v4740
  %v4742 = vpop.f32.mrb[0].mxu0
  %v4743 = vadd.f32 0.0, %v4742
  %v4744 = vpop.f32.mrb[0].mxu0
  %v4745 = vadd.f32 0.0, %v4744
  %4746 = vmatprep.mubr.bf16.mxu0 %v4171
  %4747 = vmatmul.mubr.bf16.gmra.mrb[0].mxu0 %v4170
  %v4748 = vpop.f32.mrb[0].mxu0
  %v4749 = vadd.f32 0.0, %v4748
  %v4750 = vpop.f32.mrb[0].mxu0
  %v4751 = vadd.f32 0.0, %v4750
  %v4752 = vpop.f32.mrb[0].mxu0
  %v4753 = vadd.f32 0.0, %v4752
  %v4754 = vpop.f32.mrb[0].mxu0
  %v4755 = vadd.f32 0.0, %v4754
  %4756 = vmatprep.mubr.bf16.mxu0 %v4173
  %4757 = vmatmul.mubr.bf16.gmra.mrb[0].mxu0 %v4172
  %v4758 = vpop.f32.mrb[0].mxu0
  %v4759 = vadd.f32 0.0, %v4758
  %v4760 = vpop.f32.mrb[0].mxu0
  %v4761 = vadd.f32 0.0, %v4760
  %v4762 = vpop.f32.mrb[0].mxu0
  %v4763 = vadd.f32 0.0, %v4762
  %v4764 = vpop.f32.mrb[0].mxu0
  %v4765 = vadd.f32 0.0, %v4764
  %4766 = vmatprep.mubr.bf16.mxu0 %v4175
  %4767 = vmatmul.mubr.bf16.gmra.mrb[0].mxu0 %v4174
  %v4768 = vpop.f32.mrb[0].mxu0
  %v4769 = vadd.f32 0.0, %v4768
  %v4770 = vpop.f32.mrb[0].mxu0
  %v4771 = vadd.f32 0.0, %v4770
  %v4772 = vpop.f32.mrb[0].mxu0
  %v4773 = vadd.f32 0.0, %v4772
  %v4774 = vpop.f32.mrb[0].mxu0
  %v4775 = vadd.f32 0.0, %v4774
  %4776 = vmatprep.mubr.bf16.mxu0 %v4177
  %4777 = vmatmul.mubr.bf16.gmra.mrb[0].mxu0 %v4176
  %v4778 = vpop.f32.mrb[0].mxu0
  %v4779 = vadd.f32 0.0, %v4778
  %v4780 = vpop.f32.mrb[0].mxu0
  %v4781 = vadd.f32 0.0, %v4780
  %v4782 = vpop.f32.mrb[0].mxu0
  %v4783 = vadd.f32 0.0, %v4782
  %v4784 = vpop.f32.mrb[0].mxu0
  %v4785 = vadd.f32 0.0, %v4784
  %4786 = vmatprep.mubr.bf16.mxu0 %v4179
  %4787 = vmatmul.mubr.bf16.gmra.mrb[0].mxu0 %v4178
  %v4788 = vpop.f32.mrb[0].mxu0
  %v4789 = vadd.f32 0.0, %v4788
  %v4790 = vpop.f32.mrb[0].mxu0
  %v4791 = vadd.f32 0.0, %v4790
  %v4792 = vpop.f32.mrb[0].mxu0
  %v4793 = vadd.f32 0.0, %v4792
  %v4794 = vpop.f32.mrb[0].mxu0
  %v4795 = vadd.f32 0.0, %v4794
  %4796 = vmatprep.mubr.bf16.mxu0 %v4181
  %4797 = vmatmul.mubr.bf16.gmra.mrb[0].mxu0 %v4180
  %v4798 = vpop.f32.mrb[0].mxu0
  %v4799 = vadd.f32 0.0, %v4798
  %v4800 = vpop.f32.mrb[0].mxu0
  %v4801 = vadd.f32 0.0, %v4800
  %v4802 = vpop.f32.mrb[0].mxu0
  %v4803 = vadd.f32 0.0, %v4802
  %v4804 = vpop.f32.mrb[0].mxu0
  %v4805 = vadd.f32 0.0, %v4804
  %4806 = vmatprep.mubr.bf16.mxu0 %v4183
  %4807 = vmatmul.mubr.bf16.gmra.mrb[0].mxu0 %v4182
  %v4808 = vpop.f32.mrb[0].mxu0
  %v4809 = vadd.f32 0.0, %v4808
  %v4810 = vpop.f32.mrb[0].mxu0
  %v4811 = vadd.f32 0.0, %v4810
  %v4812 = vpop.f32.mrb[0].mxu0
  %v4813 = vadd.f32 0.0, %v4812
  %v4814 = vpop.f32.mrb[0].mxu0
  %v4815 = vadd.f32 0.0, %v4814
  %4816 = vmatprep.mubr.bf16.mxu0 %v4185
  %4817 = vmatmul.mubr.bf16.gmra.mrb[0].mxu0 %v4184
  %v4818 = vpop.f32.mrb[0].mxu0
  %v4819 = vadd.f32 0.0, %v4818
  %v4820 = vpop.f32.mrb[0].mxu0
  %v4821 = vadd.f32 0.0, %v4820
  %v4822 = vpop.f32.mrb[0].mxu0
  %v4823 = vadd.f32 0.0, %v4822
  %v4824 = vpop.f32.mrb[0].mxu0
  %v4825 = vadd.f32 0.0, %v4824
  %4826 = vmatprep.mubr.bf16.mxu0 %v4187
  %4827 = vmatmul.mubr.bf16.gmra.mrb[0].mxu0 %v4186
  %v4828 = vpop.f32.mrb[0].mxu0
  %v4829 = vadd.f32 0.0, %v4828
  %v4830 = vpop.f32.mrb[0].mxu0
  %v4831 = vadd.f32 0.0, %v4830
  %v4832 = vpop.f32.mrb[0].mxu0
  %v4833 = vadd.f32 0.0, %v4832
  %v4834 = vpop.f32.mrb[0].mxu0
  %v4835 = vadd.f32 0.0, %v4834
  %4836 = vmatprep.mubr.bf16.mxu0 %v4189
  %4837 = vmatmul.mubr.bf16.gmra.mrb[0].mxu0 %v4188
  %v4838 = vpop.f32.mrb[0].mxu0
  %v4839 = vadd.f32 0.0, %v4838
  %v4840 = vpop.f32.mrb[0].mxu0
  %v4841 = vadd.f32 0.0, %v4840
  %v4842 = vpop.f32.mrb[0].mxu0
  %v4843 = vadd.f32 0.0, %v4842
  %v4844 = vpop.f32.mrb[0].mxu0
  %v4845 = vadd.f32 0.0, %v4844
  %4846 = vmatprep.mubr.bf16.mxu0 %v4191
  %4847 = vmatmul.mubr.bf16.gmra.mrb[0].mxu0 %v4190
  %v4848 = vpop.f32.mrb[0].mxu0
  %v4849 = vadd.f32 0.0, %v4848
  %v4850 = vpop.f32.mrb[0].mxu0
  %v4851 = vadd.f32 0.0, %v4850
  %v4852 = vpop.f32.mrb[0].mxu0
  %v4853 = vadd.f32 0.0, %v4852
  %v4854 = vpop.f32.mrb[0].mxu0
  %v4855 = vadd.f32 0.0, %v4854
  %4856 = vmatprep.mubr.bf16.mxu0 %v4193
  %4857 = vmatmul.mubr.bf16.gmra.mrb[0].mxu0 %v4192
  %v4858 = vpop.f32.mrb[0].mxu0
  %v4859 = vadd.f32 0.0, %v4858
  %v4860 = vpop.f32.mrb[0].mxu0
  %v4861 = vadd.f32 0.0, %v4860
  %v4862 = vpop.f32.mrb[0].mxu0
  %v4863 = vadd.f32 0.0, %v4862
  %v4864 = vpop.f32.mrb[0].mxu0
  %v4865 = vadd.f32 0.0, %v4864
  %4866 = vmatprep.mubr.bf16.mxu0 %v4195
  %4867 = vmatmul.mubr.bf16.gmra.mrb[0].mxu0 %v4194
  %v4868 = vpop.f32.mrb[0].mxu0
  %v4869 = vadd.f32 0.0, %v4868
  %v4870 = vpop.f32.mrb[0].mxu0
  %v4871 = vadd.f32 0.0, %v4870
  %v4872 = vpop.f32.mrb[0].mxu0
  %v4873 = vadd.f32 0.0, %v4872
  %v4874 = vpop.f32.mrb[0].mxu0
  %v4875 = vadd.f32 0.0, %v4874
  %4876 = vmatprep.mubr.bf16.mxu0 %v4197
  %4877 = vmatmul.mubr.bf16.gmra.mrb[0].mxu0 %v4196
  %v4878 = vpop.f32.mrb[0].mxu0
  %v4879 = vadd.f32 0.0, %v4878
  %v4880 = vpop.f32.mrb[0].mxu0
  %v4881 = vadd.f32 0.0, %v4880
  %v4882 = vpop.f32.mrb[0].mxu0
  %v4883 = vadd.f32 0.0, %v4882
  %v4884 = vpop.f32.mrb[0].mxu0
  %v4885 = vadd.f32 0.0, %v4884
  %4886 = vmatprep.mubr.bf16.mxu0 %v4199
  %4887 = vmatmul.mubr.bf16.gmra.mrb[0].mxu0 %v4198
  %v4888 = vpop.f32.mrb[0].mxu0
  %v4889 = vadd.f32 0.0, %v4888
  %v4890 = vpop.f32.mrb[0].mxu0
  %v4891 = vadd.f32 0.0, %v4890
  %v4892 = vpop.f32.mrb[0].mxu0
  %v4893 = vadd.f32 0.0, %v4892
  %v4894 = vpop.f32.mrb[0].mxu0
  %v4895 = vadd.f32 0.0, %v4894
  %4896 = vmatprep.mubr.bf16.mxu0 %v4201
  %4897 = vmatmul.mubr.bf16.gmra.mrb[0].mxu0 %v4200
  %v4898 = vpop.f32.mrb[0].mxu0
  %v4899 = vadd.f32 0.0, %v4898
  %v4900 = vpop.f32.mrb[0].mxu0
  %v4901 = vadd.f32 0.0, %v4900
  %v4902 = vpop.f32.mrb[0].mxu0
  %v4903 = vadd.f32 0.0, %v4902
  %v4904 = vpop.f32.mrb[0].mxu0
  %v4905 = vadd.f32 0.0, %v4904
  %4906 = vmatprep.mubr.bf16.mxu0 %v4203
  %4907 = vmatmul.mubr.bf16.gmra.mrb[0].mxu0 %v4202
  %v4908 = vpop.f32.mrb[0].mxu0
  %v4909 = vadd.f32 0.0, %v4908
  %v4910 = vpop.f32.mrb[0].mxu0
  %v4911 = vadd.f32 0.0, %v4910
  %v4912 = vpop.f32.mrb[0].mxu0
  %v4913 = vadd.f32 0.0, %v4912
  %v4914 = vpop.f32.mrb[0].mxu0
  %v4915 = vadd.f32 0.0, %v4914
  %4916 = vmatprep.mubr.bf16.mxu0 %v4205
  %4917 = vmatmul.mubr.bf16.gmra.mrb[0].mxu0 %v4204
  %v4918 = vpop.f32.mrb[0].mxu0
  %v4919 = vadd.f32 0.0, %v4918
  %v4920 = vpop.f32.mrb[0].mxu0
  %v4921 = vadd.f32 0.0, %v4920
  %v4922 = vpop.f32.mrb[0].mxu0
  %v4923 = vadd.f32 0.0, %v4922
  %v4924 = vpop.f32.mrb[0].mxu0
  %v4925 = vadd.f32 0.0, %v4924
  %4926 = vmatprep.mubr.bf16.mxu0 %v4207
  %4927 = vmatmul.mubr.bf16.gmra.mrb[0].mxu0 %v4206
  %v4928 = vpop.f32.mrb[0].mxu0
  %v4929 = vadd.f32 0.0, %v4928
  %v4930 = vpop.f32.mrb[0].mxu0
  %v4931 = vadd.f32 0.0, %v4930
  %v4932 = vpop.f32.mrb[0].mxu0
  %v4933 = vadd.f32 0.0, %v4932
  %v4934 = vpop.f32.mrb[0].mxu0
  %v4935 = vadd.f32 0.0, %v4934
  %4936 = vmatprep.mubr.bf16.mxu0 %v4209
  %4937 = vmatmul.mubr.bf16.gmra.mrb[0].mxu0 %v4208
  %v4938 = vpop.f32.mrb[0].mxu0
  %v4939 = vadd.f32 0.0, %v4938
  %v4940 = vpop.f32.mrb[0].mxu0
  %v4941 = vadd.f32 0.0, %v4940
  %v4942 = vpop.f32.mrb[0].mxu0
  %v4943 = vadd.f32 0.0, %v4942
  %v4944 = vpop.f32.mrb[0].mxu0
  %v4945 = vadd.f32 0.0, %v4944
  %4946 = vmatprep.mubr.bf16.mxu0 %v4211
  %4947 = vmatmul.mubr.bf16.gmra.mrb[0].mxu0 %v4210
  %v4948 = vpop.f32.mrb[0].mxu0
  %v4949 = vadd.f32 0.0, %v4948
  %v4950 = vpop.f32.mrb[0].mxu0
  %v4951 = vadd.f32 0.0, %v4950
  %v4952 = vpop.f32.mrb[0].mxu0
  %v4953 = vadd.f32 0.0, %v4952
  %v4954 = vpop.f32.mrb[0].mxu0
  %v4955 = vadd.f32 0.0, %v4954
  %4956 = vmatprep.mubr.bf16.mxu0 %v4213
  %4957 = vmatmul.mubr.bf16.gmra.mrb[0].mxu0 %v4212
  %v4958 = vpop.f32.mrb[0].mxu0
  %v4959 = vadd.f32 0.0, %v4958
  %v4960 = vpop.f32.mrb[0].mxu0
  %v4961 = vadd.f32 0.0, %v4960
  %v4962 = vpop.f32.mrb[0].mxu0
  %v4963 = vadd.f32 0.0, %v4962
  %v4964 = vpop.f32.mrb[0].mxu0
  %v4965 = vadd.f32 0.0, %v4964
  %4966 = vmatprep.mubr.bf16.mxu0 %v4215
  %4967 = vmatmul.mubr.bf16.gmra.mrb[0].mxu0 %v4214
  %v4968 = vpop.f32.mrb[0].mxu0
  %v4969 = vadd.f32 0.0, %v4968
  %v4970 = vpop.f32.mrb[0].mxu0
  %v4971 = vadd.f32 0.0, %v4970
  %v4972 = vpop.f32.mrb[0].mxu0
  %v4973 = vadd.f32 0.0, %v4972
  %v4974 = vpop.f32.mrb[0].mxu0
  %v4975 = vadd.f32 0.0, %v4974
  %4976 = vmatprep.mubr.bf16.mxu0 %v4217
  %4977 = vmatmul.mubr.bf16.gmra.mrb[0].mxu0 %v4216
  %v4978 = vpop.f32.mrb[0].mxu0
  %v4979 = vadd.f32 0.0, %v4978
  %v4980 = vpop.f32.mrb[0].mxu0
  %v4981 = vadd.f32 0.0, %v4980
  %v4982 = vpop.f32.mrb[0].mxu0
  %v4983 = vadd.f32 0.0, %v4982
  %v4984 = vpop.f32.mrb[0].mxu0
  %v4985 = vadd.f32 0.0, %v4984
  %4986 = vmatprep.mubr.bf16.mxu0 %v4219
  %4987 = vmatmul.mubr.bf16.gmra.mrb[0].mxu0 %v4218
  %v4988 = vpop.f32.mrb[0].mxu0
  %v4989 = vadd.f32 0.0, %v4988
  %v4990 = vpop.f32.mrb[0].mxu0
  %v4991 = vadd.f32 0.0, %v4990
  %v4992 = vpop.f32.mrb[0].mxu0
  %v4993 = vadd.f32 0.0, %v4992
  %v4994 = vpop.f32.mrb[0].mxu0
  %v4995 = vadd.f32 0.0, %v4994
  %4996 = vmatprep.mubr.bf16.mxu0 %v4221
  %4997 = vmatmul.mubr.bf16.gmra.mrb[0].mxu0 %v4220
  %v4998 = vpop.f32.mrb[0].mxu0
  %v4999 = vadd.f32 0.0, %v4998
  %v5000 = vpop.f32.mrb[0].mxu0
  %v5001 = vadd.f32 0.0, %v5000
  %v5002 = vpop.f32.mrb[0].mxu0
  %v5003 = vadd.f32 0.0, %v5002
  %v5004 = vpop.f32.mrb[0].mxu0
  %v5005 = vadd.f32 0.0, %v5004
  %5006 = vdwg.mxu0
  %v5007 = vrot.slane %v4449, 4
  %v5008 = vmax.f32 %v4449, %v5007
  %v5009 = vrot.slane %v5008, 2
  %v5010 = vmax.f32 %v5008, %v5009
  %v5011 = vrot.slane %v5010, 1
  %v5012 = vmax.f32 %v5010, %v5011
  %v5013 = vrot.slane %v4451, 4
  %v5014 = vmax.f32 %v4451, %v5013
  %v5015 = vrot.slane %v5014, 2
  %v5016 = vmax.f32 %v5014, %v5015
  %v5017 = vrot.slane %v5016, 1
  %v5018 = vmax.f32 %v5016, %v5017
  %v5019 = vrot.slane %v4453, 4
  %v5020 = vmax.f32 %v4453, %v5019
  %v5021 = vrot.slane %v5020, 2
  %v5022 = vmax.f32 %v5020, %v5021
  %v5023 = vrot.slane %v5022, 1
  %v5024 = vmax.f32 %v5022, %v5023
  %v5025 = vrot.slane %v4455, 4
  %v5026 = vmax.f32 %v4455, %v5025
  %v5027 = vrot.slane %v5026, 2
  %v5028 = vmax.f32 %v5026, %v5027
  %v5029 = vrot.slane %v5028, 1
  %v5030 = vmax.f32 %v5028, %v5029
  %v5031 = vrot.slane %v4459, 4
  %v5032 = vmax.f32 %v4459, %v5031
  %v5033 = vrot.slane %v5032, 2
  %v5034 = vmax.f32 %v5032, %v5033
  %v5035 = vrot.slane %v5034, 1
  %v5036 = vmax.f32 %v5034, %v5035
  %v5037 = vrot.slane %v4461, 4
  %v5038 = vmax.f32 %v4461, %v5037
  %v5039 = vrot.slane %v5038, 2
  %v5040 = vmax.f32 %v5038, %v5039
  %v5041 = vrot.slane %v5040, 1
  %v5042 = vmax.f32 %v5040, %v5041
  %v5043 = vrot.slane %v4463, 4
  %v5044 = vmax.f32 %v4463, %v5043
  %v5045 = vrot.slane %v5044, 2
  %v5046 = vmax.f32 %v5044, %v5045
  %v5047 = vrot.slane %v5046, 1
  %v5048 = vmax.f32 %v5046, %v5047
  %v5049 = vrot.slane %v4465, 4
  %v5050 = vmax.f32 %v4465, %v5049
  %v5051 = vrot.slane %v5050, 2
  %v5052 = vmax.f32 %v5050, %v5051
  %v5053 = vrot.slane %v5052, 1
  %v5054 = vmax.f32 %v5052, %v5053
  %v5055 = vrot.slane %v4469, 4
  %v5056 = vmax.f32 %v4469, %v5055
  %v5057 = vrot.slane %v5056, 2
  %v5058 = vmax.f32 %v5056, %v5057
  %v5059 = vrot.slane %v5058, 1
  %v5060 = vmax.f32 %v5058, %v5059
  %v5061 = vrot.slane %v4471, 4
  %v5062 = vmax.f32 %v4471, %v5061
  %v5063 = vrot.slane %v5062, 2
  %v5064 = vmax.f32 %v5062, %v5063
  %v5065 = vrot.slane %v5064, 1
  %v5066 = vmax.f32 %v5064, %v5065
  %v5067 = vrot.slane %v4473, 4
  %v5068 = vmax.f32 %v4473, %v5067
  %v5069 = vrot.slane %v5068, 2
  %v5070 = vmax.f32 %v5068, %v5069
  %v5071 = vrot.slane %v5070, 1
  %v5072 = vmax.f32 %v5070, %v5071
  %v5073 = vrot.slane %v4475, 4
  %v5074 = vmax.f32 %v4475, %v5073
  %v5075 = vrot.slane %v5074, 2
  %v5076 = vmax.f32 %v5074, %v5075
  %v5077 = vrot.slane %v5076, 1
  %v5078 = vmax.f32 %v5076, %v5077
  %v5079 = vrot.slane %v4479, 4
  %v5080 = vmax.f32 %v4479, %v5079
  %v5081 = vrot.slane %v5080, 2
  %v5082 = vmax.f32 %v5080, %v5081
  %v5083 = vrot.slane %v5082, 1
  %v5084 = vmax.f32 %v5082, %v5083
  %v5085 = vrot.slane %v4481, 4
  %v5086 = vmax.f32 %v4481, %v5085
  %v5087 = vrot.slane %v5086, 2
  %v5088 = vmax.f32 %v5086, %v5087
  %v5089 = vrot.slane %v5088, 1
  %v5090 = vmax.f32 %v5088, %v5089
  %v5091 = vrot.slane %v4483, 4
  %v5092 = vmax.f32 %v4483, %v5091
  %v5093 = vrot.slane %v5092, 2
  %v5094 = vmax.f32 %v5092, %v5093
  %v5095 = vrot.slane %v5094, 1
  %v5096 = vmax.f32 %v5094, %v5095
  %v5097 = vrot.slane %v4485, 4
  %v5098 = vmax.f32 %v4485, %v5097
  %v5099 = vrot.slane %v5098, 2
  %v5100 = vmax.f32 %v5098, %v5099
  %v5101 = vrot.slane %v5100, 1
  %v5102 = vmax.f32 %v5100, %v5101
  %v5103 = vrot.slane %v4489, 4
  %v5104 = vmax.f32 %v4489, %v5103
  %v5105 = vrot.slane %v5104, 2
  %v5106 = vmax.f32 %v5104, %v5105
  %v5107 = vrot.slane %v5106, 1
  %v5108 = vmax.f32 %v5106, %v5107
  %v5109 = vrot.slane %v4491, 4
  %v5110 = vmax.f32 %v4491, %v5109
  %v5111 = vrot.slane %v5110, 2
  %v5112 = vmax.f32 %v5110, %v5111
  %v5113 = vrot.slane %v5112, 1
  %v5114 = vmax.f32 %v5112, %v5113
  %v5115 = vrot.slane %v4493, 4
  %v5116 = vmax.f32 %v4493, %v5115
  %v5117 = vrot.slane %v5116, 2
  %v5118 = vmax.f32 %v5116, %v5117
  %v5119 = vrot.slane %v5118, 1
  %v5120 = vmax.f32 %v5118, %v5119
  %v5121 = vrot.slane %v4495, 4
  %v5122 = vmax.f32 %v4495, %v5121
  %v5123 = vrot.slane %v5122, 2
  %v5124 = vmax.f32 %v5122, %v5123
  %v5125 = vrot.slane %v5124, 1
  %v5126 = vmax.f32 %v5124, %v5125
  %v5127 = vrot.slane %v4499, 4
  %v5128 = vmax.f32 %v4499, %v5127
  %v5129 = vrot.slane %v5128, 2
  %v5130 = vmax.f32 %v5128, %v5129
  %v5131 = vrot.slane %v5130, 1
  %v5132 = vmax.f32 %v5130, %v5131
  %v5133 = vrot.slane %v4501, 4
  %v5134 = vmax.f32 %v4501, %v5133
  %v5135 = vrot.slane %v5134, 2
  %v5136 = vmax.f32 %v5134, %v5135
  %v5137 = vrot.slane %v5136, 1
  %v5138 = vmax.f32 %v5136, %v5137
  %v5139 = vrot.slane %v4503, 4
  %v5140 = vmax.f32 %v4503, %v5139
  %v5141 = vrot.slane %v5140, 2
  %v5142 = vmax.f32 %v5140, %v5141
  %v5143 = vrot.slane %v5142, 1
  %v5144 = vmax.f32 %v5142, %v5143
  %v5145 = vrot.slane %v4505, 4
  %v5146 = vmax.f32 %v4505, %v5145
  %v5147 = vrot.slane %v5146, 2
  %v5148 = vmax.f32 %v5146, %v5147
  %v5149 = vrot.slane %v5148, 1
  %v5150 = vmax.f32 %v5148, %v5149
  %v5151 = vrot.slane %v4509, 4
  %v5152 = vmax.f32 %v4509, %v5151
  %v5153 = vrot.slane %v5152, 2
  %v5154 = vmax.f32 %v5152, %v5153
  %v5155 = vrot.slane %v5154, 1
  %v5156 = vmax.f32 %v5154, %v5155
  %v5157 = vrot.slane %v4511, 4
  %v5158 = vmax.f32 %v4511, %v5157
  %v5159 = vrot.slane %v5158, 2
  %v5160 = vmax.f32 %v5158, %v5159
  %v5161 = vrot.slane %v5160, 1
  %v5162 = vmax.f32 %v5160, %v5161
  %v5163 = vrot.slane %v4513, 4
  %v5164 = vmax.f32 %v4513, %v5163
  %v5165 = vrot.slane %v5164, 2
  %v5166 = vmax.f32 %v5164, %v5165
  %v5167 = vrot.slane %v5166, 1
  %v5168 = vmax.f32 %v5166, %v5167
  %v5169 = vrot.slane %v4515, 4
  %v5170 = vmax.f32 %v4515, %v5169
  %v5171 = vrot.slane %v5170, 2
  %v5172 = vmax.f32 %v5170, %v5171
  %v5173 = vrot.slane %v5172, 1
  %v5174 = vmax.f32 %v5172, %v5173
  %v5175 = vrot.slane %v4519, 4
  %v5176 = vmax.f32 %v4519, %v5175
  %v5177 = vrot.slane %v5176, 2
  %v5178 = vmax.f32 %v5176, %v5177
  %v5179 = vrot.slane %v5178, 1
  %v5180 = vmax.f32 %v5178, %v5179
  %v5181 = vrot.slane %v4521, 4
  %v5182 = vmax.f32 %v4521, %v5181
  %v5183 = vrot.slane %v5182, 2
  %v5184 = vmax.f32 %v5182, %v5183
  %v5185 = vrot.slane %v5184, 1
  %v5186 = vmax.f32 %v5184, %v5185
  %v5187 = vrot.slane %v4523, 4
  %v5188 = vmax.f32 %v4523, %v5187
  %v5189 = vrot.slane %v5188, 2
  %v5190 = vmax.f32 %v5188, %v5189
  %v5191 = vrot.slane %v5190, 1
  %v5192 = vmax.f32 %v5190, %v5191
  %v5193 = vrot.slane %v4525, 4
  %v5194 = vmax.f32 %v4525, %v5193
  %v5195 = vrot.slane %v5194, 2
  %v5196 = vmax.f32 %v5194, %v5195
  %v5197 = vrot.slane %v5196, 1
  %v5198 = vmax.f32 %v5196, %v5197
  %v5199 = vrot.slane %v4529, 4
  %v5200 = vmax.f32 %v4529, %v5199
  %v5201 = vrot.slane %v5200, 2
  %v5202 = vmax.f32 %v5200, %v5201
  %v5203 = vrot.slane %v5202, 1
  %v5204 = vmax.f32 %v5202, %v5203
  %v5205 = vrot.slane %v4531, 4
  %v5206 = vmax.f32 %v4531, %v5205
  %v5207 = vrot.slane %v5206, 2
  %v5208 = vmax.f32 %v5206, %v5207
  %v5209 = vrot.slane %v5208, 1
  %v5210 = vmax.f32 %v5208, %v5209
  %v5211 = vrot.slane %v4533, 4
  %v5212 = vmax.f32 %v4533, %v5211
  %v5213 = vrot.slane %v5212, 2
  %v5214 = vmax.f32 %v5212, %v5213
  %v5215 = vrot.slane %v5214, 1
  %v5216 = vmax.f32 %v5214, %v5215
  %v5217 = vrot.slane %v4535, 4
  %v5218 = vmax.f32 %v4535, %v5217
  %v5219 = vrot.slane %v5218, 2
  %v5220 = vmax.f32 %v5218, %v5219
  %v5221 = vrot.slane %v5220, 1
  %v5222 = vmax.f32 %v5220, %v5221
  %v5223 = vrot.slane %v4539, 4
  %v5224 = vmax.f32 %v4539, %v5223
  %v5225 = vrot.slane %v5224, 2
  %v5226 = vmax.f32 %v5224, %v5225
  %v5227 = vrot.slane %v5226, 1
  %v5228 = vmax.f32 %v5226, %v5227
  %v5229 = vrot.slane %v4541, 4
  %v5230 = vmax.f32 %v4541, %v5229
  %v5231 = vrot.slane %v5230, 2
  %v5232 = vmax.f32 %v5230, %v5231
  %v5233 = vrot.slane %v5232, 1
  %v5234 = vmax.f32 %v5232, %v5233
  %v5235 = vrot.slane %v4543, 4
  %v5236 = vmax.f32 %v4543, %v5235
  %v5237 = vrot.slane %v5236, 2
  %v5238 = vmax.f32 %v5236, %v5237
  %v5239 = vrot.slane %v5238, 1
  %v5240 = vmax.f32 %v5238, %v5239
  %v5241 = vrot.slane %v4545, 4
  %v5242 = vmax.f32 %v4545, %v5241
  %v5243 = vrot.slane %v5242, 2
  %v5244 = vmax.f32 %v5242, %v5243
  %v5245 = vrot.slane %v5244, 1
  %v5246 = vmax.f32 %v5244, %v5245
  %v5247 = vrot.slane %v4549, 4
  %v5248 = vmax.f32 %v4549, %v5247
  %v5249 = vrot.slane %v5248, 2
  %v5250 = vmax.f32 %v5248, %v5249
  %v5251 = vrot.slane %v5250, 1
  %v5252 = vmax.f32 %v5250, %v5251
  %v5253 = vrot.slane %v4551, 4
  %v5254 = vmax.f32 %v4551, %v5253
  %v5255 = vrot.slane %v5254, 2
  %v5256 = vmax.f32 %v5254, %v5255
  %v5257 = vrot.slane %v5256, 1
  %v5258 = vmax.f32 %v5256, %v5257
  %v5259 = vrot.slane %v4553, 4
  %v5260 = vmax.f32 %v4553, %v5259
  %v5261 = vrot.slane %v5260, 2
  %v5262 = vmax.f32 %v5260, %v5261
  %v5263 = vrot.slane %v5262, 1
  %v5264 = vmax.f32 %v5262, %v5263
  %v5265 = vrot.slane %v4555, 4
  %v5266 = vmax.f32 %v4555, %v5265
  %v5267 = vrot.slane %v5266, 2
  %v5268 = vmax.f32 %v5266, %v5267
  %v5269 = vrot.slane %v5268, 1
  %v5270 = vmax.f32 %v5268, %v5269
  %v5271 = vrot.slane %v4559, 4
  %v5272 = vmax.f32 %v4559, %v5271
  %v5273 = vrot.slane %v5272, 2
  %v5274 = vmax.f32 %v5272, %v5273
  %v5275 = vrot.slane %v5274, 1
  %v5276 = vmax.f32 %v5274, %v5275
  %v5277 = vrot.slane %v4561, 4
  %v5278 = vmax.f32 %v4561, %v5277
  %v5279 = vrot.slane %v5278, 2
  %v5280 = vmax.f32 %v5278, %v5279
  %v5281 = vrot.slane %v5280, 1
  %v5282 = vmax.f32 %v5280, %v5281
  %v5283 = vrot.slane %v4563, 4
  %v5284 = vmax.f32 %v4563, %v5283
  %v5285 = vrot.slane %v5284, 2
  %v5286 = vmax.f32 %v5284, %v5285
  %v5287 = vrot.slane %v5286, 1
  %v5288 = vmax.f32 %v5286, %v5287
  %v5289 = vrot.slane %v4565, 4
  %v5290 = vmax.f32 %v4565, %v5289
  %v5291 = vrot.slane %v5290, 2
  %v5292 = vmax.f32 %v5290, %v5291
  %v5293 = vrot.slane %v5292, 1
  %v5294 = vmax.f32 %v5292, %v5293
  %v5295 = vrot.slane %v4569, 4
  %v5296 = vmax.f32 %v4569, %v5295
  %v5297 = vrot.slane %v5296, 2
  %v5298 = vmax.f32 %v5296, %v5297
  %v5299 = vrot.slane %v5298, 1
  %v5300 = vmax.f32 %v5298, %v5299
  %v5301 = vrot.slane %v4571, 4
  %v5302 = vmax.f32 %v4571, %v5301
  %v5303 = vrot.slane %v5302, 2
  %v5304 = vmax.f32 %v5302, %v5303
  %v5305 = vrot.slane %v5304, 1
  %v5306 = vmax.f32 %v5304, %v5305
  %v5307 = vrot.slane %v4573, 4
  %v5308 = vmax.f32 %v4573, %v5307
  %v5309 = vrot.slane %v5308, 2
  %v5310 = vmax.f32 %v5308, %v5309
  %v5311 = vrot.slane %v5310, 1
  %v5312 = vmax.f32 %v5310, %v5311
  %v5313 = vrot.slane %v4575, 4
  %v5314 = vmax.f32 %v4575, %v5313
  %v5315 = vrot.slane %v5314, 2
  %v5316 = vmax.f32 %v5314, %v5315
  %v5317 = vrot.slane %v5316, 1
  %v5318 = vmax.f32 %v5316, %v5317
  %v5319 = vrot.slane %v4579, 4
  %v5320 = vmax.f32 %v4579, %v5319
  %v5321 = vrot.slane %v5320, 2
  %v5322 = vmax.f32 %v5320, %v5321
  %v5323 = vrot.slane %v5322, 1
  %v5324 = vmax.f32 %v5322, %v5323
  %v5325 = vrot.slane %v4581, 4
  %v5326 = vmax.f32 %v4581, %v5325
  %v5327 = vrot.slane %v5326, 2
  %v5328 = vmax.f32 %v5326, %v5327
  %v5329 = vrot.slane %v5328, 1
  %v5330 = vmax.f32 %v5328, %v5329
  %v5331 = vrot.slane %v4583, 4
  %v5332 = vmax.f32 %v4583, %v5331
  %v5333 = vrot.slane %v5332, 2
  %v5334 = vmax.f32 %v5332, %v5333
  %v5335 = vrot.slane %v5334, 1
  %v5336 = vmax.f32 %v5334, %v5335
  %v5337 = vrot.slane %v4585, 4
  %v5338 = vmax.f32 %v4585, %v5337
  %v5339 = vrot.slane %v5338, 2
  %v5340 = vmax.f32 %v5338, %v5339
  %v5341 = vrot.slane %v5340, 1
  %v5342 = vmax.f32 %v5340, %v5341
  %v5343 = vrot.slane %v4589, 4
  %v5344 = vmax.f32 %v4589, %v5343
  %v5345 = vrot.slane %v5344, 2
  %v5346 = vmax.f32 %v5344, %v5345
  %v5347 = vrot.slane %v5346, 1
  %v5348 = vmax.f32 %v5346, %v5347
  %v5349 = vrot.slane %v4591, 4
  %v5350 = vmax.f32 %v4591, %v5349
  %v5351 = vrot.slane %v5350, 2
  %v5352 = vmax.f32 %v5350, %v5351
  %v5353 = vrot.slane %v5352, 1
  %v5354 = vmax.f32 %v5352, %v5353
  %v5355 = vrot.slane %v4593, 4
  %v5356 = vmax.f32 %v4593, %v5355
  %v5357 = vrot.slane %v5356, 2
  %v5358 = vmax.f32 %v5356, %v5357
  %v5359 = vrot.slane %v5358, 1
  %v5360 = vmax.f32 %v5358, %v5359
  %v5361 = vrot.slane %v4595, 4
  %v5362 = vmax.f32 %v4595, %v5361
  %v5363 = vrot.slane %v5362, 2
  %v5364 = vmax.f32 %v5362, %v5363
  %v5365 = vrot.slane %v5364, 1
  %v5366 = vmax.f32 %v5364, %v5365
  %v5367 = vrot.slane %v4599, 4
  %v5368 = vmax.f32 %v4599, %v5367
  %v5369 = vrot.slane %v5368, 2
  %v5370 = vmax.f32 %v5368, %v5369
  %v5371 = vrot.slane %v5370, 1
  %v5372 = vmax.f32 %v5370, %v5371
  %v5373 = vrot.slane %v4601, 4
  %v5374 = vmax.f32 %v4601, %v5373
  %v5375 = vrot.slane %v5374, 2
  %v5376 = vmax.f32 %v5374, %v5375
  %v5377 = vrot.slane %v5376, 1
  %v5378 = vmax.f32 %v5376, %v5377
  %v5379 = vrot.slane %v4603, 4
  %v5380 = vmax.f32 %v4603, %v5379
  %v5381 = vrot.slane %v5380, 2
  %v5382 = vmax.f32 %v5380, %v5381
  %v5383 = vrot.slane %v5382, 1
  %v5384 = vmax.f32 %v5382, %v5383
  %v5385 = vrot.slane %v4605, 4
  %v5386 = vmax.f32 %v4605, %v5385
  %v5387 = vrot.slane %v5386, 2
  %v5388 = vmax.f32 %v5386, %v5387
  %v5389 = vrot.slane %v5388, 1
  %v5390 = vmax.f32 %v5388, %v5389
  %v5391 = vrot.slane %v4609, 4
  %v5392 = vmax.f32 %v4609, %v5391
  %v5393 = vrot.slane %v5392, 2
  %v5394 = vmax.f32 %v5392, %v5393
  %v5395 = vrot.slane %v5394, 1
  %v5396 = vmax.f32 %v5394, %v5395
  %v5397 = vrot.slane %v4611, 4
  %v5398 = vmax.f32 %v4611, %v5397
  %v5399 = vrot.slane %v5398, 2
  %v5400 = vmax.f32 %v5398, %v5399
  %v5401 = vrot.slane %v5400, 1
  %v5402 = vmax.f32 %v5400, %v5401
  %v5403 = vrot.slane %v4613, 4
  %v5404 = vmax.f32 %v4613, %v5403
  %v5405 = vrot.slane %v5404, 2
  %v5406 = vmax.f32 %v5404, %v5405
  %v5407 = vrot.slane %v5406, 1
  %v5408 = vmax.f32 %v5406, %v5407
  %v5409 = vrot.slane %v4615, 4
  %v5410 = vmax.f32 %v4615, %v5409
  %v5411 = vrot.slane %v5410, 2
  %v5412 = vmax.f32 %v5410, %v5411
  %v5413 = vrot.slane %v5412, 1
  %v5414 = vmax.f32 %v5412, %v5413
  %v5415 = vrot.slane %v4619, 4
  %v5416 = vmax.f32 %v4619, %v5415
  %v5417 = vrot.slane %v5416, 2
  %v5418 = vmax.f32 %v5416, %v5417
  %v5419 = vrot.slane %v5418, 1
  %v5420 = vmax.f32 %v5418, %v5419
  %v5421 = vrot.slane %v4621, 4
  %v5422 = vmax.f32 %v4621, %v5421
  %v5423 = vrot.slane %v5422, 2
  %v5424 = vmax.f32 %v5422, %v5423
  %v5425 = vrot.slane %v5424, 1
  %v5426 = vmax.f32 %v5424, %v5425
  %v5427 = vrot.slane %v4623, 4
  %v5428 = vmax.f32 %v4623, %v5427
  %v5429 = vrot.slane %v5428, 2
  %v5430 = vmax.f32 %v5428, %v5429
  %v5431 = vrot.slane %v5430, 1
  %v5432 = vmax.f32 %v5430, %v5431
  %v5433 = vrot.slane %v4625, 4
  %v5434 = vmax.f32 %v4625, %v5433
  %v5435 = vrot.slane %v5434, 2
  %v5436 = vmax.f32 %v5434, %v5435
  %v5437 = vrot.slane %v5436, 1
  %v5438 = vmax.f32 %v5436, %v5437
  %v5439 = vrot.slane %v4629, 4
  %v5440 = vmax.f32 %v4629, %v5439
  %v5441 = vrot.slane %v5440, 2
  %v5442 = vmax.f32 %v5440, %v5441
  %v5443 = vrot.slane %v5442, 1
  %v5444 = vmax.f32 %v5442, %v5443
  %v5445 = vrot.slane %v4631, 4
  %v5446 = vmax.f32 %v4631, %v5445
  %v5447 = vrot.slane %v5446, 2
  %v5448 = vmax.f32 %v5446, %v5447
  %v5449 = vrot.slane %v5448, 1
  %v5450 = vmax.f32 %v5448, %v5449
  %v5451 = vrot.slane %v4633, 4
  %v5452 = vmax.f32 %v4633, %v5451
  %v5453 = vrot.slane %v5452, 2
  %v5454 = vmax.f32 %v5452, %v5453
  %v5455 = vrot.slane %v5454, 1
  %v5456 = vmax.f32 %v5454, %v5455
  %v5457 = vrot.slane %v4635, 4
  %v5458 = vmax.f32 %v4635, %v5457
  %v5459 = vrot.slane %v5458, 2
  %v5460 = vmax.f32 %v5458, %v5459
  %v5461 = vrot.slane %v5460, 1
  %v5462 = vmax.f32 %v5460, %v5461
  %v5463 = vrot.slane %v4639, 4
  %v5464 = vmax.f32 %v4639, %v5463
  %v5465 = vrot.slane %v5464, 2
  %v5466 = vmax.f32 %v5464, %v5465
  %v5467 = vrot.slane %v5466, 1
  %v5468 = vmax.f32 %v5466, %v5467
  %v5469 = vrot.slane %v4641, 4
  %v5470 = vmax.f32 %v4641, %v5469
  %v5471 = vrot.slane %v5470, 2
  %v5472 = vmax.f32 %v5470, %v5471
  %v5473 = vrot.slane %v5472, 1
  %v5474 = vmax.f32 %v5472, %v5473
  %v5475 = vrot.slane %v4643, 4
  %v5476 = vmax.f32 %v4643, %v5475
  %v5477 = vrot.slane %v5476, 2
  %v5478 = vmax.f32 %v5476, %v5477
  %v5479 = vrot.slane %v5478, 1
  %v5480 = vmax.f32 %v5478, %v5479
  %v5481 = vrot.slane %v4645, 4
  %v5482 = vmax.f32 %v4645, %v5481
  %v5483 = vrot.slane %v5482, 2
  %v5484 = vmax.f32 %v5482, %v5483
  %v5485 = vrot.slane %v5484, 1
  %v5486 = vmax.f32 %v5484, %v5485
  %v5487 = vrot.slane %v4649, 4
  %v5488 = vmax.f32 %v4649, %v5487
  %v5489 = vrot.slane %v5488, 2
  %v5490 = vmax.f32 %v5488, %v5489
  %v5491 = vrot.slane %v5490, 1
  %v5492 = vmax.f32 %v5490, %v5491
  %v5493 = vrot.slane %v4651, 4
  %v5494 = vmax.f32 %v4651, %v5493
  %v5495 = vrot.slane %v5494, 2
  %v5496 = vmax.f32 %v5494, %v5495
  %v5497 = vrot.slane %v5496, 1
  %v5498 = vmax.f32 %v5496, %v5497
  %v5499 = vrot.slane %v4653, 4
  %v5500 = vmax.f32 %v4653, %v5499
  %v5501 = vrot.slane %v5500, 2
  %v5502 = vmax.f32 %v5500, %v5501
  %v5503 = vrot.slane %v5502, 1
  %v5504 = vmax.f32 %v5502, %v5503
  %v5505 = vrot.slane %v4655, 4
  %v5506 = vmax.f32 %v4655, %v5505
  %v5507 = vrot.slane %v5506, 2
  %v5508 = vmax.f32 %v5506, %v5507
  %v5509 = vrot.slane %v5508, 1
  %v5510 = vmax.f32 %v5508, %v5509
  %v5511 = vrot.slane %v4659, 4
  %v5512 = vmax.f32 %v4659, %v5511
  %v5513 = vrot.slane %v5512, 2
  %v5514 = vmax.f32 %v5512, %v5513
  %v5515 = vrot.slane %v5514, 1
  %v5516 = vmax.f32 %v5514, %v5515
  %v5517 = vrot.slane %v4661, 4
  %v5518 = vmax.f32 %v4661, %v5517
  %v5519 = vrot.slane %v5518, 2
  %v5520 = vmax.f32 %v5518, %v5519
  %v5521 = vrot.slane %v5520, 1
  %v5522 = vmax.f32 %v5520, %v5521
  %v5523 = vrot.slane %v4663, 4
  %v5524 = vmax.f32 %v4663, %v5523
  %v5525 = vrot.slane %v5524, 2
  %v5526 = vmax.f32 %v5524, %v5525
  %v5527 = vrot.slane %v5526, 1
  %v5528 = vmax.f32 %v5526, %v5527
  %v5529 = vrot.slane %v4665, 4
  %v5530 = vmax.f32 %v4665, %v5529
  %v5531 = vrot.slane %v5530, 2
  %v5532 = vmax.f32 %v5530, %v5531
  %v5533 = vrot.slane %v5532, 1
  %v5534 = vmax.f32 %v5532, %v5533
  %v5535 = vrot.slane %v4669, 4
  %v5536 = vmax.f32 %v4669, %v5535
  %v5537 = vrot.slane %v5536, 2
  %v5538 = vmax.f32 %v5536, %v5537
  %v5539 = vrot.slane %v5538, 1
  %v5540 = vmax.f32 %v5538, %v5539
  %v5541 = vrot.slane %v4671, 4
  %v5542 = vmax.f32 %v4671, %v5541
  %v5543 = vrot.slane %v5542, 2
  %v5544 = vmax.f32 %v5542, %v5543
  %v5545 = vrot.slane %v5544, 1
  %v5546 = vmax.f32 %v5544, %v5545
  %v5547 = vrot.slane %v4673, 4
  %v5548 = vmax.f32 %v4673, %v5547
  %v5549 = vrot.slane %v5548, 2
  %v5550 = vmax.f32 %v5548, %v5549
  %v5551 = vrot.slane %v5550, 1
  %v5552 = vmax.f32 %v5550, %v5551
  %v5553 = vrot.slane %v4675, 4
  %v5554 = vmax.f32 %v4675, %v5553
  %v5555 = vrot.slane %v5554, 2
  %v5556 = vmax.f32 %v5554, %v5555
  %v5557 = vrot.slane %v5556, 1
  %v5558 = vmax.f32 %v5556, %v5557
  %v5559 = vrot.slane %v4679, 4
  %v5560 = vmax.f32 %v4679, %v5559
  %v5561 = vrot.slane %v5560, 2
  %v5562 = vmax.f32 %v5560, %v5561
  %v5563 = vrot.slane %v5562, 1
  %v5564 = vmax.f32 %v5562, %v5563
  %v5565 = vrot.slane %v4681, 4
  %v5566 = vmax.f32 %v4681, %v5565
  %v5567 = vrot.slane %v5566, 2
  %v5568 = vmax.f32 %v5566, %v5567
  %v5569 = vrot.slane %v5568, 1
  %v5570 = vmax.f32 %v5568, %v5569
  %v5571 = vrot.slane %v4683, 4
  %v5572 = vmax.f32 %v4683, %v5571
  %v5573 = vrot.slane %v5572, 2
  %v5574 = vmax.f32 %v5572, %v5573
  %v5575 = vrot.slane %v5574, 1
  %v5576 = vmax.f32 %v5574, %v5575
  %v5577 = vrot.slane %v4685, 4
  %v5578 = vmax.f32 %v4685, %v5577
  %v5579 = vrot.slane %v5578, 2
  %v5580 = vmax.f32 %v5578, %v5579
  %v5581 = vrot.slane %v5580, 1
  %v5582 = vmax.f32 %v5580, %v5581
  %v5583 = vrot.slane %v4689, 4
  %v5584 = vmax.f32 %v4689, %v5583
  %v5585 = vrot.slane %v5584, 2
  %v5586 = vmax.f32 %v5584, %v5585
  %v5587 = vrot.slane %v5586, 1
  %v5588 = vmax.f32 %v5586, %v5587
  %v5589 = vrot.slane %v4691, 4
  %v5590 = vmax.f32 %v4691, %v5589
  %v5591 = vrot.slane %v5590, 2
  %v5592 = vmax.f32 %v5590, %v5591
  %v5593 = vrot.slane %v5592, 1
  %v5594 = vmax.f32 %v5592, %v5593
  %v5595 = vrot.slane %v4693, 4
  %v5596 = vmax.f32 %v4693, %v5595
  %v5597 = vrot.slane %v5596, 2
  %v5598 = vmax.f32 %v5596, %v5597
  %v5599 = vrot.slane %v5598, 1
  %v5600 = vmax.f32 %v5598, %v5599
  %v5601 = vrot.slane %v4695, 4
  %v5602 = vmax.f32 %v4695, %v5601
  %v5603 = vrot.slane %v5602, 2
  %v5604 = vmax.f32 %v5602, %v5603
  %v5605 = vrot.slane %v5604, 1
  %v5606 = vmax.f32 %v5604, %v5605
  %v5607 = vrot.slane %v4699, 4
  %v5608 = vmax.f32 %v4699, %v5607
  %v5609 = vrot.slane %v5608, 2
  %v5610 = vmax.f32 %v5608, %v5609
  %v5611 = vrot.slane %v5610, 1
  %v5612 = vmax.f32 %v5610, %v5611
  %v5613 = vrot.slane %v4701, 4
  %v5614 = vmax.f32 %v4701, %v5613
  %v5615 = vrot.slane %v5614, 2
  %v5616 = vmax.f32 %v5614, %v5615
  %v5617 = vrot.slane %v5616, 1
  %v5618 = vmax.f32 %v5616, %v5617
  %v5619 = vrot.slane %v4703, 4
  %v5620 = vmax.f32 %v4703, %v5619
  %v5621 = vrot.slane %v5620, 2
  %v5622 = vmax.f32 %v5620, %v5621
  %v5623 = vrot.slane %v5622, 1
  %v5624 = vmax.f32 %v5622, %v5623
  %v5625 = vrot.slane %v4705, 4
  %v5626 = vmax.f32 %v4705, %v5625
  %v5627 = vrot.slane %v5626, 2
  %v5628 = vmax.f32 %v5626, %v5627
  %v5629 = vrot.slane %v5628, 1
  %v5630 = vmax.f32 %v5628, %v5629
  %v5631 = vrot.slane %v4709, 4
  %v5632 = vmax.f32 %v4709, %v5631
  %v5633 = vrot.slane %v5632, 2
  %v5634 = vmax.f32 %v5632, %v5633
  %v5635 = vrot.slane %v5634, 1
  %v5636 = vmax.f32 %v5634, %v5635
  %v5637 = vrot.slane %v4711, 4
  %v5638 = vmax.f32 %v4711, %v5637
  %v5639 = vrot.slane %v5638, 2
  %v5640 = vmax.f32 %v5638, %v5639
  %v5641 = vrot.slane %v5640, 1
  %v5642 = vmax.f32 %v5640, %v5641
  %v5643 = vrot.slane %v4713, 4
  %v5644 = vmax.f32 %v4713, %v5643
  %v5645 = vrot.slane %v5644, 2
  %v5646 = vmax.f32 %v5644, %v5645
  %v5647 = vrot.slane %v5646, 1
  %v5648 = vmax.f32 %v5646, %v5647
  %v5649 = vrot.slane %v4715, 4
  %v5650 = vmax.f32 %v4715, %v5649
  %v5651 = vrot.slane %v5650, 2
  %v5652 = vmax.f32 %v5650, %v5651
  %v5653 = vrot.slane %v5652, 1
  %v5654 = vmax.f32 %v5652, %v5653
  %v5655 = vrot.slane %v4719, 4
  %v5656 = vmax.f32 %v4719, %v5655
  %v5657 = vrot.slane %v5656, 2
  %v5658 = vmax.f32 %v5656, %v5657
  %v5659 = vrot.slane %v5658, 1
  %v5660 = vmax.f32 %v5658, %v5659
  %v5661 = vrot.slane %v4721, 4
  %v5662 = vmax.f32 %v4721, %v5661
  %v5663 = vrot.slane %v5662, 2
  %v5664 = vmax.f32 %v5662, %v5663
  %v5665 = vrot.slane %v5664, 1
  %v5666 = vmax.f32 %v5664, %v5665
  %v5667 = vrot.slane %v4723, 4
  %v5668 = vmax.f32 %v4723, %v5667
  %v5669 = vrot.slane %v5668, 2
  %v5670 = vmax.f32 %v5668, %v5669
  %v5671 = vrot.slane %v5670, 1
  %v5672 = vmax.f32 %v5670, %v5671
  %v5673 = vrot.slane %v4725, 4
  %v5674 = vmax.f32 %v4725, %v5673
  %v5675 = vrot.slane %v5674, 2
  %v5676 = vmax.f32 %v5674, %v5675
  %v5677 = vrot.slane %v5676, 1
  %v5678 = vmax.f32 %v5676, %v5677
  %v5679 = vrot.slane %v4729, 4
  %v5680 = vmax.f32 %v4729, %v5679
  %v5681 = vrot.slane %v5680, 2
  %v5682 = vmax.f32 %v5680, %v5681
  %v5683 = vrot.slane %v5682, 1
  %v5684 = vmax.f32 %v5682, %v5683
  %v5685 = vrot.slane %v4731, 4
  %v5686 = vmax.f32 %v4731, %v5685
  %v5687 = vrot.slane %v5686, 2
  %v5688 = vmax.f32 %v5686, %v5687
  %v5689 = vrot.slane %v5688, 1
  %v5690 = vmax.f32 %v5688, %v5689
  %v5691 = vrot.slane %v4733, 4
  %v5692 = vmax.f32 %v4733, %v5691
  %v5693 = vrot.slane %v5692, 2
  %v5694 = vmax.f32 %v5692, %v5693
  %v5695 = vrot.slane %v5694, 1
  %v5696 = vmax.f32 %v5694, %v5695
  %v5697 = vrot.slane %v4735, 4
  %v5698 = vmax.f32 %v4735, %v5697
  %v5699 = vrot.slane %v5698, 2
  %v5700 = vmax.f32 %v5698, %v5699
  %v5701 = vrot.slane %v5700, 1
  %v5702 = vmax.f32 %v5700, %v5701
  %v5703 = vrot.slane %v4739, 4
  %v5704 = vmax.f32 %v4739, %v5703
  %v5705 = vrot.slane %v5704, 2
  %v5706 = vmax.f32 %v5704, %v5705
  %v5707 = vrot.slane %v5706, 1
  %v5708 = vmax.f32 %v5706, %v5707
  %v5709 = vrot.slane %v4741, 4
  %v5710 = vmax.f32 %v4741, %v5709
  %v5711 = vrot.slane %v5710, 2
  %v5712 = vmax.f32 %v5710, %v5711
  %v5713 = vrot.slane %v5712, 1
  %v5714 = vmax.f32 %v5712, %v5713
  %v5715 = vrot.slane %v4743, 4
  %v5716 = vmax.f32 %v4743, %v5715
  %v5717 = vrot.slane %v5716, 2
  %v5718 = vmax.f32 %v5716, %v5717
  %v5719 = vrot.slane %v5718, 1
  %v5720 = vmax.f32 %v5718, %v5719
  %v5721 = vrot.slane %v4745, 4
  %v5722 = vmax.f32 %v4745, %v5721
  %v5723 = vrot.slane %v5722, 2
  %v5724 = vmax.f32 %v5722, %v5723
  %v5725 = vrot.slane %v5724, 1
  %v5726 = vmax.f32 %v5724, %v5725
  %v5727 = vrot.slane %v4749, 4
  %v5728 = vmax.f32 %v4749, %v5727
  %v5729 = vrot.slane %v5728, 2
  %v5730 = vmax.f32 %v5728, %v5729
  %v5731 = vrot.slane %v5730, 1
  %v5732 = vmax.f32 %v5730, %v5731
  %v5733 = vrot.slane %v4751, 4
  %v5734 = vmax.f32 %v4751, %v5733
  %v5735 = vrot.slane %v5734, 2
  %v5736 = vmax.f32 %v5734, %v5735
  %v5737 = vrot.slane %v5736, 1
  %v5738 = vmax.f32 %v5736, %v5737
  %v5739 = vrot.slane %v4753, 4
  %v5740 = vmax.f32 %v4753, %v5739
  %v5741 = vrot.slane %v5740, 2
  %v5742 = vmax.f32 %v5740, %v5741
  %v5743 = vrot.slane %v5742, 1
  %v5744 = vmax.f32 %v5742, %v5743
  %v5745 = vrot.slane %v4755, 4
  %v5746 = vmax.f32 %v4755, %v5745
  %v5747 = vrot.slane %v5746, 2
  %v5748 = vmax.f32 %v5746, %v5747
  %v5749 = vrot.slane %v5748, 1
  %v5750 = vmax.f32 %v5748, %v5749
  %v5751 = vrot.slane %v4759, 4
  %v5752 = vmax.f32 %v4759, %v5751
  %v5753 = vrot.slane %v5752, 2
  %v5754 = vmax.f32 %v5752, %v5753
  %v5755 = vrot.slane %v5754, 1
  %v5756 = vmax.f32 %v5754, %v5755
  %v5757 = vrot.slane %v4761, 4
  %v5758 = vmax.f32 %v4761, %v5757
  %v5759 = vrot.slane %v5758, 2
  %v5760 = vmax.f32 %v5758, %v5759
  %v5761 = vrot.slane %v5760, 1
  %v5762 = vmax.f32 %v5760, %v5761
  %v5763 = vrot.slane %v4763, 4
  %v5764 = vmax.f32 %v4763, %v5763
  %v5765 = vrot.slane %v5764, 2
  %v5766 = vmax.f32 %v5764, %v5765
  %v5767 = vrot.slane %v5766, 1
  %v5768 = vmax.f32 %v5766, %v5767
  %v5769 = vrot.slane %v4765, 4
  %v5770 = vmax.f32 %v4765, %v5769
  %v5771 = vrot.slane %v5770, 2
  %v5772 = vmax.f32 %v5770, %v5771
  %v5773 = vrot.slane %v5772, 1
  %v5774 = vmax.f32 %v5772, %v5773
  %v5775 = vrot.slane %v4769, 4
  %v5776 = vmax.f32 %v4769, %v5775
  %v5777 = vrot.slane %v5776, 2
  %v5778 = vmax.f32 %v5776, %v5777
  %v5779 = vrot.slane %v5778, 1
  %v5780 = vmax.f32 %v5778, %v5779
  %v5781 = vrot.slane %v4771, 4
  %v5782 = vmax.f32 %v4771, %v5781
  %v5783 = vrot.slane %v5782, 2
  %v5784 = vmax.f32 %v5782, %v5783
  %v5785 = vrot.slane %v5784, 1
  %v5786 = vmax.f32 %v5784, %v5785
  %v5787 = vrot.slane %v4773, 4
  %v5788 = vmax.f32 %v4773, %v5787
  %v5789 = vrot.slane %v5788, 2
  %v5790 = vmax.f32 %v5788, %v5789
  %v5791 = vrot.slane %v5790, 1
  %v5792 = vmax.f32 %v5790, %v5791
  %v5793 = vrot.slane %v4775, 4
  %v5794 = vmax.f32 %v4775, %v5793
  %v5795 = vrot.slane %v5794, 2
  %v5796 = vmax.f32 %v5794, %v5795
  %v5797 = vrot.slane %v5796, 1
  %v5798 = vmax.f32 %v5796, %v5797
  %v5799 = vrot.slane %v4779, 4
  %v5800 = vmax.f32 %v4779, %v5799
  %v5801 = vrot.slane %v5800, 2
  %v5802 = vmax.f32 %v5800, %v5801
  %v5803 = vrot.slane %v5802, 1
  %v5804 = vmax.f32 %v5802, %v5803
  %v5805 = vrot.slane %v4781, 4
  %v5806 = vmax.f32 %v4781, %v5805
  %v5807 = vrot.slane %v5806, 2
  %v5808 = vmax.f32 %v5806, %v5807
  %v5809 = vrot.slane %v5808, 1
  %v5810 = vmax.f32 %v5808, %v5809
  %v5811 = vrot.slane %v4783, 4
  %v5812 = vmax.f32 %v4783, %v5811
  %v5813 = vrot.slane %v5812, 2
  %v5814 = vmax.f32 %v5812, %v5813
  %v5815 = vrot.slane %v5814, 1
  %v5816 = vmax.f32 %v5814, %v5815
  %v5817 = vrot.slane %v4785, 4
  %v5818 = vmax.f32 %v4785, %v5817
  %v5819 = vrot.slane %v5818, 2
  %v5820 = vmax.f32 %v5818, %v5819
  %v5821 = vrot.slane %v5820, 1
  %v5822 = vmax.f32 %v5820, %v5821
  %v5823 = vrot.slane %v4789, 4
  %v5824 = vmax.f32 %v4789, %v5823
  %v5825 = vrot.slane %v5824, 2
  %v5826 = vmax.f32 %v5824, %v5825
  %v5827 = vrot.slane %v5826, 1
  %v5828 = vmax.f32 %v5826, %v5827
  %v5829 = vrot.slane %v4791, 4
  %v5830 = vmax.f32 %v4791, %v5829
  %v5831 = vrot.slane %v5830, 2
  %v5832 = vmax.f32 %v5830, %v5831
  %v5833 = vrot.slane %v5832, 1
  %v5834 = vmax.f32 %v5832, %v5833
  %v5835 = vrot.slane %v4793, 4
  %v5836 = vmax.f32 %v4793, %v5835
  %v5837 = vrot.slane %v5836, 2
  %v5838 = vmax.f32 %v5836, %v5837
  %v5839 = vrot.slane %v5838, 1
  %v5840 = vmax.f32 %v5838, %v5839
  %v5841 = vrot.slane %v4795, 4
  %v5842 = vmax.f32 %v4795, %v5841
  %v5843 = vrot.slane %v5842, 2
  %v5844 = vmax.f32 %v5842, %v5843
  %v5845 = vrot.slane %v5844, 1
  %v5846 = vmax.f32 %v5844, %v5845
  %v5847 = vrot.slane %v4799, 4
  %v5848 = vmax.f32 %v4799, %v5847
  %v5849 = vrot.slane %v5848, 2
  %v5850 = vmax.f32 %v5848, %v5849
  %v5851 = vrot.slane %v5850, 1
  %v5852 = vmax.f32 %v5850, %v5851
  %v5853 = vrot.slane %v4801, 4
  %v5854 = vmax.f32 %v4801, %v5853
  %v5855 = vrot.slane %v5854, 2
  %v5856 = vmax.f32 %v5854, %v5855
  %v5857 = vrot.slane %v5856, 1
  %v5858 = vmax.f32 %v5856, %v5857
  %v5859 = vrot.slane %v4803, 4
  %v5860 = vmax.f32 %v4803, %v5859
  %v5861 = vrot.slane %v5860, 2
  %v5862 = vmax.f32 %v5860, %v5861
  %v5863 = vrot.slane %v5862, 1
  %v5864 = vmax.f32 %v5862, %v5863
  %v5865 = vrot.slane %v4805, 4
  %v5866 = vmax.f32 %v4805, %v5865
  %v5867 = vrot.slane %v5866, 2
  %v5868 = vmax.f32 %v5866, %v5867
  %v5869 = vrot.slane %v5868, 1
  %v5870 = vmax.f32 %v5868, %v5869
  %v5871 = vrot.slane %v4809, 4
  %v5872 = vmax.f32 %v4809, %v5871
  %v5873 = vrot.slane %v5872, 2
  %v5874 = vmax.f32 %v5872, %v5873
  %v5875 = vrot.slane %v5874, 1
  %v5876 = vmax.f32 %v5874, %v5875
  %v5877 = vrot.slane %v4811, 4
  %v5878 = vmax.f32 %v4811, %v5877
  %v5879 = vrot.slane %v5878, 2
  %v5880 = vmax.f32 %v5878, %v5879
  %v5881 = vrot.slane %v5880, 1
  %v5882 = vmax.f32 %v5880, %v5881
  %v5883 = vrot.slane %v4813, 4
  %v5884 = vmax.f32 %v4813, %v5883
  %v5885 = vrot.slane %v5884, 2
  %v5886 = vmax.f32 %v5884, %v5885
  %v5887 = vrot.slane %v5886, 1
  %v5888 = vmax.f32 %v5886, %v5887
  %v5889 = vrot.slane %v4815, 4
  %v5890 = vmax.f32 %v4815, %v5889
  %v5891 = vrot.slane %v5890, 2
  %v5892 = vmax.f32 %v5890, %v5891
  %v5893 = vrot.slane %v5892, 1
  %v5894 = vmax.f32 %v5892, %v5893
  %v5895 = vrot.slane %v4819, 4
  %v5896 = vmax.f32 %v4819, %v5895
  %v5897 = vrot.slane %v5896, 2
  %v5898 = vmax.f32 %v5896, %v5897
  %v5899 = vrot.slane %v5898, 1
  %v5900 = vmax.f32 %v5898, %v5899
  %v5901 = vrot.slane %v4821, 4
  %v5902 = vmax.f32 %v4821, %v5901
  %v5903 = vrot.slane %v5902, 2
  %v5904 = vmax.f32 %v5902, %v5903
  %v5905 = vrot.slane %v5904, 1
  %v5906 = vmax.f32 %v5904, %v5905
  %v5907 = vrot.slane %v4823, 4
  %v5908 = vmax.f32 %v4823, %v5907
  %v5909 = vrot.slane %v5908, 2
  %v5910 = vmax.f32 %v5908, %v5909
  %v5911 = vrot.slane %v5910, 1
  %v5912 = vmax.f32 %v5910, %v5911
  %v5913 = vrot.slane %v4825, 4
  %v5914 = vmax.f32 %v4825, %v5913
  %v5915 = vrot.slane %v5914, 2
  %v5916 = vmax.f32 %v5914, %v5915
  %v5917 = vrot.slane %v5916, 1
  %v5918 = vmax.f32 %v5916, %v5917
  %v5919 = vrot.slane %v4829, 4
  %v5920 = vmax.f32 %v4829, %v5919
  %v5921 = vrot.slane %v5920, 2
  %v5922 = vmax.f32 %v5920, %v5921
  %v5923 = vrot.slane %v5922, 1
  %v5924 = vmax.f32 %v5922, %v5923
  %v5925 = vrot.slane %v4831, 4
  %v5926 = vmax.f32 %v4831, %v5925
  %v5927 = vrot.slane %v5926, 2
  %v5928 = vmax.f32 %v5926, %v5927
  %v5929 = vrot.slane %v5928, 1
  %v5930 = vmax.f32 %v5928, %v5929
  %v5931 = vrot.slane %v4833, 4
  %v5932 = vmax.f32 %v4833, %v5931
  %v5933 = vrot.slane %v5932, 2
  %v5934 = vmax.f32 %v5932, %v5933
  %v5935 = vrot.slane %v5934, 1
  %v5936 = vmax.f32 %v5934, %v5935
  %v5937 = vrot.slane %v4835, 4
  %v5938 = vmax.f32 %v4835, %v5937
  %v5939 = vrot.slane %v5938, 2
  %v5940 = vmax.f32 %v5938, %v5939
  %v5941 = vrot.slane %v5940, 1
  %v5942 = vmax.f32 %v5940, %v5941
  %v5943 = vrot.slane %v4839, 4
  %v5944 = vmax.f32 %v4839, %v5943
  %v5945 = vrot.slane %v5944, 2
  %v5946 = vmax.f32 %v5944, %v5945
  %v5947 = vrot.slane %v5946, 1
  %v5948 = vmax.f32 %v5946, %v5947
  %v5949 = vrot.slane %v4841, 4
  %v5950 = vmax.f32 %v4841, %v5949
  %v5951 = vrot.slane %v5950, 2
  %v5952 = vmax.f32 %v5950, %v5951
  %v5953 = vrot.slane %v5952, 1
  %v5954 = vmax.f32 %v5952, %v5953
  %v5955 = vrot.slane %v4843, 4
  %v5956 = vmax.f32 %v4843, %v5955
  %v5957 = vrot.slane %v5956, 2
  %v5958 = vmax.f32 %v5956, %v5957
  %v5959 = vrot.slane %v5958, 1
  %v5960 = vmax.f32 %v5958, %v5959
  %v5961 = vrot.slane %v4845, 4
  %v5962 = vmax.f32 %v4845, %v5961
  %v5963 = vrot.slane %v5962, 2
  %v5964 = vmax.f32 %v5962, %v5963
  %v5965 = vrot.slane %v5964, 1
  %v5966 = vmax.f32 %v5964, %v5965
  %v5967 = vrot.slane %v4849, 4
  %v5968 = vmax.f32 %v4849, %v5967
  %v5969 = vrot.slane %v5968, 2
  %v5970 = vmax.f32 %v5968, %v5969
  %v5971 = vrot.slane %v5970, 1
  %v5972 = vmax.f32 %v5970, %v5971
  %v5973 = vrot.slane %v4851, 4
  %v5974 = vmax.f32 %v4851, %v5973
  %v5975 = vrot.slane %v5974, 2
  %v5976 = vmax.f32 %v5974, %v5975
  %v5977 = vrot.slane %v5976, 1
  %v5978 = vmax.f32 %v5976, %v5977
  %v5979 = vrot.slane %v4853, 4
  %v5980 = vmax.f32 %v4853, %v5979
  %v5981 = vrot.slane %v5980, 2
  %v5982 = vmax.f32 %v5980, %v5981
  %v5983 = vrot.slane %v5982, 1
  %v5984 = vmax.f32 %v5982, %v5983
  %v5985 = vrot.slane %v4855, 4
  %v5986 = vmax.f32 %v4855, %v5985
  %v5987 = vrot.slane %v5986, 2
  %v5988 = vmax.f32 %v5986, %v5987
  %v5989 = vrot.slane %v5988, 1
  %v5990 = vmax.f32 %v5988, %v5989
  %v5991 = vrot.slane %v4859, 4
  %v5992 = vmax.f32 %v4859, %v5991
  %v5993 = vrot.slane %v5992, 2
  %v5994 = vmax.f32 %v5992, %v5993
  %v5995 = vrot.slane %v5994, 1
  %v5996 = vmax.f32 %v5994, %v5995
  %v5997 = vrot.slane %v4861, 4
  %v5998 = vmax.f32 %v4861, %v5997
  %v5999 = vrot.slane %v5998, 2
  %v6000 = vmax.f32 %v5998, %v5999
  %v6001 = vrot.slane %v6000, 1
  %v6002 = vmax.f32 %v6000, %v6001
  %v6003 = vrot.slane %v4863, 4
  %v6004 = vmax.f32 %v4863, %v6003
  %v6005 = vrot.slane %v6004, 2
  %v6006 = vmax.f32 %v6004, %v6005
  %v6007 = vrot.slane %v6006, 1
  %v6008 = vmax.f32 %v6006, %v6007
  %v6009 = vrot.slane %v4865, 4
  %v6010 = vmax.f32 %v4865, %v6009
  %v6011 = vrot.slane %v6010, 2
  %v6012 = vmax.f32 %v6010, %v6011
  %v6013 = vrot.slane %v6012, 1
  %v6014 = vmax.f32 %v6012, %v6013
  %v6015 = vrot.slane %v4869, 4
  %v6016 = vmax.f32 %v4869, %v6015
  %v6017 = vrot.slane %v6016, 2
  %v6018 = vmax.f32 %v6016, %v6017
  %v6019 = vrot.slane %v6018, 1
  %v6020 = vmax.f32 %v6018, %v6019
  %v6021 = vrot.slane %v4871, 4
  %v6022 = vmax.f32 %v4871, %v6021
  %v6023 = vrot.slane %v6022, 2
  %v6024 = vmax.f32 %v6022, %v6023
  %v6025 = vrot.slane %v6024, 1
  %v6026 = vmax.f32 %v6024, %v6025
  %v6027 = vrot.slane %v4873, 4
  %v6028 = vmax.f32 %v4873, %v6027
  %v6029 = vrot.slane %v6028, 2
  %v6030 = vmax.f32 %v6028, %v6029
  %v6031 = vrot.slane %v6030, 1
  %v6032 = vmax.f32 %v6030, %v6031
  %v6033 = vrot.slane %v4875, 4
  %v6034 = vmax.f32 %v4875, %v6033
  %v6035 = vrot.slane %v6034, 2
  %v6036 = vmax.f32 %v6034, %v6035
  %v6037 = vrot.slane %v6036, 1
  %v6038 = vmax.f32 %v6036, %v6037
  %v6039 = vrot.slane %v4879, 4
  %v6040 = vmax.f32 %v4879, %v6039
  %v6041 = vrot.slane %v6040, 2
  %v6042 = vmax.f32 %v6040, %v6041
  %v6043 = vrot.slane %v6042, 1
  %v6044 = vmax.f32 %v6042, %v6043
  %v6045 = vrot.slane %v4881, 4
  %v6046 = vmax.f32 %v4881, %v6045
  %v6047 = vrot.slane %v6046, 2
  %v6048 = vmax.f32 %v6046, %v6047
  %v6049 = vrot.slane %v6048, 1
  %v6050 = vmax.f32 %v6048, %v6049
  %v6051 = vrot.slane %v4883, 4
  %v6052 = vmax.f32 %v4883, %v6051
  %v6053 = vrot.slane %v6052, 2
  %v6054 = vmax.f32 %v6052, %v6053
  %v6055 = vrot.slane %v6054, 1
  %v6056 = vmax.f32 %v6054, %v6055
  %v6057 = vrot.slane %v4885, 4
  %v6058 = vmax.f32 %v4885, %v6057
  %v6059 = vrot.slane %v6058, 2
  %v6060 = vmax.f32 %v6058, %v6059
  %v6061 = vrot.slane %v6060, 1
  %v6062 = vmax.f32 %v6060, %v6061
  %v6063 = vrot.slane %v4889, 4
  %v6064 = vmax.f32 %v4889, %v6063
  %v6065 = vrot.slane %v6064, 2
  %v6066 = vmax.f32 %v6064, %v6065
  %v6067 = vrot.slane %v6066, 1
  %v6068 = vmax.f32 %v6066, %v6067
  %v6069 = vrot.slane %v4891, 4
  %v6070 = vmax.f32 %v4891, %v6069
  %v6071 = vrot.slane %v6070, 2
  %v6072 = vmax.f32 %v6070, %v6071
  %v6073 = vrot.slane %v6072, 1
  %v6074 = vmax.f32 %v6072, %v6073
  %v6075 = vrot.slane %v4893, 4
  %v6076 = vmax.f32 %v4893, %v6075
  %v6077 = vrot.slane %v6076, 2
  %v6078 = vmax.f32 %v6076, %v6077
  %v6079 = vrot.slane %v6078, 1
  %v6080 = vmax.f32 %v6078, %v6079
  %v6081 = vrot.slane %v4895, 4
  %v6082 = vmax.f32 %v4895, %v6081
  %v6083 = vrot.slane %v6082, 2
  %v6084 = vmax.f32 %v6082, %v6083
  %v6085 = vrot.slane %v6084, 1
  %v6086 = vmax.f32 %v6084, %v6085
  %v6087 = vrot.slane %v4899, 4
  %v6088 = vmax.f32 %v4899, %v6087
  %v6089 = vrot.slane %v6088, 2
  %v6090 = vmax.f32 %v6088, %v6089
  %v6091 = vrot.slane %v6090, 1
  %v6092 = vmax.f32 %v6090, %v6091
  %v6093 = vrot.slane %v4901, 4
  %v6094 = vmax.f32 %v4901, %v6093
  %v6095 = vrot.slane %v6094, 2
  %v6096 = vmax.f32 %v6094, %v6095
  %v6097 = vrot.slane %v6096, 1
  %v6098 = vmax.f32 %v6096, %v6097
  %v6099 = vrot.slane %v4903, 4
  %v6100 = vmax.f32 %v4903, %v6099
  %v6101 = vrot.slane %v6100, 2
  %v6102 = vmax.f32 %v6100, %v6101
  %v6103 = vrot.slane %v6102, 1
  %v6104 = vmax.f32 %v6102, %v6103
  %v6105 = vrot.slane %v4905, 4
  %v6106 = vmax.f32 %v4905, %v6105
  %v6107 = vrot.slane %v6106, 2
  %v6108 = vmax.f32 %v6106, %v6107
  %v6109 = vrot.slane %v6108, 1
  %v6110 = vmax.f32 %v6108, %v6109
  %v6111 = vrot.slane %v4909, 4
  %v6112 = vmax.f32 %v4909, %v6111
  %v6113 = vrot.slane %v6112, 2
  %v6114 = vmax.f32 %v6112, %v6113
  %v6115 = vrot.slane %v6114, 1
  %v6116 = vmax.f32 %v6114, %v6115
  %v6117 = vrot.slane %v4911, 4
  %v6118 = vmax.f32 %v4911, %v6117
  %v6119 = vrot.slane %v6118, 2
  %v6120 = vmax.f32 %v6118, %v6119
  %v6121 = vrot.slane %v6120, 1
  %v6122 = vmax.f32 %v6120, %v6121
  %v6123 = vrot.slane %v4913, 4
  %v6124 = vmax.f32 %v4913, %v6123
  %v6125 = vrot.slane %v6124, 2
  %v6126 = vmax.f32 %v6124, %v6125
  %v6127 = vrot.slane %v6126, 1
  %v6128 = vmax.f32 %v6126, %v6127
  %v6129 = vrot.slane %v4915, 4
  %v6130 = vmax.f32 %v4915, %v6129
  %v6131 = vrot.slane %v6130, 2
  %v6132 = vmax.f32 %v6130, %v6131
  %v6133 = vrot.slane %v6132, 1
  %v6134 = vmax.f32 %v6132, %v6133
  %v6135 = vrot.slane %v4919, 4
  %v6136 = vmax.f32 %v4919, %v6135
  %v6137 = vrot.slane %v6136, 2
  %v6138 = vmax.f32 %v6136, %v6137
  %v6139 = vrot.slane %v6138, 1
  %v6140 = vmax.f32 %v6138, %v6139
  %v6141 = vrot.slane %v4921, 4
  %v6142 = vmax.f32 %v4921, %v6141
  %v6143 = vrot.slane %v6142, 2
  %v6144 = vmax.f32 %v6142, %v6143
  %v6145 = vrot.slane %v6144, 1
  %v6146 = vmax.f32 %v6144, %v6145
  %v6147 = vrot.slane %v4923, 4
  %v6148 = vmax.f32 %v4923, %v6147
  %v6149 = vrot.slane %v6148, 2
  %v6150 = vmax.f32 %v6148, %v6149
  %v6151 = vrot.slane %v6150, 1
  %v6152 = vmax.f32 %v6150, %v6151
  %v6153 = vrot.slane %v4925, 4
  %v6154 = vmax.f32 %v4925, %v6153
  %v6155 = vrot.slane %v6154, 2
  %v6156 = vmax.f32 %v6154, %v6155
  %v6157 = vrot.slane %v6156, 1
  %v6158 = vmax.f32 %v6156, %v6157
  %v6159 = vrot.slane %v4929, 4
  %v6160 = vmax.f32 %v4929, %v6159
  %v6161 = vrot.slane %v6160, 2
  %v6162 = vmax.f32 %v6160, %v6161
  %v6163 = vrot.slane %v6162, 1
  %v6164 = vmax.f32 %v6162, %v6163
  %v6165 = vrot.slane %v4931, 4
  %v6166 = vmax.f32 %v4931, %v6165
  %v6167 = vrot.slane %v6166, 2
  %v6168 = vmax.f32 %v6166, %v6167
  %v6169 = vrot.slane %v6168, 1
  %v6170 = vmax.f32 %v6168, %v6169
  %v6171 = vrot.slane %v4933, 4
  %v6172 = vmax.f32 %v4933, %v6171
  %v6173 = vrot.slane %v6172, 2
  %v6174 = vmax.f32 %v6172, %v6173
  %v6175 = vrot.slane %v6174, 1
  %v6176 = vmax.f32 %v6174, %v6175
  %v6177 = vrot.slane %v4935, 4
  %v6178 = vmax.f32 %v4935, %v6177
  %v6179 = vrot.slane %v6178, 2
  %v6180 = vmax.f32 %v6178, %v6179
  %v6181 = vrot.slane %v6180, 1
  %v6182 = vmax.f32 %v6180, %v6181
  %v6183 = vrot.slane %v4939, 4
  %v6184 = vmax.f32 %v4939, %v6183
  %v6185 = vrot.slane %v6184, 2
  %v6186 = vmax.f32 %v6184, %v6185
  %v6187 = vrot.slane %v6186, 1
  %v6188 = vmax.f32 %v6186, %v6187
  %v6189 = vrot.slane %v4941, 4
  %v6190 = vmax.f32 %v4941, %v6189
  %v6191 = vrot.slane %v6190, 2
  %v6192 = vmax.f32 %v6190, %v6191
  %v6193 = vrot.slane %v6192, 1
  %v6194 = vmax.f32 %v6192, %v6193
  %v6195 = vrot.slane %v4943, 4
  %v6196 = vmax.f32 %v4943, %v6195
  %v6197 = vrot.slane %v6196, 2
  %v6198 = vmax.f32 %v6196, %v6197
  %v6199 = vrot.slane %v6198, 1
  %v6200 = vmax.f32 %v6198, %v6199
  %v6201 = vrot.slane %v4945, 4
  %v6202 = vmax.f32 %v4945, %v6201
  %v6203 = vrot.slane %v6202, 2
  %v6204 = vmax.f32 %v6202, %v6203
  %v6205 = vrot.slane %v6204, 1
  %v6206 = vmax.f32 %v6204, %v6205
  %v6207 = vrot.slane %v4949, 4
  %v6208 = vmax.f32 %v4949, %v6207
  %v6209 = vrot.slane %v6208, 2
  %v6210 = vmax.f32 %v6208, %v6209
  %v6211 = vrot.slane %v6210, 1
  %v6212 = vmax.f32 %v6210, %v6211
  %v6213 = vrot.slane %v4951, 4
  %v6214 = vmax.f32 %v4951, %v6213
  %v6215 = vrot.slane %v6214, 2
  %v6216 = vmax.f32 %v6214, %v6215
  %v6217 = vrot.slane %v6216, 1
  %v6218 = vmax.f32 %v6216, %v6217
  %v6219 = vrot.slane %v4953, 4
  %v6220 = vmax.f32 %v4953, %v6219
  %v6221 = vrot.slane %v6220, 2
  %v6222 = vmax.f32 %v6220, %v6221
  %v6223 = vrot.slane %v6222, 1
  %v6224 = vmax.f32 %v6222, %v6223
  %v6225 = vrot.slane %v4955, 4
  %v6226 = vmax.f32 %v4955, %v6225
  %v6227 = vrot.slane %v6226, 2
  %v6228 = vmax.f32 %v6226, %v6227
  %v6229 = vrot.slane %v6228, 1
  %v6230 = vmax.f32 %v6228, %v6229
  %v6231 = vrot.slane %v4959, 4
  %v6232 = vmax.f32 %v4959, %v6231
  %v6233 = vrot.slane %v6232, 2
  %v6234 = vmax.f32 %v6232, %v6233
  %v6235 = vrot.slane %v6234, 1
  %v6236 = vmax.f32 %v6234, %v6235
  %v6237 = vrot.slane %v4961, 4
  %v6238 = vmax.f32 %v4961, %v6237
  %v6239 = vrot.slane %v6238, 2
  %v6240 = vmax.f32 %v6238, %v6239
  %v6241 = vrot.slane %v6240, 1
  %v6242 = vmax.f32 %v6240, %v6241
  %v6243 = vrot.slane %v4963, 4
  %v6244 = vmax.f32 %v4963, %v6243
  %v6245 = vrot.slane %v6244, 2
  %v6246 = vmax.f32 %v6244, %v6245
  %v6247 = vrot.slane %v6246, 1
  %v6248 = vmax.f32 %v6246, %v6247
  %v6249 = vrot.slane %v4965, 4
  %v6250 = vmax.f32 %v4965, %v6249
  %v6251 = vrot.slane %v6250, 2
  %v6252 = vmax.f32 %v6250, %v6251
  %v6253 = vrot.slane %v6252, 1
  %v6254 = vmax.f32 %v6252, %v6253
  %v6255 = vrot.slane %v4969, 4
  %v6256 = vmax.f32 %v4969, %v6255
  %v6257 = vrot.slane %v6256, 2
  %v6258 = vmax.f32 %v6256, %v6257
  %v6259 = vrot.slane %v6258, 1
  %v6260 = vmax.f32 %v6258, %v6259
  %v6261 = vrot.slane %v4971, 4
  %v6262 = vmax.f32 %v4971, %v6261
  %v6263 = vrot.slane %v6262, 2
  %v6264 = vmax.f32 %v6262, %v6263
  %v6265 = vrot.slane %v6264, 1
  %v6266 = vmax.f32 %v6264, %v6265
  %v6267 = vrot.slane %v4973, 4
  %v6268 = vmax.f32 %v4973, %v6267
  %v6269 = vrot.slane %v6268, 2
  %v6270 = vmax.f32 %v6268, %v6269
  %v6271 = vrot.slane %v6270, 1
  %v6272 = vmax.f32 %v6270, %v6271
  %v6273 = vrot.slane %v4975, 4
  %v6274 = vmax.f32 %v4975, %v6273
  %v6275 = vrot.slane %v6274, 2
  %v6276 = vmax.f32 %v6274, %v6275
  %v6277 = vrot.slane %v6276, 1
  %v6278 = vmax.f32 %v6276, %v6277
  %v6279 = vrot.slane %v4979, 4
  %v6280 = vmax.f32 %v4979, %v6279
  %v6281 = vrot.slane %v6280, 2
  %v6282 = vmax.f32 %v6280, %v6281
  %v6283 = vrot.slane %v6282, 1
  %v6284 = vmax.f32 %v6282, %v6283
  %v6285 = vrot.slane %v4981, 4
  %v6286 = vmax.f32 %v4981, %v6285
  %v6287 = vrot.slane %v6286, 2
  %v6288 = vmax.f32 %v6286, %v6287
  %v6289 = vrot.slane %v6288, 1
  %v6290 = vmax.f32 %v6288, %v6289
  %v6291 = vrot.slane %v4983, 4
  %v6292 = vmax.f32 %v4983, %v6291
  %v6293 = vrot.slane %v6292, 2
  %v6294 = vmax.f32 %v6292, %v6293
  %v6295 = vrot.slane %v6294, 1
  %v6296 = vmax.f32 %v6294, %v6295
  %v6297 = vrot.slane %v4985, 4
  %v6298 = vmax.f32 %v4985, %v6297
  %v6299 = vrot.slane %v6298, 2
  %v6300 = vmax.f32 %v6298, %v6299
  %v6301 = vrot.slane %v6300, 1
  %v6302 = vmax.f32 %v6300, %v6301
  %v6303 = vrot.slane %v4989, 4
  %v6304 = vmax.f32 %v4989, %v6303
  %v6305 = vrot.slane %v6304, 2
  %v6306 = vmax.f32 %v6304, %v6305
  %v6307 = vrot.slane %v6306, 1
  %v6308 = vmax.f32 %v6306, %v6307
  %v6309 = vrot.slane %v4991, 4
  %v6310 = vmax.f32 %v4991, %v6309
  %v6311 = vrot.slane %v6310, 2
  %v6312 = vmax.f32 %v6310, %v6311
  %v6313 = vrot.slane %v6312, 1
  %v6314 = vmax.f32 %v6312, %v6313
  %v6315 = vrot.slane %v4993, 4
  %v6316 = vmax.f32 %v4993, %v6315
  %v6317 = vrot.slane %v6316, 2
  %v6318 = vmax.f32 %v6316, %v6317
  %v6319 = vrot.slane %v6318, 1
  %v6320 = vmax.f32 %v6318, %v6319
  %v6321 = vrot.slane %v4995, 4
  %v6322 = vmax.f32 %v4995, %v6321
  %v6323 = vrot.slane %v6322, 2
  %v6324 = vmax.f32 %v6322, %v6323
  %v6325 = vrot.slane %v6324, 1
  %v6326 = vmax.f32 %v6324, %v6325
  %v6327 = vrot.slane %v4999, 4
  %v6328 = vmax.f32 %v4999, %v6327
  %v6329 = vrot.slane %v6328, 2
  %v6330 = vmax.f32 %v6328, %v6329
  %v6331 = vrot.slane %v6330, 1
  %v6332 = vmax.f32 %v6330, %v6331
  %v6333 = vrot.slane %v5001, 4
  %v6334 = vmax.f32 %v5001, %v6333
  %v6335 = vrot.slane %v6334, 2
  %v6336 = vmax.f32 %v6334, %v6335
  %v6337 = vrot.slane %v6336, 1
  %v6338 = vmax.f32 %v6336, %v6337
  %v6339 = vrot.slane %v5003, 4
  %v6340 = vmax.f32 %v5003, %v6339
  %v6341 = vrot.slane %v6340, 2
  %v6342 = vmax.f32 %v6340, %v6341
  %v6343 = vrot.slane %v6342, 1
  %v6344 = vmax.f32 %v6342, %v6343
  %v6345 = vrot.slane %v5005, 4
  %v6346 = vmax.f32 %v5005, %v6345
  %v6347 = vrot.slane %v6346, 2
  %v6348 = vmax.f32 %v6346, %v6347
  %v6349 = vrot.slane %v6348, 1
  %v6350 = vmax.f32 %v6348, %v6349
  %v6351 = vsub.f32 %v4449, %v5012
  %v6352 = vsub.f32 %v4451, %v5018
  %v6353 = vsub.f32 %v4453, %v5024
  %v6354 = vsub.f32 %v4455, %v5030
  %v6355 = vsub.f32 %v4459, %v5036
  %v6356 = vsub.f32 %v4461, %v5042
  %v6357 = vsub.f32 %v4463, %v5048
  %v6358 = vsub.f32 %v4465, %v5054
  %v6359 = vsub.f32 %v4469, %v5060
  %v6360 = vsub.f32 %v4471, %v5066
  %v6361 = vsub.f32 %v4473, %v5072
  %v6362 = vsub.f32 %v4475, %v5078
  %v6363 = vsub.f32 %v4479, %v5084
  %v6364 = vsub.f32 %v4481, %v5090
  %v6365 = vsub.f32 %v4483, %v5096
  %v6366 = vsub.f32 %v4485, %v5102
  %v6367 = vsub.f32 %v4489, %v5108
  %v6368 = vsub.f32 %v4491, %v5114
  %v6369 = vsub.f32 %v4493, %v5120
  %v6370 = vsub.f32 %v4495, %v5126
  %v6371 = vsub.f32 %v4499, %v5132
  %v6372 = vsub.f32 %v4501, %v5138
  %v6373 = vsub.f32 %v4503, %v5144
  %v6374 = vsub.f32 %v4505, %v5150
  %v6375 = vsub.f32 %v4509, %v5156
  %v6376 = vsub.f32 %v4511, %v5162
  %v6377 = vsub.f32 %v4513, %v5168
  %v6378 = vsub.f32 %v4515, %v5174
  %v6379 = vsub.f32 %v4519, %v5180
  %v6380 = vsub.f32 %v4521, %v5186
  %v6381 = vsub.f32 %v4523, %v5192
  %v6382 = vsub.f32 %v4525, %v5198
  %v6383 = vsub.f32 %v4529, %v5204
  %v6384 = vsub.f32 %v4531, %v5210
  %v6385 = vsub.f32 %v4533, %v5216
  %v6386 = vsub.f32 %v4535, %v5222
  %v6387 = vsub.f32 %v4539, %v5228
  %v6388 = vsub.f32 %v4541, %v5234
  %v6389 = vsub.f32 %v4543, %v5240
  %v6390 = vsub.f32 %v4545, %v5246
  %v6391 = vsub.f32 %v4549, %v5252
  %v6392 = vsub.f32 %v4551, %v5258
  %v6393 = vsub.f32 %v4553, %v5264
  %v6394 = vsub.f32 %v4555, %v5270
  %v6395 = vsub.f32 %v4559, %v5276
  %v6396 = vsub.f32 %v4561, %v5282
  %v6397 = vsub.f32 %v4563, %v5288
  %v6398 = vsub.f32 %v4565, %v5294
  %v6399 = vsub.f32 %v4569, %v5300
  %v6400 = vsub.f32 %v4571, %v5306
  %v6401 = vsub.f32 %v4573, %v5312
  %v6402 = vsub.f32 %v4575, %v5318
  %v6403 = vsub.f32 %v4579, %v5324
  %v6404 = vsub.f32 %v4581, %v5330
  %v6405 = vsub.f32 %v4583, %v5336
  %v6406 = vsub.f32 %v4585, %v5342
  %v6407 = vsub.f32 %v4589, %v5348
  %v6408 = vsub.f32 %v4591, %v5354
  %v6409 = vsub.f32 %v4593, %v5360
  %v6410 = vsub.f32 %v4595, %v5366
  %v6411 = vsub.f32 %v4599, %v5372
  %v6412 = vsub.f32 %v4601, %v5378
  %v6413 = vsub.f32 %v4603, %v5384
  %v6414 = vsub.f32 %v4605, %v5390
  %v6415 = vsub.f32 %v4609, %v5396
  %v6416 = vsub.f32 %v4611, %v5402
  %v6417 = vsub.f32 %v4613, %v5408
  %v6418 = vsub.f32 %v4615, %v5414
  %v6419 = vsub.f32 %v4619, %v5420
  %v6420 = vsub.f32 %v4621, %v5426
  %v6421 = vsub.f32 %v4623, %v5432
  %v6422 = vsub.f32 %v4625, %v5438
  %v6423 = vsub.f32 %v4629, %v5444
  %v6424 = vsub.f32 %v4631, %v5450
  %v6425 = vsub.f32 %v4633, %v5456
  %v6426 = vsub.f32 %v4635, %v5462
  %v6427 = vsub.f32 %v4639, %v5468
  %v6428 = vsub.f32 %v4641, %v5474
  %v6429 = vsub.f32 %v4643, %v5480
  %v6430 = vsub.f32 %v4645, %v5486
  %v6431 = vsub.f32 %v4649, %v5492
  %v6432 = vsub.f32 %v4651, %v5498
  %v6433 = vsub.f32 %v4653, %v5504
  %v6434 = vsub.f32 %v4655, %v5510
  %v6435 = vsub.f32 %v4659, %v5516
  %v6436 = vsub.f32 %v4661, %v5522
  %v6437 = vsub.f32 %v4663, %v5528
  %v6438 = vsub.f32 %v4665, %v5534
  %v6439 = vsub.f32 %v4669, %v5540
  %v6440 = vsub.f32 %v4671, %v5546
  %v6441 = vsub.f32 %v4673, %v5552
  %v6442 = vsub.f32 %v4675, %v5558
  %v6443 = vsub.f32 %v4679, %v5564
  %v6444 = vsub.f32 %v4681, %v5570
  %v6445 = vsub.f32 %v4683, %v5576
  %v6446 = vsub.f32 %v4685, %v5582
  %v6447 = vsub.f32 %v4689, %v5588
  %v6448 = vsub.f32 %v4691, %v5594
  %v6449 = vsub.f32 %v4693, %v5600
  %v6450 = vsub.f32 %v4695, %v5606
  %v6451 = vsub.f32 %v4699, %v5612
  %v6452 = vsub.f32 %v4701, %v5618
  %v6453 = vsub.f32 %v4703, %v5624
  %v6454 = vsub.f32 %v4705, %v5630
  %v6455 = vsub.f32 %v4709, %v5636
  %v6456 = vsub.f32 %v4711, %v5642
  %v6457 = vsub.f32 %v4713, %v5648
  %v6458 = vsub.f32 %v4715, %v5654
  %v6459 = vsub.f32 %v4719, %v5660
  %v6460 = vsub.f32 %v4721, %v5666
  %v6461 = vsub.f32 %v4723, %v5672
  %v6462 = vsub.f32 %v4725, %v5678
  %v6463 = vsub.f32 %v4729, %v5684
  %v6464 = vsub.f32 %v4731, %v5690
  %v6465 = vsub.f32 %v4733, %v5696
  %v6466 = vsub.f32 %v4735, %v5702
  %v6467 = vsub.f32 %v4739, %v5708
  %v6468 = vsub.f32 %v4741, %v5714
  %v6469 = vsub.f32 %v4743, %v5720
  %v6470 = vsub.f32 %v4745, %v5726
  %v6471 = vsub.f32 %v4749, %v5732
  %v6472 = vsub.f32 %v4751, %v5738
  %v6473 = vsub.f32 %v4753, %v5744
  %v6474 = vsub.f32 %v4755, %v5750
  %v6475 = vsub.f32 %v4759, %v5756
  %v6476 = vsub.f32 %v4761, %v5762
  %v6477 = vsub.f32 %v4763, %v5768
  %v6478 = vsub.f32 %v4765, %v5774
  %v6479 = vsub.f32 %v4769, %v5780
  %v6480 = vsub.f32 %v4771, %v5786
  %v6481 = vsub.f32 %v4773, %v5792
  %v6482 = vsub.f32 %v4775, %v5798
  %v6483 = vsub.f32 %v4779, %v5804
  %v6484 = vsub.f32 %v4781, %v5810
  %v6485 = vsub.f32 %v4783, %v5816
  %v6486 = vsub.f32 %v4785, %v5822
  %v6487 = vsub.f32 %v4789, %v5828
  %v6488 = vsub.f32 %v4791, %v5834
  %v6489 = vsub.f32 %v4793, %v5840
  %v6490 = vsub.f32 %v4795, %v5846
  %v6491 = vsub.f32 %v4799, %v5852
  %v6492 = vsub.f32 %v4801, %v5858
  %v6493 = vsub.f32 %v4803, %v5864
  %v6494 = vsub.f32 %v4805, %v5870
  %v6495 = vsub.f32 %v4809, %v5876
  %v6496 = vsub.f32 %v4811, %v5882
  %v6497 = vsub.f32 %v4813, %v5888
  %v6498 = vsub.f32 %v4815, %v5894
  %v6499 = vsub.f32 %v4819, %v5900
  %v6500 = vsub.f32 %v4821, %v5906
  %v6501 = vsub.f32 %v4823, %v5912
  %v6502 = vsub.f32 %v4825, %v5918
  %v6503 = vsub.f32 %v4829, %v5924
  %v6504 = vsub.f32 %v4831, %v5930
  %v6505 = vsub.f32 %v4833, %v5936
  %v6506 = vsub.f32 %v4835, %v5942
  %v6507 = vsub.f32 %v4839, %v5948
  %v6508 = vsub.f32 %v4841, %v5954
  %v6509 = vsub.f32 %v4843, %v5960
  %v6510 = vsub.f32 %v4845, %v5966
  %v6511 = vsub.f32 %v4849, %v5972
  %v6512 = vsub.f32 %v4851, %v5978
  %v6513 = vsub.f32 %v4853, %v5984
  %v6514 = vsub.f32 %v4855, %v5990
  %v6515 = vsub.f32 %v4859, %v5996
  %v6516 = vsub.f32 %v4861, %v6002
  %v6517 = vsub.f32 %v4863, %v6008
  %v6518 = vsub.f32 %v4865, %v6014
  %v6519 = vsub.f32 %v4869, %v6020
  %v6520 = vsub.f32 %v4871, %v6026
  %v6521 = vsub.f32 %v4873, %v6032
  %v6522 = vsub.f32 %v4875, %v6038
  %v6523 = vsub.f32 %v4879, %v6044
  %v6524 = vsub.f32 %v4881, %v6050
  %v6525 = vsub.f32 %v4883, %v6056
  %v6526 = vsub.f32 %v4885, %v6062
  %v6527 = vsub.f32 %v4889, %v6068
  %v6528 = vsub.f32 %v4891, %v6074
  %v6529 = vsub.f32 %v4893, %v6080
  %v6530 = vsub.f32 %v4895, %v6086
  %v6531 = vsub.f32 %v4899, %v6092
  %v6532 = vsub.f32 %v4901, %v6098
  %v6533 = vsub.f32 %v4903, %v6104
  %v6534 = vsub.f32 %v4905, %v6110
  %v6535 = vsub.f32 %v4909, %v6116
  %v6536 = vsub.f32 %v4911, %v6122
  %v6537 = vsub.f32 %v4913, %v6128
  %v6538 = vsub.f32 %v4915, %v6134
  %v6539 = vsub.f32 %v4919, %v6140
  %v6540 = vsub.f32 %v4921, %v6146
  %v6541 = vsub.f32 %v4923, %v6152
  %v6542 = vsub.f32 %v4925, %v6158
  %v6543 = vsub.f32 %v4929, %v6164
  %v6544 = vsub.f32 %v4931, %v6170
  %v6545 = vsub.f32 %v4933, %v6176
  %v6546 = vsub.f32 %v4935, %v6182
  %v6547 = vsub.f32 %v4939, %v6188
  %v6548 = vsub.f32 %v4941, %v6194
  %v6549 = vsub.f32 %v4943, %v6200
  %v6550 = vsub.f32 %v4945, %v6206
  %v6551 = vsub.f32 %v4949, %v6212
  %v6552 = vsub.f32 %v4951, %v6218
  %v6553 = vsub.f32 %v4953, %v6224
  %v6554 = vsub.f32 %v4955, %v6230
  %v6555 = vsub.f32 %v4959, %v6236
  %v6556 = vsub.f32 %v4961, %v6242
  %v6557 = vsub.f32 %v4963, %v6248
  %v6558 = vsub.f32 %v4965, %v6254
  %v6559 = vsub.f32 %v4969, %v6260
  %v6560 = vsub.f32 %v4971, %v6266
  %v6561 = vsub.f32 %v4973, %v6272
  %v6562 = vsub.f32 %v4975, %v6278
  %v6563 = vsub.f32 %v4979, %v6284
  %v6564 = vsub.f32 %v4981, %v6290
  %v6565 = vsub.f32 %v4983, %v6296
  %v6566 = vsub.f32 %v4985, %v6302
  %v6567 = vsub.f32 %v4989, %v6308
  %v6568 = vsub.f32 %v4991, %v6314
  %v6569 = vsub.f32 %v4993, %v6320
  %v6570 = vsub.f32 %v4995, %v6326
  %v6571 = vsub.f32 %v4999, %v6332
  %v6572 = vsub.f32 %v5001, %v6338
  %v6573 = vsub.f32 %v5003, %v6344
  %v6574 = vsub.f32 %v5005, %v6350
  %v6575 = vmul.f32 %v6351, 1.442695
  %v6576 = vpow.pop %v6575
  %v6577 = vmul.f32 %v6352, 1.442695
  %v6578 = vpow.pop %v6577
  %v6579 = vmul.f32 %v6353, 1.442695
  %v6580 = vpow.pop %v6579
  %v6581 = vmul.f32 %v6354, 1.442695
  %v6582 = vpow.pop %v6581
  %v6583 = vmul.f32 %v6355, 1.442695
  %v6584 = vpow.pop %v6583
  %v6585 = vmul.f32 %v6356, 1.442695
  %v6586 = vpow.pop %v6585
  %v6587 = vmul.f32 %v6357, 1.442695
  %v6588 = vpow.pop %v6587
  %v6589 = vmul.f32 %v6358, 1.442695
  %v6590 = vpow.pop %v6589
  %v6591 = vmul.f32 %v6359, 1.442695
  %v6592 = vpow.pop %v6591
  %v6593 = vmul.f32 %v6360, 1.442695
  %v6594 = vpow.pop %v6593
  %v6595 = vmul.f32 %v6361, 1.442695
  %v6596 = vpow.pop %v6595
  %v6597 = vmul.f32 %v6362, 1.442695
  %v6598 = vpow.pop %v6597
  %v6599 = vmul.f32 %v6363, 1.442695
  %v6600 = vpow.pop %v6599
  %v6601 = vmul.f32 %v6364, 1.442695
  %v6602 = vpow.pop %v6601
  %v6603 = vmul.f32 %v6365, 1.442695
  %v6604 = vpow.pop %v6603
  %v6605 = vmul.f32 %v6366, 1.442695
  %v6606 = vpow.pop %v6605
  %v6607 = vmul.f32 %v6367, 1.442695
  %v6608 = vpow.pop %v6607
  %v6609 = vmul.f32 %v6368, 1.442695
  %v6610 = vpow.pop %v6609
  %v6611 = vmul.f32 %v6369, 1.442695
  %v6612 = vpow.pop %v6611
  %v6613 = vmul.f32 %v6370, 1.442695
  %v6614 = vpow.pop %v6613
  %v6615 = vmul.f32 %v6371, 1.442695
  %v6616 = vpow.pop %v6615
  %v6617 = vmul.f32 %v6372, 1.442695
  %v6618 = vpow.pop %v6617
  %v6619 = vmul.f32 %v6373, 1.442695
  %v6620 = vpow.pop %v6619
  %v6621 = vmul.f32 %v6374, 1.442695
  %v6622 = vpow.pop %v6621
  %v6623 = vmul.f32 %v6375, 1.442695
  %v6624 = vpow.pop %v6623
  %v6625 = vmul.f32 %v6376, 1.442695
  %v6626 = vpow.pop %v6625
  %v6627 = vmul.f32 %v6377, 1.442695
  %v6628 = vpow.pop %v6627
  %v6629 = vmul.f32 %v6378, 1.442695
  %v6630 = vpow.pop %v6629
  %v6631 = vmul.f32 %v6379, 1.442695
  %v6632 = vpow.pop %v6631
  %v6633 = vmul.f32 %v6380, 1.442695
  %v6634 = vpow.pop %v6633
  %v6635 = vmul.f32 %v6381, 1.442695
  %v6636 = vpow.pop %v6635
  %v6637 = vmul.f32 %v6382, 1.442695
  %v6638 = vpow.pop %v6637
  %v6639 = vmul.f32 %v6383, 1.442695
  %v6640 = vpow.pop %v6639
  %v6641 = vmul.f32 %v6384, 1.442695
  %v6642 = vpow.pop %v6641
  %v6643 = vmul.f32 %v6385, 1.442695
  %v6644 = vpow.pop %v6643
  %v6645 = vmul.f32 %v6386, 1.442695
  %v6646 = vpow.pop %v6645
  %v6647 = vmul.f32 %v6387, 1.442695
  %v6648 = vpow.pop %v6647
  %v6649 = vmul.f32 %v6388, 1.442695
  %v6650 = vpow.pop %v6649
  %v6651 = vmul.f32 %v6389, 1.442695
  %v6652 = vpow.pop %v6651
  %v6653 = vmul.f32 %v6390, 1.442695
  %v6654 = vpow.pop %v6653
  %v6655 = vmul.f32 %v6391, 1.442695
  %v6656 = vpow.pop %v6655
  %v6657 = vmul.f32 %v6392, 1.442695
  %v6658 = vpow.pop %v6657
  %v6659 = vmul.f32 %v6393, 1.442695
  %v6660 = vpow.pop %v6659
  %v6661 = vmul.f32 %v6394, 1.442695
  %v6662 = vpow.pop %v6661
  %v6663 = vmul.f32 %v6395, 1.442695
  %v6664 = vpow.pop %v6663
  %v6665 = vmul.f32 %v6396, 1.442695
  %v6666 = vpow.pop %v6665
  %v6667 = vmul.f32 %v6397, 1.442695
  %v6668 = vpow.pop %v6667
  %v6669 = vmul.f32 %v6398, 1.442695
  %v6670 = vpow.pop %v6669
  %v6671 = vmul.f32 %v6399, 1.442695
  %v6672 = vpow.pop %v6671
  %v6673 = vmul.f32 %v6400, 1.442695
  %v6674 = vpow.pop %v6673
  %v6675 = vmul.f32 %v6401, 1.442695
  %v6676 = vpow.pop %v6675
  %v6677 = vmul.f32 %v6402, 1.442695
  %v6678 = vpow.pop %v6677
  %v6679 = vmul.f32 %v6403, 1.442695
  %v6680 = vpow.pop %v6679
  %v6681 = vmul.f32 %v6404, 1.442695
  %v6682 = vpow.pop %v6681
  %v6683 = vmul.f32 %v6405, 1.442695
  %v6684 = vpow.pop %v6683
  %v6685 = vmul.f32 %v6406, 1.442695
  %v6686 = vpow.pop %v6685
  %v6687 = vmul.f32 %v6407, 1.442695
  %v6688 = vpow.pop %v6687
  %v6689 = vmul.f32 %v6408, 1.442695
  %v6690 = vpow.pop %v6689
  %v6691 = vmul.f32 %v6409, 1.442695
  %v6692 = vpow.pop %v6691
  %v6693 = vmul.f32 %v6410, 1.442695
  %v6694 = vpow.pop %v6693
  %v6695 = vmul.f32 %v6411, 1.442695
  %v6696 = vpow.pop %v6695
  %v6697 = vmul.f32 %v6412, 1.442695
  %v6698 = vpow.pop %v6697
  %v6699 = vmul.f32 %v6413, 1.442695
  %v6700 = vpow.pop %v6699
  %v6701 = vmul.f32 %v6414, 1.442695
  %v6702 = vpow.pop %v6701
  %v6703 = vmul.f32 %v6415, 1.442695
  %v6704 = vpow.pop %v6703
  %v6705 = vmul.f32 %v6416, 1.442695
  %v6706 = vpow.pop %v6705
  %v6707 = vmul.f32 %v6417, 1.442695
  %v6708 = vpow.pop %v6707
  %v6709 = vmul.f32 %v6418, 1.442695
  %v6710 = vpow.pop %v6709
  %v6711 = vmul.f32 %v6419, 1.442695
  %v6712 = vpow.pop %v6711
  %v6713 = vmul.f32 %v6420, 1.442695
  %v6714 = vpow.pop %v6713
  %v6715 = vmul.f32 %v6421, 1.442695
  %v6716 = vpow.pop %v6715
  %v6717 = vmul.f32 %v6422, 1.442695
  %v6718 = vpow.pop %v6717
  %v6719 = vmul.f32 %v6423, 1.442695
  %v6720 = vpow.pop %v6719
  %v6721 = vmul.f32 %v6424, 1.442695
  %v6722 = vpow.pop %v6721
  %v6723 = vmul.f32 %v6425, 1.442695
  %v6724 = vpow.pop %v6723
  %v6725 = vmul.f32 %v6426, 1.442695
  %v6726 = vpow.pop %v6725
  %v6727 = vmul.f32 %v6427, 1.442695
  %v6728 = vpow.pop %v6727
  %v6729 = vmul.f32 %v6428, 1.442695
  %v6730 = vpow.pop %v6729
  %v6731 = vmul.f32 %v6429, 1.442695
  %v6732 = vpow.pop %v6731
  %v6733 = vmul.f32 %v6430, 1.442695
  %v6734 = vpow.pop %v6733
  %v6735 = vmul.f32 %v6431, 1.442695
  %v6736 = vpow.pop %v6735
  %v6737 = vmul.f32 %v6432, 1.442695
  %v6738 = vpow.pop %v6737
  %v6739 = vmul.f32 %v6433, 1.442695
  %v6740 = vpow.pop %v6739
  %v6741 = vmul.f32 %v6434, 1.442695
  %v6742 = vpow.pop %v6741
  %v6743 = vmul.f32 %v6435, 1.442695
  %v6744 = vpow.pop %v6743
  %v6745 = vmul.f32 %v6436, 1.442695
  %v6746 = vpow.pop %v6745
  %v6747 = vmul.f32 %v6437, 1.442695
  %v6748 = vpow.pop %v6747
  %v6749 = vmul.f32 %v6438, 1.442695
  %v6750 = vpow.pop %v6749
  %v6751 = vmul.f32 %v6439, 1.442695
  %v6752 = vpow.pop %v6751
  %v6753 = vmul.f32 %v6440, 1.442695
  %v6754 = vpow.pop %v6753
  %v6755 = vmul.f32 %v6441, 1.442695
  %v6756 = vpow.pop %v6755
  %v6757 = vmul.f32 %v6442, 1.442695
  %v6758 = vpow.pop %v6757
  %v6759 = vmul.f32 %v6443, 1.442695
  %v6760 = vpow.pop %v6759
  %v6761 = vmul.f32 %v6444, 1.442695
  %v6762 = vpow.pop %v6761
  %v6763 = vmul.f32 %v6445, 1.442695
  %v6764 = vpow.pop %v6763
  %v6765 = vmul.f32 %v6446, 1.442695
  %v6766 = vpow.pop %v6765
  %v6767 = vmul.f32 %v6447, 1.442695
  %v6768 = vpow.pop %v6767
  %v6769 = vmul.f32 %v6448, 1.442695
  %v6770 = vpow.pop %v6769
  %v6771 = vmul.f32 %v6449, 1.442695
  %v6772 = vpow.pop %v6771
  %v6773 = vmul.f32 %v6450, 1.442695
  %v6774 = vpow.pop %v6773
  %v6775 = vmul.f32 %v6451, 1.442695
  %v6776 = vpow.pop %v6775
  %v6777 = vmul.f32 %v6452, 1.442695
  %v6778 = vpow.pop %v6777
  %v6779 = vmul.f32 %v6453, 1.442695
  %v6780 = vpow.pop %v6779
  %v6781 = vmul.f32 %v6454, 1.442695
  %v6782 = vpow.pop %v6781
  %v6783 = vmul.f32 %v6455, 1.442695
  %v6784 = vpow.pop %v6783
  %v6785 = vmul.f32 %v6456, 1.442695
  %v6786 = vpow.pop %v6785
  %v6787 = vmul.f32 %v6457, 1.442695
  %v6788 = vpow.pop %v6787
  %v6789 = vmul.f32 %v6458, 1.442695
  %v6790 = vpow.pop %v6789
  %v6791 = vmul.f32 %v6459, 1.442695
  %v6792 = vpow.pop %v6791
  %v6793 = vmul.f32 %v6460, 1.442695
  %v6794 = vpow.pop %v6793
  %v6795 = vmul.f32 %v6461, 1.442695
  %v6796 = vpow.pop %v6795
  %v6797 = vmul.f32 %v6462, 1.442695
  %v6798 = vpow.pop %v6797
  %v6799 = vmul.f32 %v6463, 1.442695
  %v6800 = vpow.pop %v6799
  %v6801 = vmul.f32 %v6464, 1.442695
  %v6802 = vpow.pop %v6801
  %v6803 = vmul.f32 %v6465, 1.442695
  %v6804 = vpow.pop %v6803
  %v6805 = vmul.f32 %v6466, 1.442695
  %v6806 = vpow.pop %v6805
  %v6807 = vmul.f32 %v6467, 1.442695
  %v6808 = vpow.pop %v6807
  %v6809 = vmul.f32 %v6468, 1.442695
  %v6810 = vpow.pop %v6809
  %v6811 = vmul.f32 %v6469, 1.442695
  %v6812 = vpow.pop %v6811
  %v6813 = vmul.f32 %v6470, 1.442695
  %v6814 = vpow.pop %v6813
  %v6815 = vmul.f32 %v6471, 1.442695
  %v6816 = vpow.pop %v6815
  %v6817 = vmul.f32 %v6472, 1.442695
  %v6818 = vpow.pop %v6817
  %v6819 = vmul.f32 %v6473, 1.442695
  %v6820 = vpow.pop %v6819
  %v6821 = vmul.f32 %v6474, 1.442695
  %v6822 = vpow.pop %v6821
  %v6823 = vmul.f32 %v6475, 1.442695
  %v6824 = vpow.pop %v6823
  %v6825 = vmul.f32 %v6476, 1.442695
  %v6826 = vpow.pop %v6825
  %v6827 = vmul.f32 %v6477, 1.442695
  %v6828 = vpow.pop %v6827
  %v6829 = vmul.f32 %v6478, 1.442695
  %v6830 = vpow.pop %v6829
  %v6831 = vmul.f32 %v6479, 1.442695
  %v6832 = vpow.pop %v6831
  %v6833 = vmul.f32 %v6480, 1.442695
  %v6834 = vpow.pop %v6833
  %v6835 = vmul.f32 %v6481, 1.442695
  %v6836 = vpow.pop %v6835
  %v6837 = vmul.f32 %v6482, 1.442695
  %v6838 = vpow.pop %v6837
  %v6839 = vmul.f32 %v6483, 1.442695
  %v6840 = vpow.pop %v6839
  %v6841 = vmul.f32 %v6484, 1.442695
  %v6842 = vpow.pop %v6841
  %v6843 = vmul.f32 %v6485, 1.442695
  %v6844 = vpow.pop %v6843
  %v6845 = vmul.f32 %v6486, 1.442695
  %v6846 = vpow.pop %v6845
  %v6847 = vmul.f32 %v6487, 1.442695
  %v6848 = vpow.pop %v6847
  %v6849 = vmul.f32 %v6488, 1.442695
  %v6850 = vpow.pop %v6849
  %v6851 = vmul.f32 %v6489, 1.442695
  %v6852 = vpow.pop %v6851
  %v6853 = vmul.f32 %v6490, 1.442695
  %v6854 = vpow.pop %v6853
  %v6855 = vmul.f32 %v6491, 1.442695
  %v6856 = vpow.pop %v6855
  %v6857 = vmul.f32 %v6492, 1.442695
  %v6858 = vpow.pop %v6857
  %v6859 = vmul.f32 %v6493, 1.442695
  %v6860 = vpow.pop %v6859
  %v6861 = vmul.f32 %v6494, 1.442695
  %v6862 = vpow.pop %v6861
  %v6863 = vmul.f32 %v6495, 1.442695
  %v6864 = vpow.pop %v6863
  %v6865 = vmul.f32 %v6496, 1.442695
  %v6866 = vpow.pop %v6865
  %v6867 = vmul.f32 %v6497, 1.442695
  %v6868 = vpow.pop %v6867
  %v6869 = vmul.f32 %v6498, 1.442695
  %v6870 = vpow.pop %v6869
  %v6871 = vmul.f32 %v6499, 1.442695
  %v6872 = vpow.pop %v6871
  %v6873 = vmul.f32 %v6500, 1.442695
  %v6874 = vpow.pop %v6873
  %v6875 = vmul.f32 %v6501, 1.442695
  %v6876 = vpow.pop %v6875
  %v6877 = vmul.f32 %v6502, 1.442695
  %v6878 = vpow.pop %v6877
  %v6879 = vmul.f32 %v6503, 1.442695
  %v6880 = vpow.pop %v6879
  %v6881 = vmul.f32 %v6504, 1.442695
  %v6882 = vpow.pop %v6881
  %v6883 = vmul.f32 %v6505, 1.442695
  %v6884 = vpow.pop %v6883
  %v6885 = vmul.f32 %v6506, 1.442695
  %v6886 = vpow.pop %v6885
  %v6887 = vmul.f32 %v6507, 1.442695
  %v6888 = vpow.pop %v6887
  %v6889 = vmul.f32 %v6508, 1.442695
  %v6890 = vpow.pop %v6889
  %v6891 = vmul.f32 %v6509, 1.442695
  %v6892 = vpow.pop %v6891
  %v6893 = vmul.f32 %v6510, 1.442695
  %v6894 = vpow.pop %v6893
  %v6895 = vmul.f32 %v6511, 1.442695
  %v6896 = vpow.pop %v6895
  %v6897 = vmul.f32 %v6512, 1.442695
  %v6898 = vpow.pop %v6897
  %v6899 = vmul.f32 %v6513, 1.442695
  %v6900 = vpow.pop %v6899
  %v6901 = vmul.f32 %v6514, 1.442695
  %v6902 = vpow.pop %v6901
  %v6903 = vmul.f32 %v6515, 1.442695
  %v6904 = vpow.pop %v6903
  %v6905 = vmul.f32 %v6516, 1.442695
  %v6906 = vpow.pop %v6905
  %v6907 = vmul.f32 %v6517, 1.442695
  %v6908 = vpow.pop %v6907
  %v6909 = vmul.f32 %v6518, 1.442695
  %v6910 = vpow.pop %v6909
  %v6911 = vmul.f32 %v6519, 1.442695
  %v6912 = vpow.pop %v6911
  %v6913 = vmul.f32 %v6520, 1.442695
  %v6914 = vpow.pop %v6913
  %v6915 = vmul.f32 %v6521, 1.442695
  %v6916 = vpow.pop %v6915
  %v6917 = vmul.f32 %v6522, 1.442695
  %v6918 = vpow.pop %v6917
  %v6919 = vmul.f32 %v6523, 1.442695
  %v6920 = vpow.pop %v6919
  %v6921 = vmul.f32 %v6524, 1.442695
  %v6922 = vpow.pop %v6921
  %v6923 = vmul.f32 %v6525, 1.442695
  %v6924 = vpow.pop %v6923
  %v6925 = vmul.f32 %v6526, 1.442695
  %v6926 = vpow.pop %v6925
  %v6927 = vmul.f32 %v6527, 1.442695
  %v6928 = vpow.pop %v6927
  %v6929 = vmul.f32 %v6528, 1.442695
  %v6930 = vpow.pop %v6929
  %v6931 = vmul.f32 %v6529, 1.442695
  %v6932 = vpow.pop %v6931
  %v6933 = vmul.f32 %v6530, 1.442695
  %v6934 = vpow.pop %v6933
  %v6935 = vmul.f32 %v6531, 1.442695
  %v6936 = vpow.pop %v6935
  %v6937 = vmul.f32 %v6532, 1.442695
  %v6938 = vpow.pop %v6937
  %v6939 = vmul.f32 %v6533, 1.442695
  %v6940 = vpow.pop %v6939
  %v6941 = vmul.f32 %v6534, 1.442695
  %v6942 = vpow.pop %v6941
  %v6943 = vmul.f32 %v6535, 1.442695
  %v6944 = vpow.pop %v6943
  %v6945 = vmul.f32 %v6536, 1.442695
  %v6946 = vpow.pop %v6945
  %v6947 = vmul.f32 %v6537, 1.442695
  %v6948 = vpow.pop %v6947
  %v6949 = vmul.f32 %v6538, 1.442695
  %v6950 = vpow.pop %v6949
  %v6951 = vmul.f32 %v6539, 1.442695
  %v6952 = vpow.pop %v6951
  %v6953 = vmul.f32 %v6540, 1.442695
  %v6954 = vpow.pop %v6953
  %v6955 = vmul.f32 %v6541, 1.442695
  %v6956 = vpow.pop %v6955
  %v6957 = vmul.f32 %v6542, 1.442695
  %v6958 = vpow.pop %v6957
  %v6959 = vmul.f32 %v6543, 1.442695
  %v6960 = vpow.pop %v6959
  %v6961 = vmul.f32 %v6544, 1.442695
  %v6962 = vpow.pop %v6961
  %v6963 = vmul.f32 %v6545, 1.442695
  %v6964 = vpow.pop %v6963
  %v6965 = vmul.f32 %v6546, 1.442695
  %v6966 = vpow.pop %v6965
  %v6967 = vmul.f32 %v6547, 1.442695
  %v6968 = vpow.pop %v6967
  %v6969 = vmul.f32 %v6548, 1.442695
  %v6970 = vpow.pop %v6969
  %v6971 = vmul.f32 %v6549, 1.442695
  %v6972 = vpow.pop %v6971
  %v6973 = vmul.f32 %v6550, 1.442695
  %v6974 = vpow.pop %v6973
  %v6975 = vmul.f32 %v6551, 1.442695
  %v6976 = vpow.pop %v6975
  %v6977 = vmul.f32 %v6552, 1.442695
  %v6978 = vpow.pop %v6977
  %v6979 = vmul.f32 %v6553, 1.442695
  %v6980 = vpow.pop %v6979
  %v6981 = vmul.f32 %v6554, 1.442695
  %v6982 = vpow.pop %v6981
  %v6983 = vmul.f32 %v6555, 1.442695
  %v6984 = vpow.pop %v6983
  %v6985 = vmul.f32 %v6556, 1.442695
  %v6986 = vpow.pop %v6985
  %v6987 = vmul.f32 %v6557, 1.442695
  %v6988 = vpow.pop %v6987
  %v6989 = vmul.f32 %v6558, 1.442695
  %v6990 = vpow.pop %v6989
  %v6991 = vmul.f32 %v6559, 1.442695
  %v6992 = vpow.pop %v6991
  %v6993 = vmul.f32 %v6560, 1.442695
  %v6994 = vpow.pop %v6993
  %v6995 = vmul.f32 %v6561, 1.442695
  %v6996 = vpow.pop %v6995
  %v6997 = vmul.f32 %v6562, 1.442695
  %v6998 = vpow.pop %v6997
  %v6999 = vmul.f32 %v6563, 1.442695
  %v7000 = vpow.pop %v6999
  %v7001 = vmul.f32 %v6564, 1.442695
  %v7002 = vpow.pop %v7001
  %v7003 = vmul.f32 %v6565, 1.442695
  %v7004 = vpow.pop %v7003
  %v7005 = vmul.f32 %v6566, 1.442695
  %v7006 = vpow.pop %v7005
  %v7007 = vmul.f32 %v6567, 1.442695
  %v7008 = vpow.pop %v7007
  %v7009 = vmul.f32 %v6568, 1.442695
  %v7010 = vpow.pop %v7009
  %v7011 = vmul.f32 %v6569, 1.442695
  %v7012 = vpow.pop %v7011
  %v7013 = vmul.f32 %v6570, 1.442695
  %v7014 = vpow.pop %v7013
  %v7015 = vmul.f32 %v6571, 1.442695
  %v7016 = vpow.pop %v7015
  %v7017 = vmul.f32 %v6572, 1.442695
  %v7018 = vpow.pop %v7017
  %v7019 = vmul.f32 %v6573, 1.442695
  %v7020 = vpow.pop %v7019
  %v7021 = vmul.f32 %v6574, 1.442695
  %v7022 = vpow.pop %v7021
  %v7023 = vrot.slane %v6576, 4
  %v7024 = vadd.f32 %v6576, %v7023
  %v7025 = vrot.slane %v7024, 2
  %v7026 = vadd.f32 %v7024, %v7025
  %v7027 = vrot.slane %v7026, 1
  %v7028 = vadd.f32 %v7026, %v7027
  %v7029 = vrot.slane %v6578, 4
  %v7030 = vadd.f32 %v6578, %v7029
  %v7031 = vrot.slane %v7030, 2
  %v7032 = vadd.f32 %v7030, %v7031
  %v7033 = vrot.slane %v7032, 1
  %v7034 = vadd.f32 %v7032, %v7033
  %v7035 = vrot.slane %v6580, 4
  %v7036 = vadd.f32 %v6580, %v7035
  %v7037 = vrot.slane %v7036, 2
  %v7038 = vadd.f32 %v7036, %v7037
  %v7039 = vrot.slane %v7038, 1
  %v7040 = vadd.f32 %v7038, %v7039
  %v7041 = vrot.slane %v6582, 4
  %v7042 = vadd.f32 %v6582, %v7041
  %v7043 = vrot.slane %v7042, 2
  %v7044 = vadd.f32 %v7042, %v7043
  %v7045 = vrot.slane %v7044, 1
  %v7046 = vadd.f32 %v7044, %v7045
  %v7047 = vrot.slane %v6584, 4
  %v7048 = vadd.f32 %v6584, %v7047
  %v7049 = vrot.slane %v7048, 2
  %v7050 = vadd.f32 %v7048, %v7049
  %v7051 = vrot.slane %v7050, 1
  %v7052 = vadd.f32 %v7050, %v7051
  %v7053 = vrot.slane %v6586, 4
  %v7054 = vadd.f32 %v6586, %v7053
  %v7055 = vrot.slane %v7054, 2
  %v7056 = vadd.f32 %v7054, %v7055
  %v7057 = vrot.slane %v7056, 1
  %v7058 = vadd.f32 %v7056, %v7057
  %v7059 = vrot.slane %v6588, 4
  %v7060 = vadd.f32 %v6588, %v7059
  %v7061 = vrot.slane %v7060, 2
  %v7062 = vadd.f32 %v7060, %v7061
  %v7063 = vrot.slane %v7062, 1
  %v7064 = vadd.f32 %v7062, %v7063
  %v7065 = vrot.slane %v6590, 4
  %v7066 = vadd.f32 %v6590, %v7065
  %v7067 = vrot.slane %v7066, 2
  %v7068 = vadd.f32 %v7066, %v7067
  %v7069 = vrot.slane %v7068, 1
  %v7070 = vadd.f32 %v7068, %v7069
  %v7071 = vrot.slane %v6592, 4
  %v7072 = vadd.f32 %v6592, %v7071
  %v7073 = vrot.slane %v7072, 2
  %v7074 = vadd.f32 %v7072, %v7073
  %v7075 = vrot.slane %v7074, 1
  %v7076 = vadd.f32 %v7074, %v7075
  %v7077 = vrot.slane %v6594, 4
  %v7078 = vadd.f32 %v6594, %v7077
  %v7079 = vrot.slane %v7078, 2
  %v7080 = vadd.f32 %v7078, %v7079
  %v7081 = vrot.slane %v7080, 1
  %v7082 = vadd.f32 %v7080, %v7081
  %v7083 = vrot.slane %v6596, 4
  %v7084 = vadd.f32 %v6596, %v7083
  %v7085 = vrot.slane %v7084, 2
  %v7086 = vadd.f32 %v7084, %v7085
  %v7087 = vrot.slane %v7086, 1
  %v7088 = vadd.f32 %v7086, %v7087
  %v7089 = vrot.slane %v6598, 4
  %v7090 = vadd.f32 %v6598, %v7089
  %v7091 = vrot.slane %v7090, 2
  %v7092 = vadd.f32 %v7090, %v7091
  %v7093 = vrot.slane %v7092, 1
  %v7094 = vadd.f32 %v7092, %v7093
  %v7095 = vrot.slane %v6600, 4
  %v7096 = vadd.f32 %v6600, %v7095
  %v7097 = vrot.slane %v7096, 2
  %v7098 = vadd.f32 %v7096, %v7097
  %v7099 = vrot.slane %v7098, 1
  %v7100 = vadd.f32 %v7098, %v7099
  %v7101 = vrot.slane %v6602, 4
  %v7102 = vadd.f32 %v6602, %v7101
  %v7103 = vrot.slane %v7102, 2
  %v7104 = vadd.f32 %v7102, %v7103
  %v7105 = vrot.slane %v7104, 1
  %v7106 = vadd.f32 %v7104, %v7105
  %v7107 = vrot.slane %v6604, 4
  %v7108 = vadd.f32 %v6604, %v7107
  %v7109 = vrot.slane %v7108, 2
  %v7110 = vadd.f32 %v7108, %v7109
  %v7111 = vrot.slane %v7110, 1
  %v7112 = vadd.f32 %v7110, %v7111
  %v7113 = vrot.slane %v6606, 4
  %v7114 = vadd.f32 %v6606, %v7113
  %v7115 = vrot.slane %v7114, 2
  %v7116 = vadd.f32 %v7114, %v7115
  %v7117 = vrot.slane %v7116, 1
  %v7118 = vadd.f32 %v7116, %v7117
  %v7119 = vrot.slane %v6608, 4
  %v7120 = vadd.f32 %v6608, %v7119
  %v7121 = vrot.slane %v7120, 2
  %v7122 = vadd.f32 %v7120, %v7121
  %v7123 = vrot.slane %v7122, 1
  %v7124 = vadd.f32 %v7122, %v7123
  %v7125 = vrot.slane %v6610, 4
  %v7126 = vadd.f32 %v6610, %v7125
  %v7127 = vrot.slane %v7126, 2
  %v7128 = vadd.f32 %v7126, %v7127
  %v7129 = vrot.slane %v7128, 1
  %v7130 = vadd.f32 %v7128, %v7129
  %v7131 = vrot.slane %v6612, 4
  %v7132 = vadd.f32 %v6612, %v7131
  %v7133 = vrot.slane %v7132, 2
  %v7134 = vadd.f32 %v7132, %v7133
  %v7135 = vrot.slane %v7134, 1
  %v7136 = vadd.f32 %v7134, %v7135
  %v7137 = vrot.slane %v6614, 4
  %v7138 = vadd.f32 %v6614, %v7137
  %v7139 = vrot.slane %v7138, 2
  %v7140 = vadd.f32 %v7138, %v7139
  %v7141 = vrot.slane %v7140, 1
  %v7142 = vadd.f32 %v7140, %v7141
  %v7143 = vrot.slane %v6616, 4
  %v7144 = vadd.f32 %v6616, %v7143
  %v7145 = vrot.slane %v7144, 2
  %v7146 = vadd.f32 %v7144, %v7145
  %v7147 = vrot.slane %v7146, 1
  %v7148 = vadd.f32 %v7146, %v7147
  %v7149 = vrot.slane %v6618, 4
  %v7150 = vadd.f32 %v6618, %v7149
  %v7151 = vrot.slane %v7150, 2
  %v7152 = vadd.f32 %v7150, %v7151
  %v7153 = vrot.slane %v7152, 1
  %v7154 = vadd.f32 %v7152, %v7153
  %v7155 = vrot.slane %v6620, 4
  %v7156 = vadd.f32 %v6620, %v7155
  %v7157 = vrot.slane %v7156, 2
  %v7158 = vadd.f32 %v7156, %v7157
  %v7159 = vrot.slane %v7158, 1
  %v7160 = vadd.f32 %v7158, %v7159
  %v7161 = vrot.slane %v6622, 4
  %v7162 = vadd.f32 %v6622, %v7161
  %v7163 = vrot.slane %v7162, 2
  %v7164 = vadd.f32 %v7162, %v7163
  %v7165 = vrot.slane %v7164, 1
  %v7166 = vadd.f32 %v7164, %v7165
  %v7167 = vrot.slane %v6624, 4
  %v7168 = vadd.f32 %v6624, %v7167
  %v7169 = vrot.slane %v7168, 2
  %v7170 = vadd.f32 %v7168, %v7169
  %v7171 = vrot.slane %v7170, 1
  %v7172 = vadd.f32 %v7170, %v7171
  %v7173 = vrot.slane %v6626, 4
  %v7174 = vadd.f32 %v6626, %v7173
  %v7175 = vrot.slane %v7174, 2
  %v7176 = vadd.f32 %v7174, %v7175
  %v7177 = vrot.slane %v7176, 1
  %v7178 = vadd.f32 %v7176, %v7177
  %v7179 = vrot.slane %v6628, 4
  %v7180 = vadd.f32 %v6628, %v7179
  %v7181 = vrot.slane %v7180, 2
  %v7182 = vadd.f32 %v7180, %v7181
  %v7183 = vrot.slane %v7182, 1
  %v7184 = vadd.f32 %v7182, %v7183
  %v7185 = vrot.slane %v6630, 4
  %v7186 = vadd.f32 %v6630, %v7185
  %v7187 = vrot.slane %v7186, 2
  %v7188 = vadd.f32 %v7186, %v7187
  %v7189 = vrot.slane %v7188, 1
  %v7190 = vadd.f32 %v7188, %v7189
  %v7191 = vrot.slane %v6632, 4
  %v7192 = vadd.f32 %v6632, %v7191
  %v7193 = vrot.slane %v7192, 2
  %v7194 = vadd.f32 %v7192, %v7193
  %v7195 = vrot.slane %v7194, 1
  %v7196 = vadd.f32 %v7194, %v7195
  %v7197 = vrot.slane %v6634, 4
  %v7198 = vadd.f32 %v6634, %v7197
  %v7199 = vrot.slane %v7198, 2
  %v7200 = vadd.f32 %v7198, %v7199
  %v7201 = vrot.slane %v7200, 1
  %v7202 = vadd.f32 %v7200, %v7201
  %v7203 = vrot.slane %v6636, 4
  %v7204 = vadd.f32 %v6636, %v7203
  %v7205 = vrot.slane %v7204, 2
  %v7206 = vadd.f32 %v7204, %v7205
  %v7207 = vrot.slane %v7206, 1
  %v7208 = vadd.f32 %v7206, %v7207
  %v7209 = vrot.slane %v6638, 4
  %v7210 = vadd.f32 %v6638, %v7209
  %v7211 = vrot.slane %v7210, 2
  %v7212 = vadd.f32 %v7210, %v7211
  %v7213 = vrot.slane %v7212, 1
  %v7214 = vadd.f32 %v7212, %v7213
  %v7215 = vrot.slane %v6640, 4
  %v7216 = vadd.f32 %v6640, %v7215
  %v7217 = vrot.slane %v7216, 2
  %v7218 = vadd.f32 %v7216, %v7217
  %v7219 = vrot.slane %v7218, 1
  %v7220 = vadd.f32 %v7218, %v7219
  %v7221 = vrot.slane %v6642, 4
  %v7222 = vadd.f32 %v6642, %v7221
  %v7223 = vrot.slane %v7222, 2
  %v7224 = vadd.f32 %v7222, %v7223
  %v7225 = vrot.slane %v7224, 1
  %v7226 = vadd.f32 %v7224, %v7225
  %v7227 = vrot.slane %v6644, 4
  %v7228 = vadd.f32 %v6644, %v7227
  %v7229 = vrot.slane %v7228, 2
  %v7230 = vadd.f32 %v7228, %v7229
  %v7231 = vrot.slane %v7230, 1
  %v7232 = vadd.f32 %v7230, %v7231
  %v7233 = vrot.slane %v6646, 4
  %v7234 = vadd.f32 %v6646, %v7233
  %v7235 = vrot.slane %v7234, 2
  %v7236 = vadd.f32 %v7234, %v7235
  %v7237 = vrot.slane %v7236, 1
  %v7238 = vadd.f32 %v7236, %v7237
  %v7239 = vrot.slane %v6648, 4
  %v7240 = vadd.f32 %v6648, %v7239
  %v7241 = vrot.slane %v7240, 2
  %v7242 = vadd.f32 %v7240, %v7241
  %v7243 = vrot.slane %v7242, 1
  %v7244 = vadd.f32 %v7242, %v7243
  %v7245 = vrot.slane %v6650, 4
  %v7246 = vadd.f32 %v6650, %v7245
  %v7247 = vrot.slane %v7246, 2
  %v7248 = vadd.f32 %v7246, %v7247
  %v7249 = vrot.slane %v7248, 1
  %v7250 = vadd.f32 %v7248, %v7249
  %v7251 = vrot.slane %v6652, 4
  %v7252 = vadd.f32 %v6652, %v7251
  %v7253 = vrot.slane %v7252, 2
  %v7254 = vadd.f32 %v7252, %v7253
  %v7255 = vrot.slane %v7254, 1
  %v7256 = vadd.f32 %v7254, %v7255
  %v7257 = vrot.slane %v6654, 4
  %v7258 = vadd.f32 %v6654, %v7257
  %v7259 = vrot.slane %v7258, 2
  %v7260 = vadd.f32 %v7258, %v7259
  %v7261 = vrot.slane %v7260, 1
  %v7262 = vadd.f32 %v7260, %v7261
  %v7263 = vrot.slane %v6656, 4
  %v7264 = vadd.f32 %v6656, %v7263
  %v7265 = vrot.slane %v7264, 2
  %v7266 = vadd.f32 %v7264, %v7265
  %v7267 = vrot.slane %v7266, 1
  %v7268 = vadd.f32 %v7266, %v7267
  %v7269 = vrot.slane %v6658, 4
  %v7270 = vadd.f32 %v6658, %v7269
  %v7271 = vrot.slane %v7270, 2
  %v7272 = vadd.f32 %v7270, %v7271
  %v7273 = vrot.slane %v7272, 1
  %v7274 = vadd.f32 %v7272, %v7273
  %v7275 = vrot.slane %v6660, 4
  %v7276 = vadd.f32 %v6660, %v7275
  %v7277 = vrot.slane %v7276, 2
  %v7278 = vadd.f32 %v7276, %v7277
  %v7279 = vrot.slane %v7278, 1
  %v7280 = vadd.f32 %v7278, %v7279
  %v7281 = vrot.slane %v6662, 4
  %v7282 = vadd.f32 %v6662, %v7281
  %v7283 = vrot.slane %v7282, 2
  %v7284 = vadd.f32 %v7282, %v7283
  %v7285 = vrot.slane %v7284, 1
  %v7286 = vadd.f32 %v7284, %v7285
  %v7287 = vrot.slane %v6664, 4
  %v7288 = vadd.f32 %v6664, %v7287
  %v7289 = vrot.slane %v7288, 2
  %v7290 = vadd.f32 %v7288, %v7289
  %v7291 = vrot.slane %v7290, 1
  %v7292 = vadd.f32 %v7290, %v7291
  %v7293 = vrot.slane %v6666, 4
  %v7294 = vadd.f32 %v6666, %v7293
  %v7295 = vrot.slane %v7294, 2
  %v7296 = vadd.f32 %v7294, %v7295
  %v7297 = vrot.slane %v7296, 1
  %v7298 = vadd.f32 %v7296, %v7297
  %v7299 = vrot.slane %v6668, 4
  %v7300 = vadd.f32 %v6668, %v7299
  %v7301 = vrot.slane %v7300, 2
  %v7302 = vadd.f32 %v7300, %v7301
  %v7303 = vrot.slane %v7302, 1
  %v7304 = vadd.f32 %v7302, %v7303
  %v7305 = vrot.slane %v6670, 4
  %v7306 = vadd.f32 %v6670, %v7305
  %v7307 = vrot.slane %v7306, 2
  %v7308 = vadd.f32 %v7306, %v7307
  %v7309 = vrot.slane %v7308, 1
  %v7310 = vadd.f32 %v7308, %v7309
  %v7311 = vrot.slane %v6672, 4
  %v7312 = vadd.f32 %v6672, %v7311
  %v7313 = vrot.slane %v7312, 2
  %v7314 = vadd.f32 %v7312, %v7313
  %v7315 = vrot.slane %v7314, 1
  %v7316 = vadd.f32 %v7314, %v7315
  %v7317 = vrot.slane %v6674, 4
  %v7318 = vadd.f32 %v6674, %v7317
  %v7319 = vrot.slane %v7318, 2
  %v7320 = vadd.f32 %v7318, %v7319
  %v7321 = vrot.slane %v7320, 1
  %v7322 = vadd.f32 %v7320, %v7321
  %v7323 = vrot.slane %v6676, 4
  %v7324 = vadd.f32 %v6676, %v7323
  %v7325 = vrot.slane %v7324, 2
  %v7326 = vadd.f32 %v7324, %v7325
  %v7327 = vrot.slane %v7326, 1
  %v7328 = vadd.f32 %v7326, %v7327
  %v7329 = vrot.slane %v6678, 4
  %v7330 = vadd.f32 %v6678, %v7329
  %v7331 = vrot.slane %v7330, 2
  %v7332 = vadd.f32 %v7330, %v7331
  %v7333 = vrot.slane %v7332, 1
  %v7334 = vadd.f32 %v7332, %v7333
  %v7335 = vrot.slane %v6680, 4
  %v7336 = vadd.f32 %v6680, %v7335
  %v7337 = vrot.slane %v7336, 2
  %v7338 = vadd.f32 %v7336, %v7337
  %v7339 = vrot.slane %v7338, 1
  %v7340 = vadd.f32 %v7338, %v7339
  %v7341 = vrot.slane %v6682, 4
  %v7342 = vadd.f32 %v6682, %v7341
  %v7343 = vrot.slane %v7342, 2
  %v7344 = vadd.f32 %v7342, %v7343
  %v7345 = vrot.slane %v7344, 1
  %v7346 = vadd.f32 %v7344, %v7345
  %v7347 = vrot.slane %v6684, 4
  %v7348 = vadd.f32 %v6684, %v7347
  %v7349 = vrot.slane %v7348, 2
  %v7350 = vadd.f32 %v7348, %v7349
  %v7351 = vrot.slane %v7350, 1
  %v7352 = vadd.f32 %v7350, %v7351
  %v7353 = vrot.slane %v6686, 4
  %v7354 = vadd.f32 %v6686, %v7353
  %v7355 = vrot.slane %v7354, 2
  %v7356 = vadd.f32 %v7354, %v7355
  %v7357 = vrot.slane %v7356, 1
  %v7358 = vadd.f32 %v7356, %v7357
  %v7359 = vrot.slane %v6688, 4
  %v7360 = vadd.f32 %v6688, %v7359
  %v7361 = vrot.slane %v7360, 2
  %v7362 = vadd.f32 %v7360, %v7361
  %v7363 = vrot.slane %v7362, 1
  %v7364 = vadd.f32 %v7362, %v7363
  %v7365 = vrot.slane %v6690, 4
  %v7366 = vadd.f32 %v6690, %v7365
  %v7367 = vrot.slane %v7366, 2
  %v7368 = vadd.f32 %v7366, %v7367
  %v7369 = vrot.slane %v7368, 1
  %v7370 = vadd.f32 %v7368, %v7369
  %v7371 = vrot.slane %v6692, 4
  %v7372 = vadd.f32 %v6692, %v7371
  %v7373 = vrot.slane %v7372, 2
  %v7374 = vadd.f32 %v7372, %v7373
  %v7375 = vrot.slane %v7374, 1
  %v7376 = vadd.f32 %v7374, %v7375
  %v7377 = vrot.slane %v6694, 4
  %v7378 = vadd.f32 %v6694, %v7377
  %v7379 = vrot.slane %v7378, 2
  %v7380 = vadd.f32 %v7378, %v7379
  %v7381 = vrot.slane %v7380, 1
  %v7382 = vadd.f32 %v7380, %v7381
  %v7383 = vrot.slane %v6696, 4
  %v7384 = vadd.f32 %v6696, %v7383
  %v7385 = vrot.slane %v7384, 2
  %v7386 = vadd.f32 %v7384, %v7385
  %v7387 = vrot.slane %v7386, 1
  %v7388 = vadd.f32 %v7386, %v7387
  %v7389 = vrot.slane %v6698, 4
  %v7390 = vadd.f32 %v6698, %v7389
  %v7391 = vrot.slane %v7390, 2
  %v7392 = vadd.f32 %v7390, %v7391
  %v7393 = vrot.slane %v7392, 1
  %v7394 = vadd.f32 %v7392, %v7393
  %v7395 = vrot.slane %v6700, 4
  %v7396 = vadd.f32 %v6700, %v7395
  %v7397 = vrot.slane %v7396, 2
  %v7398 = vadd.f32 %v7396, %v7397
  %v7399 = vrot.slane %v7398, 1
  %v7400 = vadd.f32 %v7398, %v7399
  %v7401 = vrot.slane %v6702, 4
  %v7402 = vadd.f32 %v6702, %v7401
  %v7403 = vrot.slane %v7402, 2
  %v7404 = vadd.f32 %v7402, %v7403
  %v7405 = vrot.slane %v7404, 1
  %v7406 = vadd.f32 %v7404, %v7405
  %v7407 = vrot.slane %v6704, 4
  %v7408 = vadd.f32 %v6704, %v7407
  %v7409 = vrot.slane %v7408, 2
  %v7410 = vadd.f32 %v7408, %v7409
  %v7411 = vrot.slane %v7410, 1
  %v7412 = vadd.f32 %v7410, %v7411
  %v7413 = vrot.slane %v6706, 4
  %v7414 = vadd.f32 %v6706, %v7413
  %v7415 = vrot.slane %v7414, 2
  %v7416 = vadd.f32 %v7414, %v7415
  %v7417 = vrot.slane %v7416, 1
  %v7418 = vadd.f32 %v7416, %v7417
  %v7419 = vrot.slane %v6708, 4
  %v7420 = vadd.f32 %v6708, %v7419
  %v7421 = vrot.slane %v7420, 2
  %v7422 = vadd.f32 %v7420, %v7421
  %v7423 = vrot.slane %v7422, 1
  %v7424 = vadd.f32 %v7422, %v7423
  %v7425 = vrot.slane %v6710, 4
  %v7426 = vadd.f32 %v6710, %v7425
  %v7427 = vrot.slane %v7426, 2
  %v7428 = vadd.f32 %v7426, %v7427
  %v7429 = vrot.slane %v7428, 1
  %v7430 = vadd.f32 %v7428, %v7429
  %v7431 = vrot.slane %v6712, 4
  %v7432 = vadd.f32 %v6712, %v7431
  %v7433 = vrot.slane %v7432, 2
  %v7434 = vadd.f32 %v7432, %v7433
  %v7435 = vrot.slane %v7434, 1
  %v7436 = vadd.f32 %v7434, %v7435
  %v7437 = vrot.slane %v6714, 4
  %v7438 = vadd.f32 %v6714, %v7437
  %v7439 = vrot.slane %v7438, 2
  %v7440 = vadd.f32 %v7438, %v7439
  %v7441 = vrot.slane %v7440, 1
  %v7442 = vadd.f32 %v7440, %v7441
  %v7443 = vrot.slane %v6716, 4
  %v7444 = vadd.f32 %v6716, %v7443
  %v7445 = vrot.slane %v7444, 2
  %v7446 = vadd.f32 %v7444, %v7445
  %v7447 = vrot.slane %v7446, 1
  %v7448 = vadd.f32 %v7446, %v7447
  %v7449 = vrot.slane %v6718, 4
  %v7450 = vadd.f32 %v6718, %v7449
  %v7451 = vrot.slane %v7450, 2
  %v7452 = vadd.f32 %v7450, %v7451
  %v7453 = vrot.slane %v7452, 1
  %v7454 = vadd.f32 %v7452, %v7453
  %v7455 = vrot.slane %v6720, 4
  %v7456 = vadd.f32 %v6720, %v7455
  %v7457 = vrot.slane %v7456, 2
  %v7458 = vadd.f32 %v7456, %v7457
  %v7459 = vrot.slane %v7458, 1
  %v7460 = vadd.f32 %v7458, %v7459
  %v7461 = vrot.slane %v6722, 4
  %v7462 = vadd.f32 %v6722, %v7461
  %v7463 = vrot.slane %v7462, 2
  %v7464 = vadd.f32 %v7462, %v7463
  %v7465 = vrot.slane %v7464, 1
  %v7466 = vadd.f32 %v7464, %v7465
  %v7467 = vrot.slane %v6724, 4
  %v7468 = vadd.f32 %v6724, %v7467
  %v7469 = vrot.slane %v7468, 2
  %v7470 = vadd.f32 %v7468, %v7469
  %v7471 = vrot.slane %v7470, 1
  %v7472 = vadd.f32 %v7470, %v7471
  %v7473 = vrot.slane %v6726, 4
  %v7474 = vadd.f32 %v6726, %v7473
  %v7475 = vrot.slane %v7474, 2
  %v7476 = vadd.f32 %v7474, %v7475
  %v7477 = vrot.slane %v7476, 1
  %v7478 = vadd.f32 %v7476, %v7477
  %v7479 = vrot.slane %v6728, 4
  %v7480 = vadd.f32 %v6728, %v7479
  %v7481 = vrot.slane %v7480, 2
  %v7482 = vadd.f32 %v7480, %v7481
  %v7483 = vrot.slane %v7482, 1
  %v7484 = vadd.f32 %v7482, %v7483
  %v7485 = vrot.slane %v6730, 4
  %v7486 = vadd.f32 %v6730, %v7485
  %v7487 = vrot.slane %v7486, 2
  %v7488 = vadd.f32 %v7486, %v7487
  %v7489 = vrot.slane %v7488, 1
  %v7490 = vadd.f32 %v7488, %v7489
  %v7491 = vrot.slane %v6732, 4
  %v7492 = vadd.f32 %v6732, %v7491
  %v7493 = vrot.slane %v7492, 2
  %v7494 = vadd.f32 %v7492, %v7493
  %v7495 = vrot.slane %v7494, 1
  %v7496 = vadd.f32 %v7494, %v7495
  %v7497 = vrot.slane %v6734, 4
  %v7498 = vadd.f32 %v6734, %v7497
  %v7499 = vrot.slane %v7498, 2
  %v7500 = vadd.f32 %v7498, %v7499
  %v7501 = vrot.slane %v7500, 1
  %v7502 = vadd.f32 %v7500, %v7501
  %v7503 = vrot.slane %v6736, 4
  %v7504 = vadd.f32 %v6736, %v7503
  %v7505 = vrot.slane %v7504, 2
  %v7506 = vadd.f32 %v7504, %v7505
  %v7507 = vrot.slane %v7506, 1
  %v7508 = vadd.f32 %v7506, %v7507
  %v7509 = vrot.slane %v6738, 4
  %v7510 = vadd.f32 %v6738, %v7509
  %v7511 = vrot.slane %v7510, 2
  %v7512 = vadd.f32 %v7510, %v7511
  %v7513 = vrot.slane %v7512, 1
  %v7514 = vadd.f32 %v7512, %v7513
  %v7515 = vrot.slane %v6740, 4
  %v7516 = vadd.f32 %v6740, %v7515
  %v7517 = vrot.slane %v7516, 2
  %v7518 = vadd.f32 %v7516, %v7517
  %v7519 = vrot.slane %v7518, 1
  %v7520 = vadd.f32 %v7518, %v7519
  %v7521 = vrot.slane %v6742, 4
  %v7522 = vadd.f32 %v6742, %v7521
  %v7523 = vrot.slane %v7522, 2
  %v7524 = vadd.f32 %v7522, %v7523
  %v7525 = vrot.slane %v7524, 1
  %v7526 = vadd.f32 %v7524, %v7525
  %v7527 = vrot.slane %v6744, 4
  %v7528 = vadd.f32 %v6744, %v7527
  %v7529 = vrot.slane %v7528, 2
  %v7530 = vadd.f32 %v7528, %v7529
  %v7531 = vrot.slane %v7530, 1
  %v7532 = vadd.f32 %v7530, %v7531
  %v7533 = vrot.slane %v6746, 4
  %v7534 = vadd.f32 %v6746, %v7533
  %v7535 = vrot.slane %v7534, 2
  %v7536 = vadd.f32 %v7534, %v7535
  %v7537 = vrot.slane %v7536, 1
  %v7538 = vadd.f32 %v7536, %v7537
  %v7539 = vrot.slane %v6748, 4
  %v7540 = vadd.f32 %v6748, %v7539
  %v7541 = vrot.slane %v7540, 2
  %v7542 = vadd.f32 %v7540, %v7541
  %v7543 = vrot.slane %v7542, 1
  %v7544 = vadd.f32 %v7542, %v7543
  %v7545 = vrot.slane %v6750, 4
  %v7546 = vadd.f32 %v6750, %v7545
  %v7547 = vrot.slane %v7546, 2
  %v7548 = vadd.f32 %v7546, %v7547
  %v7549 = vrot.slane %v7548, 1
  %v7550 = vadd.f32 %v7548, %v7549
  %v7551 = vrot.slane %v6752, 4
  %v7552 = vadd.f32 %v6752, %v7551
  %v7553 = vrot.slane %v7552, 2
  %v7554 = vadd.f32 %v7552, %v7553
  %v7555 = vrot.slane %v7554, 1
  %v7556 = vadd.f32 %v7554, %v7555
  %v7557 = vrot.slane %v6754, 4
  %v7558 = vadd.f32 %v6754, %v7557
  %v7559 = vrot.slane %v7558, 2
  %v7560 = vadd.f32 %v7558, %v7559
  %v7561 = vrot.slane %v7560, 1
  %v7562 = vadd.f32 %v7560, %v7561
  %v7563 = vrot.slane %v6756, 4
  %v7564 = vadd.f32 %v6756, %v7563
  %v7565 = vrot.slane %v7564, 2
  %v7566 = vadd.f32 %v7564, %v7565
  %v7567 = vrot.slane %v7566, 1
  %v7568 = vadd.f32 %v7566, %v7567
  %v7569 = vrot.slane %v6758, 4
  %v7570 = vadd.f32 %v6758, %v7569
  %v7571 = vrot.slane %v7570, 2
  %v7572 = vadd.f32 %v7570, %v7571
  %v7573 = vrot.slane %v7572, 1
  %v7574 = vadd.f32 %v7572, %v7573
  %v7575 = vrot.slane %v6760, 4
  %v7576 = vadd.f32 %v6760, %v7575
  %v7577 = vrot.slane %v7576, 2
  %v7578 = vadd.f32 %v7576, %v7577
  %v7579 = vrot.slane %v7578, 1
  %v7580 = vadd.f32 %v7578, %v7579
  %v7581 = vrot.slane %v6762, 4
  %v7582 = vadd.f32 %v6762, %v7581
  %v7583 = vrot.slane %v7582, 2
  %v7584 = vadd.f32 %v7582, %v7583
  %v7585 = vrot.slane %v7584, 1
  %v7586 = vadd.f32 %v7584, %v7585
  %v7587 = vrot.slane %v6764, 4
  %v7588 = vadd.f32 %v6764, %v7587
  %v7589 = vrot.slane %v7588, 2
  %v7590 = vadd.f32 %v7588, %v7589
  %v7591 = vrot.slane %v7590, 1
  %v7592 = vadd.f32 %v7590, %v7591
  %v7593 = vrot.slane %v6766, 4
  %v7594 = vadd.f32 %v6766, %v7593
  %v7595 = vrot.slane %v7594, 2
  %v7596 = vadd.f32 %v7594, %v7595
  %v7597 = vrot.slane %v7596, 1
  %v7598 = vadd.f32 %v7596, %v7597
  %v7599 = vrot.slane %v6768, 4
  %v7600 = vadd.f32 %v6768, %v7599
  %v7601 = vrot.slane %v7600, 2
  %v7602 = vadd.f32 %v7600, %v7601
  %v7603 = vrot.slane %v7602, 1
  %v7604 = vadd.f32 %v7602, %v7603
  %v7605 = vrot.slane %v6770, 4
  %v7606 = vadd.f32 %v6770, %v7605
  %v7607 = vrot.slane %v7606, 2
  %v7608 = vadd.f32 %v7606, %v7607
  %v7609 = vrot.slane %v7608, 1
  %v7610 = vadd.f32 %v7608, %v7609
  %v7611 = vrot.slane %v6772, 4
  %v7612 = vadd.f32 %v6772, %v7611
  %v7613 = vrot.slane %v7612, 2
  %v7614 = vadd.f32 %v7612, %v7613
  %v7615 = vrot.slane %v7614, 1
  %v7616 = vadd.f32 %v7614, %v7615
  %v7617 = vrot.slane %v6774, 4
  %v7618 = vadd.f32 %v6774, %v7617
  %v7619 = vrot.slane %v7618, 2
  %v7620 = vadd.f32 %v7618, %v7619
  %v7621 = vrot.slane %v7620, 1
  %v7622 = vadd.f32 %v7620, %v7621
  %v7623 = vrot.slane %v6776, 4
  %v7624 = vadd.f32 %v6776, %v7623
  %v7625 = vrot.slane %v7624, 2
  %v7626 = vadd.f32 %v7624, %v7625
  %v7627 = vrot.slane %v7626, 1
  %v7628 = vadd.f32 %v7626, %v7627
  %v7629 = vrot.slane %v6778, 4
  %v7630 = vadd.f32 %v6778, %v7629
  %v7631 = vrot.slane %v7630, 2
  %v7632 = vadd.f32 %v7630, %v7631
  %v7633 = vrot.slane %v7632, 1
  %v7634 = vadd.f32 %v7632, %v7633
  %v7635 = vrot.slane %v6780, 4
  %v7636 = vadd.f32 %v6780, %v7635
  %v7637 = vrot.slane %v7636, 2
  %v7638 = vadd.f32 %v7636, %v7637
  %v7639 = vrot.slane %v7638, 1
  %v7640 = vadd.f32 %v7638, %v7639
  %v7641 = vrot.slane %v6782, 4
  %v7642 = vadd.f32 %v6782, %v7641
  %v7643 = vrot.slane %v7642, 2
  %v7644 = vadd.f32 %v7642, %v7643
  %v7645 = vrot.slane %v7644, 1
  %v7646 = vadd.f32 %v7644, %v7645
  %v7647 = vrot.slane %v6784, 4
  %v7648 = vadd.f32 %v6784, %v7647
  %v7649 = vrot.slane %v7648, 2
  %v7650 = vadd.f32 %v7648, %v7649
  %v7651 = vrot.slane %v7650, 1
  %v7652 = vadd.f32 %v7650, %v7651
  %v7653 = vrot.slane %v6786, 4
  %v7654 = vadd.f32 %v6786, %v7653
  %v7655 = vrot.slane %v7654, 2
  %v7656 = vadd.f32 %v7654, %v7655
  %v7657 = vrot.slane %v7656, 1
  %v7658 = vadd.f32 %v7656, %v7657
  %v7659 = vrot.slane %v6788, 4
  %v7660 = vadd.f32 %v6788, %v7659
  %v7661 = vrot.slane %v7660, 2
  %v7662 = vadd.f32 %v7660, %v7661
  %v7663 = vrot.slane %v7662, 1
  %v7664 = vadd.f32 %v7662, %v7663
  %v7665 = vrot.slane %v6790, 4
  %v7666 = vadd.f32 %v6790, %v7665
  %v7667 = vrot.slane %v7666, 2
  %v7668 = vadd.f32 %v7666, %v7667
  %v7669 = vrot.slane %v7668, 1
  %v7670 = vadd.f32 %v7668, %v7669
  %v7671 = vrot.slane %v6792, 4
  %v7672 = vadd.f32 %v6792, %v7671
  %v7673 = vrot.slane %v7672, 2
  %v7674 = vadd.f32 %v7672, %v7673
  %v7675 = vrot.slane %v7674, 1
  %v7676 = vadd.f32 %v7674, %v7675
  %v7677 = vrot.slane %v6794, 4
  %v7678 = vadd.f32 %v6794, %v7677
  %v7679 = vrot.slane %v7678, 2
  %v7680 = vadd.f32 %v7678, %v7679
  %v7681 = vrot.slane %v7680, 1
  %v7682 = vadd.f32 %v7680, %v7681
  %v7683 = vrot.slane %v6796, 4
  %v7684 = vadd.f32 %v6796, %v7683
  %v7685 = vrot.slane %v7684, 2
  %v7686 = vadd.f32 %v7684, %v7685
  %v7687 = vrot.slane %v7686, 1
  %v7688 = vadd.f32 %v7686, %v7687
  %v7689 = vrot.slane %v6798, 4
  %v7690 = vadd.f32 %v6798, %v7689
  %v7691 = vrot.slane %v7690, 2
  %v7692 = vadd.f32 %v7690, %v7691
  %v7693 = vrot.slane %v7692, 1
  %v7694 = vadd.f32 %v7692, %v7693
  %v7695 = vrot.slane %v6800, 4
  %v7696 = vadd.f32 %v6800, %v7695
  %v7697 = vrot.slane %v7696, 2
  %v7698 = vadd.f32 %v7696, %v7697
  %v7699 = vrot.slane %v7698, 1
  %v7700 = vadd.f32 %v7698, %v7699
  %v7701 = vrot.slane %v6802, 4
  %v7702 = vadd.f32 %v6802, %v7701
  %v7703 = vrot.slane %v7702, 2
  %v7704 = vadd.f32 %v7702, %v7703
  %v7705 = vrot.slane %v7704, 1
  %v7706 = vadd.f32 %v7704, %v7705
  %v7707 = vrot.slane %v6804, 4
  %v7708 = vadd.f32 %v6804, %v7707
  %v7709 = vrot.slane %v7708, 2
  %v7710 = vadd.f32 %v7708, %v7709
  %v7711 = vrot.slane %v7710, 1
  %v7712 = vadd.f32 %v7710, %v7711
  %v7713 = vrot.slane %v6806, 4
  %v7714 = vadd.f32 %v6806, %v7713
  %v7715 = vrot.slane %v7714, 2
  %v7716 = vadd.f32 %v7714, %v7715
  %v7717 = vrot.slane %v7716, 1
  %v7718 = vadd.f32 %v7716, %v7717
  %v7719 = vrot.slane %v6808, 4
  %v7720 = vadd.f32 %v6808, %v7719
  %v7721 = vrot.slane %v7720, 2
  %v7722 = vadd.f32 %v7720, %v7721
  %v7723 = vrot.slane %v7722, 1
  %v7724 = vadd.f32 %v7722, %v7723
  %v7725 = vrot.slane %v6810, 4
  %v7726 = vadd.f32 %v6810, %v7725
  %v7727 = vrot.slane %v7726, 2
  %v7728 = vadd.f32 %v7726, %v7727
  %v7729 = vrot.slane %v7728, 1
  %v7730 = vadd.f32 %v7728, %v7729
  %v7731 = vrot.slane %v6812, 4
  %v7732 = vadd.f32 %v6812, %v7731
  %v7733 = vrot.slane %v7732, 2
  %v7734 = vadd.f32 %v7732, %v7733
  %v7735 = vrot.slane %v7734, 1
  %v7736 = vadd.f32 %v7734, %v7735
  %v7737 = vrot.slane %v6814, 4
  %v7738 = vadd.f32 %v6814, %v7737
  %v7739 = vrot.slane %v7738, 2
  %v7740 = vadd.f32 %v7738, %v7739
  %v7741 = vrot.slane %v7740, 1
  %v7742 = vadd.f32 %v7740, %v7741
  %v7743 = vrot.slane %v6816, 4
  %v7744 = vadd.f32 %v6816, %v7743
  %v7745 = vrot.slane %v7744, 2
  %v7746 = vadd.f32 %v7744, %v7745
  %v7747 = vrot.slane %v7746, 1
  %v7748 = vadd.f32 %v7746, %v7747
  %v7749 = vrot.slane %v6818, 4
  %v7750 = vadd.f32 %v6818, %v7749
  %v7751 = vrot.slane %v7750, 2
  %v7752 = vadd.f32 %v7750, %v7751
  %v7753 = vrot.slane %v7752, 1
  %v7754 = vadd.f32 %v7752, %v7753
  %v7755 = vrot.slane %v6820, 4
  %v7756 = vadd.f32 %v6820, %v7755
  %v7757 = vrot.slane %v7756, 2
  %v7758 = vadd.f32 %v7756, %v7757
  %v7759 = vrot.slane %v7758, 1
  %v7760 = vadd.f32 %v7758, %v7759
  %v7761 = vrot.slane %v6822, 4
  %v7762 = vadd.f32 %v6822, %v7761
  %v7763 = vrot.slane %v7762, 2
  %v7764 = vadd.f32 %v7762, %v7763
  %v7765 = vrot.slane %v7764, 1
  %v7766 = vadd.f32 %v7764, %v7765
  %v7767 = vrot.slane %v6824, 4
  %v7768 = vadd.f32 %v6824, %v7767
  %v7769 = vrot.slane %v7768, 2
  %v7770 = vadd.f32 %v7768, %v7769
  %v7771 = vrot.slane %v7770, 1
  %v7772 = vadd.f32 %v7770, %v7771
  %v7773 = vrot.slane %v6826, 4
  %v7774 = vadd.f32 %v6826, %v7773
  %v7775 = vrot.slane %v7774, 2
  %v7776 = vadd.f32 %v7774, %v7775
  %v7777 = vrot.slane %v7776, 1
  %v7778 = vadd.f32 %v7776, %v7777
  %v7779 = vrot.slane %v6828, 4
  %v7780 = vadd.f32 %v6828, %v7779
  %v7781 = vrot.slane %v7780, 2
  %v7782 = vadd.f32 %v7780, %v7781
  %v7783 = vrot.slane %v7782, 1
  %v7784 = vadd.f32 %v7782, %v7783
  %v7785 = vrot.slane %v6830, 4
  %v7786 = vadd.f32 %v6830, %v7785
  %v7787 = vrot.slane %v7786, 2
  %v7788 = vadd.f32 %v7786, %v7787
  %v7789 = vrot.slane %v7788, 1
  %v7790 = vadd.f32 %v7788, %v7789
  %v7791 = vrot.slane %v6832, 4
  %v7792 = vadd.f32 %v6832, %v7791
  %v7793 = vrot.slane %v7792, 2
  %v7794 = vadd.f32 %v7792, %v7793
  %v7795 = vrot.slane %v7794, 1
  %v7796 = vadd.f32 %v7794, %v7795
  %v7797 = vrot.slane %v6834, 4
  %v7798 = vadd.f32 %v6834, %v7797
  %v7799 = vrot.slane %v7798, 2
  %v7800 = vadd.f32 %v7798, %v7799
  %v7801 = vrot.slane %v7800, 1
  %v7802 = vadd.f32 %v7800, %v7801
  %v7803 = vrot.slane %v6836, 4
  %v7804 = vadd.f32 %v6836, %v7803
  %v7805 = vrot.slane %v7804, 2
  %v7806 = vadd.f32 %v7804, %v7805
  %v7807 = vrot.slane %v7806, 1
  %v7808 = vadd.f32 %v7806, %v7807
  %v7809 = vrot.slane %v6838, 4
  %v7810 = vadd.f32 %v6838, %v7809
  %v7811 = vrot.slane %v7810, 2
  %v7812 = vadd.f32 %v7810, %v7811
  %v7813 = vrot.slane %v7812, 1
  %v7814 = vadd.f32 %v7812, %v7813
  %v7815 = vrot.slane %v6840, 4
  %v7816 = vadd.f32 %v6840, %v7815
  %v7817 = vrot.slane %v7816, 2
  %v7818 = vadd.f32 %v7816, %v7817
  %v7819 = vrot.slane %v7818, 1
  %v7820 = vadd.f32 %v7818, %v7819
  %v7821 = vrot.slane %v6842, 4
  %v7822 = vadd.f32 %v6842, %v7821
  %v7823 = vrot.slane %v7822, 2
  %v7824 = vadd.f32 %v7822, %v7823
  %v7825 = vrot.slane %v7824, 1
  %v7826 = vadd.f32 %v7824, %v7825
  %v7827 = vrot.slane %v6844, 4
  %v7828 = vadd.f32 %v6844, %v7827
  %v7829 = vrot.slane %v7828, 2
  %v7830 = vadd.f32 %v7828, %v7829
  %v7831 = vrot.slane %v7830, 1
  %v7832 = vadd.f32 %v7830, %v7831
  %v7833 = vrot.slane %v6846, 4
  %v7834 = vadd.f32 %v6846, %v7833
  %v7835 = vrot.slane %v7834, 2
  %v7836 = vadd.f32 %v7834, %v7835
  %v7837 = vrot.slane %v7836, 1
  %v7838 = vadd.f32 %v7836, %v7837
  %v7839 = vrot.slane %v6848, 4
  %v7840 = vadd.f32 %v6848, %v7839
  %v7841 = vrot.slane %v7840, 2
  %v7842 = vadd.f32 %v7840, %v7841
  %v7843 = vrot.slane %v7842, 1
  %v7844 = vadd.f32 %v7842, %v7843
  %v7845 = vrot.slane %v6850, 4
  %v7846 = vadd.f32 %v6850, %v7845
  %v7847 = vrot.slane %v7846, 2
  %v7848 = vadd.f32 %v7846, %v7847
  %v7849 = vrot.slane %v7848, 1
  %v7850 = vadd.f32 %v7848, %v7849
  %v7851 = vrot.slane %v6852, 4
  %v7852 = vadd.f32 %v6852, %v7851
  %v7853 = vrot.slane %v7852, 2
  %v7854 = vadd.f32 %v7852, %v7853
  %v7855 = vrot.slane %v7854, 1
  %v7856 = vadd.f32 %v7854, %v7855
  %v7857 = vrot.slane %v6854, 4
  %v7858 = vadd.f32 %v6854, %v7857
  %v7859 = vrot.slane %v7858, 2
  %v7860 = vadd.f32 %v7858, %v7859
  %v7861 = vrot.slane %v7860, 1
  %v7862 = vadd.f32 %v7860, %v7861
  %v7863 = vrot.slane %v6856, 4
  %v7864 = vadd.f32 %v6856, %v7863
  %v7865 = vrot.slane %v7864, 2
  %v7866 = vadd.f32 %v7864, %v7865
  %v7867 = vrot.slane %v7866, 1
  %v7868 = vadd.f32 %v7866, %v7867
  %v7869 = vrot.slane %v6858, 4
  %v7870 = vadd.f32 %v6858, %v7869
  %v7871 = vrot.slane %v7870, 2
  %v7872 = vadd.f32 %v7870, %v7871
  %v7873 = vrot.slane %v7872, 1
  %v7874 = vadd.f32 %v7872, %v7873
  %v7875 = vrot.slane %v6860, 4
  %v7876 = vadd.f32 %v6860, %v7875
  %v7877 = vrot.slane %v7876, 2
  %v7878 = vadd.f32 %v7876, %v7877
  %v7879 = vrot.slane %v7878, 1
  %v7880 = vadd.f32 %v7878, %v7879
  %v7881 = vrot.slane %v6862, 4
  %v7882 = vadd.f32 %v6862, %v7881
  %v7883 = vrot.slane %v7882, 2
  %v7884 = vadd.f32 %v7882, %v7883
  %v7885 = vrot.slane %v7884, 1
  %v7886 = vadd.f32 %v7884, %v7885
  %v7887 = vrot.slane %v6864, 4
  %v7888 = vadd.f32 %v6864, %v7887
  %v7889 = vrot.slane %v7888, 2
  %v7890 = vadd.f32 %v7888, %v7889
  %v7891 = vrot.slane %v7890, 1
  %v7892 = vadd.f32 %v7890, %v7891
  %v7893 = vrot.slane %v6866, 4
  %v7894 = vadd.f32 %v6866, %v7893
  %v7895 = vrot.slane %v7894, 2
  %v7896 = vadd.f32 %v7894, %v7895
  %v7897 = vrot.slane %v7896, 1
  %v7898 = vadd.f32 %v7896, %v7897
  %v7899 = vrot.slane %v6868, 4
  %v7900 = vadd.f32 %v6868, %v7899
  %v7901 = vrot.slane %v7900, 2
  %v7902 = vadd.f32 %v7900, %v7901
  %v7903 = vrot.slane %v7902, 1
  %v7904 = vadd.f32 %v7902, %v7903
  %v7905 = vrot.slane %v6870, 4
  %v7906 = vadd.f32 %v6870, %v7905
  %v7907 = vrot.slane %v7906, 2
  %v7908 = vadd.f32 %v7906, %v7907
  %v7909 = vrot.slane %v7908, 1
  %v7910 = vadd.f32 %v7908, %v7909
  %v7911 = vrot.slane %v6872, 4
  %v7912 = vadd.f32 %v6872, %v7911
  %v7913 = vrot.slane %v7912, 2
  %v7914 = vadd.f32 %v7912, %v7913
  %v7915 = vrot.slane %v7914, 1
  %v7916 = vadd.f32 %v7914, %v7915
  %v7917 = vrot.slane %v6874, 4
  %v7918 = vadd.f32 %v6874, %v7917
  %v7919 = vrot.slane %v7918, 2
  %v7920 = vadd.f32 %v7918, %v7919
  %v7921 = vrot.slane %v7920, 1
  %v7922 = vadd.f32 %v7920, %v7921
  %v7923 = vrot.slane %v6876, 4
  %v7924 = vadd.f32 %v6876, %v7923
  %v7925 = vrot.slane %v7924, 2
  %v7926 = vadd.f32 %v7924, %v7925
  %v7927 = vrot.slane %v7926, 1
  %v7928 = vadd.f32 %v7926, %v7927
  %v7929 = vrot.slane %v6878, 4
  %v7930 = vadd.f32 %v6878, %v7929
  %v7931 = vrot.slane %v7930, 2
  %v7932 = vadd.f32 %v7930, %v7931
  %v7933 = vrot.slane %v7932, 1
  %v7934 = vadd.f32 %v7932, %v7933
  %v7935 = vrot.slane %v6880, 4
  %v7936 = vadd.f32 %v6880, %v7935
  %v7937 = vrot.slane %v7936, 2
  %v7938 = vadd.f32 %v7936, %v7937
  %v7939 = vrot.slane %v7938, 1
  %v7940 = vadd.f32 %v7938, %v7939
  %v7941 = vrot.slane %v6882, 4
  %v7942 = vadd.f32 %v6882, %v7941
  %v7943 = vrot.slane %v7942, 2
  %v7944 = vadd.f32 %v7942, %v7943
  %v7945 = vrot.slane %v7944, 1
  %v7946 = vadd.f32 %v7944, %v7945
  %v7947 = vrot.slane %v6884, 4
  %v7948 = vadd.f32 %v6884, %v7947
  %v7949 = vrot.slane %v7948, 2
  %v7950 = vadd.f32 %v7948, %v7949
  %v7951 = vrot.slane %v7950, 1
  %v7952 = vadd.f32 %v7950, %v7951
  %v7953 = vrot.slane %v6886, 4
  %v7954 = vadd.f32 %v6886, %v7953
  %v7955 = vrot.slane %v7954, 2
  %v7956 = vadd.f32 %v7954, %v7955
  %v7957 = vrot.slane %v7956, 1
  %v7958 = vadd.f32 %v7956, %v7957
  %v7959 = vrot.slane %v6888, 4
  %v7960 = vadd.f32 %v6888, %v7959
  %v7961 = vrot.slane %v7960, 2
  %v7962 = vadd.f32 %v7960, %v7961
  %v7963 = vrot.slane %v7962, 1
  %v7964 = vadd.f32 %v7962, %v7963
  %v7965 = vrot.slane %v6890, 4
  %v7966 = vadd.f32 %v6890, %v7965
  %v7967 = vrot.slane %v7966, 2
  %v7968 = vadd.f32 %v7966, %v7967
  %v7969 = vrot.slane %v7968, 1
  %v7970 = vadd.f32 %v7968, %v7969
  %v7971 = vrot.slane %v6892, 4
  %v7972 = vadd.f32 %v6892, %v7971
  %v7973 = vrot.slane %v7972, 2
  %v7974 = vadd.f32 %v7972, %v7973
  %v7975 = vrot.slane %v7974, 1
  %v7976 = vadd.f32 %v7974, %v7975
  %v7977 = vrot.slane %v6894, 4
  %v7978 = vadd.f32 %v6894, %v7977
  %v7979 = vrot.slane %v7978, 2
  %v7980 = vadd.f32 %v7978, %v7979
  %v7981 = vrot.slane %v7980, 1
  %v7982 = vadd.f32 %v7980, %v7981
  %v7983 = vrot.slane %v6896, 4
  %v7984 = vadd.f32 %v6896, %v7983
  %v7985 = vrot.slane %v7984, 2
  %v7986 = vadd.f32 %v7984, %v7985
  %v7987 = vrot.slane %v7986, 1
  %v7988 = vadd.f32 %v7986, %v7987
  %v7989 = vrot.slane %v6898, 4
  %v7990 = vadd.f32 %v6898, %v7989
  %v7991 = vrot.slane %v7990, 2
  %v7992 = vadd.f32 %v7990, %v7991
  %v7993 = vrot.slane %v7992, 1
  %v7994 = vadd.f32 %v7992, %v7993
  %v7995 = vrot.slane %v6900, 4
  %v7996 = vadd.f32 %v6900, %v7995
  %v7997 = vrot.slane %v7996, 2
  %v7998 = vadd.f32 %v7996, %v7997
  %v7999 = vrot.slane %v7998, 1
  %v8000 = vadd.f32 %v7998, %v7999
  %v8001 = vrot.slane %v6902, 4
  %v8002 = vadd.f32 %v6902, %v8001
  %v8003 = vrot.slane %v8002, 2
  %v8004 = vadd.f32 %v8002, %v8003
  %v8005 = vrot.slane %v8004, 1
  %v8006 = vadd.f32 %v8004, %v8005
  %v8007 = vrot.slane %v6904, 4
  %v8008 = vadd.f32 %v6904, %v8007
  %v8009 = vrot.slane %v8008, 2
  %v8010 = vadd.f32 %v8008, %v8009
  %v8011 = vrot.slane %v8010, 1
  %v8012 = vadd.f32 %v8010, %v8011
  %v8013 = vrot.slane %v6906, 4
  %v8014 = vadd.f32 %v6906, %v8013
  %v8015 = vrot.slane %v8014, 2
  %v8016 = vadd.f32 %v8014, %v8015
  %v8017 = vrot.slane %v8016, 1
  %v8018 = vadd.f32 %v8016, %v8017
  %v8019 = vrot.slane %v6908, 4
  %v8020 = vadd.f32 %v6908, %v8019
  %v8021 = vrot.slane %v8020, 2
  %v8022 = vadd.f32 %v8020, %v8021
  %v8023 = vrot.slane %v8022, 1
  %v8024 = vadd.f32 %v8022, %v8023
  %v8025 = vrot.slane %v6910, 4
  %v8026 = vadd.f32 %v6910, %v8025
  %v8027 = vrot.slane %v8026, 2
  %v8028 = vadd.f32 %v8026, %v8027
  %v8029 = vrot.slane %v8028, 1
  %v8030 = vadd.f32 %v8028, %v8029
  %v8031 = vrot.slane %v6912, 4
  %v8032 = vadd.f32 %v6912, %v8031
  %v8033 = vrot.slane %v8032, 2
  %v8034 = vadd.f32 %v8032, %v8033
  %v8035 = vrot.slane %v8034, 1
  %v8036 = vadd.f32 %v8034, %v8035
  %v8037 = vrot.slane %v6914, 4
  %v8038 = vadd.f32 %v6914, %v8037
  %v8039 = vrot.slane %v8038, 2
  %v8040 = vadd.f32 %v8038, %v8039
  %v8041 = vrot.slane %v8040, 1
  %v8042 = vadd.f32 %v8040, %v8041
  %v8043 = vrot.slane %v6916, 4
  %v8044 = vadd.f32 %v6916, %v8043
  %v8045 = vrot.slane %v8044, 2
  %v8046 = vadd.f32 %v8044, %v8045
  %v8047 = vrot.slane %v8046, 1
  %v8048 = vadd.f32 %v8046, %v8047
  %v8049 = vrot.slane %v6918, 4
  %v8050 = vadd.f32 %v6918, %v8049
  %v8051 = vrot.slane %v8050, 2
  %v8052 = vadd.f32 %v8050, %v8051
  %v8053 = vrot.slane %v8052, 1
  %v8054 = vadd.f32 %v8052, %v8053
  %v8055 = vrot.slane %v6920, 4
  %v8056 = vadd.f32 %v6920, %v8055
  %v8057 = vrot.slane %v8056, 2
  %v8058 = vadd.f32 %v8056, %v8057
  %v8059 = vrot.slane %v8058, 1
  %v8060 = vadd.f32 %v8058, %v8059
  %v8061 = vrot.slane %v6922, 4
  %v8062 = vadd.f32 %v6922, %v8061
  %v8063 = vrot.slane %v8062, 2
  %v8064 = vadd.f32 %v8062, %v8063
  %v8065 = vrot.slane %v8064, 1
  %v8066 = vadd.f32 %v8064, %v8065
  %v8067 = vrot.slane %v6924, 4
  %v8068 = vadd.f32 %v6924, %v8067
  %v8069 = vrot.slane %v8068, 2
  %v8070 = vadd.f32 %v8068, %v8069
  %v8071 = vrot.slane %v8070, 1
  %v8072 = vadd.f32 %v8070, %v8071
  %v8073 = vrot.slane %v6926, 4
  %v8074 = vadd.f32 %v6926, %v8073
  %v8075 = vrot.slane %v8074, 2
  %v8076 = vadd.f32 %v8074, %v8075
  %v8077 = vrot.slane %v8076, 1
  %v8078 = vadd.f32 %v8076, %v8077
  %v8079 = vrot.slane %v6928, 4
  %v8080 = vadd.f32 %v6928, %v8079
  %v8081 = vrot.slane %v8080, 2
  %v8082 = vadd.f32 %v8080, %v8081
  %v8083 = vrot.slane %v8082, 1
  %v8084 = vadd.f32 %v8082, %v8083
  %v8085 = vrot.slane %v6930, 4
  %v8086 = vadd.f32 %v6930, %v8085
  %v8087 = vrot.slane %v8086, 2
  %v8088 = vadd.f32 %v8086, %v8087
  %v8089 = vrot.slane %v8088, 1
  %v8090 = vadd.f32 %v8088, %v8089
  %v8091 = vrot.slane %v6932, 4
  %v8092 = vadd.f32 %v6932, %v8091
  %v8093 = vrot.slane %v8092, 2
  %v8094 = vadd.f32 %v8092, %v8093
  %v8095 = vrot.slane %v8094, 1
  %v8096 = vadd.f32 %v8094, %v8095
  %v8097 = vrot.slane %v6934, 4
  %v8098 = vadd.f32 %v6934, %v8097
  %v8099 = vrot.slane %v8098, 2
  %v8100 = vadd.f32 %v8098, %v8099
  %v8101 = vrot.slane %v8100, 1
  %v8102 = vadd.f32 %v8100, %v8101
  %v8103 = vrot.slane %v6936, 4
  %v8104 = vadd.f32 %v6936, %v8103
  %v8105 = vrot.slane %v8104, 2
  %v8106 = vadd.f32 %v8104, %v8105
  %v8107 = vrot.slane %v8106, 1
  %v8108 = vadd.f32 %v8106, %v8107
  %v8109 = vrot.slane %v6938, 4
  %v8110 = vadd.f32 %v6938, %v8109
  %v8111 = vrot.slane %v8110, 2
  %v8112 = vadd.f32 %v8110, %v8111
  %v8113 = vrot.slane %v8112, 1
  %v8114 = vadd.f32 %v8112, %v8113
  %v8115 = vrot.slane %v6940, 4
  %v8116 = vadd.f32 %v6940, %v8115
  %v8117 = vrot.slane %v8116, 2
  %v8118 = vadd.f32 %v8116, %v8117
  %v8119 = vrot.slane %v8118, 1
  %v8120 = vadd.f32 %v8118, %v8119
  %v8121 = vrot.slane %v6942, 4
  %v8122 = vadd.f32 %v6942, %v8121
  %v8123 = vrot.slane %v8122, 2
  %v8124 = vadd.f32 %v8122, %v8123
  %v8125 = vrot.slane %v8124, 1
  %v8126 = vadd.f32 %v8124, %v8125
  %v8127 = vrot.slane %v6944, 4
  %v8128 = vadd.f32 %v6944, %v8127
  %v8129 = vrot.slane %v8128, 2
  %v8130 = vadd.f32 %v8128, %v8129
  %v8131 = vrot.slane %v8130, 1
  %v8132 = vadd.f32 %v8130, %v8131
  %v8133 = vrot.slane %v6946, 4
  %v8134 = vadd.f32 %v6946, %v8133
  %v8135 = vrot.slane %v8134, 2
  %v8136 = vadd.f32 %v8134, %v8135
  %v8137 = vrot.slane %v8136, 1
  %v8138 = vadd.f32 %v8136, %v8137
  %v8139 = vrot.slane %v6948, 4
  %v8140 = vadd.f32 %v6948, %v8139
  %v8141 = vrot.slane %v8140, 2
  %v8142 = vadd.f32 %v8140, %v8141
  %v8143 = vrot.slane %v8142, 1
  %v8144 = vadd.f32 %v8142, %v8143
  %v8145 = vrot.slane %v6950, 4
  %v8146 = vadd.f32 %v6950, %v8145
  %v8147 = vrot.slane %v8146, 2
  %v8148 = vadd.f32 %v8146, %v8147
  %v8149 = vrot.slane %v8148, 1
  %v8150 = vadd.f32 %v8148, %v8149
  %v8151 = vrot.slane %v6952, 4
  %v8152 = vadd.f32 %v6952, %v8151
  %v8153 = vrot.slane %v8152, 2
  %v8154 = vadd.f32 %v8152, %v8153
  %v8155 = vrot.slane %v8154, 1
  %v8156 = vadd.f32 %v8154, %v8155
  %v8157 = vrot.slane %v6954, 4
  %v8158 = vadd.f32 %v6954, %v8157
  %v8159 = vrot.slane %v8158, 2
  %v8160 = vadd.f32 %v8158, %v8159
  %v8161 = vrot.slane %v8160, 1
  %v8162 = vadd.f32 %v8160, %v8161
  %v8163 = vrot.slane %v6956, 4
  %v8164 = vadd.f32 %v6956, %v8163
  %v8165 = vrot.slane %v8164, 2
  %v8166 = vadd.f32 %v8164, %v8165
  %v8167 = vrot.slane %v8166, 1
  %v8168 = vadd.f32 %v8166, %v8167
  %v8169 = vrot.slane %v6958, 4
  %v8170 = vadd.f32 %v6958, %v8169
  %v8171 = vrot.slane %v8170, 2
  %v8172 = vadd.f32 %v8170, %v8171
  %v8173 = vrot.slane %v8172, 1
  %v8174 = vadd.f32 %v8172, %v8173
  %v8175 = vrot.slane %v6960, 4
  %v8176 = vadd.f32 %v6960, %v8175
  %v8177 = vrot.slane %v8176, 2
  %v8178 = vadd.f32 %v8176, %v8177
  %v8179 = vrot.slane %v8178, 1
  %v8180 = vadd.f32 %v8178, %v8179
  %v8181 = vrot.slane %v6962, 4
  %v8182 = vadd.f32 %v6962, %v8181
  %v8183 = vrot.slane %v8182, 2
  %v8184 = vadd.f32 %v8182, %v8183
  %v8185 = vrot.slane %v8184, 1
  %v8186 = vadd.f32 %v8184, %v8185
  %v8187 = vrot.slane %v6964, 4
  %v8188 = vadd.f32 %v6964, %v8187
  %v8189 = vrot.slane %v8188, 2
  %v8190 = vadd.f32 %v8188, %v8189
  %v8191 = vrot.slane %v8190, 1
  %v8192 = vadd.f32 %v8190, %v8191
  %v8193 = vrot.slane %v6966, 4
  %v8194 = vadd.f32 %v6966, %v8193
  %v8195 = vrot.slane %v8194, 2
  %v8196 = vadd.f32 %v8194, %v8195
  %v8197 = vrot.slane %v8196, 1
  %v8198 = vadd.f32 %v8196, %v8197
  %v8199 = vrot.slane %v6968, 4
  %v8200 = vadd.f32 %v6968, %v8199
  %v8201 = vrot.slane %v8200, 2
  %v8202 = vadd.f32 %v8200, %v8201
  %v8203 = vrot.slane %v8202, 1
  %v8204 = vadd.f32 %v8202, %v8203
  %v8205 = vrot.slane %v6970, 4
  %v8206 = vadd.f32 %v6970, %v8205
  %v8207 = vrot.slane %v8206, 2
  %v8208 = vadd.f32 %v8206, %v8207
  %v8209 = vrot.slane %v8208, 1
  %v8210 = vadd.f32 %v8208, %v8209
  %v8211 = vrot.slane %v6972, 4
  %v8212 = vadd.f32 %v6972, %v8211
  %v8213 = vrot.slane %v8212, 2
  %v8214 = vadd.f32 %v8212, %v8213
  %v8215 = vrot.slane %v8214, 1
  %v8216 = vadd.f32 %v8214, %v8215
  %v8217 = vrot.slane %v6974, 4
  %v8218 = vadd.f32 %v6974, %v8217
  %v8219 = vrot.slane %v8218, 2
  %v8220 = vadd.f32 %v8218, %v8219
  %v8221 = vrot.slane %v8220, 1
  %v8222 = vadd.f32 %v8220, %v8221
  %v8223 = vrot.slane %v6976, 4
  %v8224 = vadd.f32 %v6976, %v8223
  %v8225 = vrot.slane %v8224, 2
  %v8226 = vadd.f32 %v8224, %v8225
  %v8227 = vrot.slane %v8226, 1
  %v8228 = vadd.f32 %v8226, %v8227
  %v8229 = vrot.slane %v6978, 4
  %v8230 = vadd.f32 %v6978, %v8229
  %v8231 = vrot.slane %v8230, 2
  %v8232 = vadd.f32 %v8230, %v8231
  %v8233 = vrot.slane %v8232, 1
  %v8234 = vadd.f32 %v8232, %v8233
  %v8235 = vrot.slane %v6980, 4
  %v8236 = vadd.f32 %v6980, %v8235
  %v8237 = vrot.slane %v8236, 2
  %v8238 = vadd.f32 %v8236, %v8237
  %v8239 = vrot.slane %v8238, 1
  %v8240 = vadd.f32 %v8238, %v8239
  %v8241 = vrot.slane %v6982, 4
  %v8242 = vadd.f32 %v6982, %v8241
  %v8243 = vrot.slane %v8242, 2
  %v8244 = vadd.f32 %v8242, %v8243
  %v8245 = vrot.slane %v8244, 1
  %v8246 = vadd.f32 %v8244, %v8245
  %v8247 = vrot.slane %v6984, 4
  %v8248 = vadd.f32 %v6984, %v8247
  %v8249 = vrot.slane %v8248, 2
  %v8250 = vadd.f32 %v8248, %v8249
  %v8251 = vrot.slane %v8250, 1
  %v8252 = vadd.f32 %v8250, %v8251
  %v8253 = vrot.slane %v6986, 4
  %v8254 = vadd.f32 %v6986, %v8253
  %v8255 = vrot.slane %v8254, 2
  %v8256 = vadd.f32 %v8254, %v8255
  %v8257 = vrot.slane %v8256, 1
  %v8258 = vadd.f32 %v8256, %v8257
  %v8259 = vrot.slane %v6988, 4
  %v8260 = vadd.f32 %v6988, %v8259
  %v8261 = vrot.slane %v8260, 2
  %v8262 = vadd.f32 %v8260, %v8261
  %v8263 = vrot.slane %v8262, 1
  %v8264 = vadd.f32 %v8262, %v8263
  %v8265 = vrot.slane %v6990, 4
  %v8266 = vadd.f32 %v6990, %v8265
  %v8267 = vrot.slane %v8266, 2
  %v8268 = vadd.f32 %v8266, %v8267
  %v8269 = vrot.slane %v8268, 1
  %v8270 = vadd.f32 %v8268, %v8269
  %v8271 = vrot.slane %v6992, 4
  %v8272 = vadd.f32 %v6992, %v8271
  %v8273 = vrot.slane %v8272, 2
  %v8274 = vadd.f32 %v8272, %v8273
  %v8275 = vrot.slane %v8274, 1
  %v8276 = vadd.f32 %v8274, %v8275
  %v8277 = vrot.slane %v6994, 4
  %v8278 = vadd.f32 %v6994, %v8277
  %v8279 = vrot.slane %v8278, 2
  %v8280 = vadd.f32 %v8278, %v8279
  %v8281 = vrot.slane %v8280, 1
  %v8282 = vadd.f32 %v8280, %v8281
  %v8283 = vrot.slane %v6996, 4
  %v8284 = vadd.f32 %v6996, %v8283
  %v8285 = vrot.slane %v8284, 2
  %v8286 = vadd.f32 %v8284, %v8285
  %v8287 = vrot.slane %v8286, 1
  %v8288 = vadd.f32 %v8286, %v8287
  %v8289 = vrot.slane %v6998, 4
  %v8290 = vadd.f32 %v6998, %v8289
  %v8291 = vrot.slane %v8290, 2
  %v8292 = vadd.f32 %v8290, %v8291
  %v8293 = vrot.slane %v8292, 1
  %v8294 = vadd.f32 %v8292, %v8293
  %v8295 = vrot.slane %v7000, 4
  %v8296 = vadd.f32 %v7000, %v8295
  %v8297 = vrot.slane %v8296, 2
  %v8298 = vadd.f32 %v8296, %v8297
  %v8299 = vrot.slane %v8298, 1
  %v8300 = vadd.f32 %v8298, %v8299
  %v8301 = vrot.slane %v7002, 4
  %v8302 = vadd.f32 %v7002, %v8301
  %v8303 = vrot.slane %v8302, 2
  %v8304 = vadd.f32 %v8302, %v8303
  %v8305 = vrot.slane %v8304, 1
  %v8306 = vadd.f32 %v8304, %v8305
  %v8307 = vrot.slane %v7004, 4
  %v8308 = vadd.f32 %v7004, %v8307
  %v8309 = vrot.slane %v8308, 2
  %v8310 = vadd.f32 %v8308, %v8309
  %v8311 = vrot.slane %v8310, 1
  %v8312 = vadd.f32 %v8310, %v8311
  %v8313 = vrot.slane %v7006, 4
  %v8314 = vadd.f32 %v7006, %v8313
  %v8315 = vrot.slane %v8314, 2
  %v8316 = vadd.f32 %v8314, %v8315
  %v8317 = vrot.slane %v8316, 1
  %v8318 = vadd.f32 %v8316, %v8317
  %v8319 = vrot.slane %v7008, 4
  %v8320 = vadd.f32 %v7008, %v8319
  %v8321 = vrot.slane %v8320, 2
  %v8322 = vadd.f32 %v8320, %v8321
  %v8323 = vrot.slane %v8322, 1
  %v8324 = vadd.f32 %v8322, %v8323
  %v8325 = vrot.slane %v7010, 4
  %v8326 = vadd.f32 %v7010, %v8325
  %v8327 = vrot.slane %v8326, 2
  %v8328 = vadd.f32 %v8326, %v8327
  %v8329 = vrot.slane %v8328, 1
  %v8330 = vadd.f32 %v8328, %v8329
  %v8331 = vrot.slane %v7012, 4
  %v8332 = vadd.f32 %v7012, %v8331
  %v8333 = vrot.slane %v8332, 2
  %v8334 = vadd.f32 %v8332, %v8333
  %v8335 = vrot.slane %v8334, 1
  %v8336 = vadd.f32 %v8334, %v8335
  %v8337 = vrot.slane %v7014, 4
  %v8338 = vadd.f32 %v7014, %v8337
  %v8339 = vrot.slane %v8338, 2
  %v8340 = vadd.f32 %v8338, %v8339
  %v8341 = vrot.slane %v8340, 1
  %v8342 = vadd.f32 %v8340, %v8341
  %v8343 = vrot.slane %v7016, 4
  %v8344 = vadd.f32 %v7016, %v8343
  %v8345 = vrot.slane %v8344, 2
  %v8346 = vadd.f32 %v8344, %v8345
  %v8347 = vrot.slane %v8346, 1
  %v8348 = vadd.f32 %v8346, %v8347
  %v8349 = vrot.slane %v7018, 4
  %v8350 = vadd.f32 %v7018, %v8349
  %v8351 = vrot.slane %v8350, 2
  %v8352 = vadd.f32 %v8350, %v8351
  %v8353 = vrot.slane %v8352, 1
  %v8354 = vadd.f32 %v8352, %v8353
  %v8355 = vrot.slane %v7020, 4
  %v8356 = vadd.f32 %v7020, %v8355
  %v8357 = vrot.slane %v8356, 2
  %v8358 = vadd.f32 %v8356, %v8357
  %v8359 = vrot.slane %v8358, 1
  %v8360 = vadd.f32 %v8358, %v8359
  %v8361 = vrot.slane %v7022, 4
  %v8362 = vadd.f32 %v7022, %v8361
  %v8363 = vrot.slane %v8362, 2
  %v8364 = vadd.f32 %v8362, %v8363
  %v8365 = vrot.slane %v8364, 1
  %v8366 = vadd.f32 %v8364, %v8365
  %v8367 = vrcp.pop %v7028
  %v8368 = vrcp.pop %v7034
  %v8369 = vrcp.pop %v7040
  %v8370 = vrcp.pop %v7046
  %v8371 = vrcp.pop %v7052
  %v8372 = vrcp.pop %v7058
  %v8373 = vrcp.pop %v7064
  %v8374 = vrcp.pop %v7070
  %v8375 = vrcp.pop %v7076
  %v8376 = vrcp.pop %v7082
  %v8377 = vrcp.pop %v7088
  %v8378 = vrcp.pop %v7094
  %v8379 = vrcp.pop %v7100
  %v8380 = vrcp.pop %v7106
  %v8381 = vrcp.pop %v7112
  %v8382 = vrcp.pop %v7118
  %v8383 = vrcp.pop %v7124
  %v8384 = vrcp.pop %v7130
  %v8385 = vrcp.pop %v7136
  %v8386 = vrcp.pop %v7142
  %v8387 = vrcp.pop %v7148
  %v8388 = vrcp.pop %v7154
  %v8389 = vrcp.pop %v7160
  %v8390 = vrcp.pop %v7166
  %v8391 = vrcp.pop %v7172
  %v8392 = vrcp.pop %v7178
  %v8393 = vrcp.pop %v7184
  %v8394 = vrcp.pop %v7190
  %v8395 = vrcp.pop %v7196
  %v8396 = vrcp.pop %v7202
  %v8397 = vrcp.pop %v7208
  %v8398 = vrcp.pop %v7214
  %v8399 = vrcp.pop %v7220
  %v8400 = vrcp.pop %v7226
  %v8401 = vrcp.pop %v7232
  %v8402 = vrcp.pop %v7238
  %v8403 = vrcp.pop %v7244
  %v8404 = vrcp.pop %v7250
  %v8405 = vrcp.pop %v7256
  %v8406 = vrcp.pop %v7262
  %v8407 = vrcp.pop %v7268
  %v8408 = vrcp.pop %v7274
  %v8409 = vrcp.pop %v7280
  %v8410 = vrcp.pop %v7286
  %v8411 = vrcp.pop %v7292
  %v8412 = vrcp.pop %v7298
  %v8413 = vrcp.pop %v7304
  %v8414 = vrcp.pop %v7310
  %v8415 = vrcp.pop %v7316
  %v8416 = vrcp.pop %v7322
  %v8417 = vrcp.pop %v7328
  %v8418 = vrcp.pop %v7334
  %v8419 = vrcp.pop %v7340
  %v8420 = vrcp.pop %v7346
  %v8421 = vrcp.pop %v7352
  %v8422 = vrcp.pop %v7358
  %v8423 = vrcp.pop %v7364
  %v8424 = vrcp.pop %v7370
  %v8425 = vrcp.pop %v7376
  %v8426 = vrcp.pop %v7382
  %v8427 = vrcp.pop %v7388
  %v8428 = vrcp.pop %v7394
  %v8429 = vrcp.pop %v7400
  %v8430 = vrcp.pop %v7406
  %v8431 = vrcp.pop %v7412
  %v8432 = vrcp.pop %v7418
  %v8433 = vrcp.pop %v7424
  %v8434 = vrcp.pop %v7430
  %v8435 = vrcp.pop %v7436
  %v8436 = vrcp.pop %v7442
  %v8437 = vrcp.pop %v7448
  %v8438 = vrcp.pop %v7454
  %v8439 = vrcp.pop %v7460
  %v8440 = vrcp.pop %v7466
  %v8441 = vrcp.pop %v7472
  %v8442 = vrcp.pop %v7478
  %v8443 = vrcp.pop %v7484
  %v8444 = vrcp.pop %v7490
  %v8445 = vrcp.pop %v7496
  %v8446 = vrcp.pop %v7502
  %v8447 = vrcp.pop %v7508
  %v8448 = vrcp.pop %v7514
  %v8449 = vrcp.pop %v7520
  %v8450 = vrcp.pop %v7526
  %v8451 = vrcp.pop %v7532
  %v8452 = vrcp.pop %v7538
  %v8453 = vrcp.pop %v7544
  %v8454 = vrcp.pop %v7550
  %v8455 = vrcp.pop %v7556
  %v8456 = vrcp.pop %v7562
  %v8457 = vrcp.pop %v7568
  %v8458 = vrcp.pop %v7574
  %v8459 = vrcp.pop %v7580
  %v8460 = vrcp.pop %v7586
  %v8461 = vrcp.pop %v7592
  %v8462 = vrcp.pop %v7598
  %v8463 = vrcp.pop %v7604
  %v8464 = vrcp.pop %v7610
  %v8465 = vrcp.pop %v7616
  %v8466 = vrcp.pop %v7622
  %v8467 = vrcp.pop %v7628
  %v8468 = vrcp.pop %v7634
  %v8469 = vrcp.pop %v7640
  %v8470 = vrcp.pop %v7646
  %v8471 = vrcp.pop %v7652
  %v8472 = vrcp.pop %v7658
  %v8473 = vrcp.pop %v7664
  %v8474 = vrcp.pop %v7670
  %v8475 = vrcp.pop %v7676
  %v8476 = vrcp.pop %v7682
  %v8477 = vrcp.pop %v7688
  %v8478 = vrcp.pop %v7694
  %v8479 = vrcp.pop %v7700
  %v8480 = vrcp.pop %v7706
  %v8481 = vrcp.pop %v7712
  %v8482 = vrcp.pop %v7718
  %v8483 = vrcp.pop %v7724
  %v8484 = vrcp.pop %v7730
  %v8485 = vrcp.pop %v7736
  %v8486 = vrcp.pop %v7742
  %v8487 = vrcp.pop %v7748
  %v8488 = vrcp.pop %v7754
  %v8489 = vrcp.pop %v7760
  %v8490 = vrcp.pop %v7766
  %v8491 = vrcp.pop %v7772
  %v8492 = vrcp.pop %v7778
  %v8493 = vrcp.pop %v7784
  %v8494 = vrcp.pop %v7790
  %v8495 = vrcp.pop %v7796
  %v8496 = vrcp.pop %v7802
  %v8497 = vrcp.pop %v7808
  %v8498 = vrcp.pop %v7814
  %v8499 = vrcp.pop %v7820
  %v8500 = vrcp.pop %v7826
  %v8501 = vrcp.pop %v7832
  %v8502 = vrcp.pop %v7838
  %v8503 = vrcp.pop %v7844
  %v8504 = vrcp.pop %v7850
  %v8505 = vrcp.pop %v7856
  %v8506 = vrcp.pop %v7862
  %v8507 = vrcp.pop %v7868
  %v8508 = vrcp.pop %v7874
  %v8509 = vrcp.pop %v7880
  %v8510 = vrcp.pop %v7886
  %v8511 = vrcp.pop %v7892
  %v8512 = vrcp.pop %v7898
  %v8513 = vrcp.pop %v7904
  %v8514 = vrcp.pop %v7910
  %v8515 = vrcp.pop %v7916
  %v8516 = vrcp.pop %v7922
  %v8517 = vrcp.pop %v7928
  %v8518 = vrcp.pop %v7934
  %v8519 = vrcp.pop %v7940
  %v8520 = vrcp.pop %v7946
  %v8521 = vrcp.pop %v7952
  %v8522 = vrcp.pop %v7958
  %v8523 = vrcp.pop %v7964
  %v8524 = vrcp.pop %v7970
  %v8525 = vrcp.pop %v7976
  %v8526 = vrcp.pop %v7982
  %v8527 = vrcp.pop %v7988
  %v8528 = vrcp.pop %v7994
  %v8529 = vrcp.pop %v8000
  %v8530 = vrcp.pop %v8006
  %v8531 = vrcp.pop %v8012
  %v8532 = vrcp.pop %v8018
  %v8533 = vrcp.pop %v8024
  %v8534 = vrcp.pop %v8030
  %v8535 = vrcp.pop %v8036
  %v8536 = vrcp.pop %v8042
  %v8537 = vrcp.pop %v8048
  %v8538 = vrcp.pop %v8054
  %v8539 = vrcp.pop %v8060
  %v8540 = vrcp.pop %v8066
  %v8541 = vrcp.pop %v8072
  %v8542 = vrcp.pop %v8078
  %v8543 = vrcp.pop %v8084
  %v8544 = vrcp.pop %v8090
  %v8545 = vrcp.pop %v8096
  %v8546 = vrcp.pop %v8102
  %v8547 = vrcp.pop %v8108
  %v8548 = vrcp.pop %v8114
  %v8549 = vrcp.pop %v8120
  %v8550 = vrcp.pop %v8126
  %v8551 = vrcp.pop %v8132
  %v8552 = vrcp.pop %v8138
  %v8553 = vrcp.pop %v8144
  %v8554 = vrcp.pop %v8150
  %v8555 = vrcp.pop %v8156
  %v8556 = vrcp.pop %v8162
  %v8557 = vrcp.pop %v8168
  %v8558 = vrcp.pop %v8174
  %v8559 = vrcp.pop %v8180
  %v8560 = vrcp.pop %v8186
  %v8561 = vrcp.pop %v8192
  %v8562 = vrcp.pop %v8198
  %v8563 = vrcp.pop %v8204
  %v8564 = vrcp.pop %v8210
  %v8565 = vrcp.pop %v8216
  %v8566 = vrcp.pop %v8222
  %v8567 = vrcp.pop %v8228
  %v8568 = vrcp.pop %v8234
  %v8569 = vrcp.pop %v8240
  %v8570 = vrcp.pop %v8246
  %v8571 = vrcp.pop %v8252
  %v8572 = vrcp.pop %v8258
  %v8573 = vrcp.pop %v8264
  %v8574 = vrcp.pop %v8270
  %v8575 = vrcp.pop %v8276
  %v8576 = vrcp.pop %v8282
  %v8577 = vrcp.pop %v8288
  %v8578 = vrcp.pop %v8294
  %v8579 = vrcp.pop %v8300
  %v8580 = vrcp.pop %v8306
  %v8581 = vrcp.pop %v8312
  %v8582 = vrcp.pop %v8318
  %v8583 = vrcp.pop %v8324
  %v8584 = vrcp.pop %v8330
  %v8585 = vrcp.pop %v8336
  %v8586 = vrcp.pop %v8342
  %v8587 = vrcp.pop %v8348
  %v8588 = vrcp.pop %v8354
  %v8589 = vrcp.pop %v8360
  %v8590 = vrcp.pop %v8366
  %v8591 = vunpack.c.l.bf16 %v48
  %v8592 = vunpack.c.h.bf16 %v48
  %v8593 = vunpack.c.l.bf16 %v49
  %v8594 = vunpack.c.h.bf16 %v49
  %v8595 = vunpack.c.l.bf16 %v50
  %v8596 = vunpack.c.h.bf16 %v50
  %v8597 = vunpack.c.l.bf16 %v51
  %v8598 = vunpack.c.h.bf16 %v51
  %v8599 = vunpack.c.l.bf16 %v52
  %v8600 = vunpack.c.h.bf16 %v52
  %v8601 = vunpack.c.l.bf16 %v53
  %v8602 = vunpack.c.h.bf16 %v53
  %v8603 = vunpack.c.l.bf16 %v54
  %v8604 = vunpack.c.h.bf16 %v54
  %v8605 = vunpack.c.l.bf16 %v55
  %v8606 = vunpack.c.h.bf16 %v55
  %v8607 = vunpack.c.l.bf16 %v56
  %v8608 = vunpack.c.h.bf16 %v56
  %v8609 = vunpack.c.l.bf16 %v57
  %v8610 = vunpack.c.h.bf16 %v57
  %v8611 = vunpack.c.l.bf16 %v58
  %v8612 = vunpack.c.h.bf16 %v58
  %v8613 = vunpack.c.l.bf16 %v59
  %v8614 = vunpack.c.h.bf16 %v59
  %v8615 = vunpack.c.l.bf16 %v60
  %v8616 = vunpack.c.h.bf16 %v60
  %v8617 = vunpack.c.l.bf16 %v61
  %v8618 = vunpack.c.h.bf16 %v61
  %v8619 = vunpack.c.l.bf16 %v62
  %v8620 = vunpack.c.h.bf16 %v62
  %v8621 = vunpack.c.l.bf16 %v63
  %v8622 = vunpack.c.h.bf16 %v63
  %v8623 = vunpack.c.l.bf16 %v64
  %v8624 = vunpack.c.h.bf16 %v64
  %v8625 = vunpack.c.l.bf16 %v65
  %v8626 = vunpack.c.h.bf16 %v65
  %v8627 = vunpack.c.l.bf16 %v66
  %v8628 = vunpack.c.h.bf16 %v66
  %v8629 = vunpack.c.l.bf16 %v67
  %v8630 = vunpack.c.h.bf16 %v67
  %v8631 = vunpack.c.l.bf16 %v68
  %v8632 = vunpack.c.h.bf16 %v68
  %v8633 = vunpack.c.l.bf16 %v69
  %v8634 = vunpack.c.h.bf16 %v69
  %v8635 = vunpack.c.l.bf16 %v70
  %v8636 = vunpack.c.h.bf16 %v70
  %v8637 = vunpack.c.l.bf16 %v71
  %v8638 = vunpack.c.h.bf16 %v71
  %v8639 = vunpack.c.l.bf16 %v72
  %v8640 = vunpack.c.h.bf16 %v72
  %v8641 = vunpack.c.l.bf16 %v73
  %v8642 = vunpack.c.h.bf16 %v73
  %v8643 = vunpack.c.l.bf16 %v74
  %v8644 = vunpack.c.h.bf16 %v74
  %v8645 = vunpack.c.l.bf16 %v75
  %v8646 = vunpack.c.h.bf16 %v75
  %v8647 = vunpack.c.l.bf16 %v76
  %v8648 = vunpack.c.h.bf16 %v76
  %v8649 = vunpack.c.l.bf16 %v77
  %v8650 = vunpack.c.h.bf16 %v77
  %v8651 = vunpack.c.l.bf16 %v78
  %v8652 = vunpack.c.h.bf16 %v78
  %v8653 = vunpack.c.l.bf16 %v79
  %v8654 = vunpack.c.h.bf16 %v79
  %v8655 = vunpack.c.l.bf16 %v80
  %v8656 = vunpack.c.h.bf16 %v80
  %v8657 = vunpack.c.l.bf16 %v81
  %v8658 = vunpack.c.h.bf16 %v81
  %v8659 = vunpack.c.l.bf16 %v82
  %v8660 = vunpack.c.h.bf16 %v82
  %v8661 = vunpack.c.l.bf16 %v83
  %v8662 = vunpack.c.h.bf16 %v83
  %v8663 = vunpack.c.l.bf16 %v84
  %v8664 = vunpack.c.h.bf16 %v84
  %v8665 = vunpack.c.l.bf16 %v85
  %v8666 = vunpack.c.h.bf16 %v85
  %v8667 = vunpack.c.l.bf16 %v86
  %v8668 = vunpack.c.h.bf16 %v86
  %v8669 = vunpack.c.l.bf16 %v87
  %v8670 = vunpack.c.h.bf16 %v87
  %v8671 = vunpack.c.l.bf16 %v88
  %v8672 = vunpack.c.h.bf16 %v88
  %v8673 = vunpack.c.l.bf16 %v89
  %v8674 = vunpack.c.h.bf16 %v89
  %v8675 = vunpack.c.l.bf16 %v90
  %v8676 = vunpack.c.h.bf16 %v90
  %v8677 = vunpack.c.l.bf16 %v91
  %v8678 = vunpack.c.h.bf16 %v91
  %v8679 = vunpack.c.l.bf16 %v92
  %v8680 = vunpack.c.h.bf16 %v92
  %v8681 = vunpack.c.l.bf16 %v93
  %v8682 = vunpack.c.h.bf16 %v93
  %v8683 = vunpack.c.l.bf16 %v94
  %v8684 = vunpack.c.h.bf16 %v94
  %v8685 = vunpack.c.l.bf16 %v95
  %v8686 = vunpack.c.h.bf16 %v95
  %v8687 = vunpack.c.l.bf16 %v96
  %v8688 = vunpack.c.h.bf16 %v96
  %v8689 = vunpack.c.l.bf16 %v97
  %v8690 = vunpack.c.h.bf16 %v97
  %v8691 = vunpack.c.l.bf16 %v98
  %v8692 = vunpack.c.h.bf16 %v98
  %v8693 = vunpack.c.l.bf16 %v99
  %v8694 = vunpack.c.h.bf16 %v99
  %v8695 = vunpack.c.l.bf16 %v100
  %v8696 = vunpack.c.h.bf16 %v100
  %v8697 = vunpack.c.l.bf16 %v101
  %v8698 = vunpack.c.h.bf16 %v101
  %v8699 = vunpack.c.l.bf16 %v102
  %v8700 = vunpack.c.h.bf16 %v102
  %v8701 = vunpack.c.l.bf16 %v103
  %v8702 = vunpack.c.h.bf16 %v103
  %v8703 = vunpack.c.l.bf16 %v104
  %v8704 = vunpack.c.h.bf16 %v104
  %v8705 = vunpack.c.l.bf16 %v105
  %v8706 = vunpack.c.h.bf16 %v105
  %v8707 = vunpack.c.l.bf16 %v106
  %v8708 = vunpack.c.h.bf16 %v106
  %v8709 = vunpack.c.l.bf16 %v107
  %v8710 = vunpack.c.h.bf16 %v107
  %v8711 = vunpack.c.l.bf16 %v108
  %v8712 = vunpack.c.h.bf16 %v108
  %v8713 = vunpack.c.l.bf16 %v109
  %v8714 = vunpack.c.h.bf16 %v109
  %v8715 = vunpack.c.l.bf16 %v110
  %v8716 = vunpack.c.h.bf16 %v110
  %v8717 = vunpack.c.l.bf16 %v111
  %v8718 = vunpack.c.h.bf16 %v111
  %v8719 = vunpack.c.l.bf16 %v112
  %v8720 = vunpack.c.h.bf16 %v112
  %v8721 = vunpack.c.l.bf16 %v113
  %v8722 = vunpack.c.h.bf16 %v113
  %v8723 = vunpack.c.l.bf16 %v114
  %v8724 = vunpack.c.h.bf16 %v114
  %v8725 = vunpack.c.l.bf16 %v115
  %v8726 = vunpack.c.h.bf16 %v115
  %v8727 = vunpack.c.l.bf16 %v116
  %v8728 = vunpack.c.h.bf16 %v116
  %v8729 = vunpack.c.l.bf16 %v117
  %v8730 = vunpack.c.h.bf16 %v117
  %v8731 = vunpack.c.l.bf16 %v118
  %v8732 = vunpack.c.h.bf16 %v118
  %v8733 = vunpack.c.l.bf16 %v119
  %v8734 = vunpack.c.h.bf16 %v119
  %v8735 = vunpack.c.l.bf16 %v120
  %v8736 = vunpack.c.h.bf16 %v120
  %v8737 = vunpack.c.l.bf16 %v121
  %v8738 = vunpack.c.h.bf16 %v121
  %v8739 = vunpack.c.l.bf16 %v122
  %v8740 = vunpack.c.h.bf16 %v122
  %v8741 = vunpack.c.l.bf16 %v123
  %v8742 = vunpack.c.h.bf16 %v123
  %v8743 = vunpack.c.l.bf16 %v124
  %v8744 = vunpack.c.h.bf16 %v124
  %v8745 = vunpack.c.l.bf16 %v125
  %v8746 = vunpack.c.h.bf16 %v125
  %v8747 = vunpack.c.l.bf16 %v126
  %v8748 = vunpack.c.h.bf16 %v126
  %v8749 = vunpack.c.l.bf16 %v127
  %v8750 = vunpack.c.h.bf16 %v127
  %v8751 = vunpack.c.l.bf16 %v128
  %v8752 = vunpack.c.h.bf16 %v128
  %v8753 = vunpack.c.l.bf16 %v129
  %v8754 = vunpack.c.h.bf16 %v129
  %v8755 = vunpack.c.l.bf16 %v130
  %v8756 = vunpack.c.h.bf16 %v130
  %v8757 = vunpack.c.l.bf16 %v131
  %v8758 = vunpack.c.h.bf16 %v131
  %v8759 = vunpack.c.l.bf16 %v132
  %v8760 = vunpack.c.h.bf16 %v132
  %v8761 = vunpack.c.l.bf16 %v133
  %v8762 = vunpack.c.h.bf16 %v133
  %v8763 = vunpack.c.l.bf16 %v134
  %v8764 = vunpack.c.h.bf16 %v134
  %v8765 = vunpack.c.l.bf16 %v135
  %v8766 = vunpack.c.h.bf16 %v135
  %v8767 = vunpack.c.l.bf16 %v136
  %v8768 = vunpack.c.h.bf16 %v136
  %v8769 = vunpack.c.l.bf16 %v137
  %v8770 = vunpack.c.h.bf16 %v137
  %v8771 = vunpack.c.l.bf16 %v138
  %v8772 = vunpack.c.h.bf16 %v138
  %v8773 = vunpack.c.l.bf16 %v139
  %v8774 = vunpack.c.h.bf16 %v139
  %v8775 = vunpack.c.l.bf16 %v140
  %v8776 = vunpack.c.h.bf16 %v140
  %v8777 = vunpack.c.l.bf16 %v141
  %v8778 = vunpack.c.h.bf16 %v141
  %v8779 = vunpack.c.l.bf16 %v142
  %v8780 = vunpack.c.h.bf16 %v142
  %v8781 = vunpack.c.l.bf16 %v143
  %v8782 = vunpack.c.h.bf16 %v143
  %v8783 = vunpack.c.l.bf16 %v144
  %v8784 = vunpack.c.h.bf16 %v144
  %v8785 = vunpack.c.l.bf16 %v145
  %v8786 = vunpack.c.h.bf16 %v145
  %v8787 = vunpack.c.l.bf16 %v146
  %v8788 = vunpack.c.h.bf16 %v146
  %v8789 = vunpack.c.l.bf16 %v147
  %v8790 = vunpack.c.h.bf16 %v147
  %v8791 = vunpack.c.l.bf16 %v148
  %v8792 = vunpack.c.h.bf16 %v148
  %v8793 = vunpack.c.l.bf16 %v149
  %v8794 = vunpack.c.h.bf16 %v149
  %v8795 = vunpack.c.l.bf16 %v150
  %v8796 = vunpack.c.h.bf16 %v150
  %v8797 = vunpack.c.l.bf16 %v151
  %v8798 = vunpack.c.h.bf16 %v151
  %v8799 = vunpack.c.l.bf16 %v152
  %v8800 = vunpack.c.h.bf16 %v152
  %v8801 = vunpack.c.l.bf16 %v153
  %v8802 = vunpack.c.h.bf16 %v153
  %v8803 = vunpack.c.l.bf16 %v154
  %v8804 = vunpack.c.h.bf16 %v154
  %v8805 = vunpack.c.l.bf16 %v155
  %v8806 = vunpack.c.h.bf16 %v155
  %v8807 = vunpack.c.l.bf16 %v156
  %v8808 = vunpack.c.h.bf16 %v156
  %v8809 = vunpack.c.l.bf16 %v157
  %v8810 = vunpack.c.h.bf16 %v157
  %v8811 = vunpack.c.l.bf16 %v158
  %v8812 = vunpack.c.h.bf16 %v158
  %v8813 = vunpack.c.l.bf16 %v159
  %v8814 = vunpack.c.h.bf16 %v159
  %v8815 = vmul.f32 %v8591, %v6576
  %v8816 = vmul.f32 %v8592, %v6578
  %v8817 = vmul.f32 %v8593, %v6580
  %v8818 = vmul.f32 %v8594, %v6582
  %v8819 = vmul.f32 %v8595, %v6584
  %v8820 = vmul.f32 %v8596, %v6586
  %v8821 = vmul.f32 %v8597, %v6588
  %v8822 = vmul.f32 %v8598, %v6590
  %v8823 = vmul.f32 %v8599, %v6592
  %v8824 = vmul.f32 %v8600, %v6594
  %v8825 = vmul.f32 %v8601, %v6596
  %v8826 = vmul.f32 %v8602, %v6598
  %v8827 = vmul.f32 %v8603, %v6600
  %v8828 = vmul.f32 %v8604, %v6602
  %v8829 = vmul.f32 %v8605, %v6604
  %v8830 = vmul.f32 %v8606, %v6606
  %v8831 = vmul.f32 %v8607, %v6608
  %v8832 = vmul.f32 %v8608, %v6610
  %v8833 = vmul.f32 %v8609, %v6612
  %v8834 = vmul.f32 %v8610, %v6614
  %v8835 = vmul.f32 %v8611, %v6616
  %v8836 = vmul.f32 %v8612, %v6618
  %v8837 = vmul.f32 %v8613, %v6620
  %v8838 = vmul.f32 %v8614, %v6622
  %v8839 = vmul.f32 %v8615, %v6624
  %v8840 = vmul.f32 %v8616, %v6626
  %v8841 = vmul.f32 %v8617, %v6628
  %v8842 = vmul.f32 %v8618, %v6630
  %v8843 = vmul.f32 %v8619, %v6632
  %v8844 = vmul.f32 %v8620, %v6634
  %v8845 = vmul.f32 %v8621, %v6636
  %v8846 = vmul.f32 %v8622, %v6638
  %v8847 = vmul.f32 %v8623, %v6640
  %v8848 = vmul.f32 %v8624, %v6642
  %v8849 = vmul.f32 %v8625, %v6644
  %v8850 = vmul.f32 %v8626, %v6646
  %v8851 = vmul.f32 %v8627, %v6648
  %v8852 = vmul.f32 %v8628, %v6650
  %v8853 = vmul.f32 %v8629, %v6652
  %v8854 = vmul.f32 %v8630, %v6654
  %v8855 = vmul.f32 %v8631, %v6656
  %v8856 = vmul.f32 %v8632, %v6658
  %v8857 = vmul.f32 %v8633, %v6660
  %v8858 = vmul.f32 %v8634, %v6662
  %v8859 = vmul.f32 %v8635, %v6664
  %v8860 = vmul.f32 %v8636, %v6666
  %v8861 = vmul.f32 %v8637, %v6668
  %v8862 = vmul.f32 %v8638, %v6670
  %v8863 = vmul.f32 %v8639, %v6672
  %v8864 = vmul.f32 %v8640, %v6674
  %v8865 = vmul.f32 %v8641, %v6676
  %v8866 = vmul.f32 %v8642, %v6678
  %v8867 = vmul.f32 %v8643, %v6680
  %v8868 = vmul.f32 %v8644, %v6682
  %v8869 = vmul.f32 %v8645, %v6684
  %v8870 = vmul.f32 %v8646, %v6686
  %v8871 = vmul.f32 %v8647, %v6688
  %v8872 = vmul.f32 %v8648, %v6690
  %v8873 = vmul.f32 %v8649, %v6692
  %v8874 = vmul.f32 %v8650, %v6694
  %v8875 = vmul.f32 %v8651, %v6696
  %v8876 = vmul.f32 %v8652, %v6698
  %v8877 = vmul.f32 %v8653, %v6700
  %v8878 = vmul.f32 %v8654, %v6702
  %v8879 = vmul.f32 %v8655, %v6704
  %v8880 = vmul.f32 %v8656, %v6706
  %v8881 = vmul.f32 %v8657, %v6708
  %v8882 = vmul.f32 %v8658, %v6710
  %v8883 = vmul.f32 %v8659, %v6712
  %v8884 = vmul.f32 %v8660, %v6714
  %v8885 = vmul.f32 %v8661, %v6716
  %v8886 = vmul.f32 %v8662, %v6718
  %v8887 = vmul.f32 %v8663, %v6720
  %v8888 = vmul.f32 %v8664, %v6722
  %v8889 = vmul.f32 %v8665, %v6724
  %v8890 = vmul.f32 %v8666, %v6726
  %v8891 = vmul.f32 %v8667, %v6728
  %v8892 = vmul.f32 %v8668, %v6730
  %v8893 = vmul.f32 %v8669, %v6732
  %v8894 = vmul.f32 %v8670, %v6734
  %v8895 = vmul.f32 %v8671, %v6736
  %v8896 = vmul.f32 %v8672, %v6738
  %v8897 = vmul.f32 %v8673, %v6740
  %v8898 = vmul.f32 %v8674, %v6742
  %v8899 = vmul.f32 %v8675, %v6744
  %v8900 = vmul.f32 %v8676, %v6746
  %v8901 = vmul.f32 %v8677, %v6748
  %v8902 = vmul.f32 %v8678, %v6750
  %v8903 = vmul.f32 %v8679, %v6752
  %v8904 = vmul.f32 %v8680, %v6754
  %v8905 = vmul.f32 %v8681, %v6756
  %v8906 = vmul.f32 %v8682, %v6758
  %v8907 = vmul.f32 %v8683, %v6760
  %v8908 = vmul.f32 %v8684, %v6762
  %v8909 = vmul.f32 %v8685, %v6764
  %v8910 = vmul.f32 %v8686, %v6766
  %v8911 = vmul.f32 %v8687, %v6768
  %v8912 = vmul.f32 %v8688, %v6770
  %v8913 = vmul.f32 %v8689, %v6772
  %v8914 = vmul.f32 %v8690, %v6774
  %v8915 = vmul.f32 %v8691, %v6776
  %v8916 = vmul.f32 %v8692, %v6778
  %v8917 = vmul.f32 %v8693, %v6780
  %v8918 = vmul.f32 %v8694, %v6782
  %v8919 = vmul.f32 %v8695, %v6784
  %v8920 = vmul.f32 %v8696, %v6786
  %v8921 = vmul.f32 %v8697, %v6788
  %v8922 = vmul.f32 %v8698, %v6790
  %v8923 = vmul.f32 %v8699, %v6792
  %v8924 = vmul.f32 %v8700, %v6794
  %v8925 = vmul.f32 %v8701, %v6796
  %v8926 = vmul.f32 %v8702, %v6798
  %v8927 = vmul.f32 %v8703, %v6800
  %v8928 = vmul.f32 %v8704, %v6802
  %v8929 = vmul.f32 %v8705, %v6804
  %v8930 = vmul.f32 %v8706, %v6806
  %v8931 = vmul.f32 %v8707, %v6808
  %v8932 = vmul.f32 %v8708, %v6810
  %v8933 = vmul.f32 %v8709, %v6812
  %v8934 = vmul.f32 %v8710, %v6814
  %v8935 = vmul.f32 %v8711, %v6816
  %v8936 = vmul.f32 %v8712, %v6818
  %v8937 = vmul.f32 %v8713, %v6820
  %v8938 = vmul.f32 %v8714, %v6822
  %v8939 = vmul.f32 %v8715, %v6824
  %v8940 = vmul.f32 %v8716, %v6826
  %v8941 = vmul.f32 %v8717, %v6828
  %v8942 = vmul.f32 %v8718, %v6830
  %v8943 = vmul.f32 %v8719, %v6832
  %v8944 = vmul.f32 %v8720, %v6834
  %v8945 = vmul.f32 %v8721, %v6836
  %v8946 = vmul.f32 %v8722, %v6838
  %v8947 = vmul.f32 %v8723, %v6840
  %v8948 = vmul.f32 %v8724, %v6842
  %v8949 = vmul.f32 %v8725, %v6844
  %v8950 = vmul.f32 %v8726, %v6846
  %v8951 = vmul.f32 %v8727, %v6848
  %v8952 = vmul.f32 %v8728, %v6850
  %v8953 = vmul.f32 %v8729, %v6852
  %v8954 = vmul.f32 %v8730, %v6854
  %v8955 = vmul.f32 %v8731, %v6856
  %v8956 = vmul.f32 %v8732, %v6858
  %v8957 = vmul.f32 %v8733, %v6860
  %v8958 = vmul.f32 %v8734, %v6862
  %v8959 = vmul.f32 %v8735, %v6864
  %v8960 = vmul.f32 %v8736, %v6866
  %v8961 = vmul.f32 %v8737, %v6868
  %v8962 = vmul.f32 %v8738, %v6870
  %v8963 = vmul.f32 %v8739, %v6872
  %v8964 = vmul.f32 %v8740, %v6874
  %v8965 = vmul.f32 %v8741, %v6876
  %v8966 = vmul.f32 %v8742, %v6878
  %v8967 = vmul.f32 %v8743, %v6880
  %v8968 = vmul.f32 %v8744, %v6882
  %v8969 = vmul.f32 %v8745, %v6884
  %v8970 = vmul.f32 %v8746, %v6886
  %v8971 = vmul.f32 %v8747, %v6888
  %v8972 = vmul.f32 %v8748, %v6890
  %v8973 = vmul.f32 %v8749, %v6892
  %v8974 = vmul.f32 %v8750, %v6894
  %v8975 = vmul.f32 %v8751, %v6896
  %v8976 = vmul.f32 %v8752, %v6898
  %v8977 = vmul.f32 %v8753, %v6900
  %v8978 = vmul.f32 %v8754, %v6902
  %v8979 = vmul.f32 %v8755, %v6904
  %v8980 = vmul.f32 %v8756, %v6906
  %v8981 = vmul.f32 %v8757, %v6908
  %v8982 = vmul.f32 %v8758, %v6910
  %v8983 = vmul.f32 %v8759, %v6912
  %v8984 = vmul.f32 %v8760, %v6914
  %v8985 = vmul.f32 %v8761, %v6916
  %v8986 = vmul.f32 %v8762, %v6918
  %v8987 = vmul.f32 %v8763, %v6920
  %v8988 = vmul.f32 %v8764, %v6922
  %v8989 = vmul.f32 %v8765, %v6924
  %v8990 = vmul.f32 %v8766, %v6926
  %v8991 = vmul.f32 %v8767, %v6928
  %v8992 = vmul.f32 %v8768, %v6930
  %v8993 = vmul.f32 %v8769, %v6932
  %v8994 = vmul.f32 %v8770, %v6934
  %v8995 = vmul.f32 %v8771, %v6936
  %v8996 = vmul.f32 %v8772, %v6938
  %v8997 = vmul.f32 %v8773, %v6940
  %v8998 = vmul.f32 %v8774, %v6942
  %v8999 = vmul.f32 %v8775, %v6944
  %v9000 = vmul.f32 %v8776, %v6946
  %v9001 = vmul.f32 %v8777, %v6948
  %v9002 = vmul.f32 %v8778, %v6950
  %v9003 = vmul.f32 %v8779, %v6952
  %v9004 = vmul.f32 %v8780, %v6954
  %v9005 = vmul.f32 %v8781, %v6956
  %v9006 = vmul.f32 %v8782, %v6958
  %v9007 = vmul.f32 %v8783, %v6960
  %v9008 = vmul.f32 %v8784, %v6962
  %v9009 = vmul.f32 %v8785, %v6964
  %v9010 = vmul.f32 %v8786, %v6966
  %v9011 = vmul.f32 %v8787, %v6968
  %v9012 = vmul.f32 %v8788, %v6970
  %v9013 = vmul.f32 %v8789, %v6972
  %v9014 = vmul.f32 %v8790, %v6974
  %v9015 = vmul.f32 %v8791, %v6976
  %v9016 = vmul.f32 %v8792, %v6978
  %v9017 = vmul.f32 %v8793, %v6980
  %v9018 = vmul.f32 %v8794, %v6982
  %v9019 = vmul.f32 %v8795, %v6984
  %v9020 = vmul.f32 %v8796, %v6986
  %v9021 = vmul.f32 %v8797, %v6988
  %v9022 = vmul.f32 %v8798, %v6990
  %v9023 = vmul.f32 %v8799, %v6992
  %v9024 = vmul.f32 %v8800, %v6994
  %v9025 = vmul.f32 %v8801, %v6996
  %v9026 = vmul.f32 %v8802, %v6998
  %v9027 = vmul.f32 %v8803, %v7000
  %v9028 = vmul.f32 %v8804, %v7002
  %v9029 = vmul.f32 %v8805, %v7004
  %v9030 = vmul.f32 %v8806, %v7006
  %v9031 = vmul.f32 %v8807, %v7008
  %v9032 = vmul.f32 %v8808, %v7010
  %v9033 = vmul.f32 %v8809, %v7012
  %v9034 = vmul.f32 %v8810, %v7014
  %v9035 = vmul.f32 %v8811, %v7016
  %v9036 = vmul.f32 %v8812, %v7018
  %v9037 = vmul.f32 %v8813, %v7020
  %v9038 = vmul.f32 %v8814, %v7022
  %v9039 = vrot.slane %v8815, 4
  %v9040 = vadd.f32 %v8815, %v9039
  %v9041 = vrot.slane %v9040, 2
  %v9042 = vadd.f32 %v9040, %v9041
  %v9043 = vrot.slane %v9042, 1
  %v9044 = vadd.f32 %v9042, %v9043
  %v9045 = vrot.slane %v8816, 4
  %v9046 = vadd.f32 %v8816, %v9045
  %v9047 = vrot.slane %v9046, 2
  %v9048 = vadd.f32 %v9046, %v9047
  %v9049 = vrot.slane %v9048, 1
  %v9050 = vadd.f32 %v9048, %v9049
  %v9051 = vrot.slane %v8817, 4
  %v9052 = vadd.f32 %v8817, %v9051
  %v9053 = vrot.slane %v9052, 2
  %v9054 = vadd.f32 %v9052, %v9053
  %v9055 = vrot.slane %v9054, 1
  %v9056 = vadd.f32 %v9054, %v9055
  %v9057 = vrot.slane %v8818, 4
  %v9058 = vadd.f32 %v8818, %v9057
  %v9059 = vrot.slane %v9058, 2
  %v9060 = vadd.f32 %v9058, %v9059
  %v9061 = vrot.slane %v9060, 1
  %v9062 = vadd.f32 %v9060, %v9061
  %v9063 = vrot.slane %v8819, 4
  %v9064 = vadd.f32 %v8819, %v9063
  %v9065 = vrot.slane %v9064, 2
  %v9066 = vadd.f32 %v9064, %v9065
  %v9067 = vrot.slane %v9066, 1
  %v9068 = vadd.f32 %v9066, %v9067
  %v9069 = vrot.slane %v8820, 4
  %v9070 = vadd.f32 %v8820, %v9069
  %v9071 = vrot.slane %v9070, 2
  %v9072 = vadd.f32 %v9070, %v9071
  %v9073 = vrot.slane %v9072, 1
  %v9074 = vadd.f32 %v9072, %v9073
  %v9075 = vrot.slane %v8821, 4
  %v9076 = vadd.f32 %v8821, %v9075
  %v9077 = vrot.slane %v9076, 2
  %v9078 = vadd.f32 %v9076, %v9077
  %v9079 = vrot.slane %v9078, 1
  %v9080 = vadd.f32 %v9078, %v9079
  %v9081 = vrot.slane %v8822, 4
  %v9082 = vadd.f32 %v8822, %v9081
  %v9083 = vrot.slane %v9082, 2
  %v9084 = vadd.f32 %v9082, %v9083
  %v9085 = vrot.slane %v9084, 1
  %v9086 = vadd.f32 %v9084, %v9085
  %v9087 = vrot.slane %v8823, 4
  %v9088 = vadd.f32 %v8823, %v9087
  %v9089 = vrot.slane %v9088, 2
  %v9090 = vadd.f32 %v9088, %v9089
  %v9091 = vrot.slane %v9090, 1
  %v9092 = vadd.f32 %v9090, %v9091
  %v9093 = vrot.slane %v8824, 4
  %v9094 = vadd.f32 %v8824, %v9093
  %v9095 = vrot.slane %v9094, 2
  %v9096 = vadd.f32 %v9094, %v9095
  %v9097 = vrot.slane %v9096, 1
  %v9098 = vadd.f32 %v9096, %v9097
  %v9099 = vrot.slane %v8825, 4
  %v9100 = vadd.f32 %v8825, %v9099
  %v9101 = vrot.slane %v9100, 2
  %v9102 = vadd.f32 %v9100, %v9101
  %v9103 = vrot.slane %v9102, 1
  %v9104 = vadd.f32 %v9102, %v9103
  %v9105 = vrot.slane %v8826, 4
  %v9106 = vadd.f32 %v8826, %v9105
  %v9107 = vrot.slane %v9106, 2
  %v9108 = vadd.f32 %v9106, %v9107
  %v9109 = vrot.slane %v9108, 1
  %v9110 = vadd.f32 %v9108, %v9109
  %v9111 = vrot.slane %v8827, 4
  %v9112 = vadd.f32 %v8827, %v9111
  %v9113 = vrot.slane %v9112, 2
  %v9114 = vadd.f32 %v9112, %v9113
  %v9115 = vrot.slane %v9114, 1
  %v9116 = vadd.f32 %v9114, %v9115
  %v9117 = vrot.slane %v8828, 4
  %v9118 = vadd.f32 %v8828, %v9117
  %v9119 = vrot.slane %v9118, 2
  %v9120 = vadd.f32 %v9118, %v9119
  %v9121 = vrot.slane %v9120, 1
  %v9122 = vadd.f32 %v9120, %v9121
  %v9123 = vrot.slane %v8829, 4
  %v9124 = vadd.f32 %v8829, %v9123
  %v9125 = vrot.slane %v9124, 2
  %v9126 = vadd.f32 %v9124, %v9125
  %v9127 = vrot.slane %v9126, 1
  %v9128 = vadd.f32 %v9126, %v9127
  %v9129 = vrot.slane %v8830, 4
  %v9130 = vadd.f32 %v8830, %v9129
  %v9131 = vrot.slane %v9130, 2
  %v9132 = vadd.f32 %v9130, %v9131
  %v9133 = vrot.slane %v9132, 1
  %v9134 = vadd.f32 %v9132, %v9133
  %v9135 = vrot.slane %v8831, 4
  %v9136 = vadd.f32 %v8831, %v9135
  %v9137 = vrot.slane %v9136, 2
  %v9138 = vadd.f32 %v9136, %v9137
  %v9139 = vrot.slane %v9138, 1
  %v9140 = vadd.f32 %v9138, %v9139
  %v9141 = vrot.slane %v8832, 4
  %v9142 = vadd.f32 %v8832, %v9141
  %v9143 = vrot.slane %v9142, 2
  %v9144 = vadd.f32 %v9142, %v9143
  %v9145 = vrot.slane %v9144, 1
  %v9146 = vadd.f32 %v9144, %v9145
  %v9147 = vrot.slane %v8833, 4
  %v9148 = vadd.f32 %v8833, %v9147
  %v9149 = vrot.slane %v9148, 2
  %v9150 = vadd.f32 %v9148, %v9149
  %v9151 = vrot.slane %v9150, 1
  %v9152 = vadd.f32 %v9150, %v9151
  %v9153 = vrot.slane %v8834, 4
  %v9154 = vadd.f32 %v8834, %v9153
  %v9155 = vrot.slane %v9154, 2
  %v9156 = vadd.f32 %v9154, %v9155
  %v9157 = vrot.slane %v9156, 1
  %v9158 = vadd.f32 %v9156, %v9157
  %v9159 = vrot.slane %v8835, 4
  %v9160 = vadd.f32 %v8835, %v9159
  %v9161 = vrot.slane %v9160, 2
  %v9162 = vadd.f32 %v9160, %v9161
  %v9163 = vrot.slane %v9162, 1
  %v9164 = vadd.f32 %v9162, %v9163
  %v9165 = vrot.slane %v8836, 4
  %v9166 = vadd.f32 %v8836, %v9165
  %v9167 = vrot.slane %v9166, 2
  %v9168 = vadd.f32 %v9166, %v9167
  %v9169 = vrot.slane %v9168, 1
  %v9170 = vadd.f32 %v9168, %v9169
  %v9171 = vrot.slane %v8837, 4
  %v9172 = vadd.f32 %v8837, %v9171
  %v9173 = vrot.slane %v9172, 2
  %v9174 = vadd.f32 %v9172, %v9173
  %v9175 = vrot.slane %v9174, 1
  %v9176 = vadd.f32 %v9174, %v9175
  %v9177 = vrot.slane %v8838, 4
  %v9178 = vadd.f32 %v8838, %v9177
  %v9179 = vrot.slane %v9178, 2
  %v9180 = vadd.f32 %v9178, %v9179
  %v9181 = vrot.slane %v9180, 1
  %v9182 = vadd.f32 %v9180, %v9181
  %v9183 = vrot.slane %v8839, 4
  %v9184 = vadd.f32 %v8839, %v9183
  %v9185 = vrot.slane %v9184, 2
  %v9186 = vadd.f32 %v9184, %v9185
  %v9187 = vrot.slane %v9186, 1
  %v9188 = vadd.f32 %v9186, %v9187
  %v9189 = vrot.slane %v8840, 4
  %v9190 = vadd.f32 %v8840, %v9189
  %v9191 = vrot.slane %v9190, 2
  %v9192 = vadd.f32 %v9190, %v9191
  %v9193 = vrot.slane %v9192, 1
  %v9194 = vadd.f32 %v9192, %v9193
  %v9195 = vrot.slane %v8841, 4
  %v9196 = vadd.f32 %v8841, %v9195
  %v9197 = vrot.slane %v9196, 2
  %v9198 = vadd.f32 %v9196, %v9197
  %v9199 = vrot.slane %v9198, 1
  %v9200 = vadd.f32 %v9198, %v9199
  %v9201 = vrot.slane %v8842, 4
  %v9202 = vadd.f32 %v8842, %v9201
  %v9203 = vrot.slane %v9202, 2
  %v9204 = vadd.f32 %v9202, %v9203
  %v9205 = vrot.slane %v9204, 1
  %v9206 = vadd.f32 %v9204, %v9205
  %v9207 = vrot.slane %v8843, 4
  %v9208 = vadd.f32 %v8843, %v9207
  %v9209 = vrot.slane %v9208, 2
  %v9210 = vadd.f32 %v9208, %v9209
  %v9211 = vrot.slane %v9210, 1
  %v9212 = vadd.f32 %v9210, %v9211
  %v9213 = vrot.slane %v8844, 4
  %v9214 = vadd.f32 %v8844, %v9213
  %v9215 = vrot.slane %v9214, 2
  %v9216 = vadd.f32 %v9214, %v9215
  %v9217 = vrot.slane %v9216, 1
  %v9218 = vadd.f32 %v9216, %v9217
  %v9219 = vrot.slane %v8845, 4
  %v9220 = vadd.f32 %v8845, %v9219
  %v9221 = vrot.slane %v9220, 2
  %v9222 = vadd.f32 %v9220, %v9221
  %v9223 = vrot.slane %v9222, 1
  %v9224 = vadd.f32 %v9222, %v9223
  %v9225 = vrot.slane %v8846, 4
  %v9226 = vadd.f32 %v8846, %v9225
  %v9227 = vrot.slane %v9226, 2
  %v9228 = vadd.f32 %v9226, %v9227
  %v9229 = vrot.slane %v9228, 1
  %v9230 = vadd.f32 %v9228, %v9229
  %v9231 = vrot.slane %v8847, 4
  %v9232 = vadd.f32 %v8847, %v9231
  %v9233 = vrot.slane %v9232, 2
  %v9234 = vadd.f32 %v9232, %v9233
  %v9235 = vrot.slane %v9234, 1
  %v9236 = vadd.f32 %v9234, %v9235
  %v9237 = vrot.slane %v8848, 4
  %v9238 = vadd.f32 %v8848, %v9237
  %v9239 = vrot.slane %v9238, 2
  %v9240 = vadd.f32 %v9238, %v9239
  %v9241 = vrot.slane %v9240, 1
  %v9242 = vadd.f32 %v9240, %v9241
  %v9243 = vrot.slane %v8849, 4
  %v9244 = vadd.f32 %v8849, %v9243
  %v9245 = vrot.slane %v9244, 2
  %v9246 = vadd.f32 %v9244, %v9245
  %v9247 = vrot.slane %v9246, 1
  %v9248 = vadd.f32 %v9246, %v9247
  %v9249 = vrot.slane %v8850, 4
  %v9250 = vadd.f32 %v8850, %v9249
  %v9251 = vrot.slane %v9250, 2
  %v9252 = vadd.f32 %v9250, %v9251
  %v9253 = vrot.slane %v9252, 1
  %v9254 = vadd.f32 %v9252, %v9253
  %v9255 = vrot.slane %v8851, 4
  %v9256 = vadd.f32 %v8851, %v9255
  %v9257 = vrot.slane %v9256, 2
  %v9258 = vadd.f32 %v9256, %v9257
  %v9259 = vrot.slane %v9258, 1
  %v9260 = vadd.f32 %v9258, %v9259
  %v9261 = vrot.slane %v8852, 4
  %v9262 = vadd.f32 %v8852, %v9261
  %v9263 = vrot.slane %v9262, 2
  %v9264 = vadd.f32 %v9262, %v9263
  %v9265 = vrot.slane %v9264, 1
  %v9266 = vadd.f32 %v9264, %v9265
  %v9267 = vrot.slane %v8853, 4
  %v9268 = vadd.f32 %v8853, %v9267
  %v9269 = vrot.slane %v9268, 2
  %v9270 = vadd.f32 %v9268, %v9269
  %v9271 = vrot.slane %v9270, 1
  %v9272 = vadd.f32 %v9270, %v9271
  %v9273 = vrot.slane %v8854, 4
  %v9274 = vadd.f32 %v8854, %v9273
  %v9275 = vrot.slane %v9274, 2
  %v9276 = vadd.f32 %v9274, %v9275
  %v9277 = vrot.slane %v9276, 1
  %v9278 = vadd.f32 %v9276, %v9277
  %v9279 = vrot.slane %v8855, 4
  %v9280 = vadd.f32 %v8855, %v9279
  %v9281 = vrot.slane %v9280, 2
  %v9282 = vadd.f32 %v9280, %v9281
  %v9283 = vrot.slane %v9282, 1
  %v9284 = vadd.f32 %v9282, %v9283
  %v9285 = vrot.slane %v8856, 4
  %v9286 = vadd.f32 %v8856, %v9285
  %v9287 = vrot.slane %v9286, 2
  %v9288 = vadd.f32 %v9286, %v9287
  %v9289 = vrot.slane %v9288, 1
  %v9290 = vadd.f32 %v9288, %v9289
  %v9291 = vrot.slane %v8857, 4
  %v9292 = vadd.f32 %v8857, %v9291
  %v9293 = vrot.slane %v9292, 2
  %v9294 = vadd.f32 %v9292, %v9293
  %v9295 = vrot.slane %v9294, 1
  %v9296 = vadd.f32 %v9294, %v9295
  %v9297 = vrot.slane %v8858, 4
  %v9298 = vadd.f32 %v8858, %v9297
  %v9299 = vrot.slane %v9298, 2
  %v9300 = vadd.f32 %v9298, %v9299
  %v9301 = vrot.slane %v9300, 1
  %v9302 = vadd.f32 %v9300, %v9301
  %v9303 = vrot.slane %v8859, 4
  %v9304 = vadd.f32 %v8859, %v9303
  %v9305 = vrot.slane %v9304, 2
  %v9306 = vadd.f32 %v9304, %v9305
  %v9307 = vrot.slane %v9306, 1
  %v9308 = vadd.f32 %v9306, %v9307
  %v9309 = vrot.slane %v8860, 4
  %v9310 = vadd.f32 %v8860, %v9309
  %v9311 = vrot.slane %v9310, 2
  %v9312 = vadd.f32 %v9310, %v9311
  %v9313 = vrot.slane %v9312, 1
  %v9314 = vadd.f32 %v9312, %v9313
  %v9315 = vrot.slane %v8861, 4
  %v9316 = vadd.f32 %v8861, %v9315
  %v9317 = vrot.slane %v9316, 2
  %v9318 = vadd.f32 %v9316, %v9317
  %v9319 = vrot.slane %v9318, 1
  %v9320 = vadd.f32 %v9318, %v9319
  %v9321 = vrot.slane %v8862, 4
  %v9322 = vadd.f32 %v8862, %v9321
  %v9323 = vrot.slane %v9322, 2
  %v9324 = vadd.f32 %v9322, %v9323
  %v9325 = vrot.slane %v9324, 1
  %v9326 = vadd.f32 %v9324, %v9325
  %v9327 = vrot.slane %v8863, 4
  %v9328 = vadd.f32 %v8863, %v9327
  %v9329 = vrot.slane %v9328, 2
  %v9330 = vadd.f32 %v9328, %v9329
  %v9331 = vrot.slane %v9330, 1
  %v9332 = vadd.f32 %v9330, %v9331
  %v9333 = vrot.slane %v8864, 4
  %v9334 = vadd.f32 %v8864, %v9333
  %v9335 = vrot.slane %v9334, 2
  %v9336 = vadd.f32 %v9334, %v9335
  %v9337 = vrot.slane %v9336, 1
  %v9338 = vadd.f32 %v9336, %v9337
  %v9339 = vrot.slane %v8865, 4
  %v9340 = vadd.f32 %v8865, %v9339
  %v9341 = vrot.slane %v9340, 2
  %v9342 = vadd.f32 %v9340, %v9341
  %v9343 = vrot.slane %v9342, 1
  %v9344 = vadd.f32 %v9342, %v9343
  %v9345 = vrot.slane %v8866, 4
  %v9346 = vadd.f32 %v8866, %v9345
  %v9347 = vrot.slane %v9346, 2
  %v9348 = vadd.f32 %v9346, %v9347
  %v9349 = vrot.slane %v9348, 1
  %v9350 = vadd.f32 %v9348, %v9349
  %v9351 = vrot.slane %v8867, 4
  %v9352 = vadd.f32 %v8867, %v9351
  %v9353 = vrot.slane %v9352, 2
  %v9354 = vadd.f32 %v9352, %v9353
  %v9355 = vrot.slane %v9354, 1
  %v9356 = vadd.f32 %v9354, %v9355
  %v9357 = vrot.slane %v8868, 4
  %v9358 = vadd.f32 %v8868, %v9357
  %v9359 = vrot.slane %v9358, 2
  %v9360 = vadd.f32 %v9358, %v9359
  %v9361 = vrot.slane %v9360, 1
  %v9362 = vadd.f32 %v9360, %v9361
  %v9363 = vrot.slane %v8869, 4
  %v9364 = vadd.f32 %v8869, %v9363
  %v9365 = vrot.slane %v9364, 2
  %v9366 = vadd.f32 %v9364, %v9365
  %v9367 = vrot.slane %v9366, 1
  %v9368 = vadd.f32 %v9366, %v9367
  %v9369 = vrot.slane %v8870, 4
  %v9370 = vadd.f32 %v8870, %v9369
  %v9371 = vrot.slane %v9370, 2
  %v9372 = vadd.f32 %v9370, %v9371
  %v9373 = vrot.slane %v9372, 1
  %v9374 = vadd.f32 %v9372, %v9373
  %v9375 = vrot.slane %v8871, 4
  %v9376 = vadd.f32 %v8871, %v9375
  %v9377 = vrot.slane %v9376, 2
  %v9378 = vadd.f32 %v9376, %v9377
  %v9379 = vrot.slane %v9378, 1
  %v9380 = vadd.f32 %v9378, %v9379
  %v9381 = vrot.slane %v8872, 4
  %v9382 = vadd.f32 %v8872, %v9381
  %v9383 = vrot.slane %v9382, 2
  %v9384 = vadd.f32 %v9382, %v9383
  %v9385 = vrot.slane %v9384, 1
  %v9386 = vadd.f32 %v9384, %v9385
  %v9387 = vrot.slane %v8873, 4
  %v9388 = vadd.f32 %v8873, %v9387
  %v9389 = vrot.slane %v9388, 2
  %v9390 = vadd.f32 %v9388, %v9389
  %v9391 = vrot.slane %v9390, 1
  %v9392 = vadd.f32 %v9390, %v9391
  %v9393 = vrot.slane %v8874, 4
  %v9394 = vadd.f32 %v8874, %v9393
  %v9395 = vrot.slane %v9394, 2
  %v9396 = vadd.f32 %v9394, %v9395
  %v9397 = vrot.slane %v9396, 1
  %v9398 = vadd.f32 %v9396, %v9397
  %v9399 = vrot.slane %v8875, 4
  %v9400 = vadd.f32 %v8875, %v9399
  %v9401 = vrot.slane %v9400, 2
  %v9402 = vadd.f32 %v9400, %v9401
  %v9403 = vrot.slane %v9402, 1
  %v9404 = vadd.f32 %v9402, %v9403
  %v9405 = vrot.slane %v8876, 4
  %v9406 = vadd.f32 %v8876, %v9405
  %v9407 = vrot.slane %v9406, 2
  %v9408 = vadd.f32 %v9406, %v9407
  %v9409 = vrot.slane %v9408, 1
  %v9410 = vadd.f32 %v9408, %v9409
  %v9411 = vrot.slane %v8877, 4
  %v9412 = vadd.f32 %v8877, %v9411
  %v9413 = vrot.slane %v9412, 2
  %v9414 = vadd.f32 %v9412, %v9413
  %v9415 = vrot.slane %v9414, 1
  %v9416 = vadd.f32 %v9414, %v9415
  %v9417 = vrot.slane %v8878, 4
  %v9418 = vadd.f32 %v8878, %v9417
  %v9419 = vrot.slane %v9418, 2
  %v9420 = vadd.f32 %v9418, %v9419
  %v9421 = vrot.slane %v9420, 1
  %v9422 = vadd.f32 %v9420, %v9421
  %v9423 = vrot.slane %v8879, 4
  %v9424 = vadd.f32 %v8879, %v9423
  %v9425 = vrot.slane %v9424, 2
  %v9426 = vadd.f32 %v9424, %v9425
  %v9427 = vrot.slane %v9426, 1
  %v9428 = vadd.f32 %v9426, %v9427
  %v9429 = vrot.slane %v8880, 4
  %v9430 = vadd.f32 %v8880, %v9429
  %v9431 = vrot.slane %v9430, 2
  %v9432 = vadd.f32 %v9430, %v9431
  %v9433 = vrot.slane %v9432, 1
  %v9434 = vadd.f32 %v9432, %v9433
  %v9435 = vrot.slane %v8881, 4
  %v9436 = vadd.f32 %v8881, %v9435
  %v9437 = vrot.slane %v9436, 2
  %v9438 = vadd.f32 %v9436, %v9437
  %v9439 = vrot.slane %v9438, 1
  %v9440 = vadd.f32 %v9438, %v9439
  %v9441 = vrot.slane %v8882, 4
  %v9442 = vadd.f32 %v8882, %v9441
  %v9443 = vrot.slane %v9442, 2
  %v9444 = vadd.f32 %v9442, %v9443
  %v9445 = vrot.slane %v9444, 1
  %v9446 = vadd.f32 %v9444, %v9445
  %v9447 = vrot.slane %v8883, 4
  %v9448 = vadd.f32 %v8883, %v9447
  %v9449 = vrot.slane %v9448, 2
  %v9450 = vadd.f32 %v9448, %v9449
  %v9451 = vrot.slane %v9450, 1
  %v9452 = vadd.f32 %v9450, %v9451
  %v9453 = vrot.slane %v8884, 4
  %v9454 = vadd.f32 %v8884, %v9453
  %v9455 = vrot.slane %v9454, 2
  %v9456 = vadd.f32 %v9454, %v9455
  %v9457 = vrot.slane %v9456, 1
  %v9458 = vadd.f32 %v9456, %v9457
  %v9459 = vrot.slane %v8885, 4
  %v9460 = vadd.f32 %v8885, %v9459
  %v9461 = vrot.slane %v9460, 2
  %v9462 = vadd.f32 %v9460, %v9461
  %v9463 = vrot.slane %v9462, 1
  %v9464 = vadd.f32 %v9462, %v9463
  %v9465 = vrot.slane %v8886, 4
  %v9466 = vadd.f32 %v8886, %v9465
  %v9467 = vrot.slane %v9466, 2
  %v9468 = vadd.f32 %v9466, %v9467
  %v9469 = vrot.slane %v9468, 1
  %v9470 = vadd.f32 %v9468, %v9469
  %v9471 = vrot.slane %v8887, 4
  %v9472 = vadd.f32 %v8887, %v9471
  %v9473 = vrot.slane %v9472, 2
  %v9474 = vadd.f32 %v9472, %v9473
  %v9475 = vrot.slane %v9474, 1
  %v9476 = vadd.f32 %v9474, %v9475
  %v9477 = vrot.slane %v8888, 4
  %v9478 = vadd.f32 %v8888, %v9477
  %v9479 = vrot.slane %v9478, 2
  %v9480 = vadd.f32 %v9478, %v9479
  %v9481 = vrot.slane %v9480, 1
  %v9482 = vadd.f32 %v9480, %v9481
  %v9483 = vrot.slane %v8889, 4
  %v9484 = vadd.f32 %v8889, %v9483
  %v9485 = vrot.slane %v9484, 2
  %v9486 = vadd.f32 %v9484, %v9485
  %v9487 = vrot.slane %v9486, 1
  %v9488 = vadd.f32 %v9486, %v9487
  %v9489 = vrot.slane %v8890, 4
  %v9490 = vadd.f32 %v8890, %v9489
  %v9491 = vrot.slane %v9490, 2
  %v9492 = vadd.f32 %v9490, %v9491
  %v9493 = vrot.slane %v9492, 1
  %v9494 = vadd.f32 %v9492, %v9493
  %v9495 = vrot.slane %v8891, 4
  %v9496 = vadd.f32 %v8891, %v9495
  %v9497 = vrot.slane %v9496, 2
  %v9498 = vadd.f32 %v9496, %v9497
  %v9499 = vrot.slane %v9498, 1
  %v9500 = vadd.f32 %v9498, %v9499
  %v9501 = vrot.slane %v8892, 4
  %v9502 = vadd.f32 %v8892, %v9501
  %v9503 = vrot.slane %v9502, 2
  %v9504 = vadd.f32 %v9502, %v9503
  %v9505 = vrot.slane %v9504, 1
  %v9506 = vadd.f32 %v9504, %v9505
  %v9507 = vrot.slane %v8893, 4
  %v9508 = vadd.f32 %v8893, %v9507
  %v9509 = vrot.slane %v9508, 2
  %v9510 = vadd.f32 %v9508, %v9509
  %v9511 = vrot.slane %v9510, 1
  %v9512 = vadd.f32 %v9510, %v9511
  %v9513 = vrot.slane %v8894, 4
  %v9514 = vadd.f32 %v8894, %v9513
  %v9515 = vrot.slane %v9514, 2
  %v9516 = vadd.f32 %v9514, %v9515
  %v9517 = vrot.slane %v9516, 1
  %v9518 = vadd.f32 %v9516, %v9517
  %v9519 = vrot.slane %v8895, 4
  %v9520 = vadd.f32 %v8895, %v9519
  %v9521 = vrot.slane %v9520, 2
  %v9522 = vadd.f32 %v9520, %v9521
  %v9523 = vrot.slane %v9522, 1
  %v9524 = vadd.f32 %v9522, %v9523
  %v9525 = vrot.slane %v8896, 4
  %v9526 = vadd.f32 %v8896, %v9525
  %v9527 = vrot.slane %v9526, 2
  %v9528 = vadd.f32 %v9526, %v9527
  %v9529 = vrot.slane %v9528, 1
  %v9530 = vadd.f32 %v9528, %v9529
  %v9531 = vrot.slane %v8897, 4
  %v9532 = vadd.f32 %v8897, %v9531
  %v9533 = vrot.slane %v9532, 2
  %v9534 = vadd.f32 %v9532, %v9533
  %v9535 = vrot.slane %v9534, 1
  %v9536 = vadd.f32 %v9534, %v9535
  %v9537 = vrot.slane %v8898, 4
  %v9538 = vadd.f32 %v8898, %v9537
  %v9539 = vrot.slane %v9538, 2
  %v9540 = vadd.f32 %v9538, %v9539
  %v9541 = vrot.slane %v9540, 1
  %v9542 = vadd.f32 %v9540, %v9541
  %v9543 = vrot.slane %v8899, 4
  %v9544 = vadd.f32 %v8899, %v9543
  %v9545 = vrot.slane %v9544, 2
  %v9546 = vadd.f32 %v9544, %v9545
  %v9547 = vrot.slane %v9546, 1
  %v9548 = vadd.f32 %v9546, %v9547
  %v9549 = vrot.slane %v8900, 4
  %v9550 = vadd.f32 %v8900, %v9549
  %v9551 = vrot.slane %v9550, 2
  %v9552 = vadd.f32 %v9550, %v9551
  %v9553 = vrot.slane %v9552, 1
  %v9554 = vadd.f32 %v9552, %v9553
  %v9555 = vrot.slane %v8901, 4
  %v9556 = vadd.f32 %v8901, %v9555
  %v9557 = vrot.slane %v9556, 2
  %v9558 = vadd.f32 %v9556, %v9557
  %v9559 = vrot.slane %v9558, 1
  %v9560 = vadd.f32 %v9558, %v9559
  %v9561 = vrot.slane %v8902, 4
  %v9562 = vadd.f32 %v8902, %v9561
  %v9563 = vrot.slane %v9562, 2
  %v9564 = vadd.f32 %v9562, %v9563
  %v9565 = vrot.slane %v9564, 1
  %v9566 = vadd.f32 %v9564, %v9565
  %v9567 = vrot.slane %v8903, 4
  %v9568 = vadd.f32 %v8903, %v9567
  %v9569 = vrot.slane %v9568, 2
  %v9570 = vadd.f32 %v9568, %v9569
  %v9571 = vrot.slane %v9570, 1
  %v9572 = vadd.f32 %v9570, %v9571
  %v9573 = vrot.slane %v8904, 4
  %v9574 = vadd.f32 %v8904, %v9573
  %v9575 = vrot.slane %v9574, 2
  %v9576 = vadd.f32 %v9574, %v9575
  %v9577 = vrot.slane %v9576, 1
  %v9578 = vadd.f32 %v9576, %v9577
  %v9579 = vrot.slane %v8905, 4
  %v9580 = vadd.f32 %v8905, %v9579
  %v9581 = vrot.slane %v9580, 2
  %v9582 = vadd.f32 %v9580, %v9581
  %v9583 = vrot.slane %v9582, 1
  %v9584 = vadd.f32 %v9582, %v9583
  %v9585 = vrot.slane %v8906, 4
  %v9586 = vadd.f32 %v8906, %v9585
  %v9587 = vrot.slane %v9586, 2
  %v9588 = vadd.f32 %v9586, %v9587
  %v9589 = vrot.slane %v9588, 1
  %v9590 = vadd.f32 %v9588, %v9589
  %v9591 = vrot.slane %v8907, 4
  %v9592 = vadd.f32 %v8907, %v9591
  %v9593 = vrot.slane %v9592, 2
  %v9594 = vadd.f32 %v9592, %v9593
  %v9595 = vrot.slane %v9594, 1
  %v9596 = vadd.f32 %v9594, %v9595
  %v9597 = vrot.slane %v8908, 4
  %v9598 = vadd.f32 %v8908, %v9597
  %v9599 = vrot.slane %v9598, 2
  %v9600 = vadd.f32 %v9598, %v9599
  %v9601 = vrot.slane %v9600, 1
  %v9602 = vadd.f32 %v9600, %v9601
  %v9603 = vrot.slane %v8909, 4
  %v9604 = vadd.f32 %v8909, %v9603
  %v9605 = vrot.slane %v9604, 2
  %v9606 = vadd.f32 %v9604, %v9605
  %v9607 = vrot.slane %v9606, 1
  %v9608 = vadd.f32 %v9606, %v9607
  %v9609 = vrot.slane %v8910, 4
  %v9610 = vadd.f32 %v8910, %v9609
  %v9611 = vrot.slane %v9610, 2
  %v9612 = vadd.f32 %v9610, %v9611
  %v9613 = vrot.slane %v9612, 1
  %v9614 = vadd.f32 %v9612, %v9613
  %v9615 = vrot.slane %v8911, 4
  %v9616 = vadd.f32 %v8911, %v9615
  %v9617 = vrot.slane %v9616, 2
  %v9618 = vadd.f32 %v9616, %v9617
  %v9619 = vrot.slane %v9618, 1
  %v9620 = vadd.f32 %v9618, %v9619
  %v9621 = vrot.slane %v8912, 4
  %v9622 = vadd.f32 %v8912, %v9621
  %v9623 = vrot.slane %v9622, 2
  %v9624 = vadd.f32 %v9622, %v9623
  %v9625 = vrot.slane %v9624, 1
  %v9626 = vadd.f32 %v9624, %v9625
  %v9627 = vrot.slane %v8913, 4
  %v9628 = vadd.f32 %v8913, %v9627
  %v9629 = vrot.slane %v9628, 2
  %v9630 = vadd.f32 %v9628, %v9629
  %v9631 = vrot.slane %v9630, 1
  %v9632 = vadd.f32 %v9630, %v9631
  %v9633 = vrot.slane %v8914, 4
  %v9634 = vadd.f32 %v8914, %v9633
  %v9635 = vrot.slane %v9634, 2
  %v9636 = vadd.f32 %v9634, %v9635
  %v9637 = vrot.slane %v9636, 1
  %v9638 = vadd.f32 %v9636, %v9637
  %v9639 = vrot.slane %v8915, 4
  %v9640 = vadd.f32 %v8915, %v9639
  %v9641 = vrot.slane %v9640, 2
  %v9642 = vadd.f32 %v9640, %v9641
  %v9643 = vrot.slane %v9642, 1
  %v9644 = vadd.f32 %v9642, %v9643
  %v9645 = vrot.slane %v8916, 4
  %v9646 = vadd.f32 %v8916, %v9645
  %v9647 = vrot.slane %v9646, 2
  %v9648 = vadd.f32 %v9646, %v9647
  %v9649 = vrot.slane %v9648, 1
  %v9650 = vadd.f32 %v9648, %v9649
  %v9651 = vrot.slane %v8917, 4
  %v9652 = vadd.f32 %v8917, %v9651
  %v9653 = vrot.slane %v9652, 2
  %v9654 = vadd.f32 %v9652, %v9653
  %v9655 = vrot.slane %v9654, 1
  %v9656 = vadd.f32 %v9654, %v9655
  %v9657 = vrot.slane %v8918, 4
  %v9658 = vadd.f32 %v8918, %v9657
  %v9659 = vrot.slane %v9658, 2
  %v9660 = vadd.f32 %v9658, %v9659
  %v9661 = vrot.slane %v9660, 1
  %v9662 = vadd.f32 %v9660, %v9661
  %v9663 = vrot.slane %v8919, 4
  %v9664 = vadd.f32 %v8919, %v9663
  %v9665 = vrot.slane %v9664, 2
  %v9666 = vadd.f32 %v9664, %v9665
  %v9667 = vrot.slane %v9666, 1
  %v9668 = vadd.f32 %v9666, %v9667
  %v9669 = vrot.slane %v8920, 4
  %v9670 = vadd.f32 %v8920, %v9669
  %v9671 = vrot.slane %v9670, 2
  %v9672 = vadd.f32 %v9670, %v9671
  %v9673 = vrot.slane %v9672, 1
  %v9674 = vadd.f32 %v9672, %v9673
  %v9675 = vrot.slane %v8921, 4
  %v9676 = vadd.f32 %v8921, %v9675
  %v9677 = vrot.slane %v9676, 2
  %v9678 = vadd.f32 %v9676, %v9677
  %v9679 = vrot.slane %v9678, 1
  %v9680 = vadd.f32 %v9678, %v9679
  %v9681 = vrot.slane %v8922, 4
  %v9682 = vadd.f32 %v8922, %v9681
  %v9683 = vrot.slane %v9682, 2
  %v9684 = vadd.f32 %v9682, %v9683
  %v9685 = vrot.slane %v9684, 1
  %v9686 = vadd.f32 %v9684, %v9685
  %v9687 = vrot.slane %v8923, 4
  %v9688 = vadd.f32 %v8923, %v9687
  %v9689 = vrot.slane %v9688, 2
  %v9690 = vadd.f32 %v9688, %v9689
  %v9691 = vrot.slane %v9690, 1
  %v9692 = vadd.f32 %v9690, %v9691
  %v9693 = vrot.slane %v8924, 4
  %v9694 = vadd.f32 %v8924, %v9693
  %v9695 = vrot.slane %v9694, 2
  %v9696 = vadd.f32 %v9694, %v9695
  %v9697 = vrot.slane %v9696, 1
  %v9698 = vadd.f32 %v9696, %v9697
  %v9699 = vrot.slane %v8925, 4
  %v9700 = vadd.f32 %v8925, %v9699
  %v9701 = vrot.slane %v9700, 2
  %v9702 = vadd.f32 %v9700, %v9701
  %v9703 = vrot.slane %v9702, 1
  %v9704 = vadd.f32 %v9702, %v9703
  %v9705 = vrot.slane %v8926, 4
  %v9706 = vadd.f32 %v8926, %v9705
  %v9707 = vrot.slane %v9706, 2
  %v9708 = vadd.f32 %v9706, %v9707
  %v9709 = vrot.slane %v9708, 1
  %v9710 = vadd.f32 %v9708, %v9709
  %v9711 = vrot.slane %v8927, 4
  %v9712 = vadd.f32 %v8927, %v9711
  %v9713 = vrot.slane %v9712, 2
  %v9714 = vadd.f32 %v9712, %v9713
  %v9715 = vrot.slane %v9714, 1
  %v9716 = vadd.f32 %v9714, %v9715
  %v9717 = vrot.slane %v8928, 4
  %v9718 = vadd.f32 %v8928, %v9717
  %v9719 = vrot.slane %v9718, 2
  %v9720 = vadd.f32 %v9718, %v9719
  %v9721 = vrot.slane %v9720, 1
  %v9722 = vadd.f32 %v9720, %v9721
  %v9723 = vrot.slane %v8929, 4
  %v9724 = vadd.f32 %v8929, %v9723
  %v9725 = vrot.slane %v9724, 2
  %v9726 = vadd.f32 %v9724, %v9725
  %v9727 = vrot.slane %v9726, 1
  %v9728 = vadd.f32 %v9726, %v9727
  %v9729 = vrot.slane %v8930, 4
  %v9730 = vadd.f32 %v8930, %v9729
  %v9731 = vrot.slane %v9730, 2
  %v9732 = vadd.f32 %v9730, %v9731
  %v9733 = vrot.slane %v9732, 1
  %v9734 = vadd.f32 %v9732, %v9733
  %v9735 = vrot.slane %v8931, 4
  %v9736 = vadd.f32 %v8931, %v9735
  %v9737 = vrot.slane %v9736, 2
  %v9738 = vadd.f32 %v9736, %v9737
  %v9739 = vrot.slane %v9738, 1
  %v9740 = vadd.f32 %v9738, %v9739
  %v9741 = vrot.slane %v8932, 4
  %v9742 = vadd.f32 %v8932, %v9741
  %v9743 = vrot.slane %v9742, 2
  %v9744 = vadd.f32 %v9742, %v9743
  %v9745 = vrot.slane %v9744, 1
  %v9746 = vadd.f32 %v9744, %v9745
  %v9747 = vrot.slane %v8933, 4
  %v9748 = vadd.f32 %v8933, %v9747
  %v9749 = vrot.slane %v9748, 2
  %v9750 = vadd.f32 %v9748, %v9749
  %v9751 = vrot.slane %v9750, 1
  %v9752 = vadd.f32 %v9750, %v9751
  %v9753 = vrot.slane %v8934, 4
  %v9754 = vadd.f32 %v8934, %v9753
  %v9755 = vrot.slane %v9754, 2
  %v9756 = vadd.f32 %v9754, %v9755
  %v9757 = vrot.slane %v9756, 1
  %v9758 = vadd.f32 %v9756, %v9757
  %v9759 = vrot.slane %v8935, 4
  %v9760 = vadd.f32 %v8935, %v9759
  %v9761 = vrot.slane %v9760, 2
  %v9762 = vadd.f32 %v9760, %v9761
  %v9763 = vrot.slane %v9762, 1
  %v9764 = vadd.f32 %v9762, %v9763
  %v9765 = vrot.slane %v8936, 4
  %v9766 = vadd.f32 %v8936, %v9765
  %v9767 = vrot.slane %v9766, 2
  %v9768 = vadd.f32 %v9766, %v9767
  %v9769 = vrot.slane %v9768, 1
  %v9770 = vadd.f32 %v9768, %v9769
  %v9771 = vrot.slane %v8937, 4
  %v9772 = vadd.f32 %v8937, %v9771
  %v9773 = vrot.slane %v9772, 2
  %v9774 = vadd.f32 %v9772, %v9773
  %v9775 = vrot.slane %v9774, 1
  %v9776 = vadd.f32 %v9774, %v9775
  %v9777 = vrot.slane %v8938, 4
  %v9778 = vadd.f32 %v8938, %v9777
  %v9779 = vrot.slane %v9778, 2
  %v9780 = vadd.f32 %v9778, %v9779
  %v9781 = vrot.slane %v9780, 1
  %v9782 = vadd.f32 %v9780, %v9781
  %v9783 = vrot.slane %v8939, 4
  %v9784 = vadd.f32 %v8939, %v9783
  %v9785 = vrot.slane %v9784, 2
  %v9786 = vadd.f32 %v9784, %v9785
  %v9787 = vrot.slane %v9786, 1
  %v9788 = vadd.f32 %v9786, %v9787
  %v9789 = vrot.slane %v8940, 4
  %v9790 = vadd.f32 %v8940, %v9789
  %v9791 = vrot.slane %v9790, 2
  %v9792 = vadd.f32 %v9790, %v9791
  %v9793 = vrot.slane %v9792, 1
  %v9794 = vadd.f32 %v9792, %v9793
  %v9795 = vrot.slane %v8941, 4
  %v9796 = vadd.f32 %v8941, %v9795
  %v9797 = vrot.slane %v9796, 2
  %v9798 = vadd.f32 %v9796, %v9797
  %v9799 = vrot.slane %v9798, 1
  %v9800 = vadd.f32 %v9798, %v9799
  %v9801 = vrot.slane %v8942, 4
  %v9802 = vadd.f32 %v8942, %v9801
  %v9803 = vrot.slane %v9802, 2
  %v9804 = vadd.f32 %v9802, %v9803
  %v9805 = vrot.slane %v9804, 1
  %v9806 = vadd.f32 %v9804, %v9805
  %v9807 = vrot.slane %v8943, 4
  %v9808 = vadd.f32 %v8943, %v9807
  %v9809 = vrot.slane %v9808, 2
  %v9810 = vadd.f32 %v9808, %v9809
  %v9811 = vrot.slane %v9810, 1
  %v9812 = vadd.f32 %v9810, %v9811
  %v9813 = vrot.slane %v8944, 4
  %v9814 = vadd.f32 %v8944, %v9813
  %v9815 = vrot.slane %v9814, 2
  %v9816 = vadd.f32 %v9814, %v9815
  %v9817 = vrot.slane %v9816, 1
  %v9818 = vadd.f32 %v9816, %v9817
  %v9819 = vrot.slane %v8945, 4
  %v9820 = vadd.f32 %v8945, %v9819
  %v9821 = vrot.slane %v9820, 2
  %v9822 = vadd.f32 %v9820, %v9821
  %v9823 = vrot.slane %v9822, 1
  %v9824 = vadd.f32 %v9822, %v9823
  %v9825 = vrot.slane %v8946, 4
  %v9826 = vadd.f32 %v8946, %v9825
  %v9827 = vrot.slane %v9826, 2
  %v9828 = vadd.f32 %v9826, %v9827
  %v9829 = vrot.slane %v9828, 1
  %v9830 = vadd.f32 %v9828, %v9829
  %v9831 = vrot.slane %v8947, 4
  %v9832 = vadd.f32 %v8947, %v9831
  %v9833 = vrot.slane %v9832, 2
  %v9834 = vadd.f32 %v9832, %v9833
  %v9835 = vrot.slane %v9834, 1
  %v9836 = vadd.f32 %v9834, %v9835
  %v9837 = vrot.slane %v8948, 4
  %v9838 = vadd.f32 %v8948, %v9837
  %v9839 = vrot.slane %v9838, 2
  %v9840 = vadd.f32 %v9838, %v9839
  %v9841 = vrot.slane %v9840, 1
  %v9842 = vadd.f32 %v9840, %v9841
  %v9843 = vrot.slane %v8949, 4
  %v9844 = vadd.f32 %v8949, %v9843
  %v9845 = vrot.slane %v9844, 2
  %v9846 = vadd.f32 %v9844, %v9845
  %v9847 = vrot.slane %v9846, 1
  %v9848 = vadd.f32 %v9846, %v9847
  %v9849 = vrot.slane %v8950, 4
  %v9850 = vadd.f32 %v8950, %v9849
  %v9851 = vrot.slane %v9850, 2
  %v9852 = vadd.f32 %v9850, %v9851
  %v9853 = vrot.slane %v9852, 1
  %v9854 = vadd.f32 %v9852, %v9853
  %v9855 = vrot.slane %v8951, 4
  %v9856 = vadd.f32 %v8951, %v9855
  %v9857 = vrot.slane %v9856, 2
  %v9858 = vadd.f32 %v9856, %v9857
  %v9859 = vrot.slane %v9858, 1
  %v9860 = vadd.f32 %v9858, %v9859
  %v9861 = vrot.slane %v8952, 4
  %v9862 = vadd.f32 %v8952, %v9861
  %v9863 = vrot.slane %v9862, 2
  %v9864 = vadd.f32 %v9862, %v9863
  %v9865 = vrot.slane %v9864, 1
  %v9866 = vadd.f32 %v9864, %v9865
  %v9867 = vrot.slane %v8953, 4
  %v9868 = vadd.f32 %v8953, %v9867
  %v9869 = vrot.slane %v9868, 2
  %v9870 = vadd.f32 %v9868, %v9869
  %v9871 = vrot.slane %v9870, 1
  %v9872 = vadd.f32 %v9870, %v9871
  %v9873 = vrot.slane %v8954, 4
  %v9874 = vadd.f32 %v8954, %v9873
  %v9875 = vrot.slane %v9874, 2
  %v9876 = vadd.f32 %v9874, %v9875
  %v9877 = vrot.slane %v9876, 1
  %v9878 = vadd.f32 %v9876, %v9877
  %v9879 = vrot.slane %v8955, 4
  %v9880 = vadd.f32 %v8955, %v9879
  %v9881 = vrot.slane %v9880, 2
  %v9882 = vadd.f32 %v9880, %v9881
  %v9883 = vrot.slane %v9882, 1
  %v9884 = vadd.f32 %v9882, %v9883
  %v9885 = vrot.slane %v8956, 4
  %v9886 = vadd.f32 %v8956, %v9885
  %v9887 = vrot.slane %v9886, 2
  %v9888 = vadd.f32 %v9886, %v9887
  %v9889 = vrot.slane %v9888, 1
  %v9890 = vadd.f32 %v9888, %v9889
  %v9891 = vrot.slane %v8957, 4
  %v9892 = vadd.f32 %v8957, %v9891
  %v9893 = vrot.slane %v9892, 2
  %v9894 = vadd.f32 %v9892, %v9893
  %v9895 = vrot.slane %v9894, 1
  %v9896 = vadd.f32 %v9894, %v9895
  %v9897 = vrot.slane %v8958, 4
  %v9898 = vadd.f32 %v8958, %v9897
  %v9899 = vrot.slane %v9898, 2
  %v9900 = vadd.f32 %v9898, %v9899
  %v9901 = vrot.slane %v9900, 1
  %v9902 = vadd.f32 %v9900, %v9901
  %v9903 = vrot.slane %v8959, 4
  %v9904 = vadd.f32 %v8959, %v9903
  %v9905 = vrot.slane %v9904, 2
  %v9906 = vadd.f32 %v9904, %v9905
  %v9907 = vrot.slane %v9906, 1
  %v9908 = vadd.f32 %v9906, %v9907
  %v9909 = vrot.slane %v8960, 4
  %v9910 = vadd.f32 %v8960, %v9909
  %v9911 = vrot.slane %v9910, 2
  %v9912 = vadd.f32 %v9910, %v9911
  %v9913 = vrot.slane %v9912, 1
  %v9914 = vadd.f32 %v9912, %v9913
  %v9915 = vrot.slane %v8961, 4
  %v9916 = vadd.f32 %v8961, %v9915
  %v9917 = vrot.slane %v9916, 2
  %v9918 = vadd.f32 %v9916, %v9917
  %v9919 = vrot.slane %v9918, 1
  %v9920 = vadd.f32 %v9918, %v9919
  %v9921 = vrot.slane %v8962, 4
  %v9922 = vadd.f32 %v8962, %v9921
  %v9923 = vrot.slane %v9922, 2
  %v9924 = vadd.f32 %v9922, %v9923
  %v9925 = vrot.slane %v9924, 1
  %v9926 = vadd.f32 %v9924, %v9925
  %v9927 = vrot.slane %v8963, 4
  %v9928 = vadd.f32 %v8963, %v9927
  %v9929 = vrot.slane %v9928, 2
  %v9930 = vadd.f32 %v9928, %v9929
  %v9931 = vrot.slane %v9930, 1
  %v9932 = vadd.f32 %v9930, %v9931
  %v9933 = vrot.slane %v8964, 4
  %v9934 = vadd.f32 %v8964, %v9933
  %v9935 = vrot.slane %v9934, 2
  %v9936 = vadd.f32 %v9934, %v9935
  %v9937 = vrot.slane %v9936, 1
  %v9938 = vadd.f32 %v9936, %v9937
  %v9939 = vrot.slane %v8965, 4
  %v9940 = vadd.f32 %v8965, %v9939
  %v9941 = vrot.slane %v9940, 2
  %v9942 = vadd.f32 %v9940, %v9941
  %v9943 = vrot.slane %v9942, 1
  %v9944 = vadd.f32 %v9942, %v9943
  %v9945 = vrot.slane %v8966, 4
  %v9946 = vadd.f32 %v8966, %v9945
  %v9947 = vrot.slane %v9946, 2
  %v9948 = vadd.f32 %v9946, %v9947
  %v9949 = vrot.slane %v9948, 1
  %v9950 = vadd.f32 %v9948, %v9949
  %v9951 = vrot.slane %v8967, 4
  %v9952 = vadd.f32 %v8967, %v9951
  %v9953 = vrot.slane %v9952, 2
  %v9954 = vadd.f32 %v9952, %v9953
  %v9955 = vrot.slane %v9954, 1
  %v9956 = vadd.f32 %v9954, %v9955
  %v9957 = vrot.slane %v8968, 4
  %v9958 = vadd.f32 %v8968, %v9957
  %v9959 = vrot.slane %v9958, 2
  %v9960 = vadd.f32 %v9958, %v9959
  %v9961 = vrot.slane %v9960, 1
  %v9962 = vadd.f32 %v9960, %v9961
  %v9963 = vrot.slane %v8969, 4
  %v9964 = vadd.f32 %v8969, %v9963
  %v9965 = vrot.slane %v9964, 2
  %v9966 = vadd.f32 %v9964, %v9965
  %v9967 = vrot.slane %v9966, 1
  %v9968 = vadd.f32 %v9966, %v9967
  %v9969 = vrot.slane %v8970, 4
  %v9970 = vadd.f32 %v8970, %v9969
  %v9971 = vrot.slane %v9970, 2
  %v9972 = vadd.f32 %v9970, %v9971
  %v9973 = vrot.slane %v9972, 1
  %v9974 = vadd.f32 %v9972, %v9973
  %v9975 = vrot.slane %v8971, 4
  %v9976 = vadd.f32 %v8971, %v9975
  %v9977 = vrot.slane %v9976, 2
  %v9978 = vadd.f32 %v9976, %v9977
  %v9979 = vrot.slane %v9978, 1
  %v9980 = vadd.f32 %v9978, %v9979
  %v9981 = vrot.slane %v8972, 4
  %v9982 = vadd.f32 %v8972, %v9981
  %v9983 = vrot.slane %v9982, 2
  %v9984 = vadd.f32 %v9982, %v9983
  %v9985 = vrot.slane %v9984, 1
  %v9986 = vadd.f32 %v9984, %v9985
  %v9987 = vrot.slane %v8973, 4
  %v9988 = vadd.f32 %v8973, %v9987
  %v9989 = vrot.slane %v9988, 2
  %v9990 = vadd.f32 %v9988, %v9989
  %v9991 = vrot.slane %v9990, 1
  %v9992 = vadd.f32 %v9990, %v9991
  %v9993 = vrot.slane %v8974, 4
  %v9994 = vadd.f32 %v8974, %v9993
  %v9995 = vrot.slane %v9994, 2
  %v9996 = vadd.f32 %v9994, %v9995
  %v9997 = vrot.slane %v9996, 1
  %v9998 = vadd.f32 %v9996, %v9997
  %v9999 = vrot.slane %v8975, 4
  %v10000 = vadd.f32 %v8975, %v9999
  %v10001 = vrot.slane %v10000, 2
  %v10002 = vadd.f32 %v10000, %v10001
  %v10003 = vrot.slane %v10002, 1
  %v10004 = vadd.f32 %v10002, %v10003
  %v10005 = vrot.slane %v8976, 4
  %v10006 = vadd.f32 %v8976, %v10005
  %v10007 = vrot.slane %v10006, 2
  %v10008 = vadd.f32 %v10006, %v10007
  %v10009 = vrot.slane %v10008, 1
  %v10010 = vadd.f32 %v10008, %v10009
  %v10011 = vrot.slane %v8977, 4
  %v10012 = vadd.f32 %v8977, %v10011
  %v10013 = vrot.slane %v10012, 2
  %v10014 = vadd.f32 %v10012, %v10013
  %v10015 = vrot.slane %v10014, 1
  %v10016 = vadd.f32 %v10014, %v10015
  %v10017 = vrot.slane %v8978, 4
  %v10018 = vadd.f32 %v8978, %v10017
  %v10019 = vrot.slane %v10018, 2
  %v10020 = vadd.f32 %v10018, %v10019
  %v10021 = vrot.slane %v10020, 1
  %v10022 = vadd.f32 %v10020, %v10021
  %v10023 = vrot.slane %v8979, 4
  %v10024 = vadd.f32 %v8979, %v10023
  %v10025 = vrot.slane %v10024, 2
  %v10026 = vadd.f32 %v10024, %v10025
  %v10027 = vrot.slane %v10026, 1
  %v10028 = vadd.f32 %v10026, %v10027
  %v10029 = vrot.slane %v8980, 4
  %v10030 = vadd.f32 %v8980, %v10029
  %v10031 = vrot.slane %v10030, 2
  %v10032 = vadd.f32 %v10030, %v10031
  %v10033 = vrot.slane %v10032, 1
  %v10034 = vadd.f32 %v10032, %v10033
  %v10035 = vrot.slane %v8981, 4
  %v10036 = vadd.f32 %v8981, %v10035
  %v10037 = vrot.slane %v10036, 2
  %v10038 = vadd.f32 %v10036, %v10037
  %v10039 = vrot.slane %v10038, 1
  %v10040 = vadd.f32 %v10038, %v10039
  %v10041 = vrot.slane %v8982, 4
  %v10042 = vadd.f32 %v8982, %v10041
  %v10043 = vrot.slane %v10042, 2
  %v10044 = vadd.f32 %v10042, %v10043
  %v10045 = vrot.slane %v10044, 1
  %v10046 = vadd.f32 %v10044, %v10045
  %v10047 = vrot.slane %v8983, 4
  %v10048 = vadd.f32 %v8983, %v10047
  %v10049 = vrot.slane %v10048, 2
  %v10050 = vadd.f32 %v10048, %v10049
  %v10051 = vrot.slane %v10050, 1
  %v10052 = vadd.f32 %v10050, %v10051
  %v10053 = vrot.slane %v8984, 4
  %v10054 = vadd.f32 %v8984, %v10053
  %v10055 = vrot.slane %v10054, 2
  %v10056 = vadd.f32 %v10054, %v10055
  %v10057 = vrot.slane %v10056, 1
  %v10058 = vadd.f32 %v10056, %v10057
  %v10059 = vrot.slane %v8985, 4
  %v10060 = vadd.f32 %v8985, %v10059
  %v10061 = vrot.slane %v10060, 2
  %v10062 = vadd.f32 %v10060, %v10061
  %v10063 = vrot.slane %v10062, 1
  %v10064 = vadd.f32 %v10062, %v10063
  %v10065 = vrot.slane %v8986, 4
  %v10066 = vadd.f32 %v8986, %v10065
  %v10067 = vrot.slane %v10066, 2
  %v10068 = vadd.f32 %v10066, %v10067
  %v10069 = vrot.slane %v10068, 1
  %v10070 = vadd.f32 %v10068, %v10069
  %v10071 = vrot.slane %v8987, 4
  %v10072 = vadd.f32 %v8987, %v10071
  %v10073 = vrot.slane %v10072, 2
  %v10074 = vadd.f32 %v10072, %v10073
  %v10075 = vrot.slane %v10074, 1
  %v10076 = vadd.f32 %v10074, %v10075
  %v10077 = vrot.slane %v8988, 4
  %v10078 = vadd.f32 %v8988, %v10077
  %v10079 = vrot.slane %v10078, 2
  %v10080 = vadd.f32 %v10078, %v10079
  %v10081 = vrot.slane %v10080, 1
  %v10082 = vadd.f32 %v10080, %v10081
  %v10083 = vrot.slane %v8989, 4
  %v10084 = vadd.f32 %v8989, %v10083
  %v10085 = vrot.slane %v10084, 2
  %v10086 = vadd.f32 %v10084, %v10085
  %v10087 = vrot.slane %v10086, 1
  %v10088 = vadd.f32 %v10086, %v10087
  %v10089 = vrot.slane %v8990, 4
  %v10090 = vadd.f32 %v8990, %v10089
  %v10091 = vrot.slane %v10090, 2
  %v10092 = vadd.f32 %v10090, %v10091
  %v10093 = vrot.slane %v10092, 1
  %v10094 = vadd.f32 %v10092, %v10093
  %v10095 = vrot.slane %v8991, 4
  %v10096 = vadd.f32 %v8991, %v10095
  %v10097 = vrot.slane %v10096, 2
  %v10098 = vadd.f32 %v10096, %v10097
  %v10099 = vrot.slane %v10098, 1
  %v10100 = vadd.f32 %v10098, %v10099
  %v10101 = vrot.slane %v8992, 4
  %v10102 = vadd.f32 %v8992, %v10101
  %v10103 = vrot.slane %v10102, 2
  %v10104 = vadd.f32 %v10102, %v10103
  %v10105 = vrot.slane %v10104, 1
  %v10106 = vadd.f32 %v10104, %v10105
  %v10107 = vrot.slane %v8993, 4
  %v10108 = vadd.f32 %v8993, %v10107
  %v10109 = vrot.slane %v10108, 2
  %v10110 = vadd.f32 %v10108, %v10109
  %v10111 = vrot.slane %v10110, 1
  %v10112 = vadd.f32 %v10110, %v10111
  %v10113 = vrot.slane %v8994, 4
  %v10114 = vadd.f32 %v8994, %v10113
  %v10115 = vrot.slane %v10114, 2
  %v10116 = vadd.f32 %v10114, %v10115
  %v10117 = vrot.slane %v10116, 1
  %v10118 = vadd.f32 %v10116, %v10117
  %v10119 = vrot.slane %v8995, 4
  %v10120 = vadd.f32 %v8995, %v10119
  %v10121 = vrot.slane %v10120, 2
  %v10122 = vadd.f32 %v10120, %v10121
  %v10123 = vrot.slane %v10122, 1
  %v10124 = vadd.f32 %v10122, %v10123
  %v10125 = vrot.slane %v8996, 4
  %v10126 = vadd.f32 %v8996, %v10125
  %v10127 = vrot.slane %v10126, 2
  %v10128 = vadd.f32 %v10126, %v10127
  %v10129 = vrot.slane %v10128, 1
  %v10130 = vadd.f32 %v10128, %v10129
  %v10131 = vrot.slane %v8997, 4
  %v10132 = vadd.f32 %v8997, %v10131
  %v10133 = vrot.slane %v10132, 2
  %v10134 = vadd.f32 %v10132, %v10133
  %v10135 = vrot.slane %v10134, 1
  %v10136 = vadd.f32 %v10134, %v10135
  %v10137 = vrot.slane %v8998, 4
  %v10138 = vadd.f32 %v8998, %v10137
  %v10139 = vrot.slane %v10138, 2
  %v10140 = vadd.f32 %v10138, %v10139
  %v10141 = vrot.slane %v10140, 1
  %v10142 = vadd.f32 %v10140, %v10141
  %v10143 = vrot.slane %v8999, 4
  %v10144 = vadd.f32 %v8999, %v10143
  %v10145 = vrot.slane %v10144, 2
  %v10146 = vadd.f32 %v10144, %v10145
  %v10147 = vrot.slane %v10146, 1
  %v10148 = vadd.f32 %v10146, %v10147
  %v10149 = vrot.slane %v9000, 4
  %v10150 = vadd.f32 %v9000, %v10149
  %v10151 = vrot.slane %v10150, 2
  %v10152 = vadd.f32 %v10150, %v10151
  %v10153 = vrot.slane %v10152, 1
  %v10154 = vadd.f32 %v10152, %v10153
  %v10155 = vrot.slane %v9001, 4
  %v10156 = vadd.f32 %v9001, %v10155
  %v10157 = vrot.slane %v10156, 2
  %v10158 = vadd.f32 %v10156, %v10157
  %v10159 = vrot.slane %v10158, 1
  %v10160 = vadd.f32 %v10158, %v10159
  %v10161 = vrot.slane %v9002, 4
  %v10162 = vadd.f32 %v9002, %v10161
  %v10163 = vrot.slane %v10162, 2
  %v10164 = vadd.f32 %v10162, %v10163
  %v10165 = vrot.slane %v10164, 1
  %v10166 = vadd.f32 %v10164, %v10165
  %v10167 = vrot.slane %v9003, 4
  %v10168 = vadd.f32 %v9003, %v10167
  %v10169 = vrot.slane %v10168, 2
  %v10170 = vadd.f32 %v10168, %v10169
  %v10171 = vrot.slane %v10170, 1
  %v10172 = vadd.f32 %v10170, %v10171
  %v10173 = vrot.slane %v9004, 4
  %v10174 = vadd.f32 %v9004, %v10173
  %v10175 = vrot.slane %v10174, 2
  %v10176 = vadd.f32 %v10174, %v10175
  %v10177 = vrot.slane %v10176, 1
  %v10178 = vadd.f32 %v10176, %v10177
  %v10179 = vrot.slane %v9005, 4
  %v10180 = vadd.f32 %v9005, %v10179
  %v10181 = vrot.slane %v10180, 2
  %v10182 = vadd.f32 %v10180, %v10181
  %v10183 = vrot.slane %v10182, 1
  %v10184 = vadd.f32 %v10182, %v10183
  %v10185 = vrot.slane %v9006, 4
  %v10186 = vadd.f32 %v9006, %v10185
  %v10187 = vrot.slane %v10186, 2
  %v10188 = vadd.f32 %v10186, %v10187
  %v10189 = vrot.slane %v10188, 1
  %v10190 = vadd.f32 %v10188, %v10189
  %v10191 = vrot.slane %v9007, 4
  %v10192 = vadd.f32 %v9007, %v10191
  %v10193 = vrot.slane %v10192, 2
  %v10194 = vadd.f32 %v10192, %v10193
  %v10195 = vrot.slane %v10194, 1
  %v10196 = vadd.f32 %v10194, %v10195
  %v10197 = vrot.slane %v9008, 4
  %v10198 = vadd.f32 %v9008, %v10197
  %v10199 = vrot.slane %v10198, 2
  %v10200 = vadd.f32 %v10198, %v10199
  %v10201 = vrot.slane %v10200, 1
  %v10202 = vadd.f32 %v10200, %v10201
  %v10203 = vrot.slane %v9009, 4
  %v10204 = vadd.f32 %v9009, %v10203
  %v10205 = vrot.slane %v10204, 2
  %v10206 = vadd.f32 %v10204, %v10205
  %v10207 = vrot.slane %v10206, 1
  %v10208 = vadd.f32 %v10206, %v10207
  %v10209 = vrot.slane %v9010, 4
  %v10210 = vadd.f32 %v9010, %v10209
  %v10211 = vrot.slane %v10210, 2
  %v10212 = vadd.f32 %v10210, %v10211
  %v10213 = vrot.slane %v10212, 1
  %v10214 = vadd.f32 %v10212, %v10213
  %v10215 = vrot.slane %v9011, 4
  %v10216 = vadd.f32 %v9011, %v10215
  %v10217 = vrot.slane %v10216, 2
  %v10218 = vadd.f32 %v10216, %v10217
  %v10219 = vrot.slane %v10218, 1
  %v10220 = vadd.f32 %v10218, %v10219
  %v10221 = vrot.slane %v9012, 4
  %v10222 = vadd.f32 %v9012, %v10221
  %v10223 = vrot.slane %v10222, 2
  %v10224 = vadd.f32 %v10222, %v10223
  %v10225 = vrot.slane %v10224, 1
  %v10226 = vadd.f32 %v10224, %v10225
  %v10227 = vrot.slane %v9013, 4
  %v10228 = vadd.f32 %v9013, %v10227
  %v10229 = vrot.slane %v10228, 2
  %v10230 = vadd.f32 %v10228, %v10229
  %v10231 = vrot.slane %v10230, 1
  %v10232 = vadd.f32 %v10230, %v10231
  %v10233 = vrot.slane %v9014, 4
  %v10234 = vadd.f32 %v9014, %v10233
  %v10235 = vrot.slane %v10234, 2
  %v10236 = vadd.f32 %v10234, %v10235
  %v10237 = vrot.slane %v10236, 1
  %v10238 = vadd.f32 %v10236, %v10237
  %v10239 = vrot.slane %v9015, 4
  %v10240 = vadd.f32 %v9015, %v10239
  %v10241 = vrot.slane %v10240, 2
  %v10242 = vadd.f32 %v10240, %v10241
  %v10243 = vrot.slane %v10242, 1
  %v10244 = vadd.f32 %v10242, %v10243
  %v10245 = vrot.slane %v9016, 4
  %v10246 = vadd.f32 %v9016, %v10245
  %v10247 = vrot.slane %v10246, 2
  %v10248 = vadd.f32 %v10246, %v10247
  %v10249 = vrot.slane %v10248, 1
  %v10250 = vadd.f32 %v10248, %v10249
  %v10251 = vrot.slane %v9017, 4
  %v10252 = vadd.f32 %v9017, %v10251
  %v10253 = vrot.slane %v10252, 2
  %v10254 = vadd.f32 %v10252, %v10253
  %v10255 = vrot.slane %v10254, 1
  %v10256 = vadd.f32 %v10254, %v10255
  %v10257 = vrot.slane %v9018, 4
  %v10258 = vadd.f32 %v9018, %v10257
  %v10259 = vrot.slane %v10258, 2
  %v10260 = vadd.f32 %v10258, %v10259
  %v10261 = vrot.slane %v10260, 1
  %v10262 = vadd.f32 %v10260, %v10261
  %v10263 = vrot.slane %v9019, 4
  %v10264 = vadd.f32 %v9019, %v10263
  %v10265 = vrot.slane %v10264, 2
  %v10266 = vadd.f32 %v10264, %v10265
  %v10267 = vrot.slane %v10266, 1
  %v10268 = vadd.f32 %v10266, %v10267
  %v10269 = vrot.slane %v9020, 4
  %v10270 = vadd.f32 %v9020, %v10269
  %v10271 = vrot.slane %v10270, 2
  %v10272 = vadd.f32 %v10270, %v10271
  %v10273 = vrot.slane %v10272, 1
  %v10274 = vadd.f32 %v10272, %v10273
  %v10275 = vrot.slane %v9021, 4
  %v10276 = vadd.f32 %v9021, %v10275
  %v10277 = vrot.slane %v10276, 2
  %v10278 = vadd.f32 %v10276, %v10277
  %v10279 = vrot.slane %v10278, 1
  %v10280 = vadd.f32 %v10278, %v10279
  %v10281 = vrot.slane %v9022, 4
  %v10282 = vadd.f32 %v9022, %v10281
  %v10283 = vrot.slane %v10282, 2
  %v10284 = vadd.f32 %v10282, %v10283
  %v10285 = vrot.slane %v10284, 1
  %v10286 = vadd.f32 %v10284, %v10285
  %v10287 = vrot.slane %v9023, 4
  %v10288 = vadd.f32 %v9023, %v10287
  %v10289 = vrot.slane %v10288, 2
  %v10290 = vadd.f32 %v10288, %v10289
  %v10291 = vrot.slane %v10290, 1
  %v10292 = vadd.f32 %v10290, %v10291
  %v10293 = vrot.slane %v9024, 4
  %v10294 = vadd.f32 %v9024, %v10293
  %v10295 = vrot.slane %v10294, 2
  %v10296 = vadd.f32 %v10294, %v10295
  %v10297 = vrot.slane %v10296, 1
  %v10298 = vadd.f32 %v10296, %v10297
  %v10299 = vrot.slane %v9025, 4
  %v10300 = vadd.f32 %v9025, %v10299
  %v10301 = vrot.slane %v10300, 2
  %v10302 = vadd.f32 %v10300, %v10301
  %v10303 = vrot.slane %v10302, 1
  %v10304 = vadd.f32 %v10302, %v10303
  %v10305 = vrot.slane %v9026, 4
  %v10306 = vadd.f32 %v9026, %v10305
  %v10307 = vrot.slane %v10306, 2
  %v10308 = vadd.f32 %v10306, %v10307
  %v10309 = vrot.slane %v10308, 1
  %v10310 = vadd.f32 %v10308, %v10309
  %v10311 = vrot.slane %v9027, 4
  %v10312 = vadd.f32 %v9027, %v10311
  %v10313 = vrot.slane %v10312, 2
  %v10314 = vadd.f32 %v10312, %v10313
  %v10315 = vrot.slane %v10314, 1
  %v10316 = vadd.f32 %v10314, %v10315
  %v10317 = vrot.slane %v9028, 4
  %v10318 = vadd.f32 %v9028, %v10317
  %v10319 = vrot.slane %v10318, 2
  %v10320 = vadd.f32 %v10318, %v10319
  %v10321 = vrot.slane %v10320, 1
  %v10322 = vadd.f32 %v10320, %v10321
  %v10323 = vrot.slane %v9029, 4
  %v10324 = vadd.f32 %v9029, %v10323
  %v10325 = vrot.slane %v10324, 2
  %v10326 = vadd.f32 %v10324, %v10325
  %v10327 = vrot.slane %v10326, 1
  %v10328 = vadd.f32 %v10326, %v10327
  %v10329 = vrot.slane %v9030, 4
  %v10330 = vadd.f32 %v9030, %v10329
  %v10331 = vrot.slane %v10330, 2
  %v10332 = vadd.f32 %v10330, %v10331
  %v10333 = vrot.slane %v10332, 1
  %v10334 = vadd.f32 %v10332, %v10333
  %v10335 = vrot.slane %v9031, 4
  %v10336 = vadd.f32 %v9031, %v10335
  %v10337 = vrot.slane %v10336, 2
  %v10338 = vadd.f32 %v10336, %v10337
  %v10339 = vrot.slane %v10338, 1
  %v10340 = vadd.f32 %v10338, %v10339
  %v10341 = vrot.slane %v9032, 4
  %v10342 = vadd.f32 %v9032, %v10341
  %v10343 = vrot.slane %v10342, 2
  %v10344 = vadd.f32 %v10342, %v10343
  %v10345 = vrot.slane %v10344, 1
  %v10346 = vadd.f32 %v10344, %v10345
  %v10347 = vrot.slane %v9033, 4
  %v10348 = vadd.f32 %v9033, %v10347
  %v10349 = vrot.slane %v10348, 2
  %v10350 = vadd.f32 %v10348, %v10349
  %v10351 = vrot.slane %v10350, 1
  %v10352 = vadd.f32 %v10350, %v10351
  %v10353 = vrot.slane %v9034, 4
  %v10354 = vadd.f32 %v9034, %v10353
  %v10355 = vrot.slane %v10354, 2
  %v10356 = vadd.f32 %v10354, %v10355
  %v10357 = vrot.slane %v10356, 1
  %v10358 = vadd.f32 %v10356, %v10357
  %v10359 = vrot.slane %v9035, 4
  %v10360 = vadd.f32 %v9035, %v10359
  %v10361 = vrot.slane %v10360, 2
  %v10362 = vadd.f32 %v10360, %v10361
  %v10363 = vrot.slane %v10362, 1
  %v10364 = vadd.f32 %v10362, %v10363
  %v10365 = vrot.slane %v9036, 4
  %v10366 = vadd.f32 %v9036, %v10365
  %v10367 = vrot.slane %v10366, 2
  %v10368 = vadd.f32 %v10366, %v10367
  %v10369 = vrot.slane %v10368, 1
  %v10370 = vadd.f32 %v10368, %v10369
  %v10371 = vrot.slane %v9037, 4
  %v10372 = vadd.f32 %v9037, %v10371
  %v10373 = vrot.slane %v10372, 2
  %v10374 = vadd.f32 %v10372, %v10373
  %v10375 = vrot.slane %v10374, 1
  %v10376 = vadd.f32 %v10374, %v10375
  %v10377 = vrot.slane %v9038, 4
  %v10378 = vadd.f32 %v9038, %v10377
  %v10379 = vrot.slane %v10378, 2
  %v10380 = vadd.f32 %v10378, %v10379
  %v10381 = vrot.slane %v10380, 1
  %v10382 = vadd.f32 %v10380, %v10381
  %v10383 = vmul.f32 %v9044, %v8367
  %v10384 = vmul.f32 %v9050, %v8368
  %v10385 = vmul.f32 %v9056, %v8369
  %v10386 = vmul.f32 %v9062, %v8370
  %v10387 = vmul.f32 %v9068, %v8371
  %v10388 = vmul.f32 %v9074, %v8372
  %v10389 = vmul.f32 %v9080, %v8373
  %v10390 = vmul.f32 %v9086, %v8374
  %v10391 = vmul.f32 %v9092, %v8375
  %v10392 = vmul.f32 %v9098, %v8376
  %v10393 = vmul.f32 %v9104, %v8377
  %v10394 = vmul.f32 %v9110, %v8378
  %v10395 = vmul.f32 %v9116, %v8379
  %v10396 = vmul.f32 %v9122, %v8380
  %v10397 = vmul.f32 %v9128, %v8381
  %v10398 = vmul.f32 %v9134, %v8382
  %v10399 = vmul.f32 %v9140, %v8383
  %v10400 = vmul.f32 %v9146, %v8384
  %v10401 = vmul.f32 %v9152, %v8385
  %v10402 = vmul.f32 %v9158, %v8386
  %v10403 = vmul.f32 %v9164, %v8387
  %v10404 = vmul.f32 %v9170, %v8388
  %v10405 = vmul.f32 %v9176, %v8389
  %v10406 = vmul.f32 %v9182, %v8390
  %v10407 = vmul.f32 %v9188, %v8391
  %v10408 = vmul.f32 %v9194, %v8392
  %v10409 = vmul.f32 %v9200, %v8393
  %v10410 = vmul.f32 %v9206, %v8394
  %v10411 = vmul.f32 %v9212, %v8395
  %v10412 = vmul.f32 %v9218, %v8396
  %v10413 = vmul.f32 %v9224, %v8397
  %v10414 = vmul.f32 %v9230, %v8398
  %v10415 = vmul.f32 %v9236, %v8399
  %v10416 = vmul.f32 %v9242, %v8400
  %v10417 = vmul.f32 %v9248, %v8401
  %v10418 = vmul.f32 %v9254, %v8402
  %v10419 = vmul.f32 %v9260, %v8403
  %v10420 = vmul.f32 %v9266, %v8404
  %v10421 = vmul.f32 %v9272, %v8405
  %v10422 = vmul.f32 %v9278, %v8406
  %v10423 = vmul.f32 %v9284, %v8407
  %v10424 = vmul.f32 %v9290, %v8408
  %v10425 = vmul.f32 %v9296, %v8409
  %v10426 = vmul.f32 %v9302, %v8410
  %v10427 = vmul.f32 %v9308, %v8411
  %v10428 = vmul.f32 %v9314, %v8412
  %v10429 = vmul.f32 %v9320, %v8413
  %v10430 = vmul.f32 %v9326, %v8414
  %v10431 = vmul.f32 %v9332, %v8415
  %v10432 = vmul.f32 %v9338, %v8416
  %v10433 = vmul.f32 %v9344, %v8417
  %v10434 = vmul.f32 %v9350, %v8418
  %v10435 = vmul.f32 %v9356, %v8419
  %v10436 = vmul.f32 %v9362, %v8420
  %v10437 = vmul.f32 %v9368, %v8421
  %v10438 = vmul.f32 %v9374, %v8422
  %v10439 = vmul.f32 %v9380, %v8423
  %v10440 = vmul.f32 %v9386, %v8424
  %v10441 = vmul.f32 %v9392, %v8425
  %v10442 = vmul.f32 %v9398, %v8426
  %v10443 = vmul.f32 %v9404, %v8427
  %v10444 = vmul.f32 %v9410, %v8428
  %v10445 = vmul.f32 %v9416, %v8429
  %v10446 = vmul.f32 %v9422, %v8430
  %v10447 = vmul.f32 %v9428, %v8431
  %v10448 = vmul.f32 %v9434, %v8432
  %v10449 = vmul.f32 %v9440, %v8433
  %v10450 = vmul.f32 %v9446, %v8434
  %v10451 = vmul.f32 %v9452, %v8435
  %v10452 = vmul.f32 %v9458, %v8436
  %v10453 = vmul.f32 %v9464, %v8437
  %v10454 = vmul.f32 %v9470, %v8438
  %v10455 = vmul.f32 %v9476, %v8439
  %v10456 = vmul.f32 %v9482, %v8440
  %v10457 = vmul.f32 %v9488, %v8441
  %v10458 = vmul.f32 %v9494, %v8442
  %v10459 = vmul.f32 %v9500, %v8443
  %v10460 = vmul.f32 %v9506, %v8444
  %v10461 = vmul.f32 %v9512, %v8445
  %v10462 = vmul.f32 %v9518, %v8446
  %v10463 = vmul.f32 %v9524, %v8447
  %v10464 = vmul.f32 %v9530, %v8448
  %v10465 = vmul.f32 %v9536, %v8449
  %v10466 = vmul.f32 %v9542, %v8450
  %v10467 = vmul.f32 %v9548, %v8451
  %v10468 = vmul.f32 %v9554, %v8452
  %v10469 = vmul.f32 %v9560, %v8453
  %v10470 = vmul.f32 %v9566, %v8454
  %v10471 = vmul.f32 %v9572, %v8455
  %v10472 = vmul.f32 %v9578, %v8456
  %v10473 = vmul.f32 %v9584, %v8457
  %v10474 = vmul.f32 %v9590, %v8458
  %v10475 = vmul.f32 %v9596, %v8459
  %v10476 = vmul.f32 %v9602, %v8460
  %v10477 = vmul.f32 %v9608, %v8461
  %v10478 = vmul.f32 %v9614, %v8462
  %v10479 = vmul.f32 %v9620, %v8463
  %v10480 = vmul.f32 %v9626, %v8464
  %v10481 = vmul.f32 %v9632, %v8465
  %v10482 = vmul.f32 %v9638, %v8466
  %v10483 = vmul.f32 %v9644, %v8467
  %v10484 = vmul.f32 %v9650, %v8468
  %v10485 = vmul.f32 %v9656, %v8469
  %v10486 = vmul.f32 %v9662, %v8470
  %v10487 = vmul.f32 %v9668, %v8471
  %v10488 = vmul.f32 %v9674, %v8472
  %v10489 = vmul.f32 %v9680, %v8473
  %v10490 = vmul.f32 %v9686, %v8474
  %v10491 = vmul.f32 %v9692, %v8475
  %v10492 = vmul.f32 %v9698, %v8476
  %v10493 = vmul.f32 %v9704, %v8477
  %v10494 = vmul.f32 %v9710, %v8478
  %v10495 = vmul.f32 %v9716, %v8479
  %v10496 = vmul.f32 %v9722, %v8480
  %v10497 = vmul.f32 %v9728, %v8481
  %v10498 = vmul.f32 %v9734, %v8482
  %v10499 = vmul.f32 %v9740, %v8483
  %v10500 = vmul.f32 %v9746, %v8484
  %v10501 = vmul.f32 %v9752, %v8485
  %v10502 = vmul.f32 %v9758, %v8486
  %v10503 = vmul.f32 %v9764, %v8487
  %v10504 = vmul.f32 %v9770, %v8488
  %v10505 = vmul.f32 %v9776, %v8489
  %v10506 = vmul.f32 %v9782, %v8490
  %v10507 = vmul.f32 %v9788, %v8491
  %v10508 = vmul.f32 %v9794, %v8492
  %v10509 = vmul.f32 %v9800, %v8493
  %v10510 = vmul.f32 %v9806, %v8494
  %v10511 = vmul.f32 %v9812, %v8495
  %v10512 = vmul.f32 %v9818, %v8496
  %v10513 = vmul.f32 %v9824, %v8497
  %v10514 = vmul.f32 %v9830, %v8498
  %v10515 = vmul.f32 %v9836, %v8499
  %v10516 = vmul.f32 %v9842, %v8500
  %v10517 = vmul.f32 %v9848, %v8501
  %v10518 = vmul.f32 %v9854, %v8502
  %v10519 = vmul.f32 %v9860, %v8503
  %v10520 = vmul.f32 %v9866, %v8504
  %v10521 = vmul.f32 %v9872, %v8505
  %v10522 = vmul.f32 %v9878, %v8506
  %v10523 = vmul.f32 %v9884, %v8507
  %v10524 = vmul.f32 %v9890, %v8508
  %v10525 = vmul.f32 %v9896, %v8509
  %v10526 = vmul.f32 %v9902, %v8510
  %v10527 = vmul.f32 %v9908, %v8511
  %v10528 = vmul.f32 %v9914, %v8512
  %v10529 = vmul.f32 %v9920, %v8513
  %v10530 = vmul.f32 %v9926, %v8514
  %v10531 = vmul.f32 %v9932, %v8515
  %v10532 = vmul.f32 %v9938, %v8516
  %v10533 = vmul.f32 %v9944, %v8517
  %v10534 = vmul.f32 %v9950, %v8518
  %v10535 = vmul.f32 %v9956, %v8519
  %v10536 = vmul.f32 %v9962, %v8520
  %v10537 = vmul.f32 %v9968, %v8521
  %v10538 = vmul.f32 %v9974, %v8522
  %v10539 = vmul.f32 %v9980, %v8523
  %v10540 = vmul.f32 %v9986, %v8524
  %v10541 = vmul.f32 %v9992, %v8525
  %v10542 = vmul.f32 %v9998, %v8526
  %v10543 = vmul.f32 %v10004, %v8527
  %v10544 = vmul.f32 %v10010, %v8528
  %v10545 = vmul.f32 %v10016, %v8529
  %v10546 = vmul.f32 %v10022, %v8530
  %v10547 = vmul.f32 %v10028, %v8531
  %v10548 = vmul.f32 %v10034, %v8532
  %v10549 = vmul.f32 %v10040, %v8533
  %v10550 = vmul.f32 %v10046, %v8534
  %v10551 = vmul.f32 %v10052, %v8535
  %v10552 = vmul.f32 %v10058, %v8536
  %v10553 = vmul.f32 %v10064, %v8537
  %v10554 = vmul.f32 %v10070, %v8538
  %v10555 = vmul.f32 %v10076, %v8539
  %v10556 = vmul.f32 %v10082, %v8540
  %v10557 = vmul.f32 %v10088, %v8541
  %v10558 = vmul.f32 %v10094, %v8542
  %v10559 = vmul.f32 %v10100, %v8543
  %v10560 = vmul.f32 %v10106, %v8544
  %v10561 = vmul.f32 %v10112, %v8545
  %v10562 = vmul.f32 %v10118, %v8546
  %v10563 = vmul.f32 %v10124, %v8547
  %v10564 = vmul.f32 %v10130, %v8548
  %v10565 = vmul.f32 %v10136, %v8549
  %v10566 = vmul.f32 %v10142, %v8550
  %v10567 = vmul.f32 %v10148, %v8551
  %v10568 = vmul.f32 %v10154, %v8552
  %v10569 = vmul.f32 %v10160, %v8553
  %v10570 = vmul.f32 %v10166, %v8554
  %v10571 = vmul.f32 %v10172, %v8555
  %v10572 = vmul.f32 %v10178, %v8556
  %v10573 = vmul.f32 %v10184, %v8557
  %v10574 = vmul.f32 %v10190, %v8558
  %v10575 = vmul.f32 %v10196, %v8559
  %v10576 = vmul.f32 %v10202, %v8560
  %v10577 = vmul.f32 %v10208, %v8561
  %v10578 = vmul.f32 %v10214, %v8562
  %v10579 = vmul.f32 %v10220, %v8563
  %v10580 = vmul.f32 %v10226, %v8564
  %v10581 = vmul.f32 %v10232, %v8565
  %v10582 = vmul.f32 %v10238, %v8566
  %v10583 = vmul.f32 %v10244, %v8567
  %v10584 = vmul.f32 %v10250, %v8568
  %v10585 = vmul.f32 %v10256, %v8569
  %v10586 = vmul.f32 %v10262, %v8570
  %v10587 = vmul.f32 %v10268, %v8571
  %v10588 = vmul.f32 %v10274, %v8572
  %v10589 = vmul.f32 %v10280, %v8573
  %v10590 = vmul.f32 %v10286, %v8574
  %v10591 = vmul.f32 %v10292, %v8575
  %v10592 = vmul.f32 %v10298, %v8576
  %v10593 = vmul.f32 %v10304, %v8577
  %v10594 = vmul.f32 %v10310, %v8578
  %v10595 = vmul.f32 %v10316, %v8579
  %v10596 = vmul.f32 %v10322, %v8580
  %v10597 = vmul.f32 %v10328, %v8581
  %v10598 = vmul.f32 %v10334, %v8582
  %v10599 = vmul.f32 %v10340, %v8583
  %v10600 = vmul.f32 %v10346, %v8584
  %v10601 = vmul.f32 %v10352, %v8585
  %v10602 = vmul.f32 %v10358, %v8586
  %v10603 = vmul.f32 %v10364, %v8587
  %v10604 = vmul.f32 %v10370, %v8588
  %v10605 = vmul.f32 %v10376, %v8589
  %v10606 = vmul.f32 %v10382, %v8590
  %v10635 = vrot.slane %v20, 1
  %v10636 = vrot.slane %v21, 1
  %v10637 = vrot.slane %v20, 2
  %v10638 = vrot.slane %v21, 2
  %v10639 = vrot.slane %v20, 3
  %v10640 = vrot.slane %v21, 3
  %v10641 = vrot.slane %v20, 4
  %v10642 = vrot.slane %v21, 4
  %v10643 = vrot.slane %v20, 5
  %v10644 = vrot.slane %v21, 5
  %v10645 = vrot.slane %v20, 6
  %v10646 = vrot.slane %v21, 6
  %v10647 = vrot.slane %v20, 7
  %v10648 = vrot.slane %v21, 7
  %v10649 = vrot.slane %v22, 1
  %v10650 = vrot.slane %v23, 1
  %v10651 = vrot.slane %v22, 2
  %v10652 = vrot.slane %v23, 2
  %v10653 = vrot.slane %v22, 3
  %v10654 = vrot.slane %v23, 3
  %v10655 = vrot.slane %v22, 4
  %v10656 = vrot.slane %v23, 4
  %v10657 = vrot.slane %v22, 5
  %v10658 = vrot.slane %v23, 5
  %v10659 = vrot.slane %v22, 6
  %v10660 = vrot.slane %v23, 6
  %v10661 = vrot.slane %v22, 7
  %v10662 = vrot.slane %v23, 7
  %v10663 = vrot.slane %v24, 1
  %v10664 = vrot.slane %v25, 1
  %v10665 = vrot.slane %v24, 2
  %v10666 = vrot.slane %v25, 2
  %v10667 = vrot.slane %v24, 3
  %v10668 = vrot.slane %v25, 3
  %v10669 = vrot.slane %v24, 4
  %v10670 = vrot.slane %v25, 4
  %v10671 = vrot.slane %v24, 5
  %v10672 = vrot.slane %v25, 5
  %v10673 = vrot.slane %v24, 6
  %v10674 = vrot.slane %v25, 6
  %v10675 = vrot.slane %v24, 7
  %v10676 = vrot.slane %v25, 7
  %v10677 = vrot.slane %v26, 1
  %v10678 = vrot.slane %v27, 1
  %v10679 = vrot.slane %v26, 2
  %v10680 = vrot.slane %v27, 2
  %v10681 = vrot.slane %v26, 3
  %v10682 = vrot.slane %v27, 3
  %v10683 = vrot.slane %v26, 4
  %v10684 = vrot.slane %v27, 4
  %v10685 = vrot.slane %v26, 5
  %v10686 = vrot.slane %v27, 5
  %v10687 = vrot.slane %v26, 6
  %v10688 = vrot.slane %v27, 6
  %v10689 = vrot.slane %v26, 7
  %v10690 = vrot.slane %v27, 7
  %v10691 = vrot.slane %v28, 1
  %v10692 = vrot.slane %v29, 1
  %v10693 = vrot.slane %v28, 2
  %v10694 = vrot.slane %v29, 2
  %v10695 = vrot.slane %v28, 3
  %v10696 = vrot.slane %v29, 3
  %v10697 = vrot.slane %v28, 4
  %v10698 = vrot.slane %v29, 4
  %v10699 = vrot.slane %v28, 5
  %v10700 = vrot.slane %v29, 5
  %v10701 = vrot.slane %v28, 6
  %v10702 = vrot.slane %v29, 6
  %v10703 = vrot.slane %v28, 7
  %v10704 = vrot.slane %v29, 7
  %v10705 = vrot.slane %v30, 1
  %v10706 = vrot.slane %v31, 1
  %v10707 = vrot.slane %v30, 2
  %v10708 = vrot.slane %v31, 2
  %v10709 = vrot.slane %v30, 3
  %v10710 = vrot.slane %v31, 3
  %v10711 = vrot.slane %v30, 4
  %v10712 = vrot.slane %v31, 4
  %v10713 = vrot.slane %v30, 5
  %v10714 = vrot.slane %v31, 5
  %v10715 = vrot.slane %v30, 6
  %v10716 = vrot.slane %v31, 6
  %v10717 = vrot.slane %v30, 7
  %v10718 = vrot.slane %v31, 7
  %v10719 = vrot.slane %v32, 1
  %v10720 = vrot.slane %v33, 1
  %v10721 = vrot.slane %v32, 2
  %v10722 = vrot.slane %v33, 2
  %v10723 = vrot.slane %v32, 3
  %v10724 = vrot.slane %v33, 3
  %v10725 = vrot.slane %v32, 4
  %v10726 = vrot.slane %v33, 4
  %v10727 = vrot.slane %v32, 5
  %v10728 = vrot.slane %v33, 5
  %v10729 = vrot.slane %v32, 6
  %v10730 = vrot.slane %v33, 6
  %v10731 = vrot.slane %v32, 7
  %v10732 = vrot.slane %v33, 7
  %v10733 = vrot.slane %v34, 1
  %v10734 = vrot.slane %v35, 1
  %v10735 = vrot.slane %v34, 2
  %v10736 = vrot.slane %v35, 2
  %v10737 = vrot.slane %v34, 3
  %v10738 = vrot.slane %v35, 3
  %v10739 = vrot.slane %v34, 4
  %v10740 = vrot.slane %v35, 4
  %v10741 = vrot.slane %v34, 5
  %v10742 = vrot.slane %v35, 5
  %v10743 = vrot.slane %v34, 6
  %v10744 = vrot.slane %v35, 6
  %v10745 = vrot.slane %v34, 7
  %v10746 = vrot.slane %v35, 7
  %v10747 = vrot.slane %v36, 1
  %v10748 = vrot.slane %v37, 1
  %v10749 = vrot.slane %v36, 2
  %v10750 = vrot.slane %v37, 2
  %v10751 = vrot.slane %v36, 3
  %v10752 = vrot.slane %v37, 3
  %v10753 = vrot.slane %v36, 4
  %v10754 = vrot.slane %v37, 4
  %v10755 = vrot.slane %v36, 5
  %v10756 = vrot.slane %v37, 5
  %v10757 = vrot.slane %v36, 6
  %v10758 = vrot.slane %v37, 6
  %v10759 = vrot.slane %v36, 7
  %v10760 = vrot.slane %v37, 7
  %v10761 = vrot.slane %v38, 1
  %v10762 = vrot.slane %v39, 1
  %v10763 = vrot.slane %v38, 2
  %v10764 = vrot.slane %v39, 2
  %v10765 = vrot.slane %v38, 3
  %v10766 = vrot.slane %v39, 3
  %v10767 = vrot.slane %v38, 4
  %v10768 = vrot.slane %v39, 4
  %v10769 = vrot.slane %v38, 5
  %v10770 = vrot.slane %v39, 5
  %v10771 = vrot.slane %v38, 6
  %v10772 = vrot.slane %v39, 6
  %v10773 = vrot.slane %v38, 7
  %v10774 = vrot.slane %v39, 7
  %v10775 = vrot.slane %v40, 1
  %v10776 = vrot.slane %v41, 1
  %v10777 = vrot.slane %v40, 2
  %v10778 = vrot.slane %v41, 2
  %v10779 = vrot.slane %v40, 3
  %v10780 = vrot.slane %v41, 3
  %v10781 = vrot.slane %v40, 4
  %v10782 = vrot.slane %v41, 4
  %v10783 = vrot.slane %v40, 5
  %v10784 = vrot.slane %v41, 5
  %v10785 = vrot.slane %v40, 6
  %v10786 = vrot.slane %v41, 6
  %v10787 = vrot.slane %v40, 7
  %v10788 = vrot.slane %v41, 7
  %v10789 = vrot.slane %v42, 1
  %v10790 = vrot.slane %v43, 1
  %v10791 = vrot.slane %v42, 2
  %v10792 = vrot.slane %v43, 2
  %v10793 = vrot.slane %v42, 3
  %v10794 = vrot.slane %v43, 3
  %v10795 = vrot.slane %v42, 4
  %v10796 = vrot.slane %v43, 4
  %v10797 = vrot.slane %v42, 5
  %v10798 = vrot.slane %v43, 5
  %v10799 = vrot.slane %v42, 6
  %v10800 = vrot.slane %v43, 6
  %v10801 = vrot.slane %v42, 7
  %v10802 = vrot.slane %v43, 7
  %v10803 = vrot.slane %v44, 1
  %v10804 = vrot.slane %v45, 1
  %v10805 = vrot.slane %v44, 2
  %v10806 = vrot.slane %v45, 2
  %v10807 = vrot.slane %v44, 3
  %v10808 = vrot.slane %v45, 3
  %v10809 = vrot.slane %v44, 4
  %v10810 = vrot.slane %v45, 4
  %v10811 = vrot.slane %v44, 5
  %v10812 = vrot.slane %v45, 5
  %v10813 = vrot.slane %v44, 6
  %v10814 = vrot.slane %v45, 6
  %v10815 = vrot.slane %v44, 7
  %v10816 = vrot.slane %v45, 7
  %v10817 = vrot.slane %v46, 1
  %v10818 = vrot.slane %v47, 1
  %v10819 = vrot.slane %v46, 2
  %v10820 = vrot.slane %v47, 2
  %v10821 = vrot.slane %v46, 3
  %v10822 = vrot.slane %v47, 3
  %v10823 = vrot.slane %v46, 4
  %v10824 = vrot.slane %v47, 4
  %v10825 = vrot.slane %v46, 5
  %v10826 = vrot.slane %v47, 5
  %v10827 = vrot.slane %v46, 6
  %v10828 = vrot.slane %v47, 6
  %v10829 = vrot.slane %v46, 7
  %v10830 = vrot.slane %v47, 7
  %v11055 = vadd.f32 %v10383, %v20
  %v11056 = vadd.f32 %v10384, %v21
  %v11057 = vadd.f32 %v10385, %v10635
  %v11058 = vadd.f32 %v10386, %v10636
  %v11059 = vadd.f32 %v10387, %v10637
  %v11060 = vadd.f32 %v10388, %v10638
  %v11061 = vadd.f32 %v10389, %v10639
  %v11062 = vadd.f32 %v10390, %v10640
  %v11063 = vadd.f32 %v10391, %v10641
  %v11064 = vadd.f32 %v10392, %v10642
  %v11065 = vadd.f32 %v10393, %v10643
  %v11066 = vadd.f32 %v10394, %v10644
  %v11067 = vadd.f32 %v10395, %v10645
  %v11068 = vadd.f32 %v10396, %v10646
  %v11069 = vadd.f32 %v10397, %v10647
  %v11070 = vadd.f32 %v10398, %v10648
  %v11071 = vadd.f32 %v10399, %v22
  %v11072 = vadd.f32 %v10400, %v23
  %v11073 = vadd.f32 %v10401, %v10649
  %v11074 = vadd.f32 %v10402, %v10650
  %v11075 = vadd.f32 %v10403, %v10651
  %v11076 = vadd.f32 %v10404, %v10652
  %v11077 = vadd.f32 %v10405, %v10653
  %v11078 = vadd.f32 %v10406, %v10654
  %v11079 = vadd.f32 %v10407, %v10655
  %v11080 = vadd.f32 %v10408, %v10656
  %v11081 = vadd.f32 %v10409, %v10657
  %v11082 = vadd.f32 %v10410, %v10658
  %v11083 = vadd.f32 %v10411, %v10659
  %v11084 = vadd.f32 %v10412, %v10660
  %v11085 = vadd.f32 %v10413, %v10661
  %v11086 = vadd.f32 %v10414, %v10662
  %v11087 = vadd.f32 %v10415, %v24
  %v11088 = vadd.f32 %v10416, %v25
  %v11089 = vadd.f32 %v10417, %v10663
  %v11090 = vadd.f32 %v10418, %v10664
  %v11091 = vadd.f32 %v10419, %v10665
  %v11092 = vadd.f32 %v10420, %v10666
  %v11093 = vadd.f32 %v10421, %v10667
  %v11094 = vadd.f32 %v10422, %v10668
  %v11095 = vadd.f32 %v10423, %v10669
  %v11096 = vadd.f32 %v10424, %v10670
  %v11097 = vadd.f32 %v10425, %v10671
  %v11098 = vadd.f32 %v10426, %v10672
  %v11099 = vadd.f32 %v10427, %v10673
  %v11100 = vadd.f32 %v10428, %v10674
  %v11101 = vadd.f32 %v10429, %v10675
  %v11102 = vadd.f32 %v10430, %v10676
  %v11103 = vadd.f32 %v10431, %v26
  %v11104 = vadd.f32 %v10432, %v27
  %v11105 = vadd.f32 %v10433, %v10677
  %v11106 = vadd.f32 %v10434, %v10678
  %v11107 = vadd.f32 %v10435, %v10679
  %v11108 = vadd.f32 %v10436, %v10680
  %v11109 = vadd.f32 %v10437, %v10681
  %v11110 = vadd.f32 %v10438, %v10682
  %v11111 = vadd.f32 %v10439, %v10683
  %v11112 = vadd.f32 %v10440, %v10684
  %v11113 = vadd.f32 %v10441, %v10685
  %v11114 = vadd.f32 %v10442, %v10686
  %v11115 = vadd.f32 %v10443, %v10687
  %v11116 = vadd.f32 %v10444, %v10688
  %v11117 = vadd.f32 %v10445, %v10689
  %v11118 = vadd.f32 %v10446, %v10690
  %v11119 = vadd.f32 %v10447, %v28
  %v11120 = vadd.f32 %v10448, %v29
  %v11121 = vadd.f32 %v10449, %v10691
  %v11122 = vadd.f32 %v10450, %v10692
  %v11123 = vadd.f32 %v10451, %v10693
  %v11124 = vadd.f32 %v10452, %v10694
  %v11125 = vadd.f32 %v10453, %v10695
  %v11126 = vadd.f32 %v10454, %v10696
  %v11127 = vadd.f32 %v10455, %v10697
  %v11128 = vadd.f32 %v10456, %v10698
  %v11129 = vadd.f32 %v10457, %v10699
  %v11130 = vadd.f32 %v10458, %v10700
  %v11131 = vadd.f32 %v10459, %v10701
  %v11132 = vadd.f32 %v10460, %v10702
  %v11133 = vadd.f32 %v10461, %v10703
  %v11134 = vadd.f32 %v10462, %v10704
  %v11135 = vadd.f32 %v10463, %v30
  %v11136 = vadd.f32 %v10464, %v31
  %v11137 = vadd.f32 %v10465, %v10705
  %v11138 = vadd.f32 %v10466, %v10706
  %v11139 = vadd.f32 %v10467, %v10707
  %v11140 = vadd.f32 %v10468, %v10708
  %v11141 = vadd.f32 %v10469, %v10709
  %v11142 = vadd.f32 %v10470, %v10710
  %v11143 = vadd.f32 %v10471, %v10711
  %v11144 = vadd.f32 %v10472, %v10712
  %v11145 = vadd.f32 %v10473, %v10713
  %v11146 = vadd.f32 %v10474, %v10714
  %v11147 = vadd.f32 %v10475, %v10715
  %v11148 = vadd.f32 %v10476, %v10716
  %v11149 = vadd.f32 %v10477, %v10717
  %v11150 = vadd.f32 %v10478, %v10718
  %v11151 = vadd.f32 %v10479, %v32
  %v11152 = vadd.f32 %v10480, %v33
  %v11153 = vadd.f32 %v10481, %v10719
  %v11154 = vadd.f32 %v10482, %v10720
  %v11155 = vadd.f32 %v10483, %v10721
  %v11156 = vadd.f32 %v10484, %v10722
  %v11157 = vadd.f32 %v10485, %v10723
  %v11158 = vadd.f32 %v10486, %v10724
  %v11159 = vadd.f32 %v10487, %v10725
  %v11160 = vadd.f32 %v10488, %v10726
  %v11161 = vadd.f32 %v10489, %v10727
  %v11162 = vadd.f32 %v10490, %v10728
  %v11163 = vadd.f32 %v10491, %v10729
  %v11164 = vadd.f32 %v10492, %v10730
  %v11165 = vadd.f32 %v10493, %v10731
  %v11166 = vadd.f32 %v10494, %v10732
  %v11167 = vadd.f32 %v10495, %v34
  %v11168 = vadd.f32 %v10496, %v35
  %v11169 = vadd.f32 %v10497, %v10733
  %v11170 = vadd.f32 %v10498, %v10734
  %v11171 = vadd.f32 %v10499, %v10735
  %v11172 = vadd.f32 %v10500, %v10736
  %v11173 = vadd.f32 %v10501, %v10737
  %v11174 = vadd.f32 %v10502, %v10738
  %v11175 = vadd.f32 %v10503, %v10739
  %v11176 = vadd.f32 %v10504, %v10740
  %v11177 = vadd.f32 %v10505, %v10741
  %v11178 = vadd.f32 %v10506, %v10742
  %v11179 = vadd.f32 %v10507, %v10743
  %v11180 = vadd.f32 %v10508, %v10744
  %v11181 = vadd.f32 %v10509, %v10745
  %v11182 = vadd.f32 %v10510, %v10746
  %v11183 = vadd.f32 %v10511, %v36
  %v11184 = vadd.f32 %v10512, %v37
  %v11185 = vadd.f32 %v10513, %v10747
  %v11186 = vadd.f32 %v10514, %v10748
  %v11187 = vadd.f32 %v10515, %v10749
  %v11188 = vadd.f32 %v10516, %v10750
  %v11189 = vadd.f32 %v10517, %v10751
  %v11190 = vadd.f32 %v10518, %v10752
  %v11191 = vadd.f32 %v10519, %v10753
  %v11192 = vadd.f32 %v10520, %v10754
  %v11193 = vadd.f32 %v10521, %v10755
  %v11194 = vadd.f32 %v10522, %v10756
  %v11195 = vadd.f32 %v10523, %v10757
  %v11196 = vadd.f32 %v10524, %v10758
  %v11197 = vadd.f32 %v10525, %v10759
  %v11198 = vadd.f32 %v10526, %v10760
  %v11199 = vadd.f32 %v10527, %v38
  %v11200 = vadd.f32 %v10528, %v39
  %v11201 = vadd.f32 %v10529, %v10761
  %v11202 = vadd.f32 %v10530, %v10762
  %v11203 = vadd.f32 %v10531, %v10763
  %v11204 = vadd.f32 %v10532, %v10764
  %v11205 = vadd.f32 %v10533, %v10765
  %v11206 = vadd.f32 %v10534, %v10766
  %v11207 = vadd.f32 %v10535, %v10767
  %v11208 = vadd.f32 %v10536, %v10768
  %v11209 = vadd.f32 %v10537, %v10769
  %v11210 = vadd.f32 %v10538, %v10770
  %v11211 = vadd.f32 %v10539, %v10771
  %v11212 = vadd.f32 %v10540, %v10772
  %v11213 = vadd.f32 %v10541, %v10773
  %v11214 = vadd.f32 %v10542, %v10774
  %v11215 = vadd.f32 %v10543, %v40
  %v11216 = vadd.f32 %v10544, %v41
  %v11217 = vadd.f32 %v10545, %v10775
  %v11218 = vadd.f32 %v10546, %v10776
  %v11219 = vadd.f32 %v10547, %v10777
  %v11220 = vadd.f32 %v10548, %v10778
  %v11221 = vadd.f32 %v10549, %v10779
  %v11222 = vadd.f32 %v10550, %v10780
  %v11223 = vadd.f32 %v10551, %v10781
  %v11224 = vadd.f32 %v10552, %v10782
  %v11225 = vadd.f32 %v10553, %v10783
  %v11226 = vadd.f32 %v10554, %v10784
  %v11227 = vadd.f32 %v10555, %v10785
  %v11228 = vadd.f32 %v10556, %v10786
  %v11229 = vadd.f32 %v10557, %v10787
  %v11230 = vadd.f32 %v10558, %v10788
  %v11231 = vadd.f32 %v10559, %v42
  %v11232 = vadd.f32 %v10560, %v43
  %v11233 = vadd.f32 %v10561, %v10789
  %v11234 = vadd.f32 %v10562, %v10790
  %v11235 = vadd.f32 %v10563, %v10791
  %v11236 = vadd.f32 %v10564, %v10792
  %v11237 = vadd.f32 %v10565, %v10793
  %v11238 = vadd.f32 %v10566, %v10794
  %v11239 = vadd.f32 %v10567, %v10795
  %v11240 = vadd.f32 %v10568, %v10796
  %v11241 = vadd.f32 %v10569, %v10797
  %v11242 = vadd.f32 %v10570, %v10798
  %v11243 = vadd.f32 %v10571, %v10799
  %v11244 = vadd.f32 %v10572, %v10800
  %v11245 = vadd.f32 %v10573, %v10801
  %v11246 = vadd.f32 %v10574, %v10802
  %v11247 = vadd.f32 %v10575, %v44
  %v11248 = vadd.f32 %v10576, %v45
  %v11249 = vadd.f32 %v10577, %v10803
  %v11250 = vadd.f32 %v10578, %v10804
  %v11251 = vadd.f32 %v10579, %v10805
  %v11252 = vadd.f32 %v10580, %v10806
  %v11253 = vadd.f32 %v10581, %v10807
  %v11254 = vadd.f32 %v10582, %v10808
  %v11255 = vadd.f32 %v10583, %v10809
  %v11256 = vadd.f32 %v10584, %v10810
  %v11257 = vadd.f32 %v10585, %v10811
  %v11258 = vadd.f32 %v10586, %v10812
  %v11259 = vadd.f32 %v10587, %v10813
  %v11260 = vadd.f32 %v10588, %v10814
  %v11261 = vadd.f32 %v10589, %v10815
  %v11262 = vadd.f32 %v10590, %v10816
  %v11263 = vadd.f32 %v10591, %v46
  %v11264 = vadd.f32 %v10592, %v47
  %v11265 = vadd.f32 %v10593, %v10817
  %v11266 = vadd.f32 %v10594, %v10818
  %v11267 = vadd.f32 %v10595, %v10819
  %v11268 = vadd.f32 %v10596, %v10820
  %v11269 = vadd.f32 %v10597, %v10821
  %v11270 = vadd.f32 %v10598, %v10822
  %v11271 = vadd.f32 %v10599, %v10823
  %v11272 = vadd.f32 %v10600, %v10824
  %v11273 = vadd.f32 %v10601, %v10825
  %v11274 = vadd.f32 %v10602, %v10826
  %v11275 = vadd.f32 %v10603, %v10827
  %v11276 = vadd.f32 %v10604, %v10828
  %v11277 = vadd.f32 %v10605, %v10829
  %v11278 = vadd.f32 %v10606, %v10830
  %v11279 = vmul.f32 %v11055, 0.5
  %v11280 = vmul.f32 %v11056, 0.5
  %v11281 = vmul.f32 %v11057, 0.5
  %v11282 = vmul.f32 %v11058, 0.5
  %v11283 = vmul.f32 %v11059, 0.5
  %v11284 = vmul.f32 %v11060, 0.5
  %v11285 = vmul.f32 %v11061, 0.5
  %v11286 = vmul.f32 %v11062, 0.5
  %v11287 = vmul.f32 %v11063, 0.5
  %v11288 = vmul.f32 %v11064, 0.5
  %v11289 = vmul.f32 %v11065, 0.5
  %v11290 = vmul.f32 %v11066, 0.5
  %v11291 = vmul.f32 %v11067, 0.5
  %v11292 = vmul.f32 %v11068, 0.5
  %v11293 = vmul.f32 %v11069, 0.5
  %v11294 = vmul.f32 %v11070, 0.5
  %v11295 = vmul.f32 %v11071, 0.5
  %v11296 = vmul.f32 %v11072, 0.5
  %v11297 = vmul.f32 %v11073, 0.5
  %v11298 = vmul.f32 %v11074, 0.5
  %v11299 = vmul.f32 %v11075, 0.5
  %v11300 = vmul.f32 %v11076, 0.5
  %v11301 = vmul.f32 %v11077, 0.5
  %v11302 = vmul.f32 %v11078, 0.5
  %v11303 = vmul.f32 %v11079, 0.5
  %v11304 = vmul.f32 %v11080, 0.5
  %v11305 = vmul.f32 %v11081, 0.5
  %v11306 = vmul.f32 %v11082, 0.5
  %v11307 = vmul.f32 %v11083, 0.5
  %v11308 = vmul.f32 %v11084, 0.5
  %v11309 = vmul.f32 %v11085, 0.5
  %v11310 = vmul.f32 %v11086, 0.5
  %v11311 = vmul.f32 %v11087, 0.5
  %v11312 = vmul.f32 %v11088, 0.5
  %v11313 = vmul.f32 %v11089, 0.5
  %v11314 = vmul.f32 %v11090, 0.5
  %v11315 = vmul.f32 %v11091, 0.5
  %v11316 = vmul.f32 %v11092, 0.5
  %v11317 = vmul.f32 %v11093, 0.5
  %v11318 = vmul.f32 %v11094, 0.5
  %v11319 = vmul.f32 %v11095, 0.5
  %v11320 = vmul.f32 %v11096, 0.5
  %v11321 = vmul.f32 %v11097, 0.5
  %v11322 = vmul.f32 %v11098, 0.5
  %v11323 = vmul.f32 %v11099, 0.5
  %v11324 = vmul.f32 %v11100, 0.5
  %v11325 = vmul.f32 %v11101, 0.5
  %v11326 = vmul.f32 %v11102, 0.5
  %v11327 = vmul.f32 %v11103, 0.5
  %v11328 = vmul.f32 %v11104, 0.5
  %v11329 = vmul.f32 %v11105, 0.5
  %v11330 = vmul.f32 %v11106, 0.5
  %v11331 = vmul.f32 %v11107, 0.5
  %v11332 = vmul.f32 %v11108, 0.5
  %v11333 = vmul.f32 %v11109, 0.5
  %v11334 = vmul.f32 %v11110, 0.5
  %v11335 = vmul.f32 %v11111, 0.5
  %v11336 = vmul.f32 %v11112, 0.5
  %v11337 = vmul.f32 %v11113, 0.5
  %v11338 = vmul.f32 %v11114, 0.5
  %v11339 = vmul.f32 %v11115, 0.5
  %v11340 = vmul.f32 %v11116, 0.5
  %v11341 = vmul.f32 %v11117, 0.5
  %v11342 = vmul.f32 %v11118, 0.5
  %v11343 = vmul.f32 %v11119, 0.5
  %v11344 = vmul.f32 %v11120, 0.5
  %v11345 = vmul.f32 %v11121, 0.5
  %v11346 = vmul.f32 %v11122, 0.5
  %v11347 = vmul.f32 %v11123, 0.5
  %v11348 = vmul.f32 %v11124, 0.5
  %v11349 = vmul.f32 %v11125, 0.5
  %v11350 = vmul.f32 %v11126, 0.5
  %v11351 = vmul.f32 %v11127, 0.5
  %v11352 = vmul.f32 %v11128, 0.5
  %v11353 = vmul.f32 %v11129, 0.5
  %v11354 = vmul.f32 %v11130, 0.5
  %v11355 = vmul.f32 %v11131, 0.5
  %v11356 = vmul.f32 %v11132, 0.5
  %v11357 = vmul.f32 %v11133, 0.5
  %v11358 = vmul.f32 %v11134, 0.5
  %v11359 = vmul.f32 %v11135, 0.5
  %v11360 = vmul.f32 %v11136, 0.5
  %v11361 = vmul.f32 %v11137, 0.5
  %v11362 = vmul.f32 %v11138, 0.5
  %v11363 = vmul.f32 %v11139, 0.5
  %v11364 = vmul.f32 %v11140, 0.5
  %v11365 = vmul.f32 %v11141, 0.5
  %v11366 = vmul.f32 %v11142, 0.5
  %v11367 = vmul.f32 %v11143, 0.5
  %v11368 = vmul.f32 %v11144, 0.5
  %v11369 = vmul.f32 %v11145, 0.5
  %v11370 = vmul.f32 %v11146, 0.5
  %v11371 = vmul.f32 %v11147, 0.5
  %v11372 = vmul.f32 %v11148, 0.5
  %v11373 = vmul.f32 %v11149, 0.5
  %v11374 = vmul.f32 %v11150, 0.5
  %v11375 = vmul.f32 %v11151, 0.5
  %v11376 = vmul.f32 %v11152, 0.5
  %v11377 = vmul.f32 %v11153, 0.5
  %v11378 = vmul.f32 %v11154, 0.5
  %v11379 = vmul.f32 %v11155, 0.5
  %v11380 = vmul.f32 %v11156, 0.5
  %v11381 = vmul.f32 %v11157, 0.5
  %v11382 = vmul.f32 %v11158, 0.5
  %v11383 = vmul.f32 %v11159, 0.5
  %v11384 = vmul.f32 %v11160, 0.5
  %v11385 = vmul.f32 %v11161, 0.5
  %v11386 = vmul.f32 %v11162, 0.5
  %v11387 = vmul.f32 %v11163, 0.5
  %v11388 = vmul.f32 %v11164, 0.5
  %v11389 = vmul.f32 %v11165, 0.5
  %v11390 = vmul.f32 %v11166, 0.5
  %v11391 = vmul.f32 %v11167, 0.5
  %v11392 = vmul.f32 %v11168, 0.5
  %v11393 = vmul.f32 %v11169, 0.5
  %v11394 = vmul.f32 %v11170, 0.5
  %v11395 = vmul.f32 %v11171, 0.5
  %v11396 = vmul.f32 %v11172, 0.5
  %v11397 = vmul.f32 %v11173, 0.5
  %v11398 = vmul.f32 %v11174, 0.5
  %v11399 = vmul.f32 %v11175, 0.5
  %v11400 = vmul.f32 %v11176, 0.5
  %v11401 = vmul.f32 %v11177, 0.5
  %v11402 = vmul.f32 %v11178, 0.5
  %v11403 = vmul.f32 %v11179, 0.5
  %v11404 = vmul.f32 %v11180, 0.5
  %v11405 = vmul.f32 %v11181, 0.5
  %v11406 = vmul.f32 %v11182, 0.5
  %v11407 = vmul.f32 %v11183, 0.5
  %v11408 = vmul.f32 %v11184, 0.5
  %v11409 = vmul.f32 %v11185, 0.5
  %v11410 = vmul.f32 %v11186, 0.5
  %v11411 = vmul.f32 %v11187, 0.5
  %v11412 = vmul.f32 %v11188, 0.5
  %v11413 = vmul.f32 %v11189, 0.5
  %v11414 = vmul.f32 %v11190, 0.5
  %v11415 = vmul.f32 %v11191, 0.5
  %v11416 = vmul.f32 %v11192, 0.5
  %v11417 = vmul.f32 %v11193, 0.5
  %v11418 = vmul.f32 %v11194, 0.5
  %v11419 = vmul.f32 %v11195, 0.5
  %v11420 = vmul.f32 %v11196, 0.5
  %v11421 = vmul.f32 %v11197, 0.5
  %v11422 = vmul.f32 %v11198, 0.5
  %v11423 = vmul.f32 %v11199, 0.5
  %v11424 = vmul.f32 %v11200, 0.5
  %v11425 = vmul.f32 %v11201, 0.5
  %v11426 = vmul.f32 %v11202, 0.5
  %v11427 = vmul.f32 %v11203, 0.5
  %v11428 = vmul.f32 %v11204, 0.5
  %v11429 = vmul.f32 %v11205, 0.5
  %v11430 = vmul.f32 %v11206, 0.5
  %v11431 = vmul.f32 %v11207, 0.5
  %v11432 = vmul.f32 %v11208, 0.5
  %v11433 = vmul.f32 %v11209, 0.5
  %v11434 = vmul.f32 %v11210, 0.5
  %v11435 = vmul.f32 %v11211, 0.5
  %v11436 = vmul.f32 %v11212, 0.5
  %v11437 = vmul.f32 %v11213, 0.5
  %v11438 = vmul.f32 %v11214, 0.5
  %v11439 = vmul.f32 %v11215, 0.5
  %v11440 = vmul.f32 %v11216, 0.5
  %v11441 = vmul.f32 %v11217, 0.5
  %v11442 = vmul.f32 %v11218, 0.5
  %v11443 = vmul.f32 %v11219, 0.5
  %v11444 = vmul.f32 %v11220, 0.5
  %v11445 = vmul.f32 %v11221, 0.5
  %v11446 = vmul.f32 %v11222, 0.5
  %v11447 = vmul.f32 %v11223, 0.5
  %v11448 = vmul.f32 %v11224, 0.5
  %v11449 = vmul.f32 %v11225, 0.5
  %v11450 = vmul.f32 %v11226, 0.5
  %v11451 = vmul.f32 %v11227, 0.5
  %v11452 = vmul.f32 %v11228, 0.5
  %v11453 = vmul.f32 %v11229, 0.5
  %v11454 = vmul.f32 %v11230, 0.5
  %v11455 = vmul.f32 %v11231, 0.5
  %v11456 = vmul.f32 %v11232, 0.5
  %v11457 = vmul.f32 %v11233, 0.5
  %v11458 = vmul.f32 %v11234, 0.5
  %v11459 = vmul.f32 %v11235, 0.5
  %v11460 = vmul.f32 %v11236, 0.5
  %v11461 = vmul.f32 %v11237, 0.5
  %v11462 = vmul.f32 %v11238, 0.5
  %v11463 = vmul.f32 %v11239, 0.5
  %v11464 = vmul.f32 %v11240, 0.5
  %v11465 = vmul.f32 %v11241, 0.5
  %v11466 = vmul.f32 %v11242, 0.5
  %v11467 = vmul.f32 %v11243, 0.5
  %v11468 = vmul.f32 %v11244, 0.5
  %v11469 = vmul.f32 %v11245, 0.5
  %v11470 = vmul.f32 %v11246, 0.5
  %v11471 = vmul.f32 %v11247, 0.5
  %v11472 = vmul.f32 %v11248, 0.5
  %v11473 = vmul.f32 %v11249, 0.5
  %v11474 = vmul.f32 %v11250, 0.5
  %v11475 = vmul.f32 %v11251, 0.5
  %v11476 = vmul.f32 %v11252, 0.5
  %v11477 = vmul.f32 %v11253, 0.5
  %v11478 = vmul.f32 %v11254, 0.5
  %v11479 = vmul.f32 %v11255, 0.5
  %v11480 = vmul.f32 %v11256, 0.5
  %v11481 = vmul.f32 %v11257, 0.5
  %v11482 = vmul.f32 %v11258, 0.5
  %v11483 = vmul.f32 %v11259, 0.5
  %v11484 = vmul.f32 %v11260, 0.5
  %v11485 = vmul.f32 %v11261, 0.5
  %v11486 = vmul.f32 %v11262, 0.5
  %v11487 = vmul.f32 %v11263, 0.5
  %v11488 = vmul.f32 %v11264, 0.5
  %v11489 = vmul.f32 %v11265, 0.5
  %v11490 = vmul.f32 %v11266, 0.5
  %v11491 = vmul.f32 %v11267, 0.5
  %v11492 = vmul.f32 %v11268, 0.5
  %v11493 = vmul.f32 %v11269, 0.5
  %v11494 = vmul.f32 %v11270, 0.5
  %v11495 = vmul.f32 %v11271, 0.5
  %v11496 = vmul.f32 %v11272, 0.5
  %v11497 = vmul.f32 %v11273, 0.5
  %v11498 = vmul.f32 %v11274, 0.5
  %v11499 = vmul.f32 %v11275, 0.5
  %v11500 = vmul.f32 %v11276, 0.5
  %v11501 = vmul.f32 %v11277, 0.5
  %v11502 = vmul.f32 %v11278, 0.5
  %v11727 = vrot.slane %v11281, 7
  %vm11728 = vcmask 1041409
  %v11729 = vsel %vm11728, %v11727, %v11279
  %v11730 = vrot.slane %v11283, 6
  %vm11731 = vcmask 1042434
  %v11732 = vsel %vm11731, %v11730, %v11729
  %v11733 = vrot.slane %v11285, 5
  %vm11734 = vcmask 1043459
  %v11735 = vsel %vm11734, %v11733, %v11732
  %v11736 = vrot.slane %v11287, 4
  %vm11737 = vcmask 1044484
  %v11738 = vsel %vm11737, %v11736, %v11735
  %v11739 = vrot.slane %v11289, 3
  %vm11740 = vcmask 1045509
  %v11741 = vsel %vm11740, %v11739, %v11738
  %v11742 = vrot.slane %v11291, 2
  %vm11743 = vcmask 1046534
  %v11744 = vsel %vm11743, %v11742, %v11741
  %v11745 = vrot.slane %v11293, 1
  %vm11746 = vcmask 1047559
  %v11747 = vsel %vm11746, %v11745, %v11744
  %v11748 = vrot.slane %v11282, 7
  %v11749 = vsel %vm11728, %v11748, %v11280
  %v11750 = vrot.slane %v11284, 6
  %v11751 = vsel %vm11731, %v11750, %v11749
  %v11752 = vrot.slane %v11286, 5
  %v11753 = vsel %vm11734, %v11752, %v11751
  %v11754 = vrot.slane %v11288, 4
  %v11755 = vsel %vm11737, %v11754, %v11753
  %v11756 = vrot.slane %v11290, 3
  %v11757 = vsel %vm11740, %v11756, %v11755
  %v11758 = vrot.slane %v11292, 2
  %v11759 = vsel %vm11743, %v11758, %v11757
  %v11760 = vrot.slane %v11294, 1
  %v11761 = vsel %vm11746, %v11760, %v11759
  %v11762 = vrot.slane %v11297, 7
  %v11763 = vsel %vm11728, %v11762, %v11295
  %v11764 = vrot.slane %v11299, 6
  %v11765 = vsel %vm11731, %v11764, %v11763
  %v11766 = vrot.slane %v11301, 5
  %v11767 = vsel %vm11734, %v11766, %v11765
  %v11768 = vrot.slane %v11303, 4
  %v11769 = vsel %vm11737, %v11768, %v11767
  %v11770 = vrot.slane %v11305, 3
  %v11771 = vsel %vm11740, %v11770, %v11769
  %v11772 = vrot.slane %v11307, 2
  %v11773 = vsel %vm11743, %v11772, %v11771
  %v11774 = vrot.slane %v11309, 1
  %v11775 = vsel %vm11746, %v11774, %v11773
  %v11776 = vrot.slane %v11298, 7
  %v11777 = vsel %vm11728, %v11776, %v11296
  %v11778 = vrot.slane %v11300, 6
  %v11779 = vsel %vm11731, %v11778, %v11777
  %v11780 = vrot.slane %v11302, 5
  %v11781 = vsel %vm11734, %v11780, %v11779
  %v11782 = vrot.slane %v11304, 4
  %v11783 = vsel %vm11737, %v11782, %v11781
  %v11784 = vrot.slane %v11306, 3
  %v11785 = vsel %vm11740, %v11784, %v11783
  %v11786 = vrot.slane %v11308, 2
  %v11787 = vsel %vm11743, %v11786, %v11785
  %v11788 = vrot.slane %v11310, 1
  %v11789 = vsel %vm11746, %v11788, %v11787
  %v11790 = vrot.slane %v11313, 7
  %v11791 = vsel %vm11728, %v11790, %v11311
  %v11792 = vrot.slane %v11315, 6
  %v11793 = vsel %vm11731, %v11792, %v11791
  %v11794 = vrot.slane %v11317, 5
  %v11795 = vsel %vm11734, %v11794, %v11793
  %v11796 = vrot.slane %v11319, 4
  %v11797 = vsel %vm11737, %v11796, %v11795
  %v11798 = vrot.slane %v11321, 3
  %v11799 = vsel %vm11740, %v11798, %v11797
  %v11800 = vrot.slane %v11323, 2
  %v11801 = vsel %vm11743, %v11800, %v11799
  %v11802 = vrot.slane %v11325, 1
  %v11803 = vsel %vm11746, %v11802, %v11801
  %v11804 = vrot.slane %v11314, 7
  %v11805 = vsel %vm11728, %v11804, %v11312
  %v11806 = vrot.slane %v11316, 6
  %v11807 = vsel %vm11731, %v11806, %v11805
  %v11808 = vrot.slane %v11318, 5
  %v11809 = vsel %vm11734, %v11808, %v11807
  %v11810 = vrot.slane %v11320, 4
  %v11811 = vsel %vm11737, %v11810, %v11809
  %v11812 = vrot.slane %v11322, 3
  %v11813 = vsel %vm11740, %v11812, %v11811
  %v11814 = vrot.slane %v11324, 2
  %v11815 = vsel %vm11743, %v11814, %v11813
  %v11816 = vrot.slane %v11326, 1
  %v11817 = vsel %vm11746, %v11816, %v11815
  %v11818 = vrot.slane %v11329, 7
  %v11819 = vsel %vm11728, %v11818, %v11327
  %v11820 = vrot.slane %v11331, 6
  %v11821 = vsel %vm11731, %v11820, %v11819
  %v11822 = vrot.slane %v11333, 5
  %v11823 = vsel %vm11734, %v11822, %v11821
  %v11824 = vrot.slane %v11335, 4
  %v11825 = vsel %vm11737, %v11824, %v11823
  %v11826 = vrot.slane %v11337, 3
  %v11827 = vsel %vm11740, %v11826, %v11825
  %v11828 = vrot.slane %v11339, 2
  %v11829 = vsel %vm11743, %v11828, %v11827
  %v11830 = vrot.slane %v11341, 1
  %v11831 = vsel %vm11746, %v11830, %v11829
  %v11832 = vrot.slane %v11330, 7
  %v11833 = vsel %vm11728, %v11832, %v11328
  %v11834 = vrot.slane %v11332, 6
  %v11835 = vsel %vm11731, %v11834, %v11833
  %v11836 = vrot.slane %v11334, 5
  %v11837 = vsel %vm11734, %v11836, %v11835
  %v11838 = vrot.slane %v11336, 4
  %v11839 = vsel %vm11737, %v11838, %v11837
  %v11840 = vrot.slane %v11338, 3
  %v11841 = vsel %vm11740, %v11840, %v11839
  %v11842 = vrot.slane %v11340, 2
  %v11843 = vsel %vm11743, %v11842, %v11841
  %v11844 = vrot.slane %v11342, 1
  %v11845 = vsel %vm11746, %v11844, %v11843
  %v11846 = vrot.slane %v11345, 7
  %v11847 = vsel %vm11728, %v11846, %v11343
  %v11848 = vrot.slane %v11347, 6
  %v11849 = vsel %vm11731, %v11848, %v11847
  %v11850 = vrot.slane %v11349, 5
  %v11851 = vsel %vm11734, %v11850, %v11849
  %v11852 = vrot.slane %v11351, 4
  %v11853 = vsel %vm11737, %v11852, %v11851
  %v11854 = vrot.slane %v11353, 3
  %v11855 = vsel %vm11740, %v11854, %v11853
  %v11856 = vrot.slane %v11355, 2
  %v11857 = vsel %vm11743, %v11856, %v11855
  %v11858 = vrot.slane %v11357, 1
  %v11859 = vsel %vm11746, %v11858, %v11857
  %v11860 = vrot.slane %v11346, 7
  %v11861 = vsel %vm11728, %v11860, %v11344
  %v11862 = vrot.slane %v11348, 6
  %v11863 = vsel %vm11731, %v11862, %v11861
  %v11864 = vrot.slane %v11350, 5
  %v11865 = vsel %vm11734, %v11864, %v11863
  %v11866 = vrot.slane %v11352, 4
  %v11867 = vsel %vm11737, %v11866, %v11865
  %v11868 = vrot.slane %v11354, 3
  %v11869 = vsel %vm11740, %v11868, %v11867
  %v11870 = vrot.slane %v11356, 2
  %v11871 = vsel %vm11743, %v11870, %v11869
  %v11872 = vrot.slane %v11358, 1
  %v11873 = vsel %vm11746, %v11872, %v11871
  %v11874 = vrot.slane %v11361, 7
  %v11875 = vsel %vm11728, %v11874, %v11359
  %v11876 = vrot.slane %v11363, 6
  %v11877 = vsel %vm11731, %v11876, %v11875
  %v11878 = vrot.slane %v11365, 5
  %v11879 = vsel %vm11734, %v11878, %v11877
  %v11880 = vrot.slane %v11367, 4
  %v11881 = vsel %vm11737, %v11880, %v11879
  %v11882 = vrot.slane %v11369, 3
  %v11883 = vsel %vm11740, %v11882, %v11881
  %v11884 = vrot.slane %v11371, 2
  %v11885 = vsel %vm11743, %v11884, %v11883
  %v11886 = vrot.slane %v11373, 1
  %v11887 = vsel %vm11746, %v11886, %v11885
  %v11888 = vrot.slane %v11362, 7
  %v11889 = vsel %vm11728, %v11888, %v11360
  %v11890 = vrot.slane %v11364, 6
  %v11891 = vsel %vm11731, %v11890, %v11889
  %v11892 = vrot.slane %v11366, 5
  %v11893 = vsel %vm11734, %v11892, %v11891
  %v11894 = vrot.slane %v11368, 4
  %v11895 = vsel %vm11737, %v11894, %v11893
  %v11896 = vrot.slane %v11370, 3
  %v11897 = vsel %vm11740, %v11896, %v11895
  %v11898 = vrot.slane %v11372, 2
  %v11899 = vsel %vm11743, %v11898, %v11897
  %v11900 = vrot.slane %v11374, 1
  %v11901 = vsel %vm11746, %v11900, %v11899
  %v11902 = vrot.slane %v11377, 7
  %v11903 = vsel %vm11728, %v11902, %v11375
  %v11904 = vrot.slane %v11379, 6
  %v11905 = vsel %vm11731, %v11904, %v11903
  %v11906 = vrot.slane %v11381, 5
  %v11907 = vsel %vm11734, %v11906, %v11905
  %v11908 = vrot.slane %v11383, 4
  %v11909 = vsel %vm11737, %v11908, %v11907
  %v11910 = vrot.slane %v11385, 3
  %v11911 = vsel %vm11740, %v11910, %v11909
  %v11912 = vrot.slane %v11387, 2
  %v11913 = vsel %vm11743, %v11912, %v11911
  %v11914 = vrot.slane %v11389, 1
  %v11915 = vsel %vm11746, %v11914, %v11913
  %v11916 = vrot.slane %v11378, 7
  %v11917 = vsel %vm11728, %v11916, %v11376
  %v11918 = vrot.slane %v11380, 6
  %v11919 = vsel %vm11731, %v11918, %v11917
  %v11920 = vrot.slane %v11382, 5
  %v11921 = vsel %vm11734, %v11920, %v11919
  %v11922 = vrot.slane %v11384, 4
  %v11923 = vsel %vm11737, %v11922, %v11921
  %v11924 = vrot.slane %v11386, 3
  %v11925 = vsel %vm11740, %v11924, %v11923
  %v11926 = vrot.slane %v11388, 2
  %v11927 = vsel %vm11743, %v11926, %v11925
  %v11928 = vrot.slane %v11390, 1
  %v11929 = vsel %vm11746, %v11928, %v11927
  %v11930 = vrot.slane %v11393, 7
  %v11931 = vsel %vm11728, %v11930, %v11391
  %v11932 = vrot.slane %v11395, 6
  %v11933 = vsel %vm11731, %v11932, %v11931
  %v11934 = vrot.slane %v11397, 5
  %v11935 = vsel %vm11734, %v11934, %v11933
  %v11936 = vrot.slane %v11399, 4
  %v11937 = vsel %vm11737, %v11936, %v11935
  %v11938 = vrot.slane %v11401, 3
  %v11939 = vsel %vm11740, %v11938, %v11937
  %v11940 = vrot.slane %v11403, 2
  %v11941 = vsel %vm11743, %v11940, %v11939
  %v11942 = vrot.slane %v11405, 1
  %v11943 = vsel %vm11746, %v11942, %v11941
  %v11944 = vrot.slane %v11394, 7
  %v11945 = vsel %vm11728, %v11944, %v11392
  %v11946 = vrot.slane %v11396, 6
  %v11947 = vsel %vm11731, %v11946, %v11945
  %v11948 = vrot.slane %v11398, 5
  %v11949 = vsel %vm11734, %v11948, %v11947
  %v11950 = vrot.slane %v11400, 4
  %v11951 = vsel %vm11737, %v11950, %v11949
  %v11952 = vrot.slane %v11402, 3
  %v11953 = vsel %vm11740, %v11952, %v11951
  %v11954 = vrot.slane %v11404, 2
  %v11955 = vsel %vm11743, %v11954, %v11953
  %v11956 = vrot.slane %v11406, 1
  %v11957 = vsel %vm11746, %v11956, %v11955
  %v11958 = vrot.slane %v11409, 7
  %v11959 = vsel %vm11728, %v11958, %v11407
  %v11960 = vrot.slane %v11411, 6
  %v11961 = vsel %vm11731, %v11960, %v11959
  %v11962 = vrot.slane %v11413, 5
  %v11963 = vsel %vm11734, %v11962, %v11961
  %v11964 = vrot.slane %v11415, 4
  %v11965 = vsel %vm11737, %v11964, %v11963
  %v11966 = vrot.slane %v11417, 3
  %v11967 = vsel %vm11740, %v11966, %v11965
  %v11968 = vrot.slane %v11419, 2
  %v11969 = vsel %vm11743, %v11968, %v11967
  %v11970 = vrot.slane %v11421, 1
  %v11971 = vsel %vm11746, %v11970, %v11969
  %v11972 = vrot.slane %v11410, 7
  %v11973 = vsel %vm11728, %v11972, %v11408
  %v11974 = vrot.slane %v11412, 6
  %v11975 = vsel %vm11731, %v11974, %v11973
  %v11976 = vrot.slane %v11414, 5
  %v11977 = vsel %vm11734, %v11976, %v11975
  %v11978 = vrot.slane %v11416, 4
  %v11979 = vsel %vm11737, %v11978, %v11977
  %v11980 = vrot.slane %v11418, 3
  %v11981 = vsel %vm11740, %v11980, %v11979
  %v11982 = vrot.slane %v11420, 2
  %v11983 = vsel %vm11743, %v11982, %v11981
  %v11984 = vrot.slane %v11422, 1
  %v11985 = vsel %vm11746, %v11984, %v11983
  %v11986 = vrot.slane %v11425, 7
  %v11987 = vsel %vm11728, %v11986, %v11423
  %v11988 = vrot.slane %v11427, 6
  %v11989 = vsel %vm11731, %v11988, %v11987
  %v11990 = vrot.slane %v11429, 5
  %v11991 = vsel %vm11734, %v11990, %v11989
  %v11992 = vrot.slane %v11431, 4
  %v11993 = vsel %vm11737, %v11992, %v11991
  %v11994 = vrot.slane %v11433, 3
  %v11995 = vsel %vm11740, %v11994, %v11993
  %v11996 = vrot.slane %v11435, 2
  %v11997 = vsel %vm11743, %v11996, %v11995
  %v11998 = vrot.slane %v11437, 1
  %v11999 = vsel %vm11746, %v11998, %v11997
  %v12000 = vrot.slane %v11426, 7
  %v12001 = vsel %vm11728, %v12000, %v11424
  %v12002 = vrot.slane %v11428, 6
  %v12003 = vsel %vm11731, %v12002, %v12001
  %v12004 = vrot.slane %v11430, 5
  %v12005 = vsel %vm11734, %v12004, %v12003
  %v12006 = vrot.slane %v11432, 4
  %v12007 = vsel %vm11737, %v12006, %v12005
  %v12008 = vrot.slane %v11434, 3
  %v12009 = vsel %vm11740, %v12008, %v12007
  %v12010 = vrot.slane %v11436, 2
  %v12011 = vsel %vm11743, %v12010, %v12009
  %v12012 = vrot.slane %v11438, 1
  %v12013 = vsel %vm11746, %v12012, %v12011
  %v12014 = vrot.slane %v11441, 7
  %v12015 = vsel %vm11728, %v12014, %v11439
  %v12016 = vrot.slane %v11443, 6
  %v12017 = vsel %vm11731, %v12016, %v12015
  %v12018 = vrot.slane %v11445, 5
  %v12019 = vsel %vm11734, %v12018, %v12017
  %v12020 = vrot.slane %v11447, 4
  %v12021 = vsel %vm11737, %v12020, %v12019
  %v12022 = vrot.slane %v11449, 3
  %v12023 = vsel %vm11740, %v12022, %v12021
  %v12024 = vrot.slane %v11451, 2
  %v12025 = vsel %vm11743, %v12024, %v12023
  %v12026 = vrot.slane %v11453, 1
  %v12027 = vsel %vm11746, %v12026, %v12025
  %v12028 = vrot.slane %v11442, 7
  %v12029 = vsel %vm11728, %v12028, %v11440
  %v12030 = vrot.slane %v11444, 6
  %v12031 = vsel %vm11731, %v12030, %v12029
  %v12032 = vrot.slane %v11446, 5
  %v12033 = vsel %vm11734, %v12032, %v12031
  %v12034 = vrot.slane %v11448, 4
  %v12035 = vsel %vm11737, %v12034, %v12033
  %v12036 = vrot.slane %v11450, 3
  %v12037 = vsel %vm11740, %v12036, %v12035
  %v12038 = vrot.slane %v11452, 2
  %v12039 = vsel %vm11743, %v12038, %v12037
  %v12040 = vrot.slane %v11454, 1
  %v12041 = vsel %vm11746, %v12040, %v12039
  %v12042 = vrot.slane %v11457, 7
  %v12043 = vsel %vm11728, %v12042, %v11455
  %v12044 = vrot.slane %v11459, 6
  %v12045 = vsel %vm11731, %v12044, %v12043
  %v12046 = vrot.slane %v11461, 5
  %v12047 = vsel %vm11734, %v12046, %v12045
  %v12048 = vrot.slane %v11463, 4
  %v12049 = vsel %vm11737, %v12048, %v12047
  %v12050 = vrot.slane %v11465, 3
  %v12051 = vsel %vm11740, %v12050, %v12049
  %v12052 = vrot.slane %v11467, 2
  %v12053 = vsel %vm11743, %v12052, %v12051
  %v12054 = vrot.slane %v11469, 1
  %v12055 = vsel %vm11746, %v12054, %v12053
  %v12056 = vrot.slane %v11458, 7
  %v12057 = vsel %vm11728, %v12056, %v11456
  %v12058 = vrot.slane %v11460, 6
  %v12059 = vsel %vm11731, %v12058, %v12057
  %v12060 = vrot.slane %v11462, 5
  %v12061 = vsel %vm11734, %v12060, %v12059
  %v12062 = vrot.slane %v11464, 4
  %v12063 = vsel %vm11737, %v12062, %v12061
  %v12064 = vrot.slane %v11466, 3
  %v12065 = vsel %vm11740, %v12064, %v12063
  %v12066 = vrot.slane %v11468, 2
  %v12067 = vsel %vm11743, %v12066, %v12065
  %v12068 = vrot.slane %v11470, 1
  %v12069 = vsel %vm11746, %v12068, %v12067
  %v12070 = vrot.slane %v11473, 7
  %v12071 = vsel %vm11728, %v12070, %v11471
  %v12072 = vrot.slane %v11475, 6
  %v12073 = vsel %vm11731, %v12072, %v12071
  %v12074 = vrot.slane %v11477, 5
  %v12075 = vsel %vm11734, %v12074, %v12073
  %v12076 = vrot.slane %v11479, 4
  %v12077 = vsel %vm11737, %v12076, %v12075
  %v12078 = vrot.slane %v11481, 3
  %v12079 = vsel %vm11740, %v12078, %v12077
  %v12080 = vrot.slane %v11483, 2
  %v12081 = vsel %vm11743, %v12080, %v12079
  %v12082 = vrot.slane %v11485, 1
  %v12083 = vsel %vm11746, %v12082, %v12081
  %v12084 = vrot.slane %v11474, 7
  %v12085 = vsel %vm11728, %v12084, %v11472
  %v12086 = vrot.slane %v11476, 6
  %v12087 = vsel %vm11731, %v12086, %v12085
  %v12088 = vrot.slane %v11478, 5
  %v12089 = vsel %vm11734, %v12088, %v12087
  %v12090 = vrot.slane %v11480, 4
  %v12091 = vsel %vm11737, %v12090, %v12089
  %v12092 = vrot.slane %v11482, 3
  %v12093 = vsel %vm11740, %v12092, %v12091
  %v12094 = vrot.slane %v11484, 2
  %v12095 = vsel %vm11743, %v12094, %v12093
  %v12096 = vrot.slane %v11486, 1
  %v12097 = vsel %vm11746, %v12096, %v12095
  %v12098 = vrot.slane %v11489, 7
  %v12099 = vsel %vm11728, %v12098, %v11487
  %v12100 = vrot.slane %v11491, 6
  %v12101 = vsel %vm11731, %v12100, %v12099
  %v12102 = vrot.slane %v11493, 5
  %v12103 = vsel %vm11734, %v12102, %v12101
  %v12104 = vrot.slane %v11495, 4
  %v12105 = vsel %vm11737, %v12104, %v12103
  %v12106 = vrot.slane %v11497, 3
  %v12107 = vsel %vm11740, %v12106, %v12105
  %v12108 = vrot.slane %v11499, 2
  %v12109 = vsel %vm11743, %v12108, %v12107
  %v12110 = vrot.slane %v11501, 1
  %v12111 = vsel %vm11746, %v12110, %v12109
  %v12112 = vrot.slane %v11490, 7
  %v12113 = vsel %vm11728, %v12112, %v11488
  %v12114 = vrot.slane %v11492, 6
  %v12115 = vsel %vm11731, %v12114, %v12113
  %v12116 = vrot.slane %v11494, 5
  %v12117 = vsel %vm11734, %v12116, %v12115
  %v12118 = vrot.slane %v11496, 4
  %v12119 = vsel %vm11737, %v12118, %v12117
  %v12120 = vrot.slane %v11498, 3
  %v12121 = vsel %vm11740, %v12120, %v12119
  %v12122 = vrot.slane %v11500, 2
  %v12123 = vsel %vm11743, %v12122, %v12121
  %v12124 = vrot.slane %v11502, 1
  %v12125 = vsel %vm11746, %v12124, %v12123
  %12154 = vst [vmem:[%s5] sm:$0xff] %v11747
  %12155 = vst [vmem:[%s5 + $0x8] sm:$0xff] %v11761
  %12156 = vst [vmem:[%s5 + $0x10] sm:$0xff] %v11775
  %12157 = vst [vmem:[%s5 + $0x18] sm:$0xff] %v11789
  %12158 = vst [vmem:[%s5 + $0x20] sm:$0xff] %v11803
  %12159 = vst [vmem:[%s5 + $0x28] sm:$0xff] %v11817
  %12160 = vst [vmem:[%s5 + $0x30] sm:$0xff] %v11831
  %12161 = vst [vmem:[%s5 + $0x38] sm:$0xff] %v11845
  %12162 = vst [vmem:[%s5 + $0x40] sm:$0xff] %v11859
  %12163 = vst [vmem:[%s5 + $0x48] sm:$0xff] %v11873
  %12164 = vst [vmem:[%s5 + $0x50] sm:$0xff] %v11887
  %12165 = vst [vmem:[%s5 + $0x58] sm:$0xff] %v11901
  %12166 = vst [vmem:[%s5 + $0x60] sm:$0xff] %v11915
  %12167 = vst [vmem:[%s5 + $0x68] sm:$0xff] %v11929
  %12168 = vst [vmem:[%s5 + $0x70] sm:$0xff] %v11943
  %12169 = vst [vmem:[%s5 + $0x78] sm:$0xff] %v11957
  %12170 = vst [vmem:[%s5 + $0x80] sm:$0xff] %v11971
  %12171 = vst [vmem:[%s5 + $0x88] sm:$0xff] %v11985
  %12172 = vst [vmem:[%s5 + $0x90] sm:$0xff] %v11999
  %12173 = vst [vmem:[%s5 + $0x98] sm:$0xff] %v12013
  %12174 = vst [vmem:[%s5 + $0xa0] sm:$0xff] %v12027
  %12175 = vst [vmem:[%s5 + $0xa8] sm:$0xff] %v12041
  %12176 = vst [vmem:[%s5 + $0xb0] sm:$0xff] %v12055
  %12177 = vst [vmem:[%s5 + $0xb8] sm:$0xff] %v12069
  %12178 = vst [vmem:[%s5 + $0xc0] sm:$0xff] %v12083
  %12179 = vst [vmem:[%s5 + $0xc8] sm:$0xff] %v12097
  %12180 = vst [vmem:[%s5 + $0xd0] sm:$0xff] %v12111
  %12181 = vst [vmem:[%s5 + $0xd8] sm:$0xff] %v12125
  // Predicated region
  $region22: #{filter_merger_forward.1} parent=0 // pred_check
    _
  $region23: #{filter_merger_forward.1} parent=0 // pred_check_branch
    %12183 = sbr.rel (0) target = $region25
  $region24: #{filter_merger_forward.1} parent=0 // pred_region
    _
  $region25: #{filter_merger_forward.1} parent=0 // pred_fallthru
    _
  // Predicated region
  $region26: #{filter_merger_forward.1} parent=0 // pred_check
    _
  $region27: #{filter_merger_forward.1} parent=0 // pred_check_branch
    %12185 = sbr.rel (0) target = $region29
  $region28: #{filter_merger_forward.1} parent=0 // pred_region
    _
  $region29: #{filter_merger_forward.1} parent=0 // pred_fallthru
    _

</llo_original>
